<compile_context>
chip_gen: v5e
topology: v5e:2x2
jax: 0.10.0
libtpu: 0.0.40
codegen_flags: <defaults>
</compile_context>

<pallas_src>
import jax
import jax.numpy as jnp
from jax.experimental import pallas as pl
from jax.experimental.pallas import tpu as pltpu

# Layer sizes of NN10: 2 -> 4 -> 4 -> ... -> 4 -> 1   (in_dim, out_dim) per layer.
LAYER_DIMS = [(2, 4)] + [(4, 4)] * 8 + [(4, 1)]
N_LAYERS = len(LAYER_DIMS)
MAXF = 4                      # max features per layer (packing stride)

LANE = 128                    # lanes per vreg
SUB = 8                       # sublanes per vreg
CHUNK = SUB * LANE            # 1024 samples kept register-resident at a time
CHUNKS_PER_TILE = 8           # chunks per grid step
B_TILE = CHUNK * CHUNKS_PER_TILE          # 8192 samples per grid step
ROWS_PER_TILE = B_TILE // LANE            # 64 rows of 128 lanes per grid step


def mlp_kernel(w_ref, b_ref, x_ref, o_ref):
    """Fused 10-layer MLP on the VPU.

    w_ref: SMEM f32 (N_LAYERS*4*4,)   flat weights, [i, j_out, k_in] at i*16 + j*4 + k
    b_ref: SMEM f32 (N_LAYERS*4,)     flat biases,  [i, j_out]       at i*4 + j
    x_ref: VMEM f32 (2, ROWS_PER_TILE, 128)  feature-major input block
    o_ref: VMEM f32 (ROWS_PER_TILE, 128)     one sigmoid output per sample (lane-dense)
    """
    # Hoist the 200 scalar SMEM reads out of the chunk loop (once per grid step).
    W = [[[w_ref[(i * MAXF + j) * MAXF + k] for k in range(LAYER_DIMS[i][0])]
          for j in range(LAYER_DIMS[i][1])]
         for i in range(N_LAYERS)]
    B = [[b_ref[i * MAXF + j] for j in range(LAYER_DIMS[i][1])]
         for i in range(N_LAYERS)]

    # Process the tile as CHUNKS_PER_TILE register-resident (8, 128) chunks; each
    # chunk's activations are <= 8 live vregs, and the store at the end of the chunk
    # ends their live ranges before the next chunk starts.
    for c in range(CHUNKS_PER_TILE):
        r0 = c * SUB
        # Per-feature activation planes: each is one dense (8, 128) vreg.
        h = [x_ref[f, r0:r0 + SUB, :] for f in range(LAYER_DIMS[0][0])]
        for i, (in_d, out_d) in enumerate(LAYER_DIMS):
            last = i == N_LAYERS - 1
            new_h = []
            for j in range(out_d):
                acc = h[0] * W[i][j][0]               # scalar-broadcast FMA chain (VPU)
                for k in range(1, in_d):
                    acc = acc + h[k] * W[i][j][k]
                acc = acc + B[i][j]
                new_h.append(jax.nn.sigmoid(acc) if last   # EUP (free slot)
                             else jnp.maximum(acc, 0.0))   # ReLU on hidden layers
            h = new_h
        o_ref[r0:r0 + SUB, :] = h[0]                  # lane-dense store, 1 f32/sample


def pack_params(weights, biases):
    """One-time packing of torch-style params into two flat f32 arrays for SMEM.

    weights[i]: (out_d, in_d), biases[i]: (out_d,).  Packed with stride MAXF=4:
    weight (i, j, k) -> index i*16 + j*4 + k, bias (i, j) -> index i*4 + j.
    """
    W = jnp.zeros((N_LAYERS, MAXF, MAXF), jnp.float32)
    Bb = jnp.zeros((N_LAYERS, MAXF), jnp.float32)
    for i, (w, b) in enumerate(zip(weights, biases)):
        out_d, in_d = w.shape
        assert in_d <= MAXF and out_d <= MAXF, "packing assumes <=4 features per layer"
        W = W.at[i, :out_d, :in_d].set(w.astype(jnp.float32))
        Bb = Bb.at[i, :out_d].set(b.astype(jnp.float32))
    return W.reshape(-1), Bb.reshape(-1)


@jax.jit
def nn10_forward(x, w_flat, b_flat):
    """x: (N, 2) float32.  Returns (N, 1) sigmoid outputs."""
    n = x.shape[0]
    n_pad = ((n + B_TILE - 1) // B_TILE) * B_TILE
    rows = n_pad // LANE

    # Feature-major, lane-dense input: (2, n_pad/128, 128).  Sample s lives at
    # [:, s // 128, s % 128].  (Only an 8 B/sample transpose; no 8-wide aug buffer.)
    xt = jnp.pad(x.astype(jnp.float32), ((0, n_pad - n), (0, 0))).T
    xt = xt.reshape(2, rows, LANE)

    out = pl.pallas_call(
        mlp_kernel,
        out_shape=jax.ShapeDtypeStruct((rows, LANE), jnp.float32),
        grid=(n_pad // B_TILE,),
        in_specs=[
            pl.BlockSpec(memory_space=pltpu.MemorySpace.SMEM),   # flat weights (~640 B)
            pl.BlockSpec(memory_space=pltpu.MemorySpace.SMEM),   # flat biases  (~160 B)
            pl.BlockSpec((2, ROWS_PER_TILE, LANE), lambda i: (0, i, 0)),  # batch-tiled x
        ],
        out_specs=pl.BlockSpec((ROWS_PER_TILE, LANE), lambda i: (i, 0)),
        compiler_params=pltpu.CompilerParams(
            dimension_semantics=("parallel",)),  # shards batch across TCs on v7x
    )(w_flat, b_flat, xt)

    # Row-major flatten undoes the (rows, 128) packing: element s is out[s//128, s%128].
    return out.reshape(n_pad, 1)[:n]


def init_params(key):
    """Deterministic PyTorch-style init: U(-1/sqrt(fan_in), 1/sqrt(fan_in))."""
    weights, biases = [], []
    for (in_d, out_d) in LAYER_DIMS:
        key, kw, kb = jax.random.split(key, 3)
        bound = 1.0 / float(jnp.sqrt(jnp.float32(in_d)))
        w = jax.random.uniform(kw, (out_d, in_d), jnp.float32, -bound, bound)
        b = jax.random.uniform(kb, (out_d,), jnp.float32, -bound, bound)
        weights.append(w)
        biases.append(b)
    return weights, biases


def reference_forward(x, weights, biases):
    """Pure-JAX reference matching the PyTorch module."""
    h = x
    for i, (w, b) in enumerate(zip(weights, biases)):
        z = h @ w.T + b
        h = jax.nn.sigmoid(z) if i == N_LAYERS - 1 else jnp.maximum(z, 0.0)
    return h


if __name__ == "__main__":
    key_params, key_batch = jax.random.split(jax.random.PRNGKey(0))
    weights, biases = init_params(key_params)

    # One-time parameter packing (outside the per-call hot path).
    w_flat, b_flat = jax.block_until_ready(pack_params(weights, biases))

    # XOR-style input from the reference script.
    x = jnp.array([[0.0, 0.0], [0.0, 1.0], [1.0, 0.0], [1.0, 1.0]], jnp.float32)
    out = jax.block_until_ready(nn10_forward(x, w_flat, b_flat))
    ref = reference_forward(x, weights, biases)
    assert out.shape == (4, 1), out.shape
    assert jnp.allclose(out, ref, atol=1e-5), (out, ref)

    # Non-multiple-of-tile batch to exercise padding / slicing paths.
    xb = jax.random.uniform(key_batch, (300, 2), jnp.float32)
    outb = jax.block_until_ready(nn10_forward(xb, w_flat, b_flat))
    refb = reference_forward(xb, weights, biases)
    assert outb.shape == (300, 1), outb.shape
    assert jnp.allclose(outb, refb, atol=1e-5), float(jnp.max(jnp.abs(outb - refb)))

    print("KERNEL_OK")
</pallas_src>

<mosaic_0001>
module attributes {stable_mosaic.version = 11 : i64} {
  func.func @mlp_kernel(%arg0: i32, %arg1: memref<160xf32, #tpu.memory_space<smem>>, %arg2: memref<40xf32, #tpu.memory_space<smem>>, %arg3: memref<2x64x128xf32, #tpu.memory_space<vmem>>, %arg4: memref<64x128xf32, #tpu.memory_space<vmem>>) attributes {dimension_semantics = [#tpu.dimension_semantics<parallel>], iteration_bounds = array<i64: 1>, scalar_prefetch = 0 : i64, scratch_operands = 0 : i64, tpu.core_type = #tpu.core_type<tc>, window_params = [{transform_indices = @transform_0, window_bounds = array<i64: 160>}, {transform_indices = @transform_1, window_bounds = array<i64: 40>}, {transform_indices = @transform_2, window_bounds = array<i64: 2, 64, 128>}, {transform_indices = @transform_3, window_bounds = array<i64: 64, 128>}]} {
    %c0 = arith.constant 0 : index
    %0 = memref.load %arg1[%c0] : memref<160xf32, #tpu.memory_space<smem>>
    %c1 = arith.constant 1 : index
    %1 = memref.load %arg1[%c1] : memref<160xf32, #tpu.memory_space<smem>>
    %c4 = arith.constant 4 : index
    %2 = memref.load %arg1[%c4] : memref<160xf32, #tpu.memory_space<smem>>
    %c5 = arith.constant 5 : index
    %3 = memref.load %arg1[%c5] : memref<160xf32, #tpu.memory_space<smem>>
    %c8 = arith.constant 8 : index
    %4 = memref.load %arg1[%c8] : memref<160xf32, #tpu.memory_space<smem>>
    %c9 = arith.constant 9 : index
    %5 = memref.load %arg1[%c9] : memref<160xf32, #tpu.memory_space<smem>>
    %c12 = arith.constant 12 : index
    %6 = memref.load %arg1[%c12] : memref<160xf32, #tpu.memory_space<smem>>
    %c13 = arith.constant 13 : index
    %7 = memref.load %arg1[%c13] : memref<160xf32, #tpu.memory_space<smem>>
    %c16 = arith.constant 16 : index
    %8 = memref.load %arg1[%c16] : memref<160xf32, #tpu.memory_space<smem>>
    %c17 = arith.constant 17 : index
    %9 = memref.load %arg1[%c17] : memref<160xf32, #tpu.memory_space<smem>>
    %c18 = arith.constant 18 : index
    %10 = memref.load %arg1[%c18] : memref<160xf32, #tpu.memory_space<smem>>
    %c19 = arith.constant 19 : index
    %11 = memref.load %arg1[%c19] : memref<160xf32, #tpu.memory_space<smem>>
    %c20 = arith.constant 20 : index
    %12 = memref.load %arg1[%c20] : memref<160xf32, #tpu.memory_space<smem>>
    %c21 = arith.constant 21 : index
    %13 = memref.load %arg1[%c21] : memref<160xf32, #tpu.memory_space<smem>>
    %c22 = arith.constant 22 : index
    %14 = memref.load %arg1[%c22] : memref<160xf32, #tpu.memory_space<smem>>
    %c23 = arith.constant 23 : index
    %15 = memref.load %arg1[%c23] : memref<160xf32, #tpu.memory_space<smem>>
    %c24 = arith.constant 24 : index
    %16 = memref.load %arg1[%c24] : memref<160xf32, #tpu.memory_space<smem>>
    %c25 = arith.constant 25 : index
    %17 = memref.load %arg1[%c25] : memref<160xf32, #tpu.memory_space<smem>>
    %c26 = arith.constant 26 : index
    %18 = memref.load %arg1[%c26] : memref<160xf32, #tpu.memory_space<smem>>
    %c27 = arith.constant 27 : index
    %19 = memref.load %arg1[%c27] : memref<160xf32, #tpu.memory_space<smem>>
    %c28 = arith.constant 28 : index
    %20 = memref.load %arg1[%c28] : memref<160xf32, #tpu.memory_space<smem>>
    %c29 = arith.constant 29 : index
    %21 = memref.load %arg1[%c29] : memref<160xf32, #tpu.memory_space<smem>>
    %c30 = arith.constant 30 : index
    %22 = memref.load %arg1[%c30] : memref<160xf32, #tpu.memory_space<smem>>
    %c31 = arith.constant 31 : index
    %23 = memref.load %arg1[%c31] : memref<160xf32, #tpu.memory_space<smem>>
    %c32 = arith.constant 32 : index
    %24 = memref.load %arg1[%c32] : memref<160xf32, #tpu.memory_space<smem>>
    %c33 = arith.constant 33 : index
    %25 = memref.load %arg1[%c33] : memref<160xf32, #tpu.memory_space<smem>>
    %c34 = arith.constant 34 : index
    %26 = memref.load %arg1[%c34] : memref<160xf32, #tpu.memory_space<smem>>
    %c35 = arith.constant 35 : index
    %27 = memref.load %arg1[%c35] : memref<160xf32, #tpu.memory_space<smem>>
    %c36 = arith.constant 36 : index
    %28 = memref.load %arg1[%c36] : memref<160xf32, #tpu.memory_space<smem>>
    %c37 = arith.constant 37 : index
    %29 = memref.load %arg1[%c37] : memref<160xf32, #tpu.memory_space<smem>>
    %c38 = arith.constant 38 : index
    %30 = memref.load %arg1[%c38] : memref<160xf32, #tpu.memory_space<smem>>
    %c39 = arith.constant 39 : index
    %31 = memref.load %arg1[%c39] : memref<160xf32, #tpu.memory_space<smem>>
    %c40 = arith.constant 40 : index
    %32 = memref.load %arg1[%c40] : memref<160xf32, #tpu.memory_space<smem>>
    %c41 = arith.constant 41 : index
    %33 = memref.load %arg1[%c41] : memref<160xf32, #tpu.memory_space<smem>>
    %c42 = arith.constant 42 : index
    %34 = memref.load %arg1[%c42] : memref<160xf32, #tpu.memory_space<smem>>
    %c43 = arith.constant 43 : index
    %35 = memref.load %arg1[%c43] : memref<160xf32, #tpu.memory_space<smem>>
    %c44 = arith.constant 44 : index
    %36 = memref.load %arg1[%c44] : memref<160xf32, #tpu.memory_space<smem>>
    %c45 = arith.constant 45 : index
    %37 = memref.load %arg1[%c45] : memref<160xf32, #tpu.memory_space<smem>>
    %c46 = arith.constant 46 : index
    %38 = memref.load %arg1[%c46] : memref<160xf32, #tpu.memory_space<smem>>
    %c47 = arith.constant 47 : index
    %39 = memref.load %arg1[%c47] : memref<160xf32, #tpu.memory_space<smem>>
    %c48 = arith.constant 48 : index
    %40 = memref.load %arg1[%c48] : memref<160xf32, #tpu.memory_space<smem>>
    %c49 = arith.constant 49 : index
    %41 = memref.load %arg1[%c49] : memref<160xf32, #tpu.memory_space<smem>>
    %c50 = arith.constant 50 : index
    %42 = memref.load %arg1[%c50] : memref<160xf32, #tpu.memory_space<smem>>
    %c51 = arith.constant 51 : index
    %43 = memref.load %arg1[%c51] : memref<160xf32, #tpu.memory_space<smem>>
    %c52 = arith.constant 52 : index
    %44 = memref.load %arg1[%c52] : memref<160xf32, #tpu.memory_space<smem>>
    %c53 = arith.constant 53 : index
    %45 = memref.load %arg1[%c53] : memref<160xf32, #tpu.memory_space<smem>>
    %c54 = arith.constant 54 : index
    %46 = memref.load %arg1[%c54] : memref<160xf32, #tpu.memory_space<smem>>
    %c55 = arith.constant 55 : index
    %47 = memref.load %arg1[%c55] : memref<160xf32, #tpu.memory_space<smem>>
    %c56 = arith.constant 56 : index
    %48 = memref.load %arg1[%c56] : memref<160xf32, #tpu.memory_space<smem>>
    %c57 = arith.constant 57 : index
    %49 = memref.load %arg1[%c57] : memref<160xf32, #tpu.memory_space<smem>>
    %c58 = arith.constant 58 : index
    %50 = memref.load %arg1[%c58] : memref<160xf32, #tpu.memory_space<smem>>
    %c59 = arith.constant 59 : index
    %51 = memref.load %arg1[%c59] : memref<160xf32, #tpu.memory_space<smem>>
    %c60 = arith.constant 60 : index
    %52 = memref.load %arg1[%c60] : memref<160xf32, #tpu.memory_space<smem>>
    %c61 = arith.constant 61 : index
    %53 = memref.load %arg1[%c61] : memref<160xf32, #tpu.memory_space<smem>>
    %c62 = arith.constant 62 : index
    %54 = memref.load %arg1[%c62] : memref<160xf32, #tpu.memory_space<smem>>
    %c63 = arith.constant 63 : index
    %55 = memref.load %arg1[%c63] : memref<160xf32, #tpu.memory_space<smem>>
    %c64 = arith.constant 64 : index
    %56 = memref.load %arg1[%c64] : memref<160xf32, #tpu.memory_space<smem>>
    %c65 = arith.constant 65 : index
    %57 = memref.load %arg1[%c65] : memref<160xf32, #tpu.memory_space<smem>>
    %c66 = arith.constant 66 : index
    %58 = memref.load %arg1[%c66] : memref<160xf32, #tpu.memory_space<smem>>
    %c67 = arith.constant 67 : index
    %59 = memref.load %arg1[%c67] : memref<160xf32, #tpu.memory_space<smem>>
    %c68 = arith.constant 68 : index
    %60 = memref.load %arg1[%c68] : memref<160xf32, #tpu.memory_space<smem>>
    %c69 = arith.constant 69 : index
    %61 = memref.load %arg1[%c69] : memref<160xf32, #tpu.memory_space<smem>>
    %c70 = arith.constant 70 : index
    %62 = memref.load %arg1[%c70] : memref<160xf32, #tpu.memory_space<smem>>
    %c71 = arith.constant 71 : index
    %63 = memref.load %arg1[%c71] : memref<160xf32, #tpu.memory_space<smem>>
    %c72 = arith.constant 72 : index
    %64 = memref.load %arg1[%c72] : memref<160xf32, #tpu.memory_space<smem>>
    %c73 = arith.constant 73 : index
    %65 = memref.load %arg1[%c73] : memref<160xf32, #tpu.memory_space<smem>>
    %c74 = arith.constant 74 : index
    %66 = memref.load %arg1[%c74] : memref<160xf32, #tpu.memory_space<smem>>
    %c75 = arith.constant 75 : index
    %67 = memref.load %arg1[%c75] : memref<160xf32, #tpu.memory_space<smem>>
    %c76 = arith.constant 76 : index
    %68 = memref.load %arg1[%c76] : memref<160xf32, #tpu.memory_space<smem>>
    %c77 = arith.constant 77 : index
    %69 = memref.load %arg1[%c77] : memref<160xf32, #tpu.memory_space<smem>>
    %c78 = arith.constant 78 : index
    %70 = memref.load %arg1[%c78] : memref<160xf32, #tpu.memory_space<smem>>
    %c79 = arith.constant 79 : index
    %71 = memref.load %arg1[%c79] : memref<160xf32, #tpu.memory_space<smem>>
    %c80 = arith.constant 80 : index
    %72 = memref.load %arg1[%c80] : memref<160xf32, #tpu.memory_space<smem>>
    %c81 = arith.constant 81 : index
    %73 = memref.load %arg1[%c81] : memref<160xf32, #tpu.memory_space<smem>>
    %c82 = arith.constant 82 : index
    %74 = memref.load %arg1[%c82] : memref<160xf32, #tpu.memory_space<smem>>
    %c83 = arith.constant 83 : index
    %75 = memref.load %arg1[%c83] : memref<160xf32, #tpu.memory_space<smem>>
    %c84 = arith.constant 84 : index
    %76 = memref.load %arg1[%c84] : memref<160xf32, #tpu.memory_space<smem>>
    %c85 = arith.constant 85 : index
    %77 = memref.load %arg1[%c85] : memref<160xf32, #tpu.memory_space<smem>>
    %c86 = arith.constant 86 : index
    %78 = memref.load %arg1[%c86] : memref<160xf32, #tpu.memory_space<smem>>
    %c87 = arith.constant 87 : index
    %79 = memref.load %arg1[%c87] : memref<160xf32, #tpu.memory_space<smem>>
    %c88 = arith.constant 88 : index
    %80 = memref.load %arg1[%c88] : memref<160xf32, #tpu.memory_space<smem>>
    %c89 = arith.constant 89 : index
    %81 = memref.load %arg1[%c89] : memref<160xf32, #tpu.memory_space<smem>>
    %c90 = arith.constant 90 : index
    %82 = memref.load %arg1[%c90] : memref<160xf32, #tpu.memory_space<smem>>
    %c91 = arith.constant 91 : index
    %83 = memref.load %arg1[%c91] : memref<160xf32, #tpu.memory_space<smem>>
    %c92 = arith.constant 92 : index
    %84 = memref.load %arg1[%c92] : memref<160xf32, #tpu.memory_space<smem>>
    %c93 = arith.constant 93 : index
    %85 = memref.load %arg1[%c93] : memref<160xf32, #tpu.memory_space<smem>>
    %c94 = arith.constant 94 : index
    %86 = memref.load %arg1[%c94] : memref<160xf32, #tpu.memory_space<smem>>
    %c95 = arith.constant 95 : index
    %87 = memref.load %arg1[%c95] : memref<160xf32, #tpu.memory_space<smem>>
    %c96 = arith.constant 96 : index
    %88 = memref.load %arg1[%c96] : memref<160xf32, #tpu.memory_space<smem>>
    %c97 = arith.constant 97 : index
    %89 = memref.load %arg1[%c97] : memref<160xf32, #tpu.memory_space<smem>>
    %c98 = arith.constant 98 : index
    %90 = memref.load %arg1[%c98] : memref<160xf32, #tpu.memory_space<smem>>
    %c99 = arith.constant 99 : index
    %91 = memref.load %arg1[%c99] : memref<160xf32, #tpu.memory_space<smem>>
    %c100 = arith.constant 100 : index
    %92 = memref.load %arg1[%c100] : memref<160xf32, #tpu.memory_space<smem>>
    %c101 = arith.constant 101 : index
    %93 = memref.load %arg1[%c101] : memref<160xf32, #tpu.memory_space<smem>>
    %c102 = arith.constant 102 : index
    %94 = memref.load %arg1[%c102] : memref<160xf32, #tpu.memory_space<smem>>
    %c103 = arith.constant 103 : index
    %95 = memref.load %arg1[%c103] : memref<160xf32, #tpu.memory_space<smem>>
    %c104 = arith.constant 104 : index
    %96 = memref.load %arg1[%c104] : memref<160xf32, #tpu.memory_space<smem>>
    %c105 = arith.constant 105 : index
    %97 = memref.load %arg1[%c105] : memref<160xf32, #tpu.memory_space<smem>>
    %c106 = arith.constant 106 : index
    %98 = memref.load %arg1[%c106] : memref<160xf32, #tpu.memory_space<smem>>
    %c107 = arith.constant 107 : index
    %99 = memref.load %arg1[%c107] : memref<160xf32, #tpu.memory_space<smem>>
    %c108 = arith.constant 108 : index
    %100 = memref.load %arg1[%c108] : memref<160xf32, #tpu.memory_space<smem>>
    %c109 = arith.constant 109 : index
    %101 = memref.load %arg1[%c109] : memref<160xf32, #tpu.memory_space<smem>>
    %c110 = arith.constant 110 : index
    %102 = memref.load %arg1[%c110] : memref<160xf32, #tpu.memory_space<smem>>
    %c111 = arith.constant 111 : index
    %103 = memref.load %arg1[%c111] : memref<160xf32, #tpu.memory_space<smem>>
    %c112 = arith.constant 112 : index
    %104 = memref.load %arg1[%c112] : memref<160xf32, #tpu.memory_space<smem>>
    %c113 = arith.constant 113 : index
    %105 = memref.load %arg1[%c113] : memref<160xf32, #tpu.memory_space<smem>>
    %c114 = arith.constant 114 : index
    %106 = memref.load %arg1[%c114] : memref<160xf32, #tpu.memory_space<smem>>
    %c115 = arith.constant 115 : index
    %107 = memref.load %arg1[%c115] : memref<160xf32, #tpu.memory_space<smem>>
    %c116 = arith.constant 116 : index
    %108 = memref.load %arg1[%c116] : memref<160xf32, #tpu.memory_space<smem>>
    %c117 = arith.constant 117 : index
    %109 = memref.load %arg1[%c117] : memref<160xf32, #tpu.memory_space<smem>>
    %c118 = arith.constant 118 : index
    %110 = memref.load %arg1[%c118] : memref<160xf32, #tpu.memory_space<smem>>
    %c119 = arith.constant 119 : index
    %111 = memref.load %arg1[%c119] : memref<160xf32, #tpu.memory_space<smem>>
    %c120 = arith.constant 120 : index
    %112 = memref.load %arg1[%c120] : memref<160xf32, #tpu.memory_space<smem>>
    %c121 = arith.constant 121 : index
    %113 = memref.load %arg1[%c121] : memref<160xf32, #tpu.memory_space<smem>>
    %c122 = arith.constant 122 : index
    %114 = memref.load %arg1[%c122] : memref<160xf32, #tpu.memory_space<smem>>
    %c123 = arith.constant 123 : index
    %115 = memref.load %arg1[%c123] : memref<160xf32, #tpu.memory_space<smem>>
    %c124 = arith.constant 124 : index
    %116 = memref.load %arg1[%c124] : memref<160xf32, #tpu.memory_space<smem>>
    %c125 = arith.constant 125 : index
    %117 = memref.load %arg1[%c125] : memref<160xf32, #tpu.memory_space<smem>>
    %c126 = arith.constant 126 : index
    %118 = memref.load %arg1[%c126] : memref<160xf32, #tpu.memory_space<smem>>
    %c127 = arith.constant 127 : index
    %119 = memref.load %arg1[%c127] : memref<160xf32, #tpu.memory_space<smem>>
    %c128 = arith.constant 128 : index
    %120 = memref.load %arg1[%c128] : memref<160xf32, #tpu.memory_space<smem>>
    %c129 = arith.constant 129 : index
    %121 = memref.load %arg1[%c129] : memref<160xf32, #tpu.memory_space<smem>>
    %c130 = arith.constant 130 : index
    %122 = memref.load %arg1[%c130] : memref<160xf32, #tpu.memory_space<smem>>
    %c131 = arith.constant 131 : index
    %123 = memref.load %arg1[%c131] : memref<160xf32, #tpu.memory_space<smem>>
    %c132 = arith.constant 132 : index
    %124 = memref.load %arg1[%c132] : memref<160xf32, #tpu.memory_space<smem>>
    %c133 = arith.constant 133 : index
    %125 = memref.load %arg1[%c133] : memref<160xf32, #tpu.memory_space<smem>>
    %c134 = arith.constant 134 : index
    %126 = memref.load %arg1[%c134] : memref<160xf32, #tpu.memory_space<smem>>
    %c135 = arith.constant 135 : index
    %127 = memref.load %arg1[%c135] : memref<160xf32, #tpu.memory_space<smem>>
    %c136 = arith.constant 136 : index
    %128 = memref.load %arg1[%c136] : memref<160xf32, #tpu.memory_space<smem>>
    %c137 = arith.constant 137 : index
    %129 = memref.load %arg1[%c137] : memref<160xf32, #tpu.memory_space<smem>>
    %c138 = arith.constant 138 : index
    %130 = memref.load %arg1[%c138] : memref<160xf32, #tpu.memory_space<smem>>
    %c139 = arith.constant 139 : index
    %131 = memref.load %arg1[%c139] : memref<160xf32, #tpu.memory_space<smem>>
    %c140 = arith.constant 140 : index
    %132 = memref.load %arg1[%c140] : memref<160xf32, #tpu.memory_space<smem>>
    %c141 = arith.constant 141 : index
    %133 = memref.load %arg1[%c141] : memref<160xf32, #tpu.memory_space<smem>>
    %c142 = arith.constant 142 : index
    %134 = memref.load %arg1[%c142] : memref<160xf32, #tpu.memory_space<smem>>
    %c143 = arith.constant 143 : index
    %135 = memref.load %arg1[%c143] : memref<160xf32, #tpu.memory_space<smem>>
    %c144 = arith.constant 144 : index
    %136 = memref.load %arg1[%c144] : memref<160xf32, #tpu.memory_space<smem>>
    %c145 = arith.constant 145 : index
    %137 = memref.load %arg1[%c145] : memref<160xf32, #tpu.memory_space<smem>>
    %c146 = arith.constant 146 : index
    %138 = memref.load %arg1[%c146] : memref<160xf32, #tpu.memory_space<smem>>
    %c147 = arith.constant 147 : index
    %139 = memref.load %arg1[%c147] : memref<160xf32, #tpu.memory_space<smem>>
    %c0_0 = arith.constant 0 : index
    %140 = memref.load %arg2[%c0_0] : memref<40xf32, #tpu.memory_space<smem>>
    %c1_1 = arith.constant 1 : index
    %141 = memref.load %arg2[%c1_1] : memref<40xf32, #tpu.memory_space<smem>>
    %c2 = arith.constant 2 : index
    %142 = memref.load %arg2[%c2] : memref<40xf32, #tpu.memory_space<smem>>
    %c3 = arith.constant 3 : index
    %143 = memref.load %arg2[%c3] : memref<40xf32, #tpu.memory_space<smem>>
    %c4_2 = arith.constant 4 : index
    %144 = memref.load %arg2[%c4_2] : memref<40xf32, #tpu.memory_space<smem>>
    %c5_3 = arith.constant 5 : index
    %145 = memref.load %arg2[%c5_3] : memref<40xf32, #tpu.memory_space<smem>>
    %c6 = arith.constant 6 : index
    %146 = memref.load %arg2[%c6] : memref<40xf32, #tpu.memory_space<smem>>
    %c7 = arith.constant 7 : index
    %147 = memref.load %arg2[%c7] : memref<40xf32, #tpu.memory_space<smem>>
    %c8_4 = arith.constant 8 : index
    %148 = memref.load %arg2[%c8_4] : memref<40xf32, #tpu.memory_space<smem>>
    %c9_5 = arith.constant 9 : index
    %149 = memref.load %arg2[%c9_5] : memref<40xf32, #tpu.memory_space<smem>>
    %c10 = arith.constant 10 : index
    %150 = memref.load %arg2[%c10] : memref<40xf32, #tpu.memory_space<smem>>
    %c11 = arith.constant 11 : index
    %151 = memref.load %arg2[%c11] : memref<40xf32, #tpu.memory_space<smem>>
    %c12_6 = arith.constant 12 : index
    %152 = memref.load %arg2[%c12_6] : memref<40xf32, #tpu.memory_space<smem>>
    %c13_7 = arith.constant 13 : index
    %153 = memref.load %arg2[%c13_7] : memref<40xf32, #tpu.memory_space<smem>>
    %c14 = arith.constant 14 : index
    %154 = memref.load %arg2[%c14] : memref<40xf32, #tpu.memory_space<smem>>
    %c15 = arith.constant 15 : index
    %155 = memref.load %arg2[%c15] : memref<40xf32, #tpu.memory_space<smem>>
    %c16_8 = arith.constant 16 : index
    %156 = memref.load %arg2[%c16_8] : memref<40xf32, #tpu.memory_space<smem>>
    %c17_9 = arith.constant 17 : index
    %157 = memref.load %arg2[%c17_9] : memref<40xf32, #tpu.memory_space<smem>>
    %c18_10 = arith.constant 18 : index
    %158 = memref.load %arg2[%c18_10] : memref<40xf32, #tpu.memory_space<smem>>
    %c19_11 = arith.constant 19 : index
    %159 = memref.load %arg2[%c19_11] : memref<40xf32, #tpu.memory_space<smem>>
    %c20_12 = arith.constant 20 : index
    %160 = memref.load %arg2[%c20_12] : memref<40xf32, #tpu.memory_space<smem>>
    %c21_13 = arith.constant 21 : index
    %161 = memref.load %arg2[%c21_13] : memref<40xf32, #tpu.memory_space<smem>>
    %c22_14 = arith.constant 22 : index
    %162 = memref.load %arg2[%c22_14] : memref<40xf32, #tpu.memory_space<smem>>
    %c23_15 = arith.constant 23 : index
    %163 = memref.load %arg2[%c23_15] : memref<40xf32, #tpu.memory_space<smem>>
    %c24_16 = arith.constant 24 : index
    %164 = memref.load %arg2[%c24_16] : memref<40xf32, #tpu.memory_space<smem>>
    %c25_17 = arith.constant 25 : index
    %165 = memref.load %arg2[%c25_17] : memref<40xf32, #tpu.memory_space<smem>>
    %c26_18 = arith.constant 26 : index
    %166 = memref.load %arg2[%c26_18] : memref<40xf32, #tpu.memory_space<smem>>
    %c27_19 = arith.constant 27 : index
    %167 = memref.load %arg2[%c27_19] : memref<40xf32, #tpu.memory_space<smem>>
    %c28_20 = arith.constant 28 : index
    %168 = memref.load %arg2[%c28_20] : memref<40xf32, #tpu.memory_space<smem>>
    %c29_21 = arith.constant 29 : index
    %169 = memref.load %arg2[%c29_21] : memref<40xf32, #tpu.memory_space<smem>>
    %c30_22 = arith.constant 30 : index
    %170 = memref.load %arg2[%c30_22] : memref<40xf32, #tpu.memory_space<smem>>
    %c31_23 = arith.constant 31 : index
    %171 = memref.load %arg2[%c31_23] : memref<40xf32, #tpu.memory_space<smem>>
    %c32_24 = arith.constant 32 : index
    %172 = memref.load %arg2[%c32_24] : memref<40xf32, #tpu.memory_space<smem>>
    %c33_25 = arith.constant 33 : index
    %173 = memref.load %arg2[%c33_25] : memref<40xf32, #tpu.memory_space<smem>>
    %c34_26 = arith.constant 34 : index
    %174 = memref.load %arg2[%c34_26] : memref<40xf32, #tpu.memory_space<smem>>
    %c35_27 = arith.constant 35 : index
    %175 = memref.load %arg2[%c35_27] : memref<40xf32, #tpu.memory_space<smem>>
    %c36_28 = arith.constant 36 : index
    %176 = memref.load %arg2[%c36_28] : memref<40xf32, #tpu.memory_space<smem>>
    %c0_29 = arith.constant 0 : index
    %c0_30 = arith.constant 0 : index
    %c0_31 = arith.constant 0 : index
    %177 = vector.load %arg3[%c0_29, %c0_30, %c0_31] : memref<2x64x128xf32, #tpu.memory_space<vmem>>, vector<1x8x128xf32>
    %178 = vector.shape_cast %177 : vector<1x8x128xf32> to vector<8x128xf32>
    %c1_32 = arith.constant 1 : index
    %c0_33 = arith.constant 0 : index
    %c0_34 = arith.constant 0 : index
    %179 = vector.load %arg3[%c1_32, %c0_33, %c0_34] : memref<2x64x128xf32, #tpu.memory_space<vmem>>, vector<1x8x128xf32>
    %180 = vector.shape_cast %179 : vector<1x8x128xf32> to vector<8x128xf32>
    %181 = vector.broadcast %0 : f32 to vector<8x128xf32>
    %182 = arith.mulf %178, %181 : vector<8x128xf32>
    %183 = vector.broadcast %1 : f32 to vector<8x128xf32>
    %184 = arith.mulf %180, %183 : vector<8x128xf32>
    %185 = arith.addf %182, %184 : vector<8x128xf32>
    %186 = vector.broadcast %140 : f32 to vector<8x128xf32>
    %187 = arith.addf %185, %186 : vector<8x128xf32>
    %cst = arith.constant 0.000000e+00 : f32
    %188 = vector.broadcast %cst : f32 to vector<8x128xf32>
    %189 = arith.maximumf %187, %188 : vector<8x128xf32>
    %190 = vector.broadcast %2 : f32 to vector<8x128xf32>
    %191 = arith.mulf %178, %190 : vector<8x128xf32>
    %192 = vector.broadcast %3 : f32 to vector<8x128xf32>
    %193 = arith.mulf %180, %192 : vector<8x128xf32>
    %194 = arith.addf %191, %193 : vector<8x128xf32>
    %195 = vector.broadcast %141 : f32 to vector<8x128xf32>
    %196 = arith.addf %194, %195 : vector<8x128xf32>
    %cst_35 = arith.constant 0.000000e+00 : f32
    %197 = vector.broadcast %cst_35 : f32 to vector<8x128xf32>
    %198 = arith.maximumf %196, %197 : vector<8x128xf32>
    %199 = vector.broadcast %4 : f32 to vector<8x128xf32>
    %200 = arith.mulf %178, %199 : vector<8x128xf32>
    %201 = vector.broadcast %5 : f32 to vector<8x128xf32>
    %202 = arith.mulf %180, %201 : vector<8x128xf32>
    %203 = arith.addf %200, %202 : vector<8x128xf32>
    %204 = vector.broadcast %142 : f32 to vector<8x128xf32>
    %205 = arith.addf %203, %204 : vector<8x128xf32>
    %cst_36 = arith.constant 0.000000e+00 : f32
    %206 = vector.broadcast %cst_36 : f32 to vector<8x128xf32>
    %207 = arith.maximumf %205, %206 : vector<8x128xf32>
    %208 = vector.broadcast %6 : f32 to vector<8x128xf32>
    %209 = arith.mulf %178, %208 : vector<8x128xf32>
    %210 = vector.broadcast %7 : f32 to vector<8x128xf32>
    %211 = arith.mulf %180, %210 : vector<8x128xf32>
    %212 = arith.addf %209, %211 : vector<8x128xf32>
    %213 = vector.broadcast %143 : f32 to vector<8x128xf32>
    %214 = arith.addf %212, %213 : vector<8x128xf32>
    %cst_37 = arith.constant 0.000000e+00 : f32
    %215 = vector.broadcast %cst_37 : f32 to vector<8x128xf32>
    %216 = arith.maximumf %214, %215 : vector<8x128xf32>
    %217 = vector.broadcast %8 : f32 to vector<8x128xf32>
    %218 = arith.mulf %189, %217 : vector<8x128xf32>
    %219 = vector.broadcast %9 : f32 to vector<8x128xf32>
    %220 = arith.mulf %198, %219 : vector<8x128xf32>
    %221 = arith.addf %218, %220 : vector<8x128xf32>
    %222 = vector.broadcast %10 : f32 to vector<8x128xf32>
    %223 = arith.mulf %207, %222 : vector<8x128xf32>
    %224 = arith.addf %221, %223 : vector<8x128xf32>
    %225 = vector.broadcast %11 : f32 to vector<8x128xf32>
    %226 = arith.mulf %216, %225 : vector<8x128xf32>
    %227 = arith.addf %224, %226 : vector<8x128xf32>
    %228 = vector.broadcast %144 : f32 to vector<8x128xf32>
    %229 = arith.addf %227, %228 : vector<8x128xf32>
    %cst_38 = arith.constant 0.000000e+00 : f32
    %230 = vector.broadcast %cst_38 : f32 to vector<8x128xf32>
    %231 = arith.maximumf %229, %230 : vector<8x128xf32>
    %232 = vector.broadcast %12 : f32 to vector<8x128xf32>
    %233 = arith.mulf %189, %232 : vector<8x128xf32>
    %234 = vector.broadcast %13 : f32 to vector<8x128xf32>
    %235 = arith.mulf %198, %234 : vector<8x128xf32>
    %236 = arith.addf %233, %235 : vector<8x128xf32>
    %237 = vector.broadcast %14 : f32 to vector<8x128xf32>
    %238 = arith.mulf %207, %237 : vector<8x128xf32>
    %239 = arith.addf %236, %238 : vector<8x128xf32>
    %240 = vector.broadcast %15 : f32 to vector<8x128xf32>
    %241 = arith.mulf %216, %240 : vector<8x128xf32>
    %242 = arith.addf %239, %241 : vector<8x128xf32>
    %243 = vector.broadcast %145 : f32 to vector<8x128xf32>
    %244 = arith.addf %242, %243 : vector<8x128xf32>
    %cst_39 = arith.constant 0.000000e+00 : f32
    %245 = vector.broadcast %cst_39 : f32 to vector<8x128xf32>
    %246 = arith.maximumf %244, %245 : vector<8x128xf32>
    %247 = vector.broadcast %16 : f32 to vector<8x128xf32>
    %248 = arith.mulf %189, %247 : vector<8x128xf32>
    %249 = vector.broadcast %17 : f32 to vector<8x128xf32>
    %250 = arith.mulf %198, %249 : vector<8x128xf32>
    %251 = arith.addf %248, %250 : vector<8x128xf32>
    %252 = vector.broadcast %18 : f32 to vector<8x128xf32>
    %253 = arith.mulf %207, %252 : vector<8x128xf32>
    %254 = arith.addf %251, %253 : vector<8x128xf32>
    %255 = vector.broadcast %19 : f32 to vector<8x128xf32>
    %256 = arith.mulf %216, %255 : vector<8x128xf32>
    %257 = arith.addf %254, %256 : vector<8x128xf32>
    %258 = vector.broadcast %146 : f32 to vector<8x128xf32>
    %259 = arith.addf %257, %258 : vector<8x128xf32>
    %cst_40 = arith.constant 0.000000e+00 : f32
    %260 = vector.broadcast %cst_40 : f32 to vector<8x128xf32>
    %261 = arith.maximumf %259, %260 : vector<8x128xf32>
    %262 = vector.broadcast %20 : f32 to vector<8x128xf32>
    %263 = arith.mulf %189, %262 : vector<8x128xf32>
    %264 = vector.broadcast %21 : f32 to vector<8x128xf32>
    %265 = arith.mulf %198, %264 : vector<8x128xf32>
    %266 = arith.addf %263, %265 : vector<8x128xf32>
    %267 = vector.broadcast %22 : f32 to vector<8x128xf32>
    %268 = arith.mulf %207, %267 : vector<8x128xf32>
    %269 = arith.addf %266, %268 : vector<8x128xf32>
    %270 = vector.broadcast %23 : f32 to vector<8x128xf32>
    %271 = arith.mulf %216, %270 : vector<8x128xf32>
    %272 = arith.addf %269, %271 : vector<8x128xf32>
    %273 = vector.broadcast %147 : f32 to vector<8x128xf32>
    %274 = arith.addf %272, %273 : vector<8x128xf32>
    %cst_41 = arith.constant 0.000000e+00 : f32
    %275 = vector.broadcast %cst_41 : f32 to vector<8x128xf32>
    %276 = arith.maximumf %274, %275 : vector<8x128xf32>
    %277 = vector.broadcast %24 : f32 to vector<8x128xf32>
    %278 = arith.mulf %231, %277 : vector<8x128xf32>
    %279 = vector.broadcast %25 : f32 to vector<8x128xf32>
    %280 = arith.mulf %246, %279 : vector<8x128xf32>
    %281 = arith.addf %278, %280 : vector<8x128xf32>
    %282 = vector.broadcast %26 : f32 to vector<8x128xf32>
    %283 = arith.mulf %261, %282 : vector<8x128xf32>
    %284 = arith.addf %281, %283 : vector<8x128xf32>
    %285 = vector.broadcast %27 : f32 to vector<8x128xf32>
    %286 = arith.mulf %276, %285 : vector<8x128xf32>
    %287 = arith.addf %284, %286 : vector<8x128xf32>
    %288 = vector.broadcast %148 : f32 to vector<8x128xf32>
    %289 = arith.addf %287, %288 : vector<8x128xf32>
    %cst_42 = arith.constant 0.000000e+00 : f32
    %290 = vector.broadcast %cst_42 : f32 to vector<8x128xf32>
    %291 = arith.maximumf %289, %290 : vector<8x128xf32>
    %292 = vector.broadcast %28 : f32 to vector<8x128xf32>
    %293 = arith.mulf %231, %292 : vector<8x128xf32>
    %294 = vector.broadcast %29 : f32 to vector<8x128xf32>
    %295 = arith.mulf %246, %294 : vector<8x128xf32>
    %296 = arith.addf %293, %295 : vector<8x128xf32>
    %297 = vector.broadcast %30 : f32 to vector<8x128xf32>
    %298 = arith.mulf %261, %297 : vector<8x128xf32>
    %299 = arith.addf %296, %298 : vector<8x128xf32>
    %300 = vector.broadcast %31 : f32 to vector<8x128xf32>
    %301 = arith.mulf %276, %300 : vector<8x128xf32>
    %302 = arith.addf %299, %301 : vector<8x128xf32>
    %303 = vector.broadcast %149 : f32 to vector<8x128xf32>
    %304 = arith.addf %302, %303 : vector<8x128xf32>
    %cst_43 = arith.constant 0.000000e+00 : f32
    %305 = vector.broadcast %cst_43 : f32 to vector<8x128xf32>
    %306 = arith.maximumf %304, %305 : vector<8x128xf32>
    %307 = vector.broadcast %32 : f32 to vector<8x128xf32>
    %308 = arith.mulf %231, %307 : vector<8x128xf32>
    %309 = vector.broadcast %33 : f32 to vector<8x128xf32>
    %310 = arith.mulf %246, %309 : vector<8x128xf32>
    %311 = arith.addf %308, %310 : vector<8x128xf32>
    %312 = vector.broadcast %34 : f32 to vector<8x128xf32>
    %313 = arith.mulf %261, %312 : vector<8x128xf32>
    %314 = arith.addf %311, %313 : vector<8x128xf32>
    %315 = vector.broadcast %35 : f32 to vector<8x128xf32>
    %316 = arith.mulf %276, %315 : vector<8x128xf32>
    %317 = arith.addf %314, %316 : vector<8x128xf32>
    %318 = vector.broadcast %150 : f32 to vector<8x128xf32>
    %319 = arith.addf %317, %318 : vector<8x128xf32>
    %cst_44 = arith.constant 0.000000e+00 : f32
    %320 = vector.broadcast %cst_44 : f32 to vector<8x128xf32>
    %321 = arith.maximumf %319, %320 : vector<8x128xf32>
    %322 = vector.broadcast %36 : f32 to vector<8x128xf32>
    %323 = arith.mulf %231, %322 : vector<8x128xf32>
    %324 = vector.broadcast %37 : f32 to vector<8x128xf32>
    %325 = arith.mulf %246, %324 : vector<8x128xf32>
    %326 = arith.addf %323, %325 : vector<8x128xf32>
    %327 = vector.broadcast %38 : f32 to vector<8x128xf32>
    %328 = arith.mulf %261, %327 : vector<8x128xf32>
    %329 = arith.addf %326, %328 : vector<8x128xf32>
    %330 = vector.broadcast %39 : f32 to vector<8x128xf32>
    %331 = arith.mulf %276, %330 : vector<8x128xf32>
    %332 = arith.addf %329, %331 : vector<8x128xf32>
    %333 = vector.broadcast %151 : f32 to vector<8x128xf32>
    %334 = arith.addf %332, %333 : vector<8x128xf32>
    %cst_45 = arith.constant 0.000000e+00 : f32
    %335 = vector.broadcast %cst_45 : f32 to vector<8x128xf32>
    %336 = arith.maximumf %334, %335 : vector<8x128xf32>
    %337 = vector.broadcast %40 : f32 to vector<8x128xf32>
    %338 = arith.mulf %291, %337 : vector<8x128xf32>
    %339 = vector.broadcast %41 : f32 to vector<8x128xf32>
    %340 = arith.mulf %306, %339 : vector<8x128xf32>
    %341 = arith.addf %338, %340 : vector<8x128xf32>
    %342 = vector.broadcast %42 : f32 to vector<8x128xf32>
    %343 = arith.mulf %321, %342 : vector<8x128xf32>
    %344 = arith.addf %341, %343 : vector<8x128xf32>
    %345 = vector.broadcast %43 : f32 to vector<8x128xf32>
    %346 = arith.mulf %336, %345 : vector<8x128xf32>
    %347 = arith.addf %344, %346 : vector<8x128xf32>
    %348 = vector.broadcast %152 : f32 to vector<8x128xf32>
    %349 = arith.addf %347, %348 : vector<8x128xf32>
    %cst_46 = arith.constant 0.000000e+00 : f32
    %350 = vector.broadcast %cst_46 : f32 to vector<8x128xf32>
    %351 = arith.maximumf %349, %350 : vector<8x128xf32>
    %352 = vector.broadcast %44 : f32 to vector<8x128xf32>
    %353 = arith.mulf %291, %352 : vector<8x128xf32>
    %354 = vector.broadcast %45 : f32 to vector<8x128xf32>
    %355 = arith.mulf %306, %354 : vector<8x128xf32>
    %356 = arith.addf %353, %355 : vector<8x128xf32>
    %357 = vector.broadcast %46 : f32 to vector<8x128xf32>
    %358 = arith.mulf %321, %357 : vector<8x128xf32>
    %359 = arith.addf %356, %358 : vector<8x128xf32>
    %360 = vector.broadcast %47 : f32 to vector<8x128xf32>
    %361 = arith.mulf %336, %360 : vector<8x128xf32>
    %362 = arith.addf %359, %361 : vector<8x128xf32>
    %363 = vector.broadcast %153 : f32 to vector<8x128xf32>
    %364 = arith.addf %362, %363 : vector<8x128xf32>
    %cst_47 = arith.constant 0.000000e+00 : f32
    %365 = vector.broadcast %cst_47 : f32 to vector<8x128xf32>
    %366 = arith.maximumf %364, %365 : vector<8x128xf32>
    %367 = vector.broadcast %48 : f32 to vector<8x128xf32>
    %368 = arith.mulf %291, %367 : vector<8x128xf32>
    %369 = vector.broadcast %49 : f32 to vector<8x128xf32>
    %370 = arith.mulf %306, %369 : vector<8x128xf32>
    %371 = arith.addf %368, %370 : vector<8x128xf32>
    %372 = vector.broadcast %50 : f32 to vector<8x128xf32>
    %373 = arith.mulf %321, %372 : vector<8x128xf32>
    %374 = arith.addf %371, %373 : vector<8x128xf32>
    %375 = vector.broadcast %51 : f32 to vector<8x128xf32>
    %376 = arith.mulf %336, %375 : vector<8x128xf32>
    %377 = arith.addf %374, %376 : vector<8x128xf32>
    %378 = vector.broadcast %154 : f32 to vector<8x128xf32>
    %379 = arith.addf %377, %378 : vector<8x128xf32>
    %cst_48 = arith.constant 0.000000e+00 : f32
    %380 = vector.broadcast %cst_48 : f32 to vector<8x128xf32>
    %381 = arith.maximumf %379, %380 : vector<8x128xf32>
    %382 = vector.broadcast %52 : f32 to vector<8x128xf32>
    %383 = arith.mulf %291, %382 : vector<8x128xf32>
    %384 = vector.broadcast %53 : f32 to vector<8x128xf32>
    %385 = arith.mulf %306, %384 : vector<8x128xf32>
    %386 = arith.addf %383, %385 : vector<8x128xf32>
    %387 = vector.broadcast %54 : f32 to vector<8x128xf32>
    %388 = arith.mulf %321, %387 : vector<8x128xf32>
    %389 = arith.addf %386, %388 : vector<8x128xf32>
    %390 = vector.broadcast %55 : f32 to vector<8x128xf32>
    %391 = arith.mulf %336, %390 : vector<8x128xf32>
    %392 = arith.addf %389, %391 : vector<8x128xf32>
    %393 = vector.broadcast %155 : f32 to vector<8x128xf32>
    %394 = arith.addf %392, %393 : vector<8x128xf32>
    %cst_49 = arith.constant 0.000000e+00 : f32
    %395 = vector.broadcast %cst_49 : f32 to vector<8x128xf32>
    %396 = arith.maximumf %394, %395 : vector<8x128xf32>
    %397 = vector.broadcast %56 : f32 to vector<8x128xf32>
    %398 = arith.mulf %351, %397 : vector<8x128xf32>
    %399 = vector.broadcast %57 : f32 to vector<8x128xf32>
    %400 = arith.mulf %366, %399 : vector<8x128xf32>
    %401 = arith.addf %398, %400 : vector<8x128xf32>
    %402 = vector.broadcast %58 : f32 to vector<8x128xf32>
    %403 = arith.mulf %381, %402 : vector<8x128xf32>
    %404 = arith.addf %401, %403 : vector<8x128xf32>
    %405 = vector.broadcast %59 : f32 to vector<8x128xf32>
    %406 = arith.mulf %396, %405 : vector<8x128xf32>
    %407 = arith.addf %404, %406 : vector<8x128xf32>
    %408 = vector.broadcast %156 : f32 to vector<8x128xf32>
    %409 = arith.addf %407, %408 : vector<8x128xf32>
    %cst_50 = arith.constant 0.000000e+00 : f32
    %410 = vector.broadcast %cst_50 : f32 to vector<8x128xf32>
    %411 = arith.maximumf %409, %410 : vector<8x128xf32>
    %412 = vector.broadcast %60 : f32 to vector<8x128xf32>
    %413 = arith.mulf %351, %412 : vector<8x128xf32>
    %414 = vector.broadcast %61 : f32 to vector<8x128xf32>
    %415 = arith.mulf %366, %414 : vector<8x128xf32>
    %416 = arith.addf %413, %415 : vector<8x128xf32>
    %417 = vector.broadcast %62 : f32 to vector<8x128xf32>
    %418 = arith.mulf %381, %417 : vector<8x128xf32>
    %419 = arith.addf %416, %418 : vector<8x128xf32>
    %420 = vector.broadcast %63 : f32 to vector<8x128xf32>
    %421 = arith.mulf %396, %420 : vector<8x128xf32>
    %422 = arith.addf %419, %421 : vector<8x128xf32>
    %423 = vector.broadcast %157 : f32 to vector<8x128xf32>
    %424 = arith.addf %422, %423 : vector<8x128xf32>
    %cst_51 = arith.constant 0.000000e+00 : f32
    %425 = vector.broadcast %cst_51 : f32 to vector<8x128xf32>
    %426 = arith.maximumf %424, %425 : vector<8x128xf32>
    %427 = vector.broadcast %64 : f32 to vector<8x128xf32>
    %428 = arith.mulf %351, %427 : vector<8x128xf32>
    %429 = vector.broadcast %65 : f32 to vector<8x128xf32>
    %430 = arith.mulf %366, %429 : vector<8x128xf32>
    %431 = arith.addf %428, %430 : vector<8x128xf32>
    %432 = vector.broadcast %66 : f32 to vector<8x128xf32>
    %433 = arith.mulf %381, %432 : vector<8x128xf32>
    %434 = arith.addf %431, %433 : vector<8x128xf32>
    %435 = vector.broadcast %67 : f32 to vector<8x128xf32>
    %436 = arith.mulf %396, %435 : vector<8x128xf32>
    %437 = arith.addf %434, %436 : vector<8x128xf32>
    %438 = vector.broadcast %158 : f32 to vector<8x128xf32>
    %439 = arith.addf %437, %438 : vector<8x128xf32>
    %cst_52 = arith.constant 0.000000e+00 : f32
    %440 = vector.broadcast %cst_52 : f32 to vector<8x128xf32>
    %441 = arith.maximumf %439, %440 : vector<8x128xf32>
    %442 = vector.broadcast %68 : f32 to vector<8x128xf32>
    %443 = arith.mulf %351, %442 : vector<8x128xf32>
    %444 = vector.broadcast %69 : f32 to vector<8x128xf32>
    %445 = arith.mulf %366, %444 : vector<8x128xf32>
    %446 = arith.addf %443, %445 : vector<8x128xf32>
    %447 = vector.broadcast %70 : f32 to vector<8x128xf32>
    %448 = arith.mulf %381, %447 : vector<8x128xf32>
    %449 = arith.addf %446, %448 : vector<8x128xf32>
    %450 = vector.broadcast %71 : f32 to vector<8x128xf32>
    %451 = arith.mulf %396, %450 : vector<8x128xf32>
    %452 = arith.addf %449, %451 : vector<8x128xf32>
    %453 = vector.broadcast %159 : f32 to vector<8x128xf32>
    %454 = arith.addf %452, %453 : vector<8x128xf32>
    %cst_53 = arith.constant 0.000000e+00 : f32
    %455 = vector.broadcast %cst_53 : f32 to vector<8x128xf32>
    %456 = arith.maximumf %454, %455 : vector<8x128xf32>
    %457 = vector.broadcast %72 : f32 to vector<8x128xf32>
    %458 = arith.mulf %411, %457 : vector<8x128xf32>
    %459 = vector.broadcast %73 : f32 to vector<8x128xf32>
    %460 = arith.mulf %426, %459 : vector<8x128xf32>
    %461 = arith.addf %458, %460 : vector<8x128xf32>
    %462 = vector.broadcast %74 : f32 to vector<8x128xf32>
    %463 = arith.mulf %441, %462 : vector<8x128xf32>
    %464 = arith.addf %461, %463 : vector<8x128xf32>
    %465 = vector.broadcast %75 : f32 to vector<8x128xf32>
    %466 = arith.mulf %456, %465 : vector<8x128xf32>
    %467 = arith.addf %464, %466 : vector<8x128xf32>
    %468 = vector.broadcast %160 : f32 to vector<8x128xf32>
    %469 = arith.addf %467, %468 : vector<8x128xf32>
    %cst_54 = arith.constant 0.000000e+00 : f32
    %470 = vector.broadcast %cst_54 : f32 to vector<8x128xf32>
    %471 = arith.maximumf %469, %470 : vector<8x128xf32>
    %472 = vector.broadcast %76 : f32 to vector<8x128xf32>
    %473 = arith.mulf %411, %472 : vector<8x128xf32>
    %474 = vector.broadcast %77 : f32 to vector<8x128xf32>
    %475 = arith.mulf %426, %474 : vector<8x128xf32>
    %476 = arith.addf %473, %475 : vector<8x128xf32>
    %477 = vector.broadcast %78 : f32 to vector<8x128xf32>
    %478 = arith.mulf %441, %477 : vector<8x128xf32>
    %479 = arith.addf %476, %478 : vector<8x128xf32>
    %480 = vector.broadcast %79 : f32 to vector<8x128xf32>
    %481 = arith.mulf %456, %480 : vector<8x128xf32>
    %482 = arith.addf %479, %481 : vector<8x128xf32>
    %483 = vector.broadcast %161 : f32 to vector<8x128xf32>
    %484 = arith.addf %482, %483 : vector<8x128xf32>
    %cst_55 = arith.constant 0.000000e+00 : f32
    %485 = vector.broadcast %cst_55 : f32 to vector<8x128xf32>
    %486 = arith.maximumf %484, %485 : vector<8x128xf32>
    %487 = vector.broadcast %80 : f32 to vector<8x128xf32>
    %488 = arith.mulf %411, %487 : vector<8x128xf32>
    %489 = vector.broadcast %81 : f32 to vector<8x128xf32>
    %490 = arith.mulf %426, %489 : vector<8x128xf32>
    %491 = arith.addf %488, %490 : vector<8x128xf32>
    %492 = vector.broadcast %82 : f32 to vector<8x128xf32>
    %493 = arith.mulf %441, %492 : vector<8x128xf32>
    %494 = arith.addf %491, %493 : vector<8x128xf32>
    %495 = vector.broadcast %83 : f32 to vector<8x128xf32>
    %496 = arith.mulf %456, %495 : vector<8x128xf32>
    %497 = arith.addf %494, %496 : vector<8x128xf32>
    %498 = vector.broadcast %162 : f32 to vector<8x128xf32>
    %499 = arith.addf %497, %498 : vector<8x128xf32>
    %cst_56 = arith.constant 0.000000e+00 : f32
    %500 = vector.broadcast %cst_56 : f32 to vector<8x128xf32>
    %501 = arith.maximumf %499, %500 : vector<8x128xf32>
    %502 = vector.broadcast %84 : f32 to vector<8x128xf32>
    %503 = arith.mulf %411, %502 : vector<8x128xf32>
    %504 = vector.broadcast %85 : f32 to vector<8x128xf32>
    %505 = arith.mulf %426, %504 : vector<8x128xf32>
    %506 = arith.addf %503, %505 : vector<8x128xf32>
    %507 = vector.broadcast %86 : f32 to vector<8x128xf32>
    %508 = arith.mulf %441, %507 : vector<8x128xf32>
    %509 = arith.addf %506, %508 : vector<8x128xf32>
    %510 = vector.broadcast %87 : f32 to vector<8x128xf32>
    %511 = arith.mulf %456, %510 : vector<8x128xf32>
    %512 = arith.addf %509, %511 : vector<8x128xf32>
    %513 = vector.broadcast %163 : f32 to vector<8x128xf32>
    %514 = arith.addf %512, %513 : vector<8x128xf32>
    %cst_57 = arith.constant 0.000000e+00 : f32
    %515 = vector.broadcast %cst_57 : f32 to vector<8x128xf32>
    %516 = arith.maximumf %514, %515 : vector<8x128xf32>
    %517 = vector.broadcast %88 : f32 to vector<8x128xf32>
    %518 = arith.mulf %471, %517 : vector<8x128xf32>
    %519 = vector.broadcast %89 : f32 to vector<8x128xf32>
    %520 = arith.mulf %486, %519 : vector<8x128xf32>
    %521 = arith.addf %518, %520 : vector<8x128xf32>
    %522 = vector.broadcast %90 : f32 to vector<8x128xf32>
    %523 = arith.mulf %501, %522 : vector<8x128xf32>
    %524 = arith.addf %521, %523 : vector<8x128xf32>
    %525 = vector.broadcast %91 : f32 to vector<8x128xf32>
    %526 = arith.mulf %516, %525 : vector<8x128xf32>
    %527 = arith.addf %524, %526 : vector<8x128xf32>
    %528 = vector.broadcast %164 : f32 to vector<8x128xf32>
    %529 = arith.addf %527, %528 : vector<8x128xf32>
    %cst_58 = arith.constant 0.000000e+00 : f32
    %530 = vector.broadcast %cst_58 : f32 to vector<8x128xf32>
    %531 = arith.maximumf %529, %530 : vector<8x128xf32>
    %532 = vector.broadcast %92 : f32 to vector<8x128xf32>
    %533 = arith.mulf %471, %532 : vector<8x128xf32>
    %534 = vector.broadcast %93 : f32 to vector<8x128xf32>
    %535 = arith.mulf %486, %534 : vector<8x128xf32>
    %536 = arith.addf %533, %535 : vector<8x128xf32>
    %537 = vector.broadcast %94 : f32 to vector<8x128xf32>
    %538 = arith.mulf %501, %537 : vector<8x128xf32>
    %539 = arith.addf %536, %538 : vector<8x128xf32>
    %540 = vector.broadcast %95 : f32 to vector<8x128xf32>
    %541 = arith.mulf %516, %540 : vector<8x128xf32>
    %542 = arith.addf %539, %541 : vector<8x128xf32>
    %543 = vector.broadcast %165 : f32 to vector<8x128xf32>
    %544 = arith.addf %542, %543 : vector<8x128xf32>
    %cst_59 = arith.constant 0.000000e+00 : f32
    %545 = vector.broadcast %cst_59 : f32 to vector<8x128xf32>
    %546 = arith.maximumf %544, %545 : vector<8x128xf32>
    %547 = vector.broadcast %96 : f32 to vector<8x128xf32>
    %548 = arith.mulf %471, %547 : vector<8x128xf32>
    %549 = vector.broadcast %97 : f32 to vector<8x128xf32>
    %550 = arith.mulf %486, %549 : vector<8x128xf32>
    %551 = arith.addf %548, %550 : vector<8x128xf32>
    %552 = vector.broadcast %98 : f32 to vector<8x128xf32>
    %553 = arith.mulf %501, %552 : vector<8x128xf32>
    %554 = arith.addf %551, %553 : vector<8x128xf32>
    %555 = vector.broadcast %99 : f32 to vector<8x128xf32>
    %556 = arith.mulf %516, %555 : vector<8x128xf32>
    %557 = arith.addf %554, %556 : vector<8x128xf32>
    %558 = vector.broadcast %166 : f32 to vector<8x128xf32>
    %559 = arith.addf %557, %558 : vector<8x128xf32>
    %cst_60 = arith.constant 0.000000e+00 : f32
    %560 = vector.broadcast %cst_60 : f32 to vector<8x128xf32>
    %561 = arith.maximumf %559, %560 : vector<8x128xf32>
    %562 = vector.broadcast %100 : f32 to vector<8x128xf32>
    %563 = arith.mulf %471, %562 : vector<8x128xf32>
    %564 = vector.broadcast %101 : f32 to vector<8x128xf32>
    %565 = arith.mulf %486, %564 : vector<8x128xf32>
    %566 = arith.addf %563, %565 : vector<8x128xf32>
    %567 = vector.broadcast %102 : f32 to vector<8x128xf32>
    %568 = arith.mulf %501, %567 : vector<8x128xf32>
    %569 = arith.addf %566, %568 : vector<8x128xf32>
    %570 = vector.broadcast %103 : f32 to vector<8x128xf32>
    %571 = arith.mulf %516, %570 : vector<8x128xf32>
    %572 = arith.addf %569, %571 : vector<8x128xf32>
    %573 = vector.broadcast %167 : f32 to vector<8x128xf32>
    %574 = arith.addf %572, %573 : vector<8x128xf32>
    %cst_61 = arith.constant 0.000000e+00 : f32
    %575 = vector.broadcast %cst_61 : f32 to vector<8x128xf32>
    %576 = arith.maximumf %574, %575 : vector<8x128xf32>
    %577 = vector.broadcast %104 : f32 to vector<8x128xf32>
    %578 = arith.mulf %531, %577 : vector<8x128xf32>
    %579 = vector.broadcast %105 : f32 to vector<8x128xf32>
    %580 = arith.mulf %546, %579 : vector<8x128xf32>
    %581 = arith.addf %578, %580 : vector<8x128xf32>
    %582 = vector.broadcast %106 : f32 to vector<8x128xf32>
    %583 = arith.mulf %561, %582 : vector<8x128xf32>
    %584 = arith.addf %581, %583 : vector<8x128xf32>
    %585 = vector.broadcast %107 : f32 to vector<8x128xf32>
    %586 = arith.mulf %576, %585 : vector<8x128xf32>
    %587 = arith.addf %584, %586 : vector<8x128xf32>
    %588 = vector.broadcast %168 : f32 to vector<8x128xf32>
    %589 = arith.addf %587, %588 : vector<8x128xf32>
    %cst_62 = arith.constant 0.000000e+00 : f32
    %590 = vector.broadcast %cst_62 : f32 to vector<8x128xf32>
    %591 = arith.maximumf %589, %590 : vector<8x128xf32>
    %592 = vector.broadcast %108 : f32 to vector<8x128xf32>
    %593 = arith.mulf %531, %592 : vector<8x128xf32>
    %594 = vector.broadcast %109 : f32 to vector<8x128xf32>
    %595 = arith.mulf %546, %594 : vector<8x128xf32>
    %596 = arith.addf %593, %595 : vector<8x128xf32>
    %597 = vector.broadcast %110 : f32 to vector<8x128xf32>
    %598 = arith.mulf %561, %597 : vector<8x128xf32>
    %599 = arith.addf %596, %598 : vector<8x128xf32>
    %600 = vector.broadcast %111 : f32 to vector<8x128xf32>
    %601 = arith.mulf %576, %600 : vector<8x128xf32>
    %602 = arith.addf %599, %601 : vector<8x128xf32>
    %603 = vector.broadcast %169 : f32 to vector<8x128xf32>
    %604 = arith.addf %602, %603 : vector<8x128xf32>
    %cst_63 = arith.constant 0.000000e+00 : f32
    %605 = vector.broadcast %cst_63 : f32 to vector<8x128xf32>
    %606 = arith.maximumf %604, %605 : vector<8x128xf32>
    %607 = vector.broadcast %112 : f32 to vector<8x128xf32>
    %608 = arith.mulf %531, %607 : vector<8x128xf32>
    %609 = vector.broadcast %113 : f32 to vector<8x128xf32>
    %610 = arith.mulf %546, %609 : vector<8x128xf32>
    %611 = arith.addf %608, %610 : vector<8x128xf32>
    %612 = vector.broadcast %114 : f32 to vector<8x128xf32>
    %613 = arith.mulf %561, %612 : vector<8x128xf32>
    %614 = arith.addf %611, %613 : vector<8x128xf32>
    %615 = vector.broadcast %115 : f32 to vector<8x128xf32>
    %616 = arith.mulf %576, %615 : vector<8x128xf32>
    %617 = arith.addf %614, %616 : vector<8x128xf32>
    %618 = vector.broadcast %170 : f32 to vector<8x128xf32>
    %619 = arith.addf %617, %618 : vector<8x128xf32>
    %cst_64 = arith.constant 0.000000e+00 : f32
    %620 = vector.broadcast %cst_64 : f32 to vector<8x128xf32>
    %621 = arith.maximumf %619, %620 : vector<8x128xf32>
    %622 = vector.broadcast %116 : f32 to vector<8x128xf32>
    %623 = arith.mulf %531, %622 : vector<8x128xf32>
    %624 = vector.broadcast %117 : f32 to vector<8x128xf32>
    %625 = arith.mulf %546, %624 : vector<8x128xf32>
    %626 = arith.addf %623, %625 : vector<8x128xf32>
    %627 = vector.broadcast %118 : f32 to vector<8x128xf32>
    %628 = arith.mulf %561, %627 : vector<8x128xf32>
    %629 = arith.addf %626, %628 : vector<8x128xf32>
    %630 = vector.broadcast %119 : f32 to vector<8x128xf32>
    %631 = arith.mulf %576, %630 : vector<8x128xf32>
    %632 = arith.addf %629, %631 : vector<8x128xf32>
    %633 = vector.broadcast %171 : f32 to vector<8x128xf32>
    %634 = arith.addf %632, %633 : vector<8x128xf32>
    %cst_65 = arith.constant 0.000000e+00 : f32
    %635 = vector.broadcast %cst_65 : f32 to vector<8x128xf32>
    %636 = arith.maximumf %634, %635 : vector<8x128xf32>
    %637 = vector.broadcast %120 : f32 to vector<8x128xf32>
    %638 = arith.mulf %591, %637 : vector<8x128xf32>
    %639 = vector.broadcast %121 : f32 to vector<8x128xf32>
    %640 = arith.mulf %606, %639 : vector<8x128xf32>
    %641 = arith.addf %638, %640 : vector<8x128xf32>
    %642 = vector.broadcast %122 : f32 to vector<8x128xf32>
    %643 = arith.mulf %621, %642 : vector<8x128xf32>
    %644 = arith.addf %641, %643 : vector<8x128xf32>
    %645 = vector.broadcast %123 : f32 to vector<8x128xf32>
    %646 = arith.mulf %636, %645 : vector<8x128xf32>
    %647 = arith.addf %644, %646 : vector<8x128xf32>
    %648 = vector.broadcast %172 : f32 to vector<8x128xf32>
    %649 = arith.addf %647, %648 : vector<8x128xf32>
    %cst_66 = arith.constant 0.000000e+00 : f32
    %650 = vector.broadcast %cst_66 : f32 to vector<8x128xf32>
    %651 = arith.maximumf %649, %650 : vector<8x128xf32>
    %652 = vector.broadcast %124 : f32 to vector<8x128xf32>
    %653 = arith.mulf %591, %652 : vector<8x128xf32>
    %654 = vector.broadcast %125 : f32 to vector<8x128xf32>
    %655 = arith.mulf %606, %654 : vector<8x128xf32>
    %656 = arith.addf %653, %655 : vector<8x128xf32>
    %657 = vector.broadcast %126 : f32 to vector<8x128xf32>
    %658 = arith.mulf %621, %657 : vector<8x128xf32>
    %659 = arith.addf %656, %658 : vector<8x128xf32>
    %660 = vector.broadcast %127 : f32 to vector<8x128xf32>
    %661 = arith.mulf %636, %660 : vector<8x128xf32>
    %662 = arith.addf %659, %661 : vector<8x128xf32>
    %663 = vector.broadcast %173 : f32 to vector<8x128xf32>
    %664 = arith.addf %662, %663 : vector<8x128xf32>
    %cst_67 = arith.constant 0.000000e+00 : f32
    %665 = vector.broadcast %cst_67 : f32 to vector<8x128xf32>
    %666 = arith.maximumf %664, %665 : vector<8x128xf32>
    %667 = vector.broadcast %128 : f32 to vector<8x128xf32>
    %668 = arith.mulf %591, %667 : vector<8x128xf32>
    %669 = vector.broadcast %129 : f32 to vector<8x128xf32>
    %670 = arith.mulf %606, %669 : vector<8x128xf32>
    %671 = arith.addf %668, %670 : vector<8x128xf32>
    %672 = vector.broadcast %130 : f32 to vector<8x128xf32>
    %673 = arith.mulf %621, %672 : vector<8x128xf32>
    %674 = arith.addf %671, %673 : vector<8x128xf32>
    %675 = vector.broadcast %131 : f32 to vector<8x128xf32>
    %676 = arith.mulf %636, %675 : vector<8x128xf32>
    %677 = arith.addf %674, %676 : vector<8x128xf32>
    %678 = vector.broadcast %174 : f32 to vector<8x128xf32>
    %679 = arith.addf %677, %678 : vector<8x128xf32>
    %cst_68 = arith.constant 0.000000e+00 : f32
    %680 = vector.broadcast %cst_68 : f32 to vector<8x128xf32>
    %681 = arith.maximumf %679, %680 : vector<8x128xf32>
    %682 = vector.broadcast %132 : f32 to vector<8x128xf32>
    %683 = arith.mulf %591, %682 : vector<8x128xf32>
    %684 = vector.broadcast %133 : f32 to vector<8x128xf32>
    %685 = arith.mulf %606, %684 : vector<8x128xf32>
    %686 = arith.addf %683, %685 : vector<8x128xf32>
    %687 = vector.broadcast %134 : f32 to vector<8x128xf32>
    %688 = arith.mulf %621, %687 : vector<8x128xf32>
    %689 = arith.addf %686, %688 : vector<8x128xf32>
    %690 = vector.broadcast %135 : f32 to vector<8x128xf32>
    %691 = arith.mulf %636, %690 : vector<8x128xf32>
    %692 = arith.addf %689, %691 : vector<8x128xf32>
    %693 = vector.broadcast %175 : f32 to vector<8x128xf32>
    %694 = arith.addf %692, %693 : vector<8x128xf32>
    %cst_69 = arith.constant 0.000000e+00 : f32
    %695 = vector.broadcast %cst_69 : f32 to vector<8x128xf32>
    %696 = arith.maximumf %694, %695 : vector<8x128xf32>
    %697 = vector.broadcast %136 : f32 to vector<8x128xf32>
    %698 = arith.mulf %651, %697 : vector<8x128xf32>
    %699 = vector.broadcast %137 : f32 to vector<8x128xf32>
    %700 = arith.mulf %666, %699 : vector<8x128xf32>
    %701 = arith.addf %698, %700 : vector<8x128xf32>
    %702 = vector.broadcast %138 : f32 to vector<8x128xf32>
    %703 = arith.mulf %681, %702 : vector<8x128xf32>
    %704 = arith.addf %701, %703 : vector<8x128xf32>
    %705 = vector.broadcast %139 : f32 to vector<8x128xf32>
    %706 = arith.mulf %696, %705 : vector<8x128xf32>
    %707 = arith.addf %704, %706 : vector<8x128xf32>
    %708 = vector.broadcast %176 : f32 to vector<8x128xf32>
    %709 = arith.addf %707, %708 : vector<8x128xf32>
    %710 = arith.negf %709 : vector<8x128xf32>
    %711 = math.exp %710 : vector<8x128xf32>
    %cst_70 = arith.constant 1.000000e+00 : f32
    %712 = vector.broadcast %cst_70 : f32 to vector<8x128xf32>
    %713 = arith.addf %712, %711 : vector<8x128xf32>
    %714 = arith.divf %712, %713 : vector<8x128xf32>
    %c0_71 = arith.constant 0 : index
    %c0_72 = arith.constant 0 : index
    %715 = vector.load %arg4[%c0_71, %c0_72] : memref<64x128xf32, #tpu.memory_space<vmem>>, vector<8x128xf32>
    tpu.vector_store %arg4[%c0_71, %c0_72], %714 {strides = array<i32>} : memref<64x128xf32, #tpu.memory_space<vmem>>, vector<8x128xf32>,
    %c0_73 = arith.constant 0 : index
    %c8_74 = arith.constant 8 : index
    %c0_75 = arith.constant 0 : index
    %716 = vector.load %arg3[%c0_73, %c8_74, %c0_75] : memref<2x64x128xf32, #tpu.memory_space<vmem>>, vector<1x8x128xf32>
    %717 = vector.shape_cast %716 : vector<1x8x128xf32> to vector<8x128xf32>
    %c1_76 = arith.constant 1 : index
    %c8_77 = arith.constant 8 : index
    %c0_78 = arith.constant 0 : index
    %718 = vector.load %arg3[%c1_76, %c8_77, %c0_78] : memref<2x64x128xf32, #tpu.memory_space<vmem>>, vector<1x8x128xf32>
    %719 = vector.shape_cast %718 : vector<1x8x128xf32> to vector<8x128xf32>
    %720 = vector.broadcast %0 : f32 to vector<8x128xf32>
    %721 = arith.mulf %717, %720 : vector<8x128xf32>
    %722 = vector.broadcast %1 : f32 to vector<8x128xf32>
    %723 = arith.mulf %719, %722 : vector<8x128xf32>
    %724 = arith.addf %721, %723 : vector<8x128xf32>
    %725 = vector.broadcast %140 : f32 to vector<8x128xf32>
    %726 = arith.addf %724, %725 : vector<8x128xf32>
    %cst_79 = arith.constant 0.000000e+00 : f32
    %727 = vector.broadcast %cst_79 : f32 to vector<8x128xf32>
    %728 = arith.maximumf %726, %727 : vector<8x128xf32>
    %729 = vector.broadcast %2 : f32 to vector<8x128xf32>
    %730 = arith.mulf %717, %729 : vector<8x128xf32>
    %731 = vector.broadcast %3 : f32 to vector<8x128xf32>
    %732 = arith.mulf %719, %731 : vector<8x128xf32>
    %733 = arith.addf %730, %732 : vector<8x128xf32>
    %734 = vector.broadcast %141 : f32 to vector<8x128xf32>
    %735 = arith.addf %733, %734 : vector<8x128xf32>
    %cst_80 = arith.constant 0.000000e+00 : f32
    %736 = vector.broadcast %cst_80 : f32 to vector<8x128xf32>
    %737 = arith.maximumf %735, %736 : vector<8x128xf32>
    %738 = vector.broadcast %4 : f32 to vector<8x128xf32>
    %739 = arith.mulf %717, %738 : vector<8x128xf32>
    %740 = vector.broadcast %5 : f32 to vector<8x128xf32>
    %741 = arith.mulf %719, %740 : vector<8x128xf32>
    %742 = arith.addf %739, %741 : vector<8x128xf32>
    %743 = vector.broadcast %142 : f32 to vector<8x128xf32>
    %744 = arith.addf %742, %743 : vector<8x128xf32>
    %cst_81 = arith.constant 0.000000e+00 : f32
    %745 = vector.broadcast %cst_81 : f32 to vector<8x128xf32>
    %746 = arith.maximumf %744, %745 : vector<8x128xf32>
    %747 = vector.broadcast %6 : f32 to vector<8x128xf32>
    %748 = arith.mulf %717, %747 : vector<8x128xf32>
    %749 = vector.broadcast %7 : f32 to vector<8x128xf32>
    %750 = arith.mulf %719, %749 : vector<8x128xf32>
    %751 = arith.addf %748, %750 : vector<8x128xf32>
    %752 = vector.broadcast %143 : f32 to vector<8x128xf32>
    %753 = arith.addf %751, %752 : vector<8x128xf32>
    %cst_82 = arith.constant 0.000000e+00 : f32
    %754 = vector.broadcast %cst_82 : f32 to vector<8x128xf32>
    %755 = arith.maximumf %753, %754 : vector<8x128xf32>
    %756 = vector.broadcast %8 : f32 to vector<8x128xf32>
    %757 = arith.mulf %728, %756 : vector<8x128xf32>
    %758 = vector.broadcast %9 : f32 to vector<8x128xf32>
    %759 = arith.mulf %737, %758 : vector<8x128xf32>
    %760 = arith.addf %757, %759 : vector<8x128xf32>
    %761 = vector.broadcast %10 : f32 to vector<8x128xf32>
    %762 = arith.mulf %746, %761 : vector<8x128xf32>
    %763 = arith.addf %760, %762 : vector<8x128xf32>
    %764 = vector.broadcast %11 : f32 to vector<8x128xf32>
    %765 = arith.mulf %755, %764 : vector<8x128xf32>
    %766 = arith.addf %763, %765 : vector<8x128xf32>
    %767 = vector.broadcast %144 : f32 to vector<8x128xf32>
    %768 = arith.addf %766, %767 : vector<8x128xf32>
    %cst_83 = arith.constant 0.000000e+00 : f32
    %769 = vector.broadcast %cst_83 : f32 to vector<8x128xf32>
    %770 = arith.maximumf %768, %769 : vector<8x128xf32>
    %771 = vector.broadcast %12 : f32 to vector<8x128xf32>
    %772 = arith.mulf %728, %771 : vector<8x128xf32>
    %773 = vector.broadcast %13 : f32 to vector<8x128xf32>
    %774 = arith.mulf %737, %773 : vector<8x128xf32>
    %775 = arith.addf %772, %774 : vector<8x128xf32>
    %776 = vector.broadcast %14 : f32 to vector<8x128xf32>
    %777 = arith.mulf %746, %776 : vector<8x128xf32>
    %778 = arith.addf %775, %777 : vector<8x128xf32>
    %779 = vector.broadcast %15 : f32 to vector<8x128xf32>
    %780 = arith.mulf %755, %779 : vector<8x128xf32>
    %781 = arith.addf %778, %780 : vector<8x128xf32>
    %782 = vector.broadcast %145 : f32 to vector<8x128xf32>
    %783 = arith.addf %781, %782 : vector<8x128xf32>
    %cst_84 = arith.constant 0.000000e+00 : f32
    %784 = vector.broadcast %cst_84 : f32 to vector<8x128xf32>
    %785 = arith.maximumf %783, %784 : vector<8x128xf32>
    %786 = vector.broadcast %16 : f32 to vector<8x128xf32>
    %787 = arith.mulf %728, %786 : vector<8x128xf32>
    %788 = vector.broadcast %17 : f32 to vector<8x128xf32>
    %789 = arith.mulf %737, %788 : vector<8x128xf32>
    %790 = arith.addf %787, %789 : vector<8x128xf32>
    %791 = vector.broadcast %18 : f32 to vector<8x128xf32>
    %792 = arith.mulf %746, %791 : vector<8x128xf32>
    %793 = arith.addf %790, %792 : vector<8x128xf32>
    %794 = vector.broadcast %19 : f32 to vector<8x128xf32>
    %795 = arith.mulf %755, %794 : vector<8x128xf32>
    %796 = arith.addf %793, %795 : vector<8x128xf32>
    %797 = vector.broadcast %146 : f32 to vector<8x128xf32>
    %798 = arith.addf %796, %797 : vector<8x128xf32>
    %cst_85 = arith.constant 0.000000e+00 : f32
    %799 = vector.broadcast %cst_85 : f32 to vector<8x128xf32>
    %800 = arith.maximumf %798, %799 : vector<8x128xf32>
    %801 = vector.broadcast %20 : f32 to vector<8x128xf32>
    %802 = arith.mulf %728, %801 : vector<8x128xf32>
    %803 = vector.broadcast %21 : f32 to vector<8x128xf32>
    %804 = arith.mulf %737, %803 : vector<8x128xf32>
    %805 = arith.addf %802, %804 : vector<8x128xf32>
    %806 = vector.broadcast %22 : f32 to vector<8x128xf32>
    %807 = arith.mulf %746, %806 : vector<8x128xf32>
    %808 = arith.addf %805, %807 : vector<8x128xf32>
    %809 = vector.broadcast %23 : f32 to vector<8x128xf32>
    %810 = arith.mulf %755, %809 : vector<8x128xf32>
    %811 = arith.addf %808, %810 : vector<8x128xf32>
    %812 = vector.broadcast %147 : f32 to vector<8x128xf32>
    %813 = arith.addf %811, %812 : vector<8x128xf32>
    %cst_86 = arith.constant 0.000000e+00 : f32
    %814 = vector.broadcast %cst_86 : f32 to vector<8x128xf32>
    %815 = arith.maximumf %813, %814 : vector<8x128xf32>
    %816 = vector.broadcast %24 : f32 to vector<8x128xf32>
    %817 = arith.mulf %770, %816 : vector<8x128xf32>
    %818 = vector.broadcast %25 : f32 to vector<8x128xf32>
    %819 = arith.mulf %785, %818 : vector<8x128xf32>
    %820 = arith.addf %817, %819 : vector<8x128xf32>
    %821 = vector.broadcast %26 : f32 to vector<8x128xf32>
    %822 = arith.mulf %800, %821 : vector<8x128xf32>
    %823 = arith.addf %820, %822 : vector<8x128xf32>
    %824 = vector.broadcast %27 : f32 to vector<8x128xf32>
    %825 = arith.mulf %815, %824 : vector<8x128xf32>
    %826 = arith.addf %823, %825 : vector<8x128xf32>
    %827 = vector.broadcast %148 : f32 to vector<8x128xf32>
    %828 = arith.addf %826, %827 : vector<8x128xf32>
    %cst_87 = arith.constant 0.000000e+00 : f32
    %829 = vector.broadcast %cst_87 : f32 to vector<8x128xf32>
    %830 = arith.maximumf %828, %829 : vector<8x128xf32>
    %831 = vector.broadcast %28 : f32 to vector<8x128xf32>
    %832 = arith.mulf %770, %831 : vector<8x128xf32>
    %833 = vector.broadcast %29 : f32 to vector<8x128xf32>
    %834 = arith.mulf %785, %833 : vector<8x128xf32>
    %835 = arith.addf %832, %834 : vector<8x128xf32>
    %836 = vector.broadcast %30 : f32 to vector<8x128xf32>
    %837 = arith.mulf %800, %836 : vector<8x128xf32>
    %838 = arith.addf %835, %837 : vector<8x128xf32>
    %839 = vector.broadcast %31 : f32 to vector<8x128xf32>
    %840 = arith.mulf %815, %839 : vector<8x128xf32>
    %841 = arith.addf %838, %840 : vector<8x128xf32>
    %842 = vector.broadcast %149 : f32 to vector<8x128xf32>
    %843 = arith.addf %841, %842 : vector<8x128xf32>
    %cst_88 = arith.constant 0.000000e+00 : f32
    %844 = vector.broadcast %cst_88 : f32 to vector<8x128xf32>
    %845 = arith.maximumf %843, %844 : vector<8x128xf32>
    %846 = vector.broadcast %32 : f32 to vector<8x128xf32>
    %847 = arith.mulf %770, %846 : vector<8x128xf32>
    %848 = vector.broadcast %33 : f32 to vector<8x128xf32>
    %849 = arith.mulf %785, %848 : vector<8x128xf32>
    %850 = arith.addf %847, %849 : vector<8x128xf32>
    %851 = vector.broadcast %34 : f32 to vector<8x128xf32>
    %852 = arith.mulf %800, %851 : vector<8x128xf32>
    %853 = arith.addf %850, %852 : vector<8x128xf32>
    %854 = vector.broadcast %35 : f32 to vector<8x128xf32>
    %855 = arith.mulf %815, %854 : vector<8x128xf32>
    %856 = arith.addf %853, %855 : vector<8x128xf32>
    %857 = vector.broadcast %150 : f32 to vector<8x128xf32>
    %858 = arith.addf %856, %857 : vector<8x128xf32>
    %cst_89 = arith.constant 0.000000e+00 : f32
    %859 = vector.broadcast %cst_89 : f32 to vector<8x128xf32>
    %860 = arith.maximumf %858, %859 : vector<8x128xf32>
    %861 = vector.broadcast %36 : f32 to vector<8x128xf32>
    %862 = arith.mulf %770, %861 : vector<8x128xf32>
    %863 = vector.broadcast %37 : f32 to vector<8x128xf32>
    %864 = arith.mulf %785, %863 : vector<8x128xf32>
    %865 = arith.addf %862, %864 : vector<8x128xf32>
    %866 = vector.broadcast %38 : f32 to vector<8x128xf32>
    %867 = arith.mulf %800, %866 : vector<8x128xf32>
    %868 = arith.addf %865, %867 : vector<8x128xf32>
    %869 = vector.broadcast %39 : f32 to vector<8x128xf32>
    %870 = arith.mulf %815, %869 : vector<8x128xf32>
    %871 = arith.addf %868, %870 : vector<8x128xf32>
    %872 = vector.broadcast %151 : f32 to vector<8x128xf32>
    %873 = arith.addf %871, %872 : vector<8x128xf32>
    %cst_90 = arith.constant 0.000000e+00 : f32
    %874 = vector.broadcast %cst_90 : f32 to vector<8x128xf32>
    %875 = arith.maximumf %873, %874 : vector<8x128xf32>
    %876 = vector.broadcast %40 : f32 to vector<8x128xf32>
    %877 = arith.mulf %830, %876 : vector<8x128xf32>
    %878 = vector.broadcast %41 : f32 to vector<8x128xf32>
    %879 = arith.mulf %845, %878 : vector<8x128xf32>
    %880 = arith.addf %877, %879 : vector<8x128xf32>
    %881 = vector.broadcast %42 : f32 to vector<8x128xf32>
    %882 = arith.mulf %860, %881 : vector<8x128xf32>
    %883 = arith.addf %880, %882 : vector<8x128xf32>
    %884 = vector.broadcast %43 : f32 to vector<8x128xf32>
    %885 = arith.mulf %875, %884 : vector<8x128xf32>
    %886 = arith.addf %883, %885 : vector<8x128xf32>
    %887 = vector.broadcast %152 : f32 to vector<8x128xf32>
    %888 = arith.addf %886, %887 : vector<8x128xf32>
    %cst_91 = arith.constant 0.000000e+00 : f32
    %889 = vector.broadcast %cst_91 : f32 to vector<8x128xf32>
    %890 = arith.maximumf %888, %889 : vector<8x128xf32>
    %891 = vector.broadcast %44 : f32 to vector<8x128xf32>
    %892 = arith.mulf %830, %891 : vector<8x128xf32>
    %893 = vector.broadcast %45 : f32 to vector<8x128xf32>
    %894 = arith.mulf %845, %893 : vector<8x128xf32>
    %895 = arith.addf %892, %894 : vector<8x128xf32>
    %896 = vector.broadcast %46 : f32 to vector<8x128xf32>
    %897 = arith.mulf %860, %896 : vector<8x128xf32>
    %898 = arith.addf %895, %897 : vector<8x128xf32>
    %899 = vector.broadcast %47 : f32 to vector<8x128xf32>
    %900 = arith.mulf %875, %899 : vector<8x128xf32>
    %901 = arith.addf %898, %900 : vector<8x128xf32>
    %902 = vector.broadcast %153 : f32 to vector<8x128xf32>
    %903 = arith.addf %901, %902 : vector<8x128xf32>
    %cst_92 = arith.constant 0.000000e+00 : f32
    %904 = vector.broadcast %cst_92 : f32 to vector<8x128xf32>
    %905 = arith.maximumf %903, %904 : vector<8x128xf32>
    %906 = vector.broadcast %48 : f32 to vector<8x128xf32>
    %907 = arith.mulf %830, %906 : vector<8x128xf32>
    %908 = vector.broadcast %49 : f32 to vector<8x128xf32>
    %909 = arith.mulf %845, %908 : vector<8x128xf32>
    %910 = arith.addf %907, %909 : vector<8x128xf32>
    %911 = vector.broadcast %50 : f32 to vector<8x128xf32>
    %912 = arith.mulf %860, %911 : vector<8x128xf32>
    %913 = arith.addf %910, %912 : vector<8x128xf32>
    %914 = vector.broadcast %51 : f32 to vector<8x128xf32>
    %915 = arith.mulf %875, %914 : vector<8x128xf32>
    %916 = arith.addf %913, %915 : vector<8x128xf32>
    %917 = vector.broadcast %154 : f32 to vector<8x128xf32>
    %918 = arith.addf %916, %917 : vector<8x128xf32>
    %cst_93 = arith.constant 0.000000e+00 : f32
    %919 = vector.broadcast %cst_93 : f32 to vector<8x128xf32>
    %920 = arith.maximumf %918, %919 : vector<8x128xf32>
    %921 = vector.broadcast %52 : f32 to vector<8x128xf32>
    %922 = arith.mulf %830, %921 : vector<8x128xf32>
    %923 = vector.broadcast %53 : f32 to vector<8x128xf32>
    %924 = arith.mulf %845, %923 : vector<8x128xf32>
    %925 = arith.addf %922, %924 : vector<8x128xf32>
    %926 = vector.broadcast %54 : f32 to vector<8x128xf32>
    %927 = arith.mulf %860, %926 : vector<8x128xf32>
    %928 = arith.addf %925, %927 : vector<8x128xf32>
    %929 = vector.broadcast %55 : f32 to vector<8x128xf32>
    %930 = arith.mulf %875, %929 : vector<8x128xf32>
    %931 = arith.addf %928, %930 : vector<8x128xf32>
    %932 = vector.broadcast %155 : f32 to vector<8x128xf32>
    %933 = arith.addf %931, %932 : vector<8x128xf32>
    %cst_94 = arith.constant 0.000000e+00 : f32
    %934 = vector.broadcast %cst_94 : f32 to vector<8x128xf32>
    %935 = arith.maximumf %933, %934 : vector<8x128xf32>
    %936 = vector.broadcast %56 : f32 to vector<8x128xf32>
    %937 = arith.mulf %890, %936 : vector<8x128xf32>
    %938 = vector.broadcast %57 : f32 to vector<8x128xf32>
    %939 = arith.mulf %905, %938 : vector<8x128xf32>
    %940 = arith.addf %937, %939 : vector<8x128xf32>
    %941 = vector.broadcast %58 : f32 to vector<8x128xf32>
    %942 = arith.mulf %920, %941 : vector<8x128xf32>
    %943 = arith.addf %940, %942 : vector<8x128xf32>
    %944 = vector.broadcast %59 : f32 to vector<8x128xf32>
    %945 = arith.mulf %935, %944 : vector<8x128xf32>
    %946 = arith.addf %943, %945 : vector<8x128xf32>
    %947 = vector.broadcast %156 : f32 to vector<8x128xf32>
    %948 = arith.addf %946, %947 : vector<8x128xf32>
    %cst_95 = arith.constant 0.000000e+00 : f32
    %949 = vector.broadcast %cst_95 : f32 to vector<8x128xf32>
    %950 = arith.maximumf %948, %949 : vector<8x128xf32>
    %951 = vector.broadcast %60 : f32 to vector<8x128xf32>
    %952 = arith.mulf %890, %951 : vector<8x128xf32>
    %953 = vector.broadcast %61 : f32 to vector<8x128xf32>
    %954 = arith.mulf %905, %953 : vector<8x128xf32>
    %955 = arith.addf %952, %954 : vector<8x128xf32>
    %956 = vector.broadcast %62 : f32 to vector<8x128xf32>
    %957 = arith.mulf %920, %956 : vector<8x128xf32>
    %958 = arith.addf %955, %957 : vector<8x128xf32>
    %959 = vector.broadcast %63 : f32 to vector<8x128xf32>
    %960 = arith.mulf %935, %959 : vector<8x128xf32>
    %961 = arith.addf %958, %960 : vector<8x128xf32>
    %962 = vector.broadcast %157 : f32 to vector<8x128xf32>
    %963 = arith.addf %961, %962 : vector<8x128xf32>
    %cst_96 = arith.constant 0.000000e+00 : f32
    %964 = vector.broadcast %cst_96 : f32 to vector<8x128xf32>
    %965 = arith.maximumf %963, %964 : vector<8x128xf32>
    %966 = vector.broadcast %64 : f32 to vector<8x128xf32>
    %967 = arith.mulf %890, %966 : vector<8x128xf32>
    %968 = vector.broadcast %65 : f32 to vector<8x128xf32>
    %969 = arith.mulf %905, %968 : vector<8x128xf32>
    %970 = arith.addf %967, %969 : vector<8x128xf32>
    %971 = vector.broadcast %66 : f32 to vector<8x128xf32>
    %972 = arith.mulf %920, %971 : vector<8x128xf32>
    %973 = arith.addf %970, %972 : vector<8x128xf32>
    %974 = vector.broadcast %67 : f32 to vector<8x128xf32>
    %975 = arith.mulf %935, %974 : vector<8x128xf32>
    %976 = arith.addf %973, %975 : vector<8x128xf32>
    %977 = vector.broadcast %158 : f32 to vector<8x128xf32>
    %978 = arith.addf %976, %977 : vector<8x128xf32>
    %cst_97 = arith.constant 0.000000e+00 : f32
    %979 = vector.broadcast %cst_97 : f32 to vector<8x128xf32>
    %980 = arith.maximumf %978, %979 : vector<8x128xf32>
    %981 = vector.broadcast %68 : f32 to vector<8x128xf32>
    %982 = arith.mulf %890, %981 : vector<8x128xf32>
    %983 = vector.broadcast %69 : f32 to vector<8x128xf32>
    %984 = arith.mulf %905, %983 : vector<8x128xf32>
    %985 = arith.addf %982, %984 : vector<8x128xf32>
    %986 = vector.broadcast %70 : f32 to vector<8x128xf32>
    %987 = arith.mulf %920, %986 : vector<8x128xf32>
    %988 = arith.addf %985, %987 : vector<8x128xf32>
    %989 = vector.broadcast %71 : f32 to vector<8x128xf32>
    %990 = arith.mulf %935, %989 : vector<8x128xf32>
    %991 = arith.addf %988, %990 : vector<8x128xf32>
    %992 = vector.broadcast %159 : f32 to vector<8x128xf32>
    %993 = arith.addf %991, %992 : vector<8x128xf32>
    %cst_98 = arith.constant 0.000000e+00 : f32
    %994 = vector.broadcast %cst_98 : f32 to vector<8x128xf32>
    %995 = arith.maximumf %993, %994 : vector<8x128xf32>
    %996 = vector.broadcast %72 : f32 to vector<8x128xf32>
    %997 = arith.mulf %950, %996 : vector<8x128xf32>
    %998 = vector.broadcast %73 : f32 to vector<8x128xf32>
    %999 = arith.mulf %965, %998 : vector<8x128xf32>
    %1000 = arith.addf %997, %999 : vector<8x128xf32>
    %1001 = vector.broadcast %74 : f32 to vector<8x128xf32>
    %1002 = arith.mulf %980, %1001 : vector<8x128xf32>
    %1003 = arith.addf %1000, %1002 : vector<8x128xf32>
    %1004 = vector.broadcast %75 : f32 to vector<8x128xf32>
    %1005 = arith.mulf %995, %1004 : vector<8x128xf32>
    %1006 = arith.addf %1003, %1005 : vector<8x128xf32>
    %1007 = vector.broadcast %160 : f32 to vector<8x128xf32>
    %1008 = arith.addf %1006, %1007 : vector<8x128xf32>
    %cst_99 = arith.constant 0.000000e+00 : f32
    %1009 = vector.broadcast %cst_99 : f32 to vector<8x128xf32>
    %1010 = arith.maximumf %1008, %1009 : vector<8x128xf32>
    %1011 = vector.broadcast %76 : f32 to vector<8x128xf32>
    %1012 = arith.mulf %950, %1011 : vector<8x128xf32>
    %1013 = vector.broadcast %77 : f32 to vector<8x128xf32>
    %1014 = arith.mulf %965, %1013 : vector<8x128xf32>
    %1015 = arith.addf %1012, %1014 : vector<8x128xf32>
    %1016 = vector.broadcast %78 : f32 to vector<8x128xf32>
    %1017 = arith.mulf %980, %1016 : vector<8x128xf32>
    %1018 = arith.addf %1015, %1017 : vector<8x128xf32>
    %1019 = vector.broadcast %79 : f32 to vector<8x128xf32>
    %1020 = arith.mulf %995, %1019 : vector<8x128xf32>
    %1021 = arith.addf %1018, %1020 : vector<8x128xf32>
    %1022 = vector.broadcast %161 : f32 to vector<8x128xf32>
    %1023 = arith.addf %1021, %1022 : vector<8x128xf32>
    %cst_100 = arith.constant 0.000000e+00 : f32
    %1024 = vector.broadcast %cst_100 : f32 to vector<8x128xf32>
    %1025 = arith.maximumf %1023, %1024 : vector<8x128xf32>
    %1026 = vector.broadcast %80 : f32 to vector<8x128xf32>
    %1027 = arith.mulf %950, %1026 : vector<8x128xf32>
    %1028 = vector.broadcast %81 : f32 to vector<8x128xf32>
    %1029 = arith.mulf %965, %1028 : vector<8x128xf32>
    %1030 = arith.addf %1027, %1029 : vector<8x128xf32>
    %1031 = vector.broadcast %82 : f32 to vector<8x128xf32>
    %1032 = arith.mulf %980, %1031 : vector<8x128xf32>
    %1033 = arith.addf %1030, %1032 : vector<8x128xf32>
    %1034 = vector.broadcast %83 : f32 to vector<8x128xf32>
    %1035 = arith.mulf %995, %1034 : vector<8x128xf32>
    %1036 = arith.addf %1033, %1035 : vector<8x128xf32>
    %1037 = vector.broadcast %162 : f32 to vector<8x128xf32>
    %1038 = arith.addf %1036, %1037 : vector<8x128xf32>
    %cst_101 = arith.constant 0.000000e+00 : f32
    %1039 = vector.broadcast %cst_101 : f32 to vector<8x128xf32>
    %1040 = arith.maximumf %1038, %1039 : vector<8x128xf32>
    %1041 = vector.broadcast %84 : f32 to vector<8x128xf32>
    %1042 = arith.mulf %950, %1041 : vector<8x128xf32>
    %1043 = vector.broadcast %85 : f32 to vector<8x128xf32>
    %1044 = arith.mulf %965, %1043 : vector<8x128xf32>
    %1045 = arith.addf %1042, %1044 : vector<8x128xf32>
    %1046 = vector.broadcast %86 : f32 to vector<8x128xf32>
    %1047 = arith.mulf %980, %1046 : vector<8x128xf32>
    %1048 = arith.addf %1045, %1047 : vector<8x128xf32>
    %1049 = vector.broadcast %87 : f32 to vector<8x128xf32>
    %1050 = arith.mulf %995, %1049 : vector<8x128xf32>
    %1051 = arith.addf %1048, %1050 : vector<8x128xf32>
    %1052 = vector.broadcast %163 : f32 to vector<8x128xf32>
    %1053 = arith.addf %1051, %1052 : vector<8x128xf32>
    %cst_102 = arith.constant 0.000000e+00 : f32
    %1054 = vector.broadcast %cst_102 : f32 to vector<8x128xf32>
    %1055 = arith.maximumf %1053, %1054 : vector<8x128xf32>
    %1056 = vector.broadcast %88 : f32 to vector<8x128xf32>
    %1057 = arith.mulf %1010, %1056 : vector<8x128xf32>
    %1058 = vector.broadcast %89 : f32 to vector<8x128xf32>
    %1059 = arith.mulf %1025, %1058 : vector<8x128xf32>
    %1060 = arith.addf %1057, %1059 : vector<8x128xf32>
    %1061 = vector.broadcast %90 : f32 to vector<8x128xf32>
    %1062 = arith.mulf %1040, %1061 : vector<8x128xf32>
    %1063 = arith.addf %1060, %1062 : vector<8x128xf32>
    %1064 = vector.broadcast %91 : f32 to vector<8x128xf32>
    %1065 = arith.mulf %1055, %1064 : vector<8x128xf32>
    %1066 = arith.addf %1063, %1065 : vector<8x128xf32>
    %1067 = vector.broadcast %164 : f32 to vector<8x128xf32>
    %1068 = arith.addf %1066, %1067 : vector<8x128xf32>
    %cst_103 = arith.constant 0.000000e+00 : f32
    %1069 = vector.broadcast %cst_103 : f32 to vector<8x128xf32>
    %1070 = arith.maximumf %1068, %1069 : vector<8x128xf32>
    %1071 = vector.broadcast %92 : f32 to vector<8x128xf32>
    %1072 = arith.mulf %1010, %1071 : vector<8x128xf32>
    %1073 = vector.broadcast %93 : f32 to vector<8x128xf32>
    %1074 = arith.mulf %1025, %1073 : vector<8x128xf32>
    %1075 = arith.addf %1072, %1074 : vector<8x128xf32>
    %1076 = vector.broadcast %94 : f32 to vector<8x128xf32>
    %1077 = arith.mulf %1040, %1076 : vector<8x128xf32>
    %1078 = arith.addf %1075, %1077 : vector<8x128xf32>
    %1079 = vector.broadcast %95 : f32 to vector<8x128xf32>
    %1080 = arith.mulf %1055, %1079 : vector<8x128xf32>
    %1081 = arith.addf %1078, %1080 : vector<8x128xf32>
    %1082 = vector.broadcast %165 : f32 to vector<8x128xf32>
    %1083 = arith.addf %1081, %1082 : vector<8x128xf32>
    %cst_104 = arith.constant 0.000000e+00 : f32
    %1084 = vector.broadcast %cst_104 : f32 to vector<8x128xf32>
    %1085 = arith.maximumf %1083, %1084 : vector<8x128xf32>
    %1086 = vector.broadcast %96 : f32 to vector<8x128xf32>
    %1087 = arith.mulf %1010, %1086 : vector<8x128xf32>
    %1088 = vector.broadcast %97 : f32 to vector<8x128xf32>
    %1089 = arith.mulf %1025, %1088 : vector<8x128xf32>
    %1090 = arith.addf %1087, %1089 : vector<8x128xf32>
    %1091 = vector.broadcast %98 : f32 to vector<8x128xf32>
    %1092 = arith.mulf %1040, %1091 : vector<8x128xf32>
    %1093 = arith.addf %1090, %1092 : vector<8x128xf32>
    %1094 = vector.broadcast %99 : f32 to vector<8x128xf32>
    %1095 = arith.mulf %1055, %1094 : vector<8x128xf32>
    %1096 = arith.addf %1093, %1095 : vector<8x128xf32>
    %1097 = vector.broadcast %166 : f32 to vector<8x128xf32>
    %1098 = arith.addf %1096, %1097 : vector<8x128xf32>
    %cst_105 = arith.constant 0.000000e+00 : f32
    %1099 = vector.broadcast %cst_105 : f32 to vector<8x128xf32>
    %1100 = arith.maximumf %1098, %1099 : vector<8x128xf32>
    %1101 = vector.broadcast %100 : f32 to vector<8x128xf32>
    %1102 = arith.mulf %1010, %1101 : vector<8x128xf32>
    %1103 = vector.broadcast %101 : f32 to vector<8x128xf32>
    %1104 = arith.mulf %1025, %1103 : vector<8x128xf32>
    %1105 = arith.addf %1102, %1104 : vector<8x128xf32>
    %1106 = vector.broadcast %102 : f32 to vector<8x128xf32>
    %1107 = arith.mulf %1040, %1106 : vector<8x128xf32>
    %1108 = arith.addf %1105, %1107 : vector<8x128xf32>
    %1109 = vector.broadcast %103 : f32 to vector<8x128xf32>
    %1110 = arith.mulf %1055, %1109 : vector<8x128xf32>
    %1111 = arith.addf %1108, %1110 : vector<8x128xf32>
    %1112 = vector.broadcast %167 : f32 to vector<8x128xf32>
    %1113 = arith.addf %1111, %1112 : vector<8x128xf32>
    %cst_106 = arith.constant 0.000000e+00 : f32
    %1114 = vector.broadcast %cst_106 : f32 to vector<8x128xf32>
    %1115 = arith.maximumf %1113, %1114 : vector<8x128xf32>
    %1116 = vector.broadcast %104 : f32 to vector<8x128xf32>
    %1117 = arith.mulf %1070, %1116 : vector<8x128xf32>
    %1118 = vector.broadcast %105 : f32 to vector<8x128xf32>
    %1119 = arith.mulf %1085, %1118 : vector<8x128xf32>
    %1120 = arith.addf %1117, %1119 : vector<8x128xf32>
    %1121 = vector.broadcast %106 : f32 to vector<8x128xf32>
    %1122 = arith.mulf %1100, %1121 : vector<8x128xf32>
    %1123 = arith.addf %1120, %1122 : vector<8x128xf32>
    %1124 = vector.broadcast %107 : f32 to vector<8x128xf32>
    %1125 = arith.mulf %1115, %1124 : vector<8x128xf32>
    %1126 = arith.addf %1123, %1125 : vector<8x128xf32>
    %1127 = vector.broadcast %168 : f32 to vector<8x128xf32>
    %1128 = arith.addf %1126, %1127 : vector<8x128xf32>
    %cst_107 = arith.constant 0.000000e+00 : f32
    %1129 = vector.broadcast %cst_107 : f32 to vector<8x128xf32>
    %1130 = arith.maximumf %1128, %1129 : vector<8x128xf32>
    %1131 = vector.broadcast %108 : f32 to vector<8x128xf32>
    %1132 = arith.mulf %1070, %1131 : vector<8x128xf32>
    %1133 = vector.broadcast %109 : f32 to vector<8x128xf32>
    %1134 = arith.mulf %1085, %1133 : vector<8x128xf32>
    %1135 = arith.addf %1132, %1134 : vector<8x128xf32>
    %1136 = vector.broadcast %110 : f32 to vector<8x128xf32>
    %1137 = arith.mulf %1100, %1136 : vector<8x128xf32>
    %1138 = arith.addf %1135, %1137 : vector<8x128xf32>
    %1139 = vector.broadcast %111 : f32 to vector<8x128xf32>
    %1140 = arith.mulf %1115, %1139 : vector<8x128xf32>
    %1141 = arith.addf %1138, %1140 : vector<8x128xf32>
    %1142 = vector.broadcast %169 : f32 to vector<8x128xf32>
    %1143 = arith.addf %1141, %1142 : vector<8x128xf32>
    %cst_108 = arith.constant 0.000000e+00 : f32
    %1144 = vector.broadcast %cst_108 : f32 to vector<8x128xf32>
    %1145 = arith.maximumf %1143, %1144 : vector<8x128xf32>
    %1146 = vector.broadcast %112 : f32 to vector<8x128xf32>
    %1147 = arith.mulf %1070, %1146 : vector<8x128xf32>
    %1148 = vector.broadcast %113 : f32 to vector<8x128xf32>
    %1149 = arith.mulf %1085, %1148 : vector<8x128xf32>
    %1150 = arith.addf %1147, %1149 : vector<8x128xf32>
    %1151 = vector.broadcast %114 : f32 to vector<8x128xf32>
    %1152 = arith.mulf %1100, %1151 : vector<8x128xf32>
    %1153 = arith.addf %1150, %1152 : vector<8x128xf32>
    %1154 = vector.broadcast %115 : f32 to vector<8x128xf32>
    %1155 = arith.mulf %1115, %1154 : vector<8x128xf32>
    %1156 = arith.addf %1153, %1155 : vector<8x128xf32>
    %1157 = vector.broadcast %170 : f32 to vector<8x128xf32>
    %1158 = arith.addf %1156, %1157 : vector<8x128xf32>
    %cst_109 = arith.constant 0.000000e+00 : f32
    %1159 = vector.broadcast %cst_109 : f32 to vector<8x128xf32>
    %1160 = arith.maximumf %1158, %1159 : vector<8x128xf32>
    %1161 = vector.broadcast %116 : f32 to vector<8x128xf32>
    %1162 = arith.mulf %1070, %1161 : vector<8x128xf32>
    %1163 = vector.broadcast %117 : f32 to vector<8x128xf32>
    %1164 = arith.mulf %1085, %1163 : vector<8x128xf32>
    %1165 = arith.addf %1162, %1164 : vector<8x128xf32>
    %1166 = vector.broadcast %118 : f32 to vector<8x128xf32>
    %1167 = arith.mulf %1100, %1166 : vector<8x128xf32>
    %1168 = arith.addf %1165, %1167 : vector<8x128xf32>
    %1169 = vector.broadcast %119 : f32 to vector<8x128xf32>
    %1170 = arith.mulf %1115, %1169 : vector<8x128xf32>
    %1171 = arith.addf %1168, %1170 : vector<8x128xf32>
    %1172 = vector.broadcast %171 : f32 to vector<8x128xf32>
    %1173 = arith.addf %1171, %1172 : vector<8x128xf32>
    %cst_110 = arith.constant 0.000000e+00 : f32
    %1174 = vector.broadcast %cst_110 : f32 to vector<8x128xf32>
    %1175 = arith.maximumf %1173, %1174 : vector<8x128xf32>
    %1176 = vector.broadcast %120 : f32 to vector<8x128xf32>
    %1177 = arith.mulf %1130, %1176 : vector<8x128xf32>
    %1178 = vector.broadcast %121 : f32 to vector<8x128xf32>
    %1179 = arith.mulf %1145, %1178 : vector<8x128xf32>
    %1180 = arith.addf %1177, %1179 : vector<8x128xf32>
    %1181 = vector.broadcast %122 : f32 to vector<8x128xf32>
    %1182 = arith.mulf %1160, %1181 : vector<8x128xf32>
    %1183 = arith.addf %1180, %1182 : vector<8x128xf32>
    %1184 = vector.broadcast %123 : f32 to vector<8x128xf32>
    %1185 = arith.mulf %1175, %1184 : vector<8x128xf32>
    %1186 = arith.addf %1183, %1185 : vector<8x128xf32>
    %1187 = vector.broadcast %172 : f32 to vector<8x128xf32>
    %1188 = arith.addf %1186, %1187 : vector<8x128xf32>
    %cst_111 = arith.constant 0.000000e+00 : f32
    %1189 = vector.broadcast %cst_111 : f32 to vector<8x128xf32>
    %1190 = arith.maximumf %1188, %1189 : vector<8x128xf32>
    %1191 = vector.broadcast %124 : f32 to vector<8x128xf32>
    %1192 = arith.mulf %1130, %1191 : vector<8x128xf32>
    %1193 = vector.broadcast %125 : f32 to vector<8x128xf32>
    %1194 = arith.mulf %1145, %1193 : vector<8x128xf32>
    %1195 = arith.addf %1192, %1194 : vector<8x128xf32>
    %1196 = vector.broadcast %126 : f32 to vector<8x128xf32>
    %1197 = arith.mulf %1160, %1196 : vector<8x128xf32>
    %1198 = arith.addf %1195, %1197 : vector<8x128xf32>
    %1199 = vector.broadcast %127 : f32 to vector<8x128xf32>
    %1200 = arith.mulf %1175, %1199 : vector<8x128xf32>
    %1201 = arith.addf %1198, %1200 : vector<8x128xf32>
    %1202 = vector.broadcast %173 : f32 to vector<8x128xf32>
    %1203 = arith.addf %1201, %1202 : vector<8x128xf32>
    %cst_112 = arith.constant 0.000000e+00 : f32
    %1204 = vector.broadcast %cst_112 : f32 to vector<8x128xf32>
    %1205 = arith.maximumf %1203, %1204 : vector<8x128xf32>
    %1206 = vector.broadcast %128 : f32 to vector<8x128xf32>
    %1207 = arith.mulf %1130, %1206 : vector<8x128xf32>
    %1208 = vector.broadcast %129 : f32 to vector<8x128xf32>
    %1209 = arith.mulf %1145, %1208 : vector<8x128xf32>
    %1210 = arith.addf %1207, %1209 : vector<8x128xf32>
    %1211 = vector.broadcast %130 : f32 to vector<8x128xf32>
    %1212 = arith.mulf %1160, %1211 : vector<8x128xf32>
    %1213 = arith.addf %1210, %1212 : vector<8x128xf32>
    %1214 = vector.broadcast %131 : f32 to vector<8x128xf32>
    %1215 = arith.mulf %1175, %1214 : vector<8x128xf32>
    %1216 = arith.addf %1213, %1215 : vector<8x128xf32>
    %1217 = vector.broadcast %174 : f32 to vector<8x128xf32>
    %1218 = arith.addf %1216, %1217 : vector<8x128xf32>
    %cst_113 = arith.constant 0.000000e+00 : f32
    %1219 = vector.broadcast %cst_113 : f32 to vector<8x128xf32>
    %1220 = arith.maximumf %1218, %1219 : vector<8x128xf32>
    %1221 = vector.broadcast %132 : f32 to vector<8x128xf32>
    %1222 = arith.mulf %1130, %1221 : vector<8x128xf32>
    %1223 = vector.broadcast %133 : f32 to vector<8x128xf32>
    %1224 = arith.mulf %1145, %1223 : vector<8x128xf32>
    %1225 = arith.addf %1222, %1224 : vector<8x128xf32>
    %1226 = vector.broadcast %134 : f32 to vector<8x128xf32>
    %1227 = arith.mulf %1160, %1226 : vector<8x128xf32>
    %1228 = arith.addf %1225, %1227 : vector<8x128xf32>
    %1229 = vector.broadcast %135 : f32 to vector<8x128xf32>
    %1230 = arith.mulf %1175, %1229 : vector<8x128xf32>
    %1231 = arith.addf %1228, %1230 : vector<8x128xf32>
    %1232 = vector.broadcast %175 : f32 to vector<8x128xf32>
    %1233 = arith.addf %1231, %1232 : vector<8x128xf32>
    %cst_114 = arith.constant 0.000000e+00 : f32
    %1234 = vector.broadcast %cst_114 : f32 to vector<8x128xf32>
    %1235 = arith.maximumf %1233, %1234 : vector<8x128xf32>
    %1236 = vector.broadcast %136 : f32 to vector<8x128xf32>
    %1237 = arith.mulf %1190, %1236 : vector<8x128xf32>
    %1238 = vector.broadcast %137 : f32 to vector<8x128xf32>
    %1239 = arith.mulf %1205, %1238 : vector<8x128xf32>
    %1240 = arith.addf %1237, %1239 : vector<8x128xf32>
    %1241 = vector.broadcast %138 : f32 to vector<8x128xf32>
    %1242 = arith.mulf %1220, %1241 : vector<8x128xf32>
    %1243 = arith.addf %1240, %1242 : vector<8x128xf32>
    %1244 = vector.broadcast %139 : f32 to vector<8x128xf32>
    %1245 = arith.mulf %1235, %1244 : vector<8x128xf32>
    %1246 = arith.addf %1243, %1245 : vector<8x128xf32>
    %1247 = vector.broadcast %176 : f32 to vector<8x128xf32>
    %1248 = arith.addf %1246, %1247 : vector<8x128xf32>
    %1249 = arith.negf %1248 : vector<8x128xf32>
    %1250 = math.exp %1249 : vector<8x128xf32>
    %cst_115 = arith.constant 1.000000e+00 : f32
    %1251 = vector.broadcast %cst_115 : f32 to vector<8x128xf32>
    %1252 = arith.addf %1251, %1250 : vector<8x128xf32>
    %1253 = arith.divf %1251, %1252 : vector<8x128xf32>
    %c8_116 = arith.constant 8 : index
    %c0_117 = arith.constant 0 : index
    %1254 = vector.load %arg4[%c8_116, %c0_117] : memref<64x128xf32, #tpu.memory_space<vmem>>, vector<8x128xf32>
    tpu.vector_store %arg4[%c8_116, %c0_117], %1253 {strides = array<i32>} : memref<64x128xf32, #tpu.memory_space<vmem>>, vector<8x128xf32>,
    %c0_118 = arith.constant 0 : index
    %c16_119 = arith.constant 16 : index
    %c0_120 = arith.constant 0 : index
    %1255 = vector.load %arg3[%c0_118, %c16_119, %c0_120] : memref<2x64x128xf32, #tpu.memory_space<vmem>>, vector<1x8x128xf32>
    %1256 = vector.shape_cast %1255 : vector<1x8x128xf32> to vector<8x128xf32>
    %c1_121 = arith.constant 1 : index
    %c16_122 = arith.constant 16 : index
    %c0_123 = arith.constant 0 : index
    %1257 = vector.load %arg3[%c1_121, %c16_122, %c0_123] : memref<2x64x128xf32, #tpu.memory_space<vmem>>, vector<1x8x128xf32>
    %1258 = vector.shape_cast %1257 : vector<1x8x128xf32> to vector<8x128xf32>
    %1259 = vector.broadcast %0 : f32 to vector<8x128xf32>
    %1260 = arith.mulf %1256, %1259 : vector<8x128xf32>
    %1261 = vector.broadcast %1 : f32 to vector<8x128xf32>
    %1262 = arith.mulf %1258, %1261 : vector<8x128xf32>
    %1263 = arith.addf %1260, %1262 : vector<8x128xf32>
    %1264 = vector.broadcast %140 : f32 to vector<8x128xf32>
    %1265 = arith.addf %1263, %1264 : vector<8x128xf32>
    %cst_124 = arith.constant 0.000000e+00 : f32
    %1266 = vector.broadcast %cst_124 : f32 to vector<8x128xf32>
    %1267 = arith.maximumf %1265, %1266 : vector<8x128xf32>
    %1268 = vector.broadcast %2 : f32 to vector<8x128xf32>
    %1269 = arith.mulf %1256, %1268 : vector<8x128xf32>
    %1270 = vector.broadcast %3 : f32 to vector<8x128xf32>
    %1271 = arith.mulf %1258, %1270 : vector<8x128xf32>
    %1272 = arith.addf %1269, %1271 : vector<8x128xf32>
    %1273 = vector.broadcast %141 : f32 to vector<8x128xf32>
    %1274 = arith.addf %1272, %1273 : vector<8x128xf32>
    %cst_125 = arith.constant 0.000000e+00 : f32
    %1275 = vector.broadcast %cst_125 : f32 to vector<8x128xf32>
    %1276 = arith.maximumf %1274, %1275 : vector<8x128xf32>
    %1277 = vector.broadcast %4 : f32 to vector<8x128xf32>
    %1278 = arith.mulf %1256, %1277 : vector<8x128xf32>
    %1279 = vector.broadcast %5 : f32 to vector<8x128xf32>
    %1280 = arith.mulf %1258, %1279 : vector<8x128xf32>
    %1281 = arith.addf %1278, %1280 : vector<8x128xf32>
    %1282 = vector.broadcast %142 : f32 to vector<8x128xf32>
    %1283 = arith.addf %1281, %1282 : vector<8x128xf32>
    %cst_126 = arith.constant 0.000000e+00 : f32
    %1284 = vector.broadcast %cst_126 : f32 to vector<8x128xf32>
    %1285 = arith.maximumf %1283, %1284 : vector<8x128xf32>
    %1286 = vector.broadcast %6 : f32 to vector<8x128xf32>
    %1287 = arith.mulf %1256, %1286 : vector<8x128xf32>
    %1288 = vector.broadcast %7 : f32 to vector<8x128xf32>
    %1289 = arith.mulf %1258, %1288 : vector<8x128xf32>
    %1290 = arith.addf %1287, %1289 : vector<8x128xf32>
    %1291 = vector.broadcast %143 : f32 to vector<8x128xf32>
    %1292 = arith.addf %1290, %1291 : vector<8x128xf32>
    %cst_127 = arith.constant 0.000000e+00 : f32
    %1293 = vector.broadcast %cst_127 : f32 to vector<8x128xf32>
    %1294 = arith.maximumf %1292, %1293 : vector<8x128xf32>
    %1295 = vector.broadcast %8 : f32 to vector<8x128xf32>
    %1296 = arith.mulf %1267, %1295 : vector<8x128xf32>
    %1297 = vector.broadcast %9 : f32 to vector<8x128xf32>
    %1298 = arith.mulf %1276, %1297 : vector<8x128xf32>
    %1299 = arith.addf %1296, %1298 : vector<8x128xf32>
    %1300 = vector.broadcast %10 : f32 to vector<8x128xf32>
    %1301 = arith.mulf %1285, %1300 : vector<8x128xf32>
    %1302 = arith.addf %1299, %1301 : vector<8x128xf32>
    %1303 = vector.broadcast %11 : f32 to vector<8x128xf32>
    %1304 = arith.mulf %1294, %1303 : vector<8x128xf32>
    %1305 = arith.addf %1302, %1304 : vector<8x128xf32>
    %1306 = vector.broadcast %144 : f32 to vector<8x128xf32>
    %1307 = arith.addf %1305, %1306 : vector<8x128xf32>
    %cst_128 = arith.constant 0.000000e+00 : f32
    %1308 = vector.broadcast %cst_128 : f32 to vector<8x128xf32>
    %1309 = arith.maximumf %1307, %1308 : vector<8x128xf32>
    %1310 = vector.broadcast %12 : f32 to vector<8x128xf32>
    %1311 = arith.mulf %1267, %1310 : vector<8x128xf32>
    %1312 = vector.broadcast %13 : f32 to vector<8x128xf32>
    %1313 = arith.mulf %1276, %1312 : vector<8x128xf32>
    %1314 = arith.addf %1311, %1313 : vector<8x128xf32>
    %1315 = vector.broadcast %14 : f32 to vector<8x128xf32>
    %1316 = arith.mulf %1285, %1315 : vector<8x128xf32>
    %1317 = arith.addf %1314, %1316 : vector<8x128xf32>
    %1318 = vector.broadcast %15 : f32 to vector<8x128xf32>
    %1319 = arith.mulf %1294, %1318 : vector<8x128xf32>
    %1320 = arith.addf %1317, %1319 : vector<8x128xf32>
    %1321 = vector.broadcast %145 : f32 to vector<8x128xf32>
    %1322 = arith.addf %1320, %1321 : vector<8x128xf32>
    %cst_129 = arith.constant 0.000000e+00 : f32
    %1323 = vector.broadcast %cst_129 : f32 to vector<8x128xf32>
    %1324 = arith.maximumf %1322, %1323 : vector<8x128xf32>
    %1325 = vector.broadcast %16 : f32 to vector<8x128xf32>
    %1326 = arith.mulf %1267, %1325 : vector<8x128xf32>
    %1327 = vector.broadcast %17 : f32 to vector<8x128xf32>
    %1328 = arith.mulf %1276, %1327 : vector<8x128xf32>
    %1329 = arith.addf %1326, %1328 : vector<8x128xf32>
    %1330 = vector.broadcast %18 : f32 to vector<8x128xf32>
    %1331 = arith.mulf %1285, %1330 : vector<8x128xf32>
    %1332 = arith.addf %1329, %1331 : vector<8x128xf32>
    %1333 = vector.broadcast %19 : f32 to vector<8x128xf32>
    %1334 = arith.mulf %1294, %1333 : vector<8x128xf32>
    %1335 = arith.addf %1332, %1334 : vector<8x128xf32>
    %1336 = vector.broadcast %146 : f32 to vector<8x128xf32>
    %1337 = arith.addf %1335, %1336 : vector<8x128xf32>
    %cst_130 = arith.constant 0.000000e+00 : f32
    %1338 = vector.broadcast %cst_130 : f32 to vector<8x128xf32>
    %1339 = arith.maximumf %1337, %1338 : vector<8x128xf32>
    %1340 = vector.broadcast %20 : f32 to vector<8x128xf32>
    %1341 = arith.mulf %1267, %1340 : vector<8x128xf32>
    %1342 = vector.broadcast %21 : f32 to vector<8x128xf32>
    %1343 = arith.mulf %1276, %1342 : vector<8x128xf32>
    %1344 = arith.addf %1341, %1343 : vector<8x128xf32>
    %1345 = vector.broadcast %22 : f32 to vector<8x128xf32>
    %1346 = arith.mulf %1285, %1345 : vector<8x128xf32>
    %1347 = arith.addf %1344, %1346 : vector<8x128xf32>
    %1348 = vector.broadcast %23 : f32 to vector<8x128xf32>
    %1349 = arith.mulf %1294, %1348 : vector<8x128xf32>
    %1350 = arith.addf %1347, %1349 : vector<8x128xf32>
    %1351 = vector.broadcast %147 : f32 to vector<8x128xf32>
    %1352 = arith.addf %1350, %1351 : vector<8x128xf32>
    %cst_131 = arith.constant 0.000000e+00 : f32
    %1353 = vector.broadcast %cst_131 : f32 to vector<8x128xf32>
    %1354 = arith.maximumf %1352, %1353 : vector<8x128xf32>
    %1355 = vector.broadcast %24 : f32 to vector<8x128xf32>
    %1356 = arith.mulf %1309, %1355 : vector<8x128xf32>
    %1357 = vector.broadcast %25 : f32 to vector<8x128xf32>
    %1358 = arith.mulf %1324, %1357 : vector<8x128xf32>
    %1359 = arith.addf %1356, %1358 : vector<8x128xf32>
    %1360 = vector.broadcast %26 : f32 to vector<8x128xf32>
    %1361 = arith.mulf %1339, %1360 : vector<8x128xf32>
    %1362 = arith.addf %1359, %1361 : vector<8x128xf32>
    %1363 = vector.broadcast %27 : f32 to vector<8x128xf32>
    %1364 = arith.mulf %1354, %1363 : vector<8x128xf32>
    %1365 = arith.addf %1362, %1364 : vector<8x128xf32>
    %1366 = vector.broadcast %148 : f32 to vector<8x128xf32>
    %1367 = arith.addf %1365, %1366 : vector<8x128xf32>
    %cst_132 = arith.constant 0.000000e+00 : f32
    %1368 = vector.broadcast %cst_132 : f32 to vector<8x128xf32>
    %1369 = arith.maximumf %1367, %1368 : vector<8x128xf32>
    %1370 = vector.broadcast %28 : f32 to vector<8x128xf32>
    %1371 = arith.mulf %1309, %1370 : vector<8x128xf32>
    %1372 = vector.broadcast %29 : f32 to vector<8x128xf32>
    %1373 = arith.mulf %1324, %1372 : vector<8x128xf32>
    %1374 = arith.addf %1371, %1373 : vector<8x128xf32>
    %1375 = vector.broadcast %30 : f32 to vector<8x128xf32>
    %1376 = arith.mulf %1339, %1375 : vector<8x128xf32>
    %1377 = arith.addf %1374, %1376 : vector<8x128xf32>
    %1378 = vector.broadcast %31 : f32 to vector<8x128xf32>
    %1379 = arith.mulf %1354, %1378 : vector<8x128xf32>
    %1380 = arith.addf %1377, %1379 : vector<8x128xf32>
    %1381 = vector.broadcast %149 : f32 to vector<8x128xf32>
    %1382 = arith.addf %1380, %1381 : vector<8x128xf32>
    %cst_133 = arith.constant 0.000000e+00 : f32
    %1383 = vector.broadcast %cst_133 : f32 to vector<8x128xf32>
    %1384 = arith.maximumf %1382, %1383 : vector<8x128xf32>
    %1385 = vector.broadcast %32 : f32 to vector<8x128xf32>
    %1386 = arith.mulf %1309, %1385 : vector<8x128xf32>
    %1387 = vector.broadcast %33 : f32 to vector<8x128xf32>
    %1388 = arith.mulf %1324, %1387 : vector<8x128xf32>
    %1389 = arith.addf %1386, %1388 : vector<8x128xf32>
    %1390 = vector.broadcast %34 : f32 to vector<8x128xf32>
    %1391 = arith.mulf %1339, %1390 : vector<8x128xf32>
    %1392 = arith.addf %1389, %1391 : vector<8x128xf32>
    %1393 = vector.broadcast %35 : f32 to vector<8x128xf32>
    %1394 = arith.mulf %1354, %1393 : vector<8x128xf32>
    %1395 = arith.addf %1392, %1394 : vector<8x128xf32>
    %1396 = vector.broadcast %150 : f32 to vector<8x128xf32>
    %1397 = arith.addf %1395, %1396 : vector<8x128xf32>
    %cst_134 = arith.constant 0.000000e+00 : f32
    %1398 = vector.broadcast %cst_134 : f32 to vector<8x128xf32>
    %1399 = arith.maximumf %1397, %1398 : vector<8x128xf32>
    %1400 = vector.broadcast %36 : f32 to vector<8x128xf32>
    %1401 = arith.mulf %1309, %1400 : vector<8x128xf32>
    %1402 = vector.broadcast %37 : f32 to vector<8x128xf32>
    %1403 = arith.mulf %1324, %1402 : vector<8x128xf32>
    %1404 = arith.addf %1401, %1403 : vector<8x128xf32>
    %1405 = vector.broadcast %38 : f32 to vector<8x128xf32>
    %1406 = arith.mulf %1339, %1405 : vector<8x128xf32>
    %1407 = arith.addf %1404, %1406 : vector<8x128xf32>
    %1408 = vector.broadcast %39 : f32 to vector<8x128xf32>
    %1409 = arith.mulf %1354, %1408 : vector<8x128xf32>
    %1410 = arith.addf %1407, %1409 : vector<8x128xf32>
    %1411 = vector.broadcast %151 : f32 to vector<8x128xf32>
    %1412 = arith.addf %1410, %1411 : vector<8x128xf32>
    %cst_135 = arith.constant 0.000000e+00 : f32
    %1413 = vector.broadcast %cst_135 : f32 to vector<8x128xf32>
    %1414 = arith.maximumf %1412, %1413 : vector<8x128xf32>
    %1415 = vector.broadcast %40 : f32 to vector<8x128xf32>
    %1416 = arith.mulf %1369, %1415 : vector<8x128xf32>
    %1417 = vector.broadcast %41 : f32 to vector<8x128xf32>
    %1418 = arith.mulf %1384, %1417 : vector<8x128xf32>
    %1419 = arith.addf %1416, %1418 : vector<8x128xf32>
    %1420 = vector.broadcast %42 : f32 to vector<8x128xf32>
    %1421 = arith.mulf %1399, %1420 : vector<8x128xf32>
    %1422 = arith.addf %1419, %1421 : vector<8x128xf32>
    %1423 = vector.broadcast %43 : f32 to vector<8x128xf32>
    %1424 = arith.mulf %1414, %1423 : vector<8x128xf32>
    %1425 = arith.addf %1422, %1424 : vector<8x128xf32>
    %1426 = vector.broadcast %152 : f32 to vector<8x128xf32>
    %1427 = arith.addf %1425, %1426 : vector<8x128xf32>
    %cst_136 = arith.constant 0.000000e+00 : f32
    %1428 = vector.broadcast %cst_136 : f32 to vector<8x128xf32>
    %1429 = arith.maximumf %1427, %1428 : vector<8x128xf32>
    %1430 = vector.broadcast %44 : f32 to vector<8x128xf32>
    %1431 = arith.mulf %1369, %1430 : vector<8x128xf32>
    %1432 = vector.broadcast %45 : f32 to vector<8x128xf32>
    %1433 = arith.mulf %1384, %1432 : vector<8x128xf32>
    %1434 = arith.addf %1431, %1433 : vector<8x128xf32>
    %1435 = vector.broadcast %46 : f32 to vector<8x128xf32>
    %1436 = arith.mulf %1399, %1435 : vector<8x128xf32>
    %1437 = arith.addf %1434, %1436 : vector<8x128xf32>
    %1438 = vector.broadcast %47 : f32 to vector<8x128xf32>
    %1439 = arith.mulf %1414, %1438 : vector<8x128xf32>
    %1440 = arith.addf %1437, %1439 : vector<8x128xf32>
    %1441 = vector.broadcast %153 : f32 to vector<8x128xf32>
    %1442 = arith.addf %1440, %1441 : vector<8x128xf32>
    %cst_137 = arith.constant 0.000000e+00 : f32
    %1443 = vector.broadcast %cst_137 : f32 to vector<8x128xf32>
    %1444 = arith.maximumf %1442, %1443 : vector<8x128xf32>
    %1445 = vector.broadcast %48 : f32 to vector<8x128xf32>
    %1446 = arith.mulf %1369, %1445 : vector<8x128xf32>
    %1447 = vector.broadcast %49 : f32 to vector<8x128xf32>
    %1448 = arith.mulf %1384, %1447 : vector<8x128xf32>
    %1449 = arith.addf %1446, %1448 : vector<8x128xf32>
    %1450 = vector.broadcast %50 : f32 to vector<8x128xf32>
    %1451 = arith.mulf %1399, %1450 : vector<8x128xf32>
    %1452 = arith.addf %1449, %1451 : vector<8x128xf32>
    %1453 = vector.broadcast %51 : f32 to vector<8x128xf32>
    %1454 = arith.mulf %1414, %1453 : vector<8x128xf32>
    %1455 = arith.addf %1452, %1454 : vector<8x128xf32>
    %1456 = vector.broadcast %154 : f32 to vector<8x128xf32>
    %1457 = arith.addf %1455, %1456 : vector<8x128xf32>
    %cst_138 = arith.constant 0.000000e+00 : f32
    %1458 = vector.broadcast %cst_138 : f32 to vector<8x128xf32>
    %1459 = arith.maximumf %1457, %1458 : vector<8x128xf32>
    %1460 = vector.broadcast %52 : f32 to vector<8x128xf32>
    %1461 = arith.mulf %1369, %1460 : vector<8x128xf32>
    %1462 = vector.broadcast %53 : f32 to vector<8x128xf32>
    %1463 = arith.mulf %1384, %1462 : vector<8x128xf32>
    %1464 = arith.addf %1461, %1463 : vector<8x128xf32>
    %1465 = vector.broadcast %54 : f32 to vector<8x128xf32>
    %1466 = arith.mulf %1399, %1465 : vector<8x128xf32>
    %1467 = arith.addf %1464, %1466 : vector<8x128xf32>
    %1468 = vector.broadcast %55 : f32 to vector<8x128xf32>
    %1469 = arith.mulf %1414, %1468 : vector<8x128xf32>
    %1470 = arith.addf %1467, %1469 : vector<8x128xf32>
    %1471 = vector.broadcast %155 : f32 to vector<8x128xf32>
    %1472 = arith.addf %1470, %1471 : vector<8x128xf32>
    %cst_139 = arith.constant 0.000000e+00 : f32
    %1473 = vector.broadcast %cst_139 : f32 to vector<8x128xf32>
    %1474 = arith.maximumf %1472, %1473 : vector<8x128xf32>
    %1475 = vector.broadcast %56 : f32 to vector<8x128xf32>
    %1476 = arith.mulf %1429, %1475 : vector<8x128xf32>
    %1477 = vector.broadcast %57 : f32 to vector<8x128xf32>
    %1478 = arith.mulf %1444, %1477 : vector<8x128xf32>
    %1479 = arith.addf %1476, %1478 : vector<8x128xf32>
    %1480 = vector.broadcast %58 : f32 to vector<8x128xf32>
    %1481 = arith.mulf %1459, %1480 : vector<8x128xf32>
    %1482 = arith.addf %1479, %1481 : vector<8x128xf32>
    %1483 = vector.broadcast %59 : f32 to vector<8x128xf32>
    %1484 = arith.mulf %1474, %1483 : vector<8x128xf32>
    %1485 = arith.addf %1482, %1484 : vector<8x128xf32>
    %1486 = vector.broadcast %156 : f32 to vector<8x128xf32>
    %1487 = arith.addf %1485, %1486 : vector<8x128xf32>
    %cst_140 = arith.constant 0.000000e+00 : f32
    %1488 = vector.broadcast %cst_140 : f32 to vector<8x128xf32>
    %1489 = arith.maximumf %1487, %1488 : vector<8x128xf32>
    %1490 = vector.broadcast %60 : f32 to vector<8x128xf32>
    %1491 = arith.mulf %1429, %1490 : vector<8x128xf32>
    %1492 = vector.broadcast %61 : f32 to vector<8x128xf32>
    %1493 = arith.mulf %1444, %1492 : vector<8x128xf32>
    %1494 = arith.addf %1491, %1493 : vector<8x128xf32>
    %1495 = vector.broadcast %62 : f32 to vector<8x128xf32>
    %1496 = arith.mulf %1459, %1495 : vector<8x128xf32>
    %1497 = arith.addf %1494, %1496 : vector<8x128xf32>
    %1498 = vector.broadcast %63 : f32 to vector<8x128xf32>
    %1499 = arith.mulf %1474, %1498 : vector<8x128xf32>
    %1500 = arith.addf %1497, %1499 : vector<8x128xf32>
    %1501 = vector.broadcast %157 : f32 to vector<8x128xf32>
    %1502 = arith.addf %1500, %1501 : vector<8x128xf32>
    %cst_141 = arith.constant 0.000000e+00 : f32
    %1503 = vector.broadcast %cst_141 : f32 to vector<8x128xf32>
    %1504 = arith.maximumf %1502, %1503 : vector<8x128xf32>
    %1505 = vector.broadcast %64 : f32 to vector<8x128xf32>
    %1506 = arith.mulf %1429, %1505 : vector<8x128xf32>
    %1507 = vector.broadcast %65 : f32 to vector<8x128xf32>
    %1508 = arith.mulf %1444, %1507 : vector<8x128xf32>
    %1509 = arith.addf %1506, %1508 : vector<8x128xf32>
    %1510 = vector.broadcast %66 : f32 to vector<8x128xf32>
    %1511 = arith.mulf %1459, %1510 : vector<8x128xf32>
    %1512 = arith.addf %1509, %1511 : vector<8x128xf32>
    %1513 = vector.broadcast %67 : f32 to vector<8x128xf32>
    %1514 = arith.mulf %1474, %1513 : vector<8x128xf32>
    %1515 = arith.addf %1512, %1514 : vector<8x128xf32>
    %1516 = vector.broadcast %158 : f32 to vector<8x128xf32>
    %1517 = arith.addf %1515, %1516 : vector<8x128xf32>
    %cst_142 = arith.constant 0.000000e+00 : f32
    %1518 = vector.broadcast %cst_142 : f32 to vector<8x128xf32>
    %1519 = arith.maximumf %1517, %1518 : vector<8x128xf32>
    %1520 = vector.broadcast %68 : f32 to vector<8x128xf32>
    %1521 = arith.mulf %1429, %1520 : vector<8x128xf32>
    %1522 = vector.broadcast %69 : f32 to vector<8x128xf32>
    %1523 = arith.mulf %1444, %1522 : vector<8x128xf32>
    %1524 = arith.addf %1521, %1523 : vector<8x128xf32>
    %1525 = vector.broadcast %70 : f32 to vector<8x128xf32>
    %1526 = arith.mulf %1459, %1525 : vector<8x128xf32>
    %1527 = arith.addf %1524, %1526 : vector<8x128xf32>
    %1528 = vector.broadcast %71 : f32 to vector<8x128xf32>
    %1529 = arith.mulf %1474, %1528 : vector<8x128xf32>
    %1530 = arith.addf %1527, %1529 : vector<8x128xf32>
    %1531 = vector.broadcast %159 : f32 to vector<8x128xf32>
    %1532 = arith.addf %1530, %1531 : vector<8x128xf32>
    %cst_143 = arith.constant 0.000000e+00 : f32
    %1533 = vector.broadcast %cst_143 : f32 to vector<8x128xf32>
    %1534 = arith.maximumf %1532, %1533 : vector<8x128xf32>
    %1535 = vector.broadcast %72 : f32 to vector<8x128xf32>
    %1536 = arith.mulf %1489, %1535 : vector<8x128xf32>
    %1537 = vector.broadcast %73 : f32 to vector<8x128xf32>
    %1538 = arith.mulf %1504, %1537 : vector<8x128xf32>
    %1539 = arith.addf %1536, %1538 : vector<8x128xf32>
    %1540 = vector.broadcast %74 : f32 to vector<8x128xf32>
    %1541 = arith.mulf %1519, %1540 : vector<8x128xf32>
    %1542 = arith.addf %1539, %1541 : vector<8x128xf32>
    %1543 = vector.broadcast %75 : f32 to vector<8x128xf32>
    %1544 = arith.mulf %1534, %1543 : vector<8x128xf32>
    %1545 = arith.addf %1542, %1544 : vector<8x128xf32>
    %1546 = vector.broadcast %160 : f32 to vector<8x128xf32>
    %1547 = arith.addf %1545, %1546 : vector<8x128xf32>
    %cst_144 = arith.constant 0.000000e+00 : f32
    %1548 = vector.broadcast %cst_144 : f32 to vector<8x128xf32>
    %1549 = arith.maximumf %1547, %1548 : vector<8x128xf32>
    %1550 = vector.broadcast %76 : f32 to vector<8x128xf32>
    %1551 = arith.mulf %1489, %1550 : vector<8x128xf32>
    %1552 = vector.broadcast %77 : f32 to vector<8x128xf32>
    %1553 = arith.mulf %1504, %1552 : vector<8x128xf32>
    %1554 = arith.addf %1551, %1553 : vector<8x128xf32>
    %1555 = vector.broadcast %78 : f32 to vector<8x128xf32>
    %1556 = arith.mulf %1519, %1555 : vector<8x128xf32>
    %1557 = arith.addf %1554, %1556 : vector<8x128xf32>
    %1558 = vector.broadcast %79 : f32 to vector<8x128xf32>
    %1559 = arith.mulf %1534, %1558 : vector<8x128xf32>
    %1560 = arith.addf %1557, %1559 : vector<8x128xf32>
    %1561 = vector.broadcast %161 : f32 to vector<8x128xf32>
    %1562 = arith.addf %1560, %1561 : vector<8x128xf32>
    %cst_145 = arith.constant 0.000000e+00 : f32
    %1563 = vector.broadcast %cst_145 : f32 to vector<8x128xf32>
    %1564 = arith.maximumf %1562, %1563 : vector<8x128xf32>
    %1565 = vector.broadcast %80 : f32 to vector<8x128xf32>
    %1566 = arith.mulf %1489, %1565 : vector<8x128xf32>
    %1567 = vector.broadcast %81 : f32 to vector<8x128xf32>
    %1568 = arith.mulf %1504, %1567 : vector<8x128xf32>
    %1569 = arith.addf %1566, %1568 : vector<8x128xf32>
    %1570 = vector.broadcast %82 : f32 to vector<8x128xf32>
    %1571 = arith.mulf %1519, %1570 : vector<8x128xf32>
    %1572 = arith.addf %1569, %1571 : vector<8x128xf32>
    %1573 = vector.broadcast %83 : f32 to vector<8x128xf32>
    %1574 = arith.mulf %1534, %1573 : vector<8x128xf32>
    %1575 = arith.addf %1572, %1574 : vector<8x128xf32>
    %1576 = vector.broadcast %162 : f32 to vector<8x128xf32>
    %1577 = arith.addf %1575, %1576 : vector<8x128xf32>
    %cst_146 = arith.constant 0.000000e+00 : f32
    %1578 = vector.broadcast %cst_146 : f32 to vector<8x128xf32>
    %1579 = arith.maximumf %1577, %1578 : vector<8x128xf32>
    %1580 = vector.broadcast %84 : f32 to vector<8x128xf32>
    %1581 = arith.mulf %1489, %1580 : vector<8x128xf32>
    %1582 = vector.broadcast %85 : f32 to vector<8x128xf32>
    %1583 = arith.mulf %1504, %1582 : vector<8x128xf32>
    %1584 = arith.addf %1581, %1583 : vector<8x128xf32>
    %1585 = vector.broadcast %86 : f32 to vector<8x128xf32>
    %1586 = arith.mulf %1519, %1585 : vector<8x128xf32>
    %1587 = arith.addf %1584, %1586 : vector<8x128xf32>
    %1588 = vector.broadcast %87 : f32 to vector<8x128xf32>
    %1589 = arith.mulf %1534, %1588 : vector<8x128xf32>
    %1590 = arith.addf %1587, %1589 : vector<8x128xf32>
    %1591 = vector.broadcast %163 : f32 to vector<8x128xf32>
    %1592 = arith.addf %1590, %1591 : vector<8x128xf32>
    %cst_147 = arith.constant 0.000000e+00 : f32
    %1593 = vector.broadcast %cst_147 : f32 to vector<8x128xf32>
    %1594 = arith.maximumf %1592, %1593 : vector<8x128xf32>
    %1595 = vector.broadcast %88 : f32 to vector<8x128xf32>
    %1596 = arith.mulf %1549, %1595 : vector<8x128xf32>
    %1597 = vector.broadcast %89 : f32 to vector<8x128xf32>
    %1598 = arith.mulf %1564, %1597 : vector<8x128xf32>
    %1599 = arith.addf %1596, %1598 : vector<8x128xf32>
    %1600 = vector.broadcast %90 : f32 to vector<8x128xf32>
    %1601 = arith.mulf %1579, %1600 : vector<8x128xf32>
    %1602 = arith.addf %1599, %1601 : vector<8x128xf32>
    %1603 = vector.broadcast %91 : f32 to vector<8x128xf32>
    %1604 = arith.mulf %1594, %1603 : vector<8x128xf32>
    %1605 = arith.addf %1602, %1604 : vector<8x128xf32>
    %1606 = vector.broadcast %164 : f32 to vector<8x128xf32>
    %1607 = arith.addf %1605, %1606 : vector<8x128xf32>
    %cst_148 = arith.constant 0.000000e+00 : f32
    %1608 = vector.broadcast %cst_148 : f32 to vector<8x128xf32>
    %1609 = arith.maximumf %1607, %1608 : vector<8x128xf32>
    %1610 = vector.broadcast %92 : f32 to vector<8x128xf32>
    %1611 = arith.mulf %1549, %1610 : vector<8x128xf32>
    %1612 = vector.broadcast %93 : f32 to vector<8x128xf32>
    %1613 = arith.mulf %1564, %1612 : vector<8x128xf32>
    %1614 = arith.addf %1611, %1613 : vector<8x128xf32>
    %1615 = vector.broadcast %94 : f32 to vector<8x128xf32>
    %1616 = arith.mulf %1579, %1615 : vector<8x128xf32>
    %1617 = arith.addf %1614, %1616 : vector<8x128xf32>
    %1618 = vector.broadcast %95 : f32 to vector<8x128xf32>
    %1619 = arith.mulf %1594, %1618 : vector<8x128xf32>
    %1620 = arith.addf %1617, %1619 : vector<8x128xf32>
    %1621 = vector.broadcast %165 : f32 to vector<8x128xf32>
    %1622 = arith.addf %1620, %1621 : vector<8x128xf32>
    %cst_149 = arith.constant 0.000000e+00 : f32
    %1623 = vector.broadcast %cst_149 : f32 to vector<8x128xf32>
    %1624 = arith.maximumf %1622, %1623 : vector<8x128xf32>
    %1625 = vector.broadcast %96 : f32 to vector<8x128xf32>
    %1626 = arith.mulf %1549, %1625 : vector<8x128xf32>
    %1627 = vector.broadcast %97 : f32 to vector<8x128xf32>
    %1628 = arith.mulf %1564, %1627 : vector<8x128xf32>
    %1629 = arith.addf %1626, %1628 : vector<8x128xf32>
    %1630 = vector.broadcast %98 : f32 to vector<8x128xf32>
    %1631 = arith.mulf %1579, %1630 : vector<8x128xf32>
    %1632 = arith.addf %1629, %1631 : vector<8x128xf32>
    %1633 = vector.broadcast %99 : f32 to vector<8x128xf32>
    %1634 = arith.mulf %1594, %1633 : vector<8x128xf32>
    %1635 = arith.addf %1632, %1634 : vector<8x128xf32>
    %1636 = vector.broadcast %166 : f32 to vector<8x128xf32>
    %1637 = arith.addf %1635, %1636 : vector<8x128xf32>
    %cst_150 = arith.constant 0.000000e+00 : f32
    %1638 = vector.broadcast %cst_150 : f32 to vector<8x128xf32>
    %1639 = arith.maximumf %1637, %1638 : vector<8x128xf32>
    %1640 = vector.broadcast %100 : f32 to vector<8x128xf32>
    %1641 = arith.mulf %1549, %1640 : vector<8x128xf32>
    %1642 = vector.broadcast %101 : f32 to vector<8x128xf32>
    %1643 = arith.mulf %1564, %1642 : vector<8x128xf32>
    %1644 = arith.addf %1641, %1643 : vector<8x128xf32>
    %1645 = vector.broadcast %102 : f32 to vector<8x128xf32>
    %1646 = arith.mulf %1579, %1645 : vector<8x128xf32>
    %1647 = arith.addf %1644, %1646 : vector<8x128xf32>
    %1648 = vector.broadcast %103 : f32 to vector<8x128xf32>
    %1649 = arith.mulf %1594, %1648 : vector<8x128xf32>
    %1650 = arith.addf %1647, %1649 : vector<8x128xf32>
    %1651 = vector.broadcast %167 : f32 to vector<8x128xf32>
    %1652 = arith.addf %1650, %1651 : vector<8x128xf32>
    %cst_151 = arith.constant 0.000000e+00 : f32
    %1653 = vector.broadcast %cst_151 : f32 to vector<8x128xf32>
    %1654 = arith.maximumf %1652, %1653 : vector<8x128xf32>
    %1655 = vector.broadcast %104 : f32 to vector<8x128xf32>
    %1656 = arith.mulf %1609, %1655 : vector<8x128xf32>
    %1657 = vector.broadcast %105 : f32 to vector<8x128xf32>
    %1658 = arith.mulf %1624, %1657 : vector<8x128xf32>
    %1659 = arith.addf %1656, %1658 : vector<8x128xf32>
    %1660 = vector.broadcast %106 : f32 to vector<8x128xf32>
    %1661 = arith.mulf %1639, %1660 : vector<8x128xf32>
    %1662 = arith.addf %1659, %1661 : vector<8x128xf32>
    %1663 = vector.broadcast %107 : f32 to vector<8x128xf32>
    %1664 = arith.mulf %1654, %1663 : vector<8x128xf32>
    %1665 = arith.addf %1662, %1664 : vector<8x128xf32>
    %1666 = vector.broadcast %168 : f32 to vector<8x128xf32>
    %1667 = arith.addf %1665, %1666 : vector<8x128xf32>
    %cst_152 = arith.constant 0.000000e+00 : f32
    %1668 = vector.broadcast %cst_152 : f32 to vector<8x128xf32>
    %1669 = arith.maximumf %1667, %1668 : vector<8x128xf32>
    %1670 = vector.broadcast %108 : f32 to vector<8x128xf32>
    %1671 = arith.mulf %1609, %1670 : vector<8x128xf32>
    %1672 = vector.broadcast %109 : f32 to vector<8x128xf32>
    %1673 = arith.mulf %1624, %1672 : vector<8x128xf32>
    %1674 = arith.addf %1671, %1673 : vector<8x128xf32>
    %1675 = vector.broadcast %110 : f32 to vector<8x128xf32>
    %1676 = arith.mulf %1639, %1675 : vector<8x128xf32>
    %1677 = arith.addf %1674, %1676 : vector<8x128xf32>
    %1678 = vector.broadcast %111 : f32 to vector<8x128xf32>
    %1679 = arith.mulf %1654, %1678 : vector<8x128xf32>
    %1680 = arith.addf %1677, %1679 : vector<8x128xf32>
    %1681 = vector.broadcast %169 : f32 to vector<8x128xf32>
    %1682 = arith.addf %1680, %1681 : vector<8x128xf32>
    %cst_153 = arith.constant 0.000000e+00 : f32
    %1683 = vector.broadcast %cst_153 : f32 to vector<8x128xf32>
    %1684 = arith.maximumf %1682, %1683 : vector<8x128xf32>
    %1685 = vector.broadcast %112 : f32 to vector<8x128xf32>
    %1686 = arith.mulf %1609, %1685 : vector<8x128xf32>
    %1687 = vector.broadcast %113 : f32 to vector<8x128xf32>
    %1688 = arith.mulf %1624, %1687 : vector<8x128xf32>
    %1689 = arith.addf %1686, %1688 : vector<8x128xf32>
    %1690 = vector.broadcast %114 : f32 to vector<8x128xf32>
    %1691 = arith.mulf %1639, %1690 : vector<8x128xf32>
    %1692 = arith.addf %1689, %1691 : vector<8x128xf32>
    %1693 = vector.broadcast %115 : f32 to vector<8x128xf32>
    %1694 = arith.mulf %1654, %1693 : vector<8x128xf32>
    %1695 = arith.addf %1692, %1694 : vector<8x128xf32>
    %1696 = vector.broadcast %170 : f32 to vector<8x128xf32>
    %1697 = arith.addf %1695, %1696 : vector<8x128xf32>
    %cst_154 = arith.constant 0.000000e+00 : f32
    %1698 = vector.broadcast %cst_154 : f32 to vector<8x128xf32>
    %1699 = arith.maximumf %1697, %1698 : vector<8x128xf32>
    %1700 = vector.broadcast %116 : f32 to vector<8x128xf32>
    %1701 = arith.mulf %1609, %1700 : vector<8x128xf32>
    %1702 = vector.broadcast %117 : f32 to vector<8x128xf32>
    %1703 = arith.mulf %1624, %1702 : vector<8x128xf32>
    %1704 = arith.addf %1701, %1703 : vector<8x128xf32>
    %1705 = vector.broadcast %118 : f32 to vector<8x128xf32>
    %1706 = arith.mulf %1639, %1705 : vector<8x128xf32>
    %1707 = arith.addf %1704, %1706 : vector<8x128xf32>
    %1708 = vector.broadcast %119 : f32 to vector<8x128xf32>
    %1709 = arith.mulf %1654, %1708 : vector<8x128xf32>
    %1710 = arith.addf %1707, %1709 : vector<8x128xf32>
    %1711 = vector.broadcast %171 : f32 to vector<8x128xf32>
    %1712 = arith.addf %1710, %1711 : vector<8x128xf32>
    %cst_155 = arith.constant 0.000000e+00 : f32
    %1713 = vector.broadcast %cst_155 : f32 to vector<8x128xf32>
    %1714 = arith.maximumf %1712, %1713 : vector<8x128xf32>
    %1715 = vector.broadcast %120 : f32 to vector<8x128xf32>
    %1716 = arith.mulf %1669, %1715 : vector<8x128xf32>
    %1717 = vector.broadcast %121 : f32 to vector<8x128xf32>
    %1718 = arith.mulf %1684, %1717 : vector<8x128xf32>
    %1719 = arith.addf %1716, %1718 : vector<8x128xf32>
    %1720 = vector.broadcast %122 : f32 to vector<8x128xf32>
    %1721 = arith.mulf %1699, %1720 : vector<8x128xf32>
    %1722 = arith.addf %1719, %1721 : vector<8x128xf32>
    %1723 = vector.broadcast %123 : f32 to vector<8x128xf32>
    %1724 = arith.mulf %1714, %1723 : vector<8x128xf32>
    %1725 = arith.addf %1722, %1724 : vector<8x128xf32>
    %1726 = vector.broadcast %172 : f32 to vector<8x128xf32>
    %1727 = arith.addf %1725, %1726 : vector<8x128xf32>
    %cst_156 = arith.constant 0.000000e+00 : f32
    %1728 = vector.broadcast %cst_156 : f32 to vector<8x128xf32>
    %1729 = arith.maximumf %1727, %1728 : vector<8x128xf32>
    %1730 = vector.broadcast %124 : f32 to vector<8x128xf32>
    %1731 = arith.mulf %1669, %1730 : vector<8x128xf32>
    %1732 = vector.broadcast %125 : f32 to vector<8x128xf32>
    %1733 = arith.mulf %1684, %1732 : vector<8x128xf32>
    %1734 = arith.addf %1731, %1733 : vector<8x128xf32>
    %1735 = vector.broadcast %126 : f32 to vector<8x128xf32>
    %1736 = arith.mulf %1699, %1735 : vector<8x128xf32>
    %1737 = arith.addf %1734, %1736 : vector<8x128xf32>
    %1738 = vector.broadcast %127 : f32 to vector<8x128xf32>
    %1739 = arith.mulf %1714, %1738 : vector<8x128xf32>
    %1740 = arith.addf %1737, %1739 : vector<8x128xf32>
    %1741 = vector.broadcast %173 : f32 to vector<8x128xf32>
    %1742 = arith.addf %1740, %1741 : vector<8x128xf32>
    %cst_157 = arith.constant 0.000000e+00 : f32
    %1743 = vector.broadcast %cst_157 : f32 to vector<8x128xf32>
    %1744 = arith.maximumf %1742, %1743 : vector<8x128xf32>
    %1745 = vector.broadcast %128 : f32 to vector<8x128xf32>
    %1746 = arith.mulf %1669, %1745 : vector<8x128xf32>
    %1747 = vector.broadcast %129 : f32 to vector<8x128xf32>
    %1748 = arith.mulf %1684, %1747 : vector<8x128xf32>
    %1749 = arith.addf %1746, %1748 : vector<8x128xf32>
    %1750 = vector.broadcast %130 : f32 to vector<8x128xf32>
    %1751 = arith.mulf %1699, %1750 : vector<8x128xf32>
    %1752 = arith.addf %1749, %1751 : vector<8x128xf32>
    %1753 = vector.broadcast %131 : f32 to vector<8x128xf32>
    %1754 = arith.mulf %1714, %1753 : vector<8x128xf32>
    %1755 = arith.addf %1752, %1754 : vector<8x128xf32>
    %1756 = vector.broadcast %174 : f32 to vector<8x128xf32>
    %1757 = arith.addf %1755, %1756 : vector<8x128xf32>
    %cst_158 = arith.constant 0.000000e+00 : f32
    %1758 = vector.broadcast %cst_158 : f32 to vector<8x128xf32>
    %1759 = arith.maximumf %1757, %1758 : vector<8x128xf32>
    %1760 = vector.broadcast %132 : f32 to vector<8x128xf32>
    %1761 = arith.mulf %1669, %1760 : vector<8x128xf32>
    %1762 = vector.broadcast %133 : f32 to vector<8x128xf32>
    %1763 = arith.mulf %1684, %1762 : vector<8x128xf32>
    %1764 = arith.addf %1761, %1763 : vector<8x128xf32>
    %1765 = vector.broadcast %134 : f32 to vector<8x128xf32>
    %1766 = arith.mulf %1699, %1765 : vector<8x128xf32>
    %1767 = arith.addf %1764, %1766 : vector<8x128xf32>
    %1768 = vector.broadcast %135 : f32 to vector<8x128xf32>
    %1769 = arith.mulf %1714, %1768 : vector<8x128xf32>
    %1770 = arith.addf %1767, %1769 : vector<8x128xf32>
    %1771 = vector.broadcast %175 : f32 to vector<8x128xf32>
    %1772 = arith.addf %1770, %1771 : vector<8x128xf32>
    %cst_159 = arith.constant 0.000000e+00 : f32
    %1773 = vector.broadcast %cst_159 : f32 to vector<8x128xf32>
    %1774 = arith.maximumf %1772, %1773 : vector<8x128xf32>
    %1775 = vector.broadcast %136 : f32 to vector<8x128xf32>
    %1776 = arith.mulf %1729, %1775 : vector<8x128xf32>
    %1777 = vector.broadcast %137 : f32 to vector<8x128xf32>
    %1778 = arith.mulf %1744, %1777 : vector<8x128xf32>
    %1779 = arith.addf %1776, %1778 : vector<8x128xf32>
    %1780 = vector.broadcast %138 : f32 to vector<8x128xf32>
    %1781 = arith.mulf %1759, %1780 : vector<8x128xf32>
    %1782 = arith.addf %1779, %1781 : vector<8x128xf32>
    %1783 = vector.broadcast %139 : f32 to vector<8x128xf32>
    %1784 = arith.mulf %1774, %1783 : vector<8x128xf32>
    %1785 = arith.addf %1782, %1784 : vector<8x128xf32>
    %1786 = vector.broadcast %176 : f32 to vector<8x128xf32>
    %1787 = arith.addf %1785, %1786 : vector<8x128xf32>
    %1788 = arith.negf %1787 : vector<8x128xf32>
    %1789 = math.exp %1788 : vector<8x128xf32>
    %cst_160 = arith.constant 1.000000e+00 : f32
    %1790 = vector.broadcast %cst_160 : f32 to vector<8x128xf32>
    %1791 = arith.addf %1790, %1789 : vector<8x128xf32>
    %1792 = arith.divf %1790, %1791 : vector<8x128xf32>
    %c16_161 = arith.constant 16 : index
    %c0_162 = arith.constant 0 : index
    %1793 = vector.load %arg4[%c16_161, %c0_162] : memref<64x128xf32, #tpu.memory_space<vmem>>, vector<8x128xf32>
    tpu.vector_store %arg4[%c16_161, %c0_162], %1792 {strides = array<i32>} : memref<64x128xf32, #tpu.memory_space<vmem>>, vector<8x128xf32>,
    %c0_163 = arith.constant 0 : index
    %c24_164 = arith.constant 24 : index
    %c0_165 = arith.constant 0 : index
    %1794 = vector.load %arg3[%c0_163, %c24_164, %c0_165] : memref<2x64x128xf32, #tpu.memory_space<vmem>>, vector<1x8x128xf32>
    %1795 = vector.shape_cast %1794 : vector<1x8x128xf32> to vector<8x128xf32>
    %c1_166 = arith.constant 1 : index
    %c24_167 = arith.constant 24 : index
    %c0_168 = arith.constant 0 : index
    %1796 = vector.load %arg3[%c1_166, %c24_167, %c0_168] : memref<2x64x128xf32, #tpu.memory_space<vmem>>, vector<1x8x128xf32>
    %1797 = vector.shape_cast %1796 : vector<1x8x128xf32> to vector<8x128xf32>
    %1798 = vector.broadcast %0 : f32 to vector<8x128xf32>
    %1799 = arith.mulf %1795, %1798 : vector<8x128xf32>
    %1800 = vector.broadcast %1 : f32 to vector<8x128xf32>
    %1801 = arith.mulf %1797, %1800 : vector<8x128xf32>
    %1802 = arith.addf %1799, %1801 : vector<8x128xf32>
    %1803 = vector.broadcast %140 : f32 to vector<8x128xf32>
    %1804 = arith.addf %1802, %1803 : vector<8x128xf32>
    %cst_169 = arith.constant 0.000000e+00 : f32
    %1805 = vector.broadcast %cst_169 : f32 to vector<8x128xf32>
    %1806 = arith.maximumf %1804, %1805 : vector<8x128xf32>
    %1807 = vector.broadcast %2 : f32 to vector<8x128xf32>
    %1808 = arith.mulf %1795, %1807 : vector<8x128xf32>
    %1809 = vector.broadcast %3 : f32 to vector<8x128xf32>
    %1810 = arith.mulf %1797, %1809 : vector<8x128xf32>
    %1811 = arith.addf %1808, %1810 : vector<8x128xf32>
    %1812 = vector.broadcast %141 : f32 to vector<8x128xf32>
    %1813 = arith.addf %1811, %1812 : vector<8x128xf32>
    %cst_170 = arith.constant 0.000000e+00 : f32
    %1814 = vector.broadcast %cst_170 : f32 to vector<8x128xf32>
    %1815 = arith.maximumf %1813, %1814 : vector<8x128xf32>
    %1816 = vector.broadcast %4 : f32 to vector<8x128xf32>
    %1817 = arith.mulf %1795, %1816 : vector<8x128xf32>
    %1818 = vector.broadcast %5 : f32 to vector<8x128xf32>
    %1819 = arith.mulf %1797, %1818 : vector<8x128xf32>
    %1820 = arith.addf %1817, %1819 : vector<8x128xf32>
    %1821 = vector.broadcast %142 : f32 to vector<8x128xf32>
    %1822 = arith.addf %1820, %1821 : vector<8x128xf32>
    %cst_171 = arith.constant 0.000000e+00 : f32
    %1823 = vector.broadcast %cst_171 : f32 to vector<8x128xf32>
    %1824 = arith.maximumf %1822, %1823 : vector<8x128xf32>
    %1825 = vector.broadcast %6 : f32 to vector<8x128xf32>
    %1826 = arith.mulf %1795, %1825 : vector<8x128xf32>
    %1827 = vector.broadcast %7 : f32 to vector<8x128xf32>
    %1828 = arith.mulf %1797, %1827 : vector<8x128xf32>
    %1829 = arith.addf %1826, %1828 : vector<8x128xf32>
    %1830 = vector.broadcast %143 : f32 to vector<8x128xf32>
    %1831 = arith.addf %1829, %1830 : vector<8x128xf32>
    %cst_172 = arith.constant 0.000000e+00 : f32
    %1832 = vector.broadcast %cst_172 : f32 to vector<8x128xf32>
    %1833 = arith.maximumf %1831, %1832 : vector<8x128xf32>
    %1834 = vector.broadcast %8 : f32 to vector<8x128xf32>
    %1835 = arith.mulf %1806, %1834 : vector<8x128xf32>
    %1836 = vector.broadcast %9 : f32 to vector<8x128xf32>
    %1837 = arith.mulf %1815, %1836 : vector<8x128xf32>
    %1838 = arith.addf %1835, %1837 : vector<8x128xf32>
    %1839 = vector.broadcast %10 : f32 to vector<8x128xf32>
    %1840 = arith.mulf %1824, %1839 : vector<8x128xf32>
    %1841 = arith.addf %1838, %1840 : vector<8x128xf32>
    %1842 = vector.broadcast %11 : f32 to vector<8x128xf32>
    %1843 = arith.mulf %1833, %1842 : vector<8x128xf32>
    %1844 = arith.addf %1841, %1843 : vector<8x128xf32>
    %1845 = vector.broadcast %144 : f32 to vector<8x128xf32>
    %1846 = arith.addf %1844, %1845 : vector<8x128xf32>
    %cst_173 = arith.constant 0.000000e+00 : f32
    %1847 = vector.broadcast %cst_173 : f32 to vector<8x128xf32>
    %1848 = arith.maximumf %1846, %1847 : vector<8x128xf32>
    %1849 = vector.broadcast %12 : f32 to vector<8x128xf32>
    %1850 = arith.mulf %1806, %1849 : vector<8x128xf32>
    %1851 = vector.broadcast %13 : f32 to vector<8x128xf32>
    %1852 = arith.mulf %1815, %1851 : vector<8x128xf32>
    %1853 = arith.addf %1850, %1852 : vector<8x128xf32>
    %1854 = vector.broadcast %14 : f32 to vector<8x128xf32>
    %1855 = arith.mulf %1824, %1854 : vector<8x128xf32>
    %1856 = arith.addf %1853, %1855 : vector<8x128xf32>
    %1857 = vector.broadcast %15 : f32 to vector<8x128xf32>
    %1858 = arith.mulf %1833, %1857 : vector<8x128xf32>
    %1859 = arith.addf %1856, %1858 : vector<8x128xf32>
    %1860 = vector.broadcast %145 : f32 to vector<8x128xf32>
    %1861 = arith.addf %1859, %1860 : vector<8x128xf32>
    %cst_174 = arith.constant 0.000000e+00 : f32
    %1862 = vector.broadcast %cst_174 : f32 to vector<8x128xf32>
    %1863 = arith.maximumf %1861, %1862 : vector<8x128xf32>
    %1864 = vector.broadcast %16 : f32 to vector<8x128xf32>
    %1865 = arith.mulf %1806, %1864 : vector<8x128xf32>
    %1866 = vector.broadcast %17 : f32 to vector<8x128xf32>
    %1867 = arith.mulf %1815, %1866 : vector<8x128xf32>
    %1868 = arith.addf %1865, %1867 : vector<8x128xf32>
    %1869 = vector.broadcast %18 : f32 to vector<8x128xf32>
    %1870 = arith.mulf %1824, %1869 : vector<8x128xf32>
    %1871 = arith.addf %1868, %1870 : vector<8x128xf32>
    %1872 = vector.broadcast %19 : f32 to vector<8x128xf32>
    %1873 = arith.mulf %1833, %1872 : vector<8x128xf32>
    %1874 = arith.addf %1871, %1873 : vector<8x128xf32>
    %1875 = vector.broadcast %146 : f32 to vector<8x128xf32>
    %1876 = arith.addf %1874, %1875 : vector<8x128xf32>
    %cst_175 = arith.constant 0.000000e+00 : f32
    %1877 = vector.broadcast %cst_175 : f32 to vector<8x128xf32>
    %1878 = arith.maximumf %1876, %1877 : vector<8x128xf32>
    %1879 = vector.broadcast %20 : f32 to vector<8x128xf32>
    %1880 = arith.mulf %1806, %1879 : vector<8x128xf32>
    %1881 = vector.broadcast %21 : f32 to vector<8x128xf32>
    %1882 = arith.mulf %1815, %1881 : vector<8x128xf32>
    %1883 = arith.addf %1880, %1882 : vector<8x128xf32>
    %1884 = vector.broadcast %22 : f32 to vector<8x128xf32>
    %1885 = arith.mulf %1824, %1884 : vector<8x128xf32>
    %1886 = arith.addf %1883, %1885 : vector<8x128xf32>
    %1887 = vector.broadcast %23 : f32 to vector<8x128xf32>
    %1888 = arith.mulf %1833, %1887 : vector<8x128xf32>
    %1889 = arith.addf %1886, %1888 : vector<8x128xf32>
    %1890 = vector.broadcast %147 : f32 to vector<8x128xf32>
    %1891 = arith.addf %1889, %1890 : vector<8x128xf32>
    %cst_176 = arith.constant 0.000000e+00 : f32
    %1892 = vector.broadcast %cst_176 : f32 to vector<8x128xf32>
    %1893 = arith.maximumf %1891, %1892 : vector<8x128xf32>
    %1894 = vector.broadcast %24 : f32 to vector<8x128xf32>
    %1895 = arith.mulf %1848, %1894 : vector<8x128xf32>
    %1896 = vector.broadcast %25 : f32 to vector<8x128xf32>
    %1897 = arith.mulf %1863, %1896 : vector<8x128xf32>
    %1898 = arith.addf %1895, %1897 : vector<8x128xf32>
    %1899 = vector.broadcast %26 : f32 to vector<8x128xf32>
    %1900 = arith.mulf %1878, %1899 : vector<8x128xf32>
    %1901 = arith.addf %1898, %1900 : vector<8x128xf32>
    %1902 = vector.broadcast %27 : f32 to vector<8x128xf32>
    %1903 = arith.mulf %1893, %1902 : vector<8x128xf32>
    %1904 = arith.addf %1901, %1903 : vector<8x128xf32>
    %1905 = vector.broadcast %148 : f32 to vector<8x128xf32>
    %1906 = arith.addf %1904, %1905 : vector<8x128xf32>
    %cst_177 = arith.constant 0.000000e+00 : f32
    %1907 = vector.broadcast %cst_177 : f32 to vector<8x128xf32>
    %1908 = arith.maximumf %1906, %1907 : vector<8x128xf32>
    %1909 = vector.broadcast %28 : f32 to vector<8x128xf32>
    %1910 = arith.mulf %1848, %1909 : vector<8x128xf32>
    %1911 = vector.broadcast %29 : f32 to vector<8x128xf32>
    %1912 = arith.mulf %1863, %1911 : vector<8x128xf32>
    %1913 = arith.addf %1910, %1912 : vector<8x128xf32>
    %1914 = vector.broadcast %30 : f32 to vector<8x128xf32>
    %1915 = arith.mulf %1878, %1914 : vector<8x128xf32>
    %1916 = arith.addf %1913, %1915 : vector<8x128xf32>
    %1917 = vector.broadcast %31 : f32 to vector<8x128xf32>
    %1918 = arith.mulf %1893, %1917 : vector<8x128xf32>
    %1919 = arith.addf %1916, %1918 : vector<8x128xf32>
    %1920 = vector.broadcast %149 : f32 to vector<8x128xf32>
    %1921 = arith.addf %1919, %1920 : vector<8x128xf32>
    %cst_178 = arith.constant 0.000000e+00 : f32
    %1922 = vector.broadcast %cst_178 : f32 to vector<8x128xf32>
    %1923 = arith.maximumf %1921, %1922 : vector<8x128xf32>
    %1924 = vector.broadcast %32 : f32 to vector<8x128xf32>
    %1925 = arith.mulf %1848, %1924 : vector<8x128xf32>
    %1926 = vector.broadcast %33 : f32 to vector<8x128xf32>
    %1927 = arith.mulf %1863, %1926 : vector<8x128xf32>
    %1928 = arith.addf %1925, %1927 : vector<8x128xf32>
    %1929 = vector.broadcast %34 : f32 to vector<8x128xf32>
    %1930 = arith.mulf %1878, %1929 : vector<8x128xf32>
    %1931 = arith.addf %1928, %1930 : vector<8x128xf32>
    %1932 = vector.broadcast %35 : f32 to vector<8x128xf32>
    %1933 = arith.mulf %1893, %1932 : vector<8x128xf32>
    %1934 = arith.addf %1931, %1933 : vector<8x128xf32>
    %1935 = vector.broadcast %150 : f32 to vector<8x128xf32>
    %1936 = arith.addf %1934, %1935 : vector<8x128xf32>
    %cst_179 = arith.constant 0.000000e+00 : f32
    %1937 = vector.broadcast %cst_179 : f32 to vector<8x128xf32>
    %1938 = arith.maximumf %1936, %1937 : vector<8x128xf32>
    %1939 = vector.broadcast %36 : f32 to vector<8x128xf32>
    %1940 = arith.mulf %1848, %1939 : vector<8x128xf32>
    %1941 = vector.broadcast %37 : f32 to vector<8x128xf32>
    %1942 = arith.mulf %1863, %1941 : vector<8x128xf32>
    %1943 = arith.addf %1940, %1942 : vector<8x128xf32>
    %1944 = vector.broadcast %38 : f32 to vector<8x128xf32>
    %1945 = arith.mulf %1878, %1944 : vector<8x128xf32>
    %1946 = arith.addf %1943, %1945 : vector<8x128xf32>
    %1947 = vector.broadcast %39 : f32 to vector<8x128xf32>
    %1948 = arith.mulf %1893, %1947 : vector<8x128xf32>
    %1949 = arith.addf %1946, %1948 : vector<8x128xf32>
    %1950 = vector.broadcast %151 : f32 to vector<8x128xf32>
    %1951 = arith.addf %1949, %1950 : vector<8x128xf32>
    %cst_180 = arith.constant 0.000000e+00 : f32
    %1952 = vector.broadcast %cst_180 : f32 to vector<8x128xf32>
    %1953 = arith.maximumf %1951, %1952 : vector<8x128xf32>
    %1954 = vector.broadcast %40 : f32 to vector<8x128xf32>
    %1955 = arith.mulf %1908, %1954 : vector<8x128xf32>
    %1956 = vector.broadcast %41 : f32 to vector<8x128xf32>
    %1957 = arith.mulf %1923, %1956 : vector<8x128xf32>
    %1958 = arith.addf %1955, %1957 : vector<8x128xf32>
    %1959 = vector.broadcast %42 : f32 to vector<8x128xf32>
    %1960 = arith.mulf %1938, %1959 : vector<8x128xf32>
    %1961 = arith.addf %1958, %1960 : vector<8x128xf32>
    %1962 = vector.broadcast %43 : f32 to vector<8x128xf32>
    %1963 = arith.mulf %1953, %1962 : vector<8x128xf32>
    %1964 = arith.addf %1961, %1963 : vector<8x128xf32>
    %1965 = vector.broadcast %152 : f32 to vector<8x128xf32>
    %1966 = arith.addf %1964, %1965 : vector<8x128xf32>
    %cst_181 = arith.constant 0.000000e+00 : f32
    %1967 = vector.broadcast %cst_181 : f32 to vector<8x128xf32>
    %1968 = arith.maximumf %1966, %1967 : vector<8x128xf32>
    %1969 = vector.broadcast %44 : f32 to vector<8x128xf32>
    %1970 = arith.mulf %1908, %1969 : vector<8x128xf32>
    %1971 = vector.broadcast %45 : f32 to vector<8x128xf32>
    %1972 = arith.mulf %1923, %1971 : vector<8x128xf32>
    %1973 = arith.addf %1970, %1972 : vector<8x128xf32>
    %1974 = vector.broadcast %46 : f32 to vector<8x128xf32>
    %1975 = arith.mulf %1938, %1974 : vector<8x128xf32>
    %1976 = arith.addf %1973, %1975 : vector<8x128xf32>
    %1977 = vector.broadcast %47 : f32 to vector<8x128xf32>
    %1978 = arith.mulf %1953, %1977 : vector<8x128xf32>
    %1979 = arith.addf %1976, %1978 : vector<8x128xf32>
    %1980 = vector.broadcast %153 : f32 to vector<8x128xf32>
    %1981 = arith.addf %1979, %1980 : vector<8x128xf32>
    %cst_182 = arith.constant 0.000000e+00 : f32
    %1982 = vector.broadcast %cst_182 : f32 to vector<8x128xf32>
    %1983 = arith.maximumf %1981, %1982 : vector<8x128xf32>
    %1984 = vector.broadcast %48 : f32 to vector<8x128xf32>
    %1985 = arith.mulf %1908, %1984 : vector<8x128xf32>
    %1986 = vector.broadcast %49 : f32 to vector<8x128xf32>
    %1987 = arith.mulf %1923, %1986 : vector<8x128xf32>
    %1988 = arith.addf %1985, %1987 : vector<8x128xf32>
    %1989 = vector.broadcast %50 : f32 to vector<8x128xf32>
    %1990 = arith.mulf %1938, %1989 : vector<8x128xf32>
    %1991 = arith.addf %1988, %1990 : vector<8x128xf32>
    %1992 = vector.broadcast %51 : f32 to vector<8x128xf32>
    %1993 = arith.mulf %1953, %1992 : vector<8x128xf32>
    %1994 = arith.addf %1991, %1993 : vector<8x128xf32>
    %1995 = vector.broadcast %154 : f32 to vector<8x128xf32>
    %1996 = arith.addf %1994, %1995 : vector<8x128xf32>
    %cst_183 = arith.constant 0.000000e+00 : f32
    %1997 = vector.broadcast %cst_183 : f32 to vector<8x128xf32>
    %1998 = arith.maximumf %1996, %1997 : vector<8x128xf32>
    %1999 = vector.broadcast %52 : f32 to vector<8x128xf32>
    %2000 = arith.mulf %1908, %1999 : vector<8x128xf32>
    %2001 = vector.broadcast %53 : f32 to vector<8x128xf32>
    %2002 = arith.mulf %1923, %2001 : vector<8x128xf32>
    %2003 = arith.addf %2000, %2002 : vector<8x128xf32>
    %2004 = vector.broadcast %54 : f32 to vector<8x128xf32>
    %2005 = arith.mulf %1938, %2004 : vector<8x128xf32>
    %2006 = arith.addf %2003, %2005 : vector<8x128xf32>
    %2007 = vector.broadcast %55 : f32 to vector<8x128xf32>
    %2008 = arith.mulf %1953, %2007 : vector<8x128xf32>
    %2009 = arith.addf %2006, %2008 : vector<8x128xf32>
    %2010 = vector.broadcast %155 : f32 to vector<8x128xf32>
    %2011 = arith.addf %2009, %2010 : vector<8x128xf32>
    %cst_184 = arith.constant 0.000000e+00 : f32
    %2012 = vector.broadcast %cst_184 : f32 to vector<8x128xf32>
    %2013 = arith.maximumf %2011, %2012 : vector<8x128xf32>
    %2014 = vector.broadcast %56 : f32 to vector<8x128xf32>
    %2015 = arith.mulf %1968, %2014 : vector<8x128xf32>
    %2016 = vector.broadcast %57 : f32 to vector<8x128xf32>
    %2017 = arith.mulf %1983, %2016 : vector<8x128xf32>
    %2018 = arith.addf %2015, %2017 : vector<8x128xf32>
    %2019 = vector.broadcast %58 : f32 to vector<8x128xf32>
    %2020 = arith.mulf %1998, %2019 : vector<8x128xf32>
    %2021 = arith.addf %2018, %2020 : vector<8x128xf32>
    %2022 = vector.broadcast %59 : f32 to vector<8x128xf32>
    %2023 = arith.mulf %2013, %2022 : vector<8x128xf32>
    %2024 = arith.addf %2021, %2023 : vector<8x128xf32>
    %2025 = vector.broadcast %156 : f32 to vector<8x128xf32>
    %2026 = arith.addf %2024, %2025 : vector<8x128xf32>
    %cst_185 = arith.constant 0.000000e+00 : f32
    %2027 = vector.broadcast %cst_185 : f32 to vector<8x128xf32>
    %2028 = arith.maximumf %2026, %2027 : vector<8x128xf32>
    %2029 = vector.broadcast %60 : f32 to vector<8x128xf32>
    %2030 = arith.mulf %1968, %2029 : vector<8x128xf32>
    %2031 = vector.broadcast %61 : f32 to vector<8x128xf32>
    %2032 = arith.mulf %1983, %2031 : vector<8x128xf32>
    %2033 = arith.addf %2030, %2032 : vector<8x128xf32>
    %2034 = vector.broadcast %62 : f32 to vector<8x128xf32>
    %2035 = arith.mulf %1998, %2034 : vector<8x128xf32>
    %2036 = arith.addf %2033, %2035 : vector<8x128xf32>
    %2037 = vector.broadcast %63 : f32 to vector<8x128xf32>
    %2038 = arith.mulf %2013, %2037 : vector<8x128xf32>
    %2039 = arith.addf %2036, %2038 : vector<8x128xf32>
    %2040 = vector.broadcast %157 : f32 to vector<8x128xf32>
    %2041 = arith.addf %2039, %2040 : vector<8x128xf32>
    %cst_186 = arith.constant 0.000000e+00 : f32
    %2042 = vector.broadcast %cst_186 : f32 to vector<8x128xf32>
    %2043 = arith.maximumf %2041, %2042 : vector<8x128xf32>
    %2044 = vector.broadcast %64 : f32 to vector<8x128xf32>
    %2045 = arith.mulf %1968, %2044 : vector<8x128xf32>
    %2046 = vector.broadcast %65 : f32 to vector<8x128xf32>
    %2047 = arith.mulf %1983, %2046 : vector<8x128xf32>
    %2048 = arith.addf %2045, %2047 : vector<8x128xf32>
    %2049 = vector.broadcast %66 : f32 to vector<8x128xf32>
    %2050 = arith.mulf %1998, %2049 : vector<8x128xf32>
    %2051 = arith.addf %2048, %2050 : vector<8x128xf32>
    %2052 = vector.broadcast %67 : f32 to vector<8x128xf32>
    %2053 = arith.mulf %2013, %2052 : vector<8x128xf32>
    %2054 = arith.addf %2051, %2053 : vector<8x128xf32>
    %2055 = vector.broadcast %158 : f32 to vector<8x128xf32>
    %2056 = arith.addf %2054, %2055 : vector<8x128xf32>
    %cst_187 = arith.constant 0.000000e+00 : f32
    %2057 = vector.broadcast %cst_187 : f32 to vector<8x128xf32>
    %2058 = arith.maximumf %2056, %2057 : vector<8x128xf32>
    %2059 = vector.broadcast %68 : f32 to vector<8x128xf32>
    %2060 = arith.mulf %1968, %2059 : vector<8x128xf32>
    %2061 = vector.broadcast %69 : f32 to vector<8x128xf32>
    %2062 = arith.mulf %1983, %2061 : vector<8x128xf32>
    %2063 = arith.addf %2060, %2062 : vector<8x128xf32>
    %2064 = vector.broadcast %70 : f32 to vector<8x128xf32>
    %2065 = arith.mulf %1998, %2064 : vector<8x128xf32>
    %2066 = arith.addf %2063, %2065 : vector<8x128xf32>
    %2067 = vector.broadcast %71 : f32 to vector<8x128xf32>
    %2068 = arith.mulf %2013, %2067 : vector<8x128xf32>
    %2069 = arith.addf %2066, %2068 : vector<8x128xf32>
    %2070 = vector.broadcast %159 : f32 to vector<8x128xf32>
    %2071 = arith.addf %2069, %2070 : vector<8x128xf32>
    %cst_188 = arith.constant 0.000000e+00 : f32
    %2072 = vector.broadcast %cst_188 : f32 to vector<8x128xf32>
    %2073 = arith.maximumf %2071, %2072 : vector<8x128xf32>
    %2074 = vector.broadcast %72 : f32 to vector<8x128xf32>
    %2075 = arith.mulf %2028, %2074 : vector<8x128xf32>
    %2076 = vector.broadcast %73 : f32 to vector<8x128xf32>
    %2077 = arith.mulf %2043, %2076 : vector<8x128xf32>
    %2078 = arith.addf %2075, %2077 : vector<8x128xf32>
    %2079 = vector.broadcast %74 : f32 to vector<8x128xf32>
    %2080 = arith.mulf %2058, %2079 : vector<8x128xf32>
    %2081 = arith.addf %2078, %2080 : vector<8x128xf32>
    %2082 = vector.broadcast %75 : f32 to vector<8x128xf32>
    %2083 = arith.mulf %2073, %2082 : vector<8x128xf32>
    %2084 = arith.addf %2081, %2083 : vector<8x128xf32>
    %2085 = vector.broadcast %160 : f32 to vector<8x128xf32>
    %2086 = arith.addf %2084, %2085 : vector<8x128xf32>
    %cst_189 = arith.constant 0.000000e+00 : f32
    %2087 = vector.broadcast %cst_189 : f32 to vector<8x128xf32>
    %2088 = arith.maximumf %2086, %2087 : vector<8x128xf32>
    %2089 = vector.broadcast %76 : f32 to vector<8x128xf32>
    %2090 = arith.mulf %2028, %2089 : vector<8x128xf32>
    %2091 = vector.broadcast %77 : f32 to vector<8x128xf32>
    %2092 = arith.mulf %2043, %2091 : vector<8x128xf32>
    %2093 = arith.addf %2090, %2092 : vector<8x128xf32>
    %2094 = vector.broadcast %78 : f32 to vector<8x128xf32>
    %2095 = arith.mulf %2058, %2094 : vector<8x128xf32>
    %2096 = arith.addf %2093, %2095 : vector<8x128xf32>
    %2097 = vector.broadcast %79 : f32 to vector<8x128xf32>
    %2098 = arith.mulf %2073, %2097 : vector<8x128xf32>
    %2099 = arith.addf %2096, %2098 : vector<8x128xf32>
    %2100 = vector.broadcast %161 : f32 to vector<8x128xf32>
    %2101 = arith.addf %2099, %2100 : vector<8x128xf32>
    %cst_190 = arith.constant 0.000000e+00 : f32
    %2102 = vector.broadcast %cst_190 : f32 to vector<8x128xf32>
    %2103 = arith.maximumf %2101, %2102 : vector<8x128xf32>
    %2104 = vector.broadcast %80 : f32 to vector<8x128xf32>
    %2105 = arith.mulf %2028, %2104 : vector<8x128xf32>
    %2106 = vector.broadcast %81 : f32 to vector<8x128xf32>
    %2107 = arith.mulf %2043, %2106 : vector<8x128xf32>
    %2108 = arith.addf %2105, %2107 : vector<8x128xf32>
    %2109 = vector.broadcast %82 : f32 to vector<8x128xf32>
    %2110 = arith.mulf %2058, %2109 : vector<8x128xf32>
    %2111 = arith.addf %2108, %2110 : vector<8x128xf32>
    %2112 = vector.broadcast %83 : f32 to vector<8x128xf32>
    %2113 = arith.mulf %2073, %2112 : vector<8x128xf32>
    %2114 = arith.addf %2111, %2113 : vector<8x128xf32>
    %2115 = vector.broadcast %162 : f32 to vector<8x128xf32>
    %2116 = arith.addf %2114, %2115 : vector<8x128xf32>
    %cst_191 = arith.constant 0.000000e+00 : f32
    %2117 = vector.broadcast %cst_191 : f32 to vector<8x128xf32>
    %2118 = arith.maximumf %2116, %2117 : vector<8x128xf32>
    %2119 = vector.broadcast %84 : f32 to vector<8x128xf32>
    %2120 = arith.mulf %2028, %2119 : vector<8x128xf32>
    %2121 = vector.broadcast %85 : f32 to vector<8x128xf32>
    %2122 = arith.mulf %2043, %2121 : vector<8x128xf32>
    %2123 = arith.addf %2120, %2122 : vector<8x128xf32>
    %2124 = vector.broadcast %86 : f32 to vector<8x128xf32>
    %2125 = arith.mulf %2058, %2124 : vector<8x128xf32>
    %2126 = arith.addf %2123, %2125 : vector<8x128xf32>
    %2127 = vector.broadcast %87 : f32 to vector<8x128xf32>
    %2128 = arith.mulf %2073, %2127 : vector<8x128xf32>
    %2129 = arith.addf %2126, %2128 : vector<8x128xf32>
    %2130 = vector.broadcast %163 : f32 to vector<8x128xf32>
    %2131 = arith.addf %2129, %2130 : vector<8x128xf32>
    %cst_192 = arith.constant 0.000000e+00 : f32
    %2132 = vector.broadcast %cst_192 : f32 to vector<8x128xf32>
    %2133 = arith.maximumf %2131, %2132 : vector<8x128xf32>
    %2134 = vector.broadcast %88 : f32 to vector<8x128xf32>
    %2135 = arith.mulf %2088, %2134 : vector<8x128xf32>
    %2136 = vector.broadcast %89 : f32 to vector<8x128xf32>
    %2137 = arith.mulf %2103, %2136 : vector<8x128xf32>
    %2138 = arith.addf %2135, %2137 : vector<8x128xf32>
    %2139 = vector.broadcast %90 : f32 to vector<8x128xf32>
    %2140 = arith.mulf %2118, %2139 : vector<8x128xf32>
    %2141 = arith.addf %2138, %2140 : vector<8x128xf32>
    %2142 = vector.broadcast %91 : f32 to vector<8x128xf32>
    %2143 = arith.mulf %2133, %2142 : vector<8x128xf32>
    %2144 = arith.addf %2141, %2143 : vector<8x128xf32>
    %2145 = vector.broadcast %164 : f32 to vector<8x128xf32>
    %2146 = arith.addf %2144, %2145 : vector<8x128xf32>
    %cst_193 = arith.constant 0.000000e+00 : f32
    %2147 = vector.broadcast %cst_193 : f32 to vector<8x128xf32>
    %2148 = arith.maximumf %2146, %2147 : vector<8x128xf32>
    %2149 = vector.broadcast %92 : f32 to vector<8x128xf32>
    %2150 = arith.mulf %2088, %2149 : vector<8x128xf32>
    %2151 = vector.broadcast %93 : f32 to vector<8x128xf32>
    %2152 = arith.mulf %2103, %2151 : vector<8x128xf32>
    %2153 = arith.addf %2150, %2152 : vector<8x128xf32>
    %2154 = vector.broadcast %94 : f32 to vector<8x128xf32>
    %2155 = arith.mulf %2118, %2154 : vector<8x128xf32>
    %2156 = arith.addf %2153, %2155 : vector<8x128xf32>
    %2157 = vector.broadcast %95 : f32 to vector<8x128xf32>
    %2158 = arith.mulf %2133, %2157 : vector<8x128xf32>
    %2159 = arith.addf %2156, %2158 : vector<8x128xf32>
    %2160 = vector.broadcast %165 : f32 to vector<8x128xf32>
    %2161 = arith.addf %2159, %2160 : vector<8x128xf32>
    %cst_194 = arith.constant 0.000000e+00 : f32
    %2162 = vector.broadcast %cst_194 : f32 to vector<8x128xf32>
    %2163 = arith.maximumf %2161, %2162 : vector<8x128xf32>
    %2164 = vector.broadcast %96 : f32 to vector<8x128xf32>
    %2165 = arith.mulf %2088, %2164 : vector<8x128xf32>
    %2166 = vector.broadcast %97 : f32 to vector<8x128xf32>
    %2167 = arith.mulf %2103, %2166 : vector<8x128xf32>
    %2168 = arith.addf %2165, %2167 : vector<8x128xf32>
    %2169 = vector.broadcast %98 : f32 to vector<8x128xf32>
    %2170 = arith.mulf %2118, %2169 : vector<8x128xf32>
    %2171 = arith.addf %2168, %2170 : vector<8x128xf32>
    %2172 = vector.broadcast %99 : f32 to vector<8x128xf32>
    %2173 = arith.mulf %2133, %2172 : vector<8x128xf32>
    %2174 = arith.addf %2171, %2173 : vector<8x128xf32>
    %2175 = vector.broadcast %166 : f32 to vector<8x128xf32>
    %2176 = arith.addf %2174, %2175 : vector<8x128xf32>
    %cst_195 = arith.constant 0.000000e+00 : f32
    %2177 = vector.broadcast %cst_195 : f32 to vector<8x128xf32>
    %2178 = arith.maximumf %2176, %2177 : vector<8x128xf32>
    %2179 = vector.broadcast %100 : f32 to vector<8x128xf32>
    %2180 = arith.mulf %2088, %2179 : vector<8x128xf32>
    %2181 = vector.broadcast %101 : f32 to vector<8x128xf32>
    %2182 = arith.mulf %2103, %2181 : vector<8x128xf32>
    %2183 = arith.addf %2180, %2182 : vector<8x128xf32>
    %2184 = vector.broadcast %102 : f32 to vector<8x128xf32>
    %2185 = arith.mulf %2118, %2184 : vector<8x128xf32>
    %2186 = arith.addf %2183, %2185 : vector<8x128xf32>
    %2187 = vector.broadcast %103 : f32 to vector<8x128xf32>
    %2188 = arith.mulf %2133, %2187 : vector<8x128xf32>
    %2189 = arith.addf %2186, %2188 : vector<8x128xf32>
    %2190 = vector.broadcast %167 : f32 to vector<8x128xf32>
    %2191 = arith.addf %2189, %2190 : vector<8x128xf32>
    %cst_196 = arith.constant 0.000000e+00 : f32
    %2192 = vector.broadcast %cst_196 : f32 to vector<8x128xf32>
    %2193 = arith.maximumf %2191, %2192 : vector<8x128xf32>
    %2194 = vector.broadcast %104 : f32 to vector<8x128xf32>
    %2195 = arith.mulf %2148, %2194 : vector<8x128xf32>
    %2196 = vector.broadcast %105 : f32 to vector<8x128xf32>
    %2197 = arith.mulf %2163, %2196 : vector<8x128xf32>
    %2198 = arith.addf %2195, %2197 : vector<8x128xf32>
    %2199 = vector.broadcast %106 : f32 to vector<8x128xf32>
    %2200 = arith.mulf %2178, %2199 : vector<8x128xf32>
    %2201 = arith.addf %2198, %2200 : vector<8x128xf32>
    %2202 = vector.broadcast %107 : f32 to vector<8x128xf32>
    %2203 = arith.mulf %2193, %2202 : vector<8x128xf32>
    %2204 = arith.addf %2201, %2203 : vector<8x128xf32>
    %2205 = vector.broadcast %168 : f32 to vector<8x128xf32>
    %2206 = arith.addf %2204, %2205 : vector<8x128xf32>
    %cst_197 = arith.constant 0.000000e+00 : f32
    %2207 = vector.broadcast %cst_197 : f32 to vector<8x128xf32>
    %2208 = arith.maximumf %2206, %2207 : vector<8x128xf32>
    %2209 = vector.broadcast %108 : f32 to vector<8x128xf32>
    %2210 = arith.mulf %2148, %2209 : vector<8x128xf32>
    %2211 = vector.broadcast %109 : f32 to vector<8x128xf32>
    %2212 = arith.mulf %2163, %2211 : vector<8x128xf32>
    %2213 = arith.addf %2210, %2212 : vector<8x128xf32>
    %2214 = vector.broadcast %110 : f32 to vector<8x128xf32>
    %2215 = arith.mulf %2178, %2214 : vector<8x128xf32>
    %2216 = arith.addf %2213, %2215 : vector<8x128xf32>
    %2217 = vector.broadcast %111 : f32 to vector<8x128xf32>
    %2218 = arith.mulf %2193, %2217 : vector<8x128xf32>
    %2219 = arith.addf %2216, %2218 : vector<8x128xf32>
    %2220 = vector.broadcast %169 : f32 to vector<8x128xf32>
    %2221 = arith.addf %2219, %2220 : vector<8x128xf32>
    %cst_198 = arith.constant 0.000000e+00 : f32
    %2222 = vector.broadcast %cst_198 : f32 to vector<8x128xf32>
    %2223 = arith.maximumf %2221, %2222 : vector<8x128xf32>
    %2224 = vector.broadcast %112 : f32 to vector<8x128xf32>
    %2225 = arith.mulf %2148, %2224 : vector<8x128xf32>
    %2226 = vector.broadcast %113 : f32 to vector<8x128xf32>
    %2227 = arith.mulf %2163, %2226 : vector<8x128xf32>
    %2228 = arith.addf %2225, %2227 : vector<8x128xf32>
    %2229 = vector.broadcast %114 : f32 to vector<8x128xf32>
    %2230 = arith.mulf %2178, %2229 : vector<8x128xf32>
    %2231 = arith.addf %2228, %2230 : vector<8x128xf32>
    %2232 = vector.broadcast %115 : f32 to vector<8x128xf32>
    %2233 = arith.mulf %2193, %2232 : vector<8x128xf32>
    %2234 = arith.addf %2231, %2233 : vector<8x128xf32>
    %2235 = vector.broadcast %170 : f32 to vector<8x128xf32>
    %2236 = arith.addf %2234, %2235 : vector<8x128xf32>
    %cst_199 = arith.constant 0.000000e+00 : f32
    %2237 = vector.broadcast %cst_199 : f32 to vector<8x128xf32>
    %2238 = arith.maximumf %2236, %2237 : vector<8x128xf32>
    %2239 = vector.broadcast %116 : f32 to vector<8x128xf32>
    %2240 = arith.mulf %2148, %2239 : vector<8x128xf32>
    %2241 = vector.broadcast %117 : f32 to vector<8x128xf32>
    %2242 = arith.mulf %2163, %2241 : vector<8x128xf32>
    %2243 = arith.addf %2240, %2242 : vector<8x128xf32>
    %2244 = vector.broadcast %118 : f32 to vector<8x128xf32>
    %2245 = arith.mulf %2178, %2244 : vector<8x128xf32>
    %2246 = arith.addf %2243, %2245 : vector<8x128xf32>
    %2247 = vector.broadcast %119 : f32 to vector<8x128xf32>
    %2248 = arith.mulf %2193, %2247 : vector<8x128xf32>
    %2249 = arith.addf %2246, %2248 : vector<8x128xf32>
    %2250 = vector.broadcast %171 : f32 to vector<8x128xf32>
    %2251 = arith.addf %2249, %2250 : vector<8x128xf32>
    %cst_200 = arith.constant 0.000000e+00 : f32
    %2252 = vector.broadcast %cst_200 : f32 to vector<8x128xf32>
    %2253 = arith.maximumf %2251, %2252 : vector<8x128xf32>
    %2254 = vector.broadcast %120 : f32 to vector<8x128xf32>
    %2255 = arith.mulf %2208, %2254 : vector<8x128xf32>
    %2256 = vector.broadcast %121 : f32 to vector<8x128xf32>
    %2257 = arith.mulf %2223, %2256 : vector<8x128xf32>
    %2258 = arith.addf %2255, %2257 : vector<8x128xf32>
    %2259 = vector.broadcast %122 : f32 to vector<8x128xf32>
    %2260 = arith.mulf %2238, %2259 : vector<8x128xf32>
    %2261 = arith.addf %2258, %2260 : vector<8x128xf32>
    %2262 = vector.broadcast %123 : f32 to vector<8x128xf32>
    %2263 = arith.mulf %2253, %2262 : vector<8x128xf32>
    %2264 = arith.addf %2261, %2263 : vector<8x128xf32>
    %2265 = vector.broadcast %172 : f32 to vector<8x128xf32>
    %2266 = arith.addf %2264, %2265 : vector<8x128xf32>
    %cst_201 = arith.constant 0.000000e+00 : f32
    %2267 = vector.broadcast %cst_201 : f32 to vector<8x128xf32>
    %2268 = arith.maximumf %2266, %2267 : vector<8x128xf32>
    %2269 = vector.broadcast %124 : f32 to vector<8x128xf32>
    %2270 = arith.mulf %2208, %2269 : vector<8x128xf32>
    %2271 = vector.broadcast %125 : f32 to vector<8x128xf32>
    %2272 = arith.mulf %2223, %2271 : vector<8x128xf32>
    %2273 = arith.addf %2270, %2272 : vector<8x128xf32>
    %2274 = vector.broadcast %126 : f32 to vector<8x128xf32>
    %2275 = arith.mulf %2238, %2274 : vector<8x128xf32>
    %2276 = arith.addf %2273, %2275 : vector<8x128xf32>
    %2277 = vector.broadcast %127 : f32 to vector<8x128xf32>
    %2278 = arith.mulf %2253, %2277 : vector<8x128xf32>
    %2279 = arith.addf %2276, %2278 : vector<8x128xf32>
    %2280 = vector.broadcast %173 : f32 to vector<8x128xf32>
    %2281 = arith.addf %2279, %2280 : vector<8x128xf32>
    %cst_202 = arith.constant 0.000000e+00 : f32
    %2282 = vector.broadcast %cst_202 : f32 to vector<8x128xf32>
    %2283 = arith.maximumf %2281, %2282 : vector<8x128xf32>
    %2284 = vector.broadcast %128 : f32 to vector<8x128xf32>
    %2285 = arith.mulf %2208, %2284 : vector<8x128xf32>
    %2286 = vector.broadcast %129 : f32 to vector<8x128xf32>
    %2287 = arith.mulf %2223, %2286 : vector<8x128xf32>
    %2288 = arith.addf %2285, %2287 : vector<8x128xf32>
    %2289 = vector.broadcast %130 : f32 to vector<8x128xf32>
    %2290 = arith.mulf %2238, %2289 : vector<8x128xf32>
    %2291 = arith.addf %2288, %2290 : vector<8x128xf32>
    %2292 = vector.broadcast %131 : f32 to vector<8x128xf32>
    %2293 = arith.mulf %2253, %2292 : vector<8x128xf32>
    %2294 = arith.addf %2291, %2293 : vector<8x128xf32>
    %2295 = vector.broadcast %174 : f32 to vector<8x128xf32>
    %2296 = arith.addf %2294, %2295 : vector<8x128xf32>
    %cst_203 = arith.constant 0.000000e+00 : f32
    %2297 = vector.broadcast %cst_203 : f32 to vector<8x128xf32>
    %2298 = arith.maximumf %2296, %2297 : vector<8x128xf32>
    %2299 = vector.broadcast %132 : f32 to vector<8x128xf32>
    %2300 = arith.mulf %2208, %2299 : vector<8x128xf32>
    %2301 = vector.broadcast %133 : f32 to vector<8x128xf32>
    %2302 = arith.mulf %2223, %2301 : vector<8x128xf32>
    %2303 = arith.addf %2300, %2302 : vector<8x128xf32>
    %2304 = vector.broadcast %134 : f32 to vector<8x128xf32>
    %2305 = arith.mulf %2238, %2304 : vector<8x128xf32>
    %2306 = arith.addf %2303, %2305 : vector<8x128xf32>
    %2307 = vector.broadcast %135 : f32 to vector<8x128xf32>
    %2308 = arith.mulf %2253, %2307 : vector<8x128xf32>
    %2309 = arith.addf %2306, %2308 : vector<8x128xf32>
    %2310 = vector.broadcast %175 : f32 to vector<8x128xf32>
    %2311 = arith.addf %2309, %2310 : vector<8x128xf32>
    %cst_204 = arith.constant 0.000000e+00 : f32
    %2312 = vector.broadcast %cst_204 : f32 to vector<8x128xf32>
    %2313 = arith.maximumf %2311, %2312 : vector<8x128xf32>
    %2314 = vector.broadcast %136 : f32 to vector<8x128xf32>
    %2315 = arith.mulf %2268, %2314 : vector<8x128xf32>
    %2316 = vector.broadcast %137 : f32 to vector<8x128xf32>
    %2317 = arith.mulf %2283, %2316 : vector<8x128xf32>
    %2318 = arith.addf %2315, %2317 : vector<8x128xf32>
    %2319 = vector.broadcast %138 : f32 to vector<8x128xf32>
    %2320 = arith.mulf %2298, %2319 : vector<8x128xf32>
    %2321 = arith.addf %2318, %2320 : vector<8x128xf32>
    %2322 = vector.broadcast %139 : f32 to vector<8x128xf32>
    %2323 = arith.mulf %2313, %2322 : vector<8x128xf32>
    %2324 = arith.addf %2321, %2323 : vector<8x128xf32>
    %2325 = vector.broadcast %176 : f32 to vector<8x128xf32>
    %2326 = arith.addf %2324, %2325 : vector<8x128xf32>
    %2327 = arith.negf %2326 : vector<8x128xf32>
    %2328 = math.exp %2327 : vector<8x128xf32>
    %cst_205 = arith.constant 1.000000e+00 : f32
    %2329 = vector.broadcast %cst_205 : f32 to vector<8x128xf32>
    %2330 = arith.addf %2329, %2328 : vector<8x128xf32>
    %2331 = arith.divf %2329, %2330 : vector<8x128xf32>
    %c24_206 = arith.constant 24 : index
    %c0_207 = arith.constant 0 : index
    %2332 = vector.load %arg4[%c24_206, %c0_207] : memref<64x128xf32, #tpu.memory_space<vmem>>, vector<8x128xf32>
    tpu.vector_store %arg4[%c24_206, %c0_207], %2331 {strides = array<i32>} : memref<64x128xf32, #tpu.memory_space<vmem>>, vector<8x128xf32>,
    %c0_208 = arith.constant 0 : index
    %c32_209 = arith.constant 32 : index
    %c0_210 = arith.constant 0 : index
    %2333 = vector.load %arg3[%c0_208, %c32_209, %c0_210] : memref<2x64x128xf32, #tpu.memory_space<vmem>>, vector<1x8x128xf32>
    %2334 = vector.shape_cast %2333 : vector<1x8x128xf32> to vector<8x128xf32>
    %c1_211 = arith.constant 1 : index
    %c32_212 = arith.constant 32 : index
    %c0_213 = arith.constant 0 : index
    %2335 = vector.load %arg3[%c1_211, %c32_212, %c0_213] : memref<2x64x128xf32, #tpu.memory_space<vmem>>, vector<1x8x128xf32>
    %2336 = vector.shape_cast %2335 : vector<1x8x128xf32> to vector<8x128xf32>
    %2337 = vector.broadcast %0 : f32 to vector<8x128xf32>
    %2338 = arith.mulf %2334, %2337 : vector<8x128xf32>
    %2339 = vector.broadcast %1 : f32 to vector<8x128xf32>
    %2340 = arith.mulf %2336, %2339 : vector<8x128xf32>
    %2341 = arith.addf %2338, %2340 : vector<8x128xf32>
    %2342 = vector.broadcast %140 : f32 to vector<8x128xf32>
    %2343 = arith.addf %2341, %2342 : vector<8x128xf32>
    %cst_214 = arith.constant 0.000000e+00 : f32
    %2344 = vector.broadcast %cst_214 : f32 to vector<8x128xf32>
    %2345 = arith.maximumf %2343, %2344 : vector<8x128xf32>
    %2346 = vector.broadcast %2 : f32 to vector<8x128xf32>
    %2347 = arith.mulf %2334, %2346 : vector<8x128xf32>
    %2348 = vector.broadcast %3 : f32 to vector<8x128xf32>
    %2349 = arith.mulf %2336, %2348 : vector<8x128xf32>
    %2350 = arith.addf %2347, %2349 : vector<8x128xf32>
    %2351 = vector.broadcast %141 : f32 to vector<8x128xf32>
    %2352 = arith.addf %2350, %2351 : vector<8x128xf32>
    %cst_215 = arith.constant 0.000000e+00 : f32
    %2353 = vector.broadcast %cst_215 : f32 to vector<8x128xf32>
    %2354 = arith.maximumf %2352, %2353 : vector<8x128xf32>
    %2355 = vector.broadcast %4 : f32 to vector<8x128xf32>
    %2356 = arith.mulf %2334, %2355 : vector<8x128xf32>
    %2357 = vector.broadcast %5 : f32 to vector<8x128xf32>
    %2358 = arith.mulf %2336, %2357 : vector<8x128xf32>
    %2359 = arith.addf %2356, %2358 : vector<8x128xf32>
    %2360 = vector.broadcast %142 : f32 to vector<8x128xf32>
    %2361 = arith.addf %2359, %2360 : vector<8x128xf32>
    %cst_216 = arith.constant 0.000000e+00 : f32
    %2362 = vector.broadcast %cst_216 : f32 to vector<8x128xf32>
    %2363 = arith.maximumf %2361, %2362 : vector<8x128xf32>
    %2364 = vector.broadcast %6 : f32 to vector<8x128xf32>
    %2365 = arith.mulf %2334, %2364 : vector<8x128xf32>
    %2366 = vector.broadcast %7 : f32 to vector<8x128xf32>
    %2367 = arith.mulf %2336, %2366 : vector<8x128xf32>
    %2368 = arith.addf %2365, %2367 : vector<8x128xf32>
    %2369 = vector.broadcast %143 : f32 to vector<8x128xf32>
    %2370 = arith.addf %2368, %2369 : vector<8x128xf32>
    %cst_217 = arith.constant 0.000000e+00 : f32
    %2371 = vector.broadcast %cst_217 : f32 to vector<8x128xf32>
    %2372 = arith.maximumf %2370, %2371 : vector<8x128xf32>
    %2373 = vector.broadcast %8 : f32 to vector<8x128xf32>
    %2374 = arith.mulf %2345, %2373 : vector<8x128xf32>
    %2375 = vector.broadcast %9 : f32 to vector<8x128xf32>
    %2376 = arith.mulf %2354, %2375 : vector<8x128xf32>
    %2377 = arith.addf %2374, %2376 : vector<8x128xf32>
    %2378 = vector.broadcast %10 : f32 to vector<8x128xf32>
    %2379 = arith.mulf %2363, %2378 : vector<8x128xf32>
    %2380 = arith.addf %2377, %2379 : vector<8x128xf32>
    %2381 = vector.broadcast %11 : f32 to vector<8x128xf32>
    %2382 = arith.mulf %2372, %2381 : vector<8x128xf32>
    %2383 = arith.addf %2380, %2382 : vector<8x128xf32>
    %2384 = vector.broadcast %144 : f32 to vector<8x128xf32>
    %2385 = arith.addf %2383, %2384 : vector<8x128xf32>
    %cst_218 = arith.constant 0.000000e+00 : f32
    %2386 = vector.broadcast %cst_218 : f32 to vector<8x128xf32>
    %2387 = arith.maximumf %2385, %2386 : vector<8x128xf32>
    %2388 = vector.broadcast %12 : f32 to vector<8x128xf32>
    %2389 = arith.mulf %2345, %2388 : vector<8x128xf32>
    %2390 = vector.broadcast %13 : f32 to vector<8x128xf32>
    %2391 = arith.mulf %2354, %2390 : vector<8x128xf32>
    %2392 = arith.addf %2389, %2391 : vector<8x128xf32>
    %2393 = vector.broadcast %14 : f32 to vector<8x128xf32>
    %2394 = arith.mulf %2363, %2393 : vector<8x128xf32>
    %2395 = arith.addf %2392, %2394 : vector<8x128xf32>
    %2396 = vector.broadcast %15 : f32 to vector<8x128xf32>
    %2397 = arith.mulf %2372, %2396 : vector<8x128xf32>
    %2398 = arith.addf %2395, %2397 : vector<8x128xf32>
    %2399 = vector.broadcast %145 : f32 to vector<8x128xf32>
    %2400 = arith.addf %2398, %2399 : vector<8x128xf32>
    %cst_219 = arith.constant 0.000000e+00 : f32
    %2401 = vector.broadcast %cst_219 : f32 to vector<8x128xf32>
    %2402 = arith.maximumf %2400, %2401 : vector<8x128xf32>
    %2403 = vector.broadcast %16 : f32 to vector<8x128xf32>
    %2404 = arith.mulf %2345, %2403 : vector<8x128xf32>
    %2405 = vector.broadcast %17 : f32 to vector<8x128xf32>
    %2406 = arith.mulf %2354, %2405 : vector<8x128xf32>
    %2407 = arith.addf %2404, %2406 : vector<8x128xf32>
    %2408 = vector.broadcast %18 : f32 to vector<8x128xf32>
    %2409 = arith.mulf %2363, %2408 : vector<8x128xf32>
    %2410 = arith.addf %2407, %2409 : vector<8x128xf32>
    %2411 = vector.broadcast %19 : f32 to vector<8x128xf32>
    %2412 = arith.mulf %2372, %2411 : vector<8x128xf32>
    %2413 = arith.addf %2410, %2412 : vector<8x128xf32>
    %2414 = vector.broadcast %146 : f32 to vector<8x128xf32>
    %2415 = arith.addf %2413, %2414 : vector<8x128xf32>
    %cst_220 = arith.constant 0.000000e+00 : f32
    %2416 = vector.broadcast %cst_220 : f32 to vector<8x128xf32>
    %2417 = arith.maximumf %2415, %2416 : vector<8x128xf32>
    %2418 = vector.broadcast %20 : f32 to vector<8x128xf32>
    %2419 = arith.mulf %2345, %2418 : vector<8x128xf32>
    %2420 = vector.broadcast %21 : f32 to vector<8x128xf32>
    %2421 = arith.mulf %2354, %2420 : vector<8x128xf32>
    %2422 = arith.addf %2419, %2421 : vector<8x128xf32>
    %2423 = vector.broadcast %22 : f32 to vector<8x128xf32>
    %2424 = arith.mulf %2363, %2423 : vector<8x128xf32>
    %2425 = arith.addf %2422, %2424 : vector<8x128xf32>
    %2426 = vector.broadcast %23 : f32 to vector<8x128xf32>
    %2427 = arith.mulf %2372, %2426 : vector<8x128xf32>
    %2428 = arith.addf %2425, %2427 : vector<8x128xf32>
    %2429 = vector.broadcast %147 : f32 to vector<8x128xf32>
    %2430 = arith.addf %2428, %2429 : vector<8x128xf32>
    %cst_221 = arith.constant 0.000000e+00 : f32
    %2431 = vector.broadcast %cst_221 : f32 to vector<8x128xf32>
    %2432 = arith.maximumf %2430, %2431 : vector<8x128xf32>
    %2433 = vector.broadcast %24 : f32 to vector<8x128xf32>
    %2434 = arith.mulf %2387, %2433 : vector<8x128xf32>
    %2435 = vector.broadcast %25 : f32 to vector<8x128xf32>
    %2436 = arith.mulf %2402, %2435 : vector<8x128xf32>
    %2437 = arith.addf %2434, %2436 : vector<8x128xf32>
    %2438 = vector.broadcast %26 : f32 to vector<8x128xf32>
    %2439 = arith.mulf %2417, %2438 : vector<8x128xf32>
    %2440 = arith.addf %2437, %2439 : vector<8x128xf32>
    %2441 = vector.broadcast %27 : f32 to vector<8x128xf32>
    %2442 = arith.mulf %2432, %2441 : vector<8x128xf32>
    %2443 = arith.addf %2440, %2442 : vector<8x128xf32>
    %2444 = vector.broadcast %148 : f32 to vector<8x128xf32>
    %2445 = arith.addf %2443, %2444 : vector<8x128xf32>
    %cst_222 = arith.constant 0.000000e+00 : f32
    %2446 = vector.broadcast %cst_222 : f32 to vector<8x128xf32>
    %2447 = arith.maximumf %2445, %2446 : vector<8x128xf32>
    %2448 = vector.broadcast %28 : f32 to vector<8x128xf32>
    %2449 = arith.mulf %2387, %2448 : vector<8x128xf32>
    %2450 = vector.broadcast %29 : f32 to vector<8x128xf32>
    %2451 = arith.mulf %2402, %2450 : vector<8x128xf32>
    %2452 = arith.addf %2449, %2451 : vector<8x128xf32>
    %2453 = vector.broadcast %30 : f32 to vector<8x128xf32>
    %2454 = arith.mulf %2417, %2453 : vector<8x128xf32>
    %2455 = arith.addf %2452, %2454 : vector<8x128xf32>
    %2456 = vector.broadcast %31 : f32 to vector<8x128xf32>
    %2457 = arith.mulf %2432, %2456 : vector<8x128xf32>
    %2458 = arith.addf %2455, %2457 : vector<8x128xf32>
    %2459 = vector.broadcast %149 : f32 to vector<8x128xf32>
    %2460 = arith.addf %2458, %2459 : vector<8x128xf32>
    %cst_223 = arith.constant 0.000000e+00 : f32
    %2461 = vector.broadcast %cst_223 : f32 to vector<8x128xf32>
    %2462 = arith.maximumf %2460, %2461 : vector<8x128xf32>
    %2463 = vector.broadcast %32 : f32 to vector<8x128xf32>
    %2464 = arith.mulf %2387, %2463 : vector<8x128xf32>
    %2465 = vector.broadcast %33 : f32 to vector<8x128xf32>
    %2466 = arith.mulf %2402, %2465 : vector<8x128xf32>
    %2467 = arith.addf %2464, %2466 : vector<8x128xf32>
    %2468 = vector.broadcast %34 : f32 to vector<8x128xf32>
    %2469 = arith.mulf %2417, %2468 : vector<8x128xf32>
    %2470 = arith.addf %2467, %2469 : vector<8x128xf32>
    %2471 = vector.broadcast %35 : f32 to vector<8x128xf32>
    %2472 = arith.mulf %2432, %2471 : vector<8x128xf32>
    %2473 = arith.addf %2470, %2472 : vector<8x128xf32>
    %2474 = vector.broadcast %150 : f32 to vector<8x128xf32>
    %2475 = arith.addf %2473, %2474 : vector<8x128xf32>
    %cst_224 = arith.constant 0.000000e+00 : f32
    %2476 = vector.broadcast %cst_224 : f32 to vector<8x128xf32>
    %2477 = arith.maximumf %2475, %2476 : vector<8x128xf32>
    %2478 = vector.broadcast %36 : f32 to vector<8x128xf32>
    %2479 = arith.mulf %2387, %2478 : vector<8x128xf32>
    %2480 = vector.broadcast %37 : f32 to vector<8x128xf32>
    %2481 = arith.mulf %2402, %2480 : vector<8x128xf32>
    %2482 = arith.addf %2479, %2481 : vector<8x128xf32>
    %2483 = vector.broadcast %38 : f32 to vector<8x128xf32>
    %2484 = arith.mulf %2417, %2483 : vector<8x128xf32>
    %2485 = arith.addf %2482, %2484 : vector<8x128xf32>
    %2486 = vector.broadcast %39 : f32 to vector<8x128xf32>
    %2487 = arith.mulf %2432, %2486 : vector<8x128xf32>
    %2488 = arith.addf %2485, %2487 : vector<8x128xf32>
    %2489 = vector.broadcast %151 : f32 to vector<8x128xf32>
    %2490 = arith.addf %2488, %2489 : vector<8x128xf32>
    %cst_225 = arith.constant 0.000000e+00 : f32
    %2491 = vector.broadcast %cst_225 : f32 to vector<8x128xf32>
    %2492 = arith.maximumf %2490, %2491 : vector<8x128xf32>
    %2493 = vector.broadcast %40 : f32 to vector<8x128xf32>
    %2494 = arith.mulf %2447, %2493 : vector<8x128xf32>
    %2495 = vector.broadcast %41 : f32 to vector<8x128xf32>
    %2496 = arith.mulf %2462, %2495 : vector<8x128xf32>
    %2497 = arith.addf %2494, %2496 : vector<8x128xf32>
    %2498 = vector.broadcast %42 : f32 to vector<8x128xf32>
    %2499 = arith.mulf %2477, %2498 : vector<8x128xf32>
    %2500 = arith.addf %2497, %2499 : vector<8x128xf32>
    %2501 = vector.broadcast %43 : f32 to vector<8x128xf32>
    %2502 = arith.mulf %2492, %2501 : vector<8x128xf32>
    %2503 = arith.addf %2500, %2502 : vector<8x128xf32>
    %2504 = vector.broadcast %152 : f32 to vector<8x128xf32>
    %2505 = arith.addf %2503, %2504 : vector<8x128xf32>
    %cst_226 = arith.constant 0.000000e+00 : f32
    %2506 = vector.broadcast %cst_226 : f32 to vector<8x128xf32>
    %2507 = arith.maximumf %2505, %2506 : vector<8x128xf32>
    %2508 = vector.broadcast %44 : f32 to vector<8x128xf32>
    %2509 = arith.mulf %2447, %2508 : vector<8x128xf32>
    %2510 = vector.broadcast %45 : f32 to vector<8x128xf32>
    %2511 = arith.mulf %2462, %2510 : vector<8x128xf32>
    %2512 = arith.addf %2509, %2511 : vector<8x128xf32>
    %2513 = vector.broadcast %46 : f32 to vector<8x128xf32>
    %2514 = arith.mulf %2477, %2513 : vector<8x128xf32>
    %2515 = arith.addf %2512, %2514 : vector<8x128xf32>
    %2516 = vector.broadcast %47 : f32 to vector<8x128xf32>
    %2517 = arith.mulf %2492, %2516 : vector<8x128xf32>
    %2518 = arith.addf %2515, %2517 : vector<8x128xf32>
    %2519 = vector.broadcast %153 : f32 to vector<8x128xf32>
    %2520 = arith.addf %2518, %2519 : vector<8x128xf32>
    %cst_227 = arith.constant 0.000000e+00 : f32
    %2521 = vector.broadcast %cst_227 : f32 to vector<8x128xf32>
    %2522 = arith.maximumf %2520, %2521 : vector<8x128xf32>
    %2523 = vector.broadcast %48 : f32 to vector<8x128xf32>
    %2524 = arith.mulf %2447, %2523 : vector<8x128xf32>
    %2525 = vector.broadcast %49 : f32 to vector<8x128xf32>
    %2526 = arith.mulf %2462, %2525 : vector<8x128xf32>
    %2527 = arith.addf %2524, %2526 : vector<8x128xf32>
    %2528 = vector.broadcast %50 : f32 to vector<8x128xf32>
    %2529 = arith.mulf %2477, %2528 : vector<8x128xf32>
    %2530 = arith.addf %2527, %2529 : vector<8x128xf32>
    %2531 = vector.broadcast %51 : f32 to vector<8x128xf32>
    %2532 = arith.mulf %2492, %2531 : vector<8x128xf32>
    %2533 = arith.addf %2530, %2532 : vector<8x128xf32>
    %2534 = vector.broadcast %154 : f32 to vector<8x128xf32>
    %2535 = arith.addf %2533, %2534 : vector<8x128xf32>
    %cst_228 = arith.constant 0.000000e+00 : f32
    %2536 = vector.broadcast %cst_228 : f32 to vector<8x128xf32>
    %2537 = arith.maximumf %2535, %2536 : vector<8x128xf32>
    %2538 = vector.broadcast %52 : f32 to vector<8x128xf32>
    %2539 = arith.mulf %2447, %2538 : vector<8x128xf32>
    %2540 = vector.broadcast %53 : f32 to vector<8x128xf32>
    %2541 = arith.mulf %2462, %2540 : vector<8x128xf32>
    %2542 = arith.addf %2539, %2541 : vector<8x128xf32>
    %2543 = vector.broadcast %54 : f32 to vector<8x128xf32>
    %2544 = arith.mulf %2477, %2543 : vector<8x128xf32>
    %2545 = arith.addf %2542, %2544 : vector<8x128xf32>
    %2546 = vector.broadcast %55 : f32 to vector<8x128xf32>
    %2547 = arith.mulf %2492, %2546 : vector<8x128xf32>
    %2548 = arith.addf %2545, %2547 : vector<8x128xf32>
    %2549 = vector.broadcast %155 : f32 to vector<8x128xf32>
    %2550 = arith.addf %2548, %2549 : vector<8x128xf32>
    %cst_229 = arith.constant 0.000000e+00 : f32
    %2551 = vector.broadcast %cst_229 : f32 to vector<8x128xf32>
    %2552 = arith.maximumf %2550, %2551 : vector<8x128xf32>
    %2553 = vector.broadcast %56 : f32 to vector<8x128xf32>
    %2554 = arith.mulf %2507, %2553 : vector<8x128xf32>
    %2555 = vector.broadcast %57 : f32 to vector<8x128xf32>
    %2556 = arith.mulf %2522, %2555 : vector<8x128xf32>
    %2557 = arith.addf %2554, %2556 : vector<8x128xf32>
    %2558 = vector.broadcast %58 : f32 to vector<8x128xf32>
    %2559 = arith.mulf %2537, %2558 : vector<8x128xf32>
    %2560 = arith.addf %2557, %2559 : vector<8x128xf32>
    %2561 = vector.broadcast %59 : f32 to vector<8x128xf32>
    %2562 = arith.mulf %2552, %2561 : vector<8x128xf32>
    %2563 = arith.addf %2560, %2562 : vector<8x128xf32>
    %2564 = vector.broadcast %156 : f32 to vector<8x128xf32>
    %2565 = arith.addf %2563, %2564 : vector<8x128xf32>
    %cst_230 = arith.constant 0.000000e+00 : f32
    %2566 = vector.broadcast %cst_230 : f32 to vector<8x128xf32>
    %2567 = arith.maximumf %2565, %2566 : vector<8x128xf32>
    %2568 = vector.broadcast %60 : f32 to vector<8x128xf32>
    %2569 = arith.mulf %2507, %2568 : vector<8x128xf32>
    %2570 = vector.broadcast %61 : f32 to vector<8x128xf32>
    %2571 = arith.mulf %2522, %2570 : vector<8x128xf32>
    %2572 = arith.addf %2569, %2571 : vector<8x128xf32>
    %2573 = vector.broadcast %62 : f32 to vector<8x128xf32>
    %2574 = arith.mulf %2537, %2573 : vector<8x128xf32>
    %2575 = arith.addf %2572, %2574 : vector<8x128xf32>
    %2576 = vector.broadcast %63 : f32 to vector<8x128xf32>
    %2577 = arith.mulf %2552, %2576 : vector<8x128xf32>
    %2578 = arith.addf %2575, %2577 : vector<8x128xf32>
    %2579 = vector.broadcast %157 : f32 to vector<8x128xf32>
    %2580 = arith.addf %2578, %2579 : vector<8x128xf32>
    %cst_231 = arith.constant 0.000000e+00 : f32
    %2581 = vector.broadcast %cst_231 : f32 to vector<8x128xf32>
    %2582 = arith.maximumf %2580, %2581 : vector<8x128xf32>
    %2583 = vector.broadcast %64 : f32 to vector<8x128xf32>
    %2584 = arith.mulf %2507, %2583 : vector<8x128xf32>
    %2585 = vector.broadcast %65 : f32 to vector<8x128xf32>
    %2586 = arith.mulf %2522, %2585 : vector<8x128xf32>
    %2587 = arith.addf %2584, %2586 : vector<8x128xf32>
    %2588 = vector.broadcast %66 : f32 to vector<8x128xf32>
    %2589 = arith.mulf %2537, %2588 : vector<8x128xf32>
    %2590 = arith.addf %2587, %2589 : vector<8x128xf32>
    %2591 = vector.broadcast %67 : f32 to vector<8x128xf32>
    %2592 = arith.mulf %2552, %2591 : vector<8x128xf32>
    %2593 = arith.addf %2590, %2592 : vector<8x128xf32>
    %2594 = vector.broadcast %158 : f32 to vector<8x128xf32>
    %2595 = arith.addf %2593, %2594 : vector<8x128xf32>
    %cst_232 = arith.constant 0.000000e+00 : f32
    %2596 = vector.broadcast %cst_232 : f32 to vector<8x128xf32>
    %2597 = arith.maximumf %2595, %2596 : vector<8x128xf32>
    %2598 = vector.broadcast %68 : f32 to vector<8x128xf32>
    %2599 = arith.mulf %2507, %2598 : vector<8x128xf32>
    %2600 = vector.broadcast %69 : f32 to vector<8x128xf32>
    %2601 = arith.mulf %2522, %2600 : vector<8x128xf32>
    %2602 = arith.addf %2599, %2601 : vector<8x128xf32>
    %2603 = vector.broadcast %70 : f32 to vector<8x128xf32>
    %2604 = arith.mulf %2537, %2603 : vector<8x128xf32>
    %2605 = arith.addf %2602, %2604 : vector<8x128xf32>
    %2606 = vector.broadcast %71 : f32 to vector<8x128xf32>
    %2607 = arith.mulf %2552, %2606 : vector<8x128xf32>
    %2608 = arith.addf %2605, %2607 : vector<8x128xf32>
    %2609 = vector.broadcast %159 : f32 to vector<8x128xf32>
    %2610 = arith.addf %2608, %2609 : vector<8x128xf32>
    %cst_233 = arith.constant 0.000000e+00 : f32
    %2611 = vector.broadcast %cst_233 : f32 to vector<8x128xf32>
    %2612 = arith.maximumf %2610, %2611 : vector<8x128xf32>
    %2613 = vector.broadcast %72 : f32 to vector<8x128xf32>
    %2614 = arith.mulf %2567, %2613 : vector<8x128xf32>
    %2615 = vector.broadcast %73 : f32 to vector<8x128xf32>
    %2616 = arith.mulf %2582, %2615 : vector<8x128xf32>
    %2617 = arith.addf %2614, %2616 : vector<8x128xf32>
    %2618 = vector.broadcast %74 : f32 to vector<8x128xf32>
    %2619 = arith.mulf %2597, %2618 : vector<8x128xf32>
    %2620 = arith.addf %2617, %2619 : vector<8x128xf32>
    %2621 = vector.broadcast %75 : f32 to vector<8x128xf32>
    %2622 = arith.mulf %2612, %2621 : vector<8x128xf32>
    %2623 = arith.addf %2620, %2622 : vector<8x128xf32>
    %2624 = vector.broadcast %160 : f32 to vector<8x128xf32>
    %2625 = arith.addf %2623, %2624 : vector<8x128xf32>
    %cst_234 = arith.constant 0.000000e+00 : f32
    %2626 = vector.broadcast %cst_234 : f32 to vector<8x128xf32>
    %2627 = arith.maximumf %2625, %2626 : vector<8x128xf32>
    %2628 = vector.broadcast %76 : f32 to vector<8x128xf32>
    %2629 = arith.mulf %2567, %2628 : vector<8x128xf32>
    %2630 = vector.broadcast %77 : f32 to vector<8x128xf32>
    %2631 = arith.mulf %2582, %2630 : vector<8x128xf32>
    %2632 = arith.addf %2629, %2631 : vector<8x128xf32>
    %2633 = vector.broadcast %78 : f32 to vector<8x128xf32>
    %2634 = arith.mulf %2597, %2633 : vector<8x128xf32>
    %2635 = arith.addf %2632, %2634 : vector<8x128xf32>
    %2636 = vector.broadcast %79 : f32 to vector<8x128xf32>
    %2637 = arith.mulf %2612, %2636 : vector<8x128xf32>
    %2638 = arith.addf %2635, %2637 : vector<8x128xf32>
    %2639 = vector.broadcast %161 : f32 to vector<8x128xf32>
    %2640 = arith.addf %2638, %2639 : vector<8x128xf32>
    %cst_235 = arith.constant 0.000000e+00 : f32
    %2641 = vector.broadcast %cst_235 : f32 to vector<8x128xf32>
    %2642 = arith.maximumf %2640, %2641 : vector<8x128xf32>
    %2643 = vector.broadcast %80 : f32 to vector<8x128xf32>
    %2644 = arith.mulf %2567, %2643 : vector<8x128xf32>
    %2645 = vector.broadcast %81 : f32 to vector<8x128xf32>
    %2646 = arith.mulf %2582, %2645 : vector<8x128xf32>
    %2647 = arith.addf %2644, %2646 : vector<8x128xf32>
    %2648 = vector.broadcast %82 : f32 to vector<8x128xf32>
    %2649 = arith.mulf %2597, %2648 : vector<8x128xf32>
    %2650 = arith.addf %2647, %2649 : vector<8x128xf32>
    %2651 = vector.broadcast %83 : f32 to vector<8x128xf32>
    %2652 = arith.mulf %2612, %2651 : vector<8x128xf32>
    %2653 = arith.addf %2650, %2652 : vector<8x128xf32>
    %2654 = vector.broadcast %162 : f32 to vector<8x128xf32>
    %2655 = arith.addf %2653, %2654 : vector<8x128xf32>
    %cst_236 = arith.constant 0.000000e+00 : f32
    %2656 = vector.broadcast %cst_236 : f32 to vector<8x128xf32>
    %2657 = arith.maximumf %2655, %2656 : vector<8x128xf32>
    %2658 = vector.broadcast %84 : f32 to vector<8x128xf32>
    %2659 = arith.mulf %2567, %2658 : vector<8x128xf32>
    %2660 = vector.broadcast %85 : f32 to vector<8x128xf32>
    %2661 = arith.mulf %2582, %2660 : vector<8x128xf32>
    %2662 = arith.addf %2659, %2661 : vector<8x128xf32>
    %2663 = vector.broadcast %86 : f32 to vector<8x128xf32>
    %2664 = arith.mulf %2597, %2663 : vector<8x128xf32>
    %2665 = arith.addf %2662, %2664 : vector<8x128xf32>
    %2666 = vector.broadcast %87 : f32 to vector<8x128xf32>
    %2667 = arith.mulf %2612, %2666 : vector<8x128xf32>
    %2668 = arith.addf %2665, %2667 : vector<8x128xf32>
    %2669 = vector.broadcast %163 : f32 to vector<8x128xf32>
    %2670 = arith.addf %2668, %2669 : vector<8x128xf32>
    %cst_237 = arith.constant 0.000000e+00 : f32
    %2671 = vector.broadcast %cst_237 : f32 to vector<8x128xf32>
    %2672 = arith.maximumf %2670, %2671 : vector<8x128xf32>
    %2673 = vector.broadcast %88 : f32 to vector<8x128xf32>
    %2674 = arith.mulf %2627, %2673 : vector<8x128xf32>
    %2675 = vector.broadcast %89 : f32 to vector<8x128xf32>
    %2676 = arith.mulf %2642, %2675 : vector<8x128xf32>
    %2677 = arith.addf %2674, %2676 : vector<8x128xf32>
    %2678 = vector.broadcast %90 : f32 to vector<8x128xf32>
    %2679 = arith.mulf %2657, %2678 : vector<8x128xf32>
    %2680 = arith.addf %2677, %2679 : vector<8x128xf32>
    %2681 = vector.broadcast %91 : f32 to vector<8x128xf32>
    %2682 = arith.mulf %2672, %2681 : vector<8x128xf32>
    %2683 = arith.addf %2680, %2682 : vector<8x128xf32>
    %2684 = vector.broadcast %164 : f32 to vector<8x128xf32>
    %2685 = arith.addf %2683, %2684 : vector<8x128xf32>
    %cst_238 = arith.constant 0.000000e+00 : f32
    %2686 = vector.broadcast %cst_238 : f32 to vector<8x128xf32>
    %2687 = arith.maximumf %2685, %2686 : vector<8x128xf32>
    %2688 = vector.broadcast %92 : f32 to vector<8x128xf32>
    %2689 = arith.mulf %2627, %2688 : vector<8x128xf32>
    %2690 = vector.broadcast %93 : f32 to vector<8x128xf32>
    %2691 = arith.mulf %2642, %2690 : vector<8x128xf32>
    %2692 = arith.addf %2689, %2691 : vector<8x128xf32>
    %2693 = vector.broadcast %94 : f32 to vector<8x128xf32>
    %2694 = arith.mulf %2657, %2693 : vector<8x128xf32>
    %2695 = arith.addf %2692, %2694 : vector<8x128xf32>
    %2696 = vector.broadcast %95 : f32 to vector<8x128xf32>
    %2697 = arith.mulf %2672, %2696 : vector<8x128xf32>
    %2698 = arith.addf %2695, %2697 : vector<8x128xf32>
    %2699 = vector.broadcast %165 : f32 to vector<8x128xf32>
    %2700 = arith.addf %2698, %2699 : vector<8x128xf32>
    %cst_239 = arith.constant 0.000000e+00 : f32
    %2701 = vector.broadcast %cst_239 : f32 to vector<8x128xf32>
    %2702 = arith.maximumf %2700, %2701 : vector<8x128xf32>
    %2703 = vector.broadcast %96 : f32 to vector<8x128xf32>
    %2704 = arith.mulf %2627, %2703 : vector<8x128xf32>
    %2705 = vector.broadcast %97 : f32 to vector<8x128xf32>
    %2706 = arith.mulf %2642, %2705 : vector<8x128xf32>
    %2707 = arith.addf %2704, %2706 : vector<8x128xf32>
    %2708 = vector.broadcast %98 : f32 to vector<8x128xf32>
    %2709 = arith.mulf %2657, %2708 : vector<8x128xf32>
    %2710 = arith.addf %2707, %2709 : vector<8x128xf32>
    %2711 = vector.broadcast %99 : f32 to vector<8x128xf32>
    %2712 = arith.mulf %2672, %2711 : vector<8x128xf32>
    %2713 = arith.addf %2710, %2712 : vector<8x128xf32>
    %2714 = vector.broadcast %166 : f32 to vector<8x128xf32>
    %2715 = arith.addf %2713, %2714 : vector<8x128xf32>
    %cst_240 = arith.constant 0.000000e+00 : f32
    %2716 = vector.broadcast %cst_240 : f32 to vector<8x128xf32>
    %2717 = arith.maximumf %2715, %2716 : vector<8x128xf32>
    %2718 = vector.broadcast %100 : f32 to vector<8x128xf32>
    %2719 = arith.mulf %2627, %2718 : vector<8x128xf32>
    %2720 = vector.broadcast %101 : f32 to vector<8x128xf32>
    %2721 = arith.mulf %2642, %2720 : vector<8x128xf32>
    %2722 = arith.addf %2719, %2721 : vector<8x128xf32>
    %2723 = vector.broadcast %102 : f32 to vector<8x128xf32>
    %2724 = arith.mulf %2657, %2723 : vector<8x128xf32>
    %2725 = arith.addf %2722, %2724 : vector<8x128xf32>
    %2726 = vector.broadcast %103 : f32 to vector<8x128xf32>
    %2727 = arith.mulf %2672, %2726 : vector<8x128xf32>
    %2728 = arith.addf %2725, %2727 : vector<8x128xf32>
    %2729 = vector.broadcast %167 : f32 to vector<8x128xf32>
    %2730 = arith.addf %2728, %2729 : vector<8x128xf32>
    %cst_241 = arith.constant 0.000000e+00 : f32
    %2731 = vector.broadcast %cst_241 : f32 to vector<8x128xf32>
    %2732 = arith.maximumf %2730, %2731 : vector<8x128xf32>
    %2733 = vector.broadcast %104 : f32 to vector<8x128xf32>
    %2734 = arith.mulf %2687, %2733 : vector<8x128xf32>
    %2735 = vector.broadcast %105 : f32 to vector<8x128xf32>
    %2736 = arith.mulf %2702, %2735 : vector<8x128xf32>
    %2737 = arith.addf %2734, %2736 : vector<8x128xf32>
    %2738 = vector.broadcast %106 : f32 to vector<8x128xf32>
    %2739 = arith.mulf %2717, %2738 : vector<8x128xf32>
    %2740 = arith.addf %2737, %2739 : vector<8x128xf32>
    %2741 = vector.broadcast %107 : f32 to vector<8x128xf32>
    %2742 = arith.mulf %2732, %2741 : vector<8x128xf32>
    %2743 = arith.addf %2740, %2742 : vector<8x128xf32>
    %2744 = vector.broadcast %168 : f32 to vector<8x128xf32>
    %2745 = arith.addf %2743, %2744 : vector<8x128xf32>
    %cst_242 = arith.constant 0.000000e+00 : f32
    %2746 = vector.broadcast %cst_242 : f32 to vector<8x128xf32>
    %2747 = arith.maximumf %2745, %2746 : vector<8x128xf32>
    %2748 = vector.broadcast %108 : f32 to vector<8x128xf32>
    %2749 = arith.mulf %2687, %2748 : vector<8x128xf32>
    %2750 = vector.broadcast %109 : f32 to vector<8x128xf32>
    %2751 = arith.mulf %2702, %2750 : vector<8x128xf32>
    %2752 = arith.addf %2749, %2751 : vector<8x128xf32>
    %2753 = vector.broadcast %110 : f32 to vector<8x128xf32>
    %2754 = arith.mulf %2717, %2753 : vector<8x128xf32>
    %2755 = arith.addf %2752, %2754 : vector<8x128xf32>
    %2756 = vector.broadcast %111 : f32 to vector<8x128xf32>
    %2757 = arith.mulf %2732, %2756 : vector<8x128xf32>
    %2758 = arith.addf %2755, %2757 : vector<8x128xf32>
    %2759 = vector.broadcast %169 : f32 to vector<8x128xf32>
    %2760 = arith.addf %2758, %2759 : vector<8x128xf32>
    %cst_243 = arith.constant 0.000000e+00 : f32
    %2761 = vector.broadcast %cst_243 : f32 to vector<8x128xf32>
    %2762 = arith.maximumf %2760, %2761 : vector<8x128xf32>
    %2763 = vector.broadcast %112 : f32 to vector<8x128xf32>
    %2764 = arith.mulf %2687, %2763 : vector<8x128xf32>
    %2765 = vector.broadcast %113 : f32 to vector<8x128xf32>
    %2766 = arith.mulf %2702, %2765 : vector<8x128xf32>
    %2767 = arith.addf %2764, %2766 : vector<8x128xf32>
    %2768 = vector.broadcast %114 : f32 to vector<8x128xf32>
    %2769 = arith.mulf %2717, %2768 : vector<8x128xf32>
    %2770 = arith.addf %2767, %2769 : vector<8x128xf32>
    %2771 = vector.broadcast %115 : f32 to vector<8x128xf32>
    %2772 = arith.mulf %2732, %2771 : vector<8x128xf32>
    %2773 = arith.addf %2770, %2772 : vector<8x128xf32>
    %2774 = vector.broadcast %170 : f32 to vector<8x128xf32>
    %2775 = arith.addf %2773, %2774 : vector<8x128xf32>
    %cst_244 = arith.constant 0.000000e+00 : f32
    %2776 = vector.broadcast %cst_244 : f32 to vector<8x128xf32>
    %2777 = arith.maximumf %2775, %2776 : vector<8x128xf32>
    %2778 = vector.broadcast %116 : f32 to vector<8x128xf32>
    %2779 = arith.mulf %2687, %2778 : vector<8x128xf32>
    %2780 = vector.broadcast %117 : f32 to vector<8x128xf32>
    %2781 = arith.mulf %2702, %2780 : vector<8x128xf32>
    %2782 = arith.addf %2779, %2781 : vector<8x128xf32>
    %2783 = vector.broadcast %118 : f32 to vector<8x128xf32>
    %2784 = arith.mulf %2717, %2783 : vector<8x128xf32>
    %2785 = arith.addf %2782, %2784 : vector<8x128xf32>
    %2786 = vector.broadcast %119 : f32 to vector<8x128xf32>
    %2787 = arith.mulf %2732, %2786 : vector<8x128xf32>
    %2788 = arith.addf %2785, %2787 : vector<8x128xf32>
    %2789 = vector.broadcast %171 : f32 to vector<8x128xf32>
    %2790 = arith.addf %2788, %2789 : vector<8x128xf32>
    %cst_245 = arith.constant 0.000000e+00 : f32
    %2791 = vector.broadcast %cst_245 : f32 to vector<8x128xf32>
    %2792 = arith.maximumf %2790, %2791 : vector<8x128xf32>
    %2793 = vector.broadcast %120 : f32 to vector<8x128xf32>
    %2794 = arith.mulf %2747, %2793 : vector<8x128xf32>
    %2795 = vector.broadcast %121 : f32 to vector<8x128xf32>
    %2796 = arith.mulf %2762, %2795 : vector<8x128xf32>
    %2797 = arith.addf %2794, %2796 : vector<8x128xf32>
    %2798 = vector.broadcast %122 : f32 to vector<8x128xf32>
    %2799 = arith.mulf %2777, %2798 : vector<8x128xf32>
    %2800 = arith.addf %2797, %2799 : vector<8x128xf32>
    %2801 = vector.broadcast %123 : f32 to vector<8x128xf32>
    %2802 = arith.mulf %2792, %2801 : vector<8x128xf32>
    %2803 = arith.addf %2800, %2802 : vector<8x128xf32>
    %2804 = vector.broadcast %172 : f32 to vector<8x128xf32>
    %2805 = arith.addf %2803, %2804 : vector<8x128xf32>
    %cst_246 = arith.constant 0.000000e+00 : f32
    %2806 = vector.broadcast %cst_246 : f32 to vector<8x128xf32>
    %2807 = arith.maximumf %2805, %2806 : vector<8x128xf32>
    %2808 = vector.broadcast %124 : f32 to vector<8x128xf32>
    %2809 = arith.mulf %2747, %2808 : vector<8x128xf32>
    %2810 = vector.broadcast %125 : f32 to vector<8x128xf32>
    %2811 = arith.mulf %2762, %2810 : vector<8x128xf32>
    %2812 = arith.addf %2809, %2811 : vector<8x128xf32>
    %2813 = vector.broadcast %126 : f32 to vector<8x128xf32>
    %2814 = arith.mulf %2777, %2813 : vector<8x128xf32>
    %2815 = arith.addf %2812, %2814 : vector<8x128xf32>
    %2816 = vector.broadcast %127 : f32 to vector<8x128xf32>
    %2817 = arith.mulf %2792, %2816 : vector<8x128xf32>
    %2818 = arith.addf %2815, %2817 : vector<8x128xf32>
    %2819 = vector.broadcast %173 : f32 to vector<8x128xf32>
    %2820 = arith.addf %2818, %2819 : vector<8x128xf32>
    %cst_247 = arith.constant 0.000000e+00 : f32
    %2821 = vector.broadcast %cst_247 : f32 to vector<8x128xf32>
    %2822 = arith.maximumf %2820, %2821 : vector<8x128xf32>
    %2823 = vector.broadcast %128 : f32 to vector<8x128xf32>
    %2824 = arith.mulf %2747, %2823 : vector<8x128xf32>
    %2825 = vector.broadcast %129 : f32 to vector<8x128xf32>
    %2826 = arith.mulf %2762, %2825 : vector<8x128xf32>
    %2827 = arith.addf %2824, %2826 : vector<8x128xf32>
    %2828 = vector.broadcast %130 : f32 to vector<8x128xf32>
    %2829 = arith.mulf %2777, %2828 : vector<8x128xf32>
    %2830 = arith.addf %2827, %2829 : vector<8x128xf32>
    %2831 = vector.broadcast %131 : f32 to vector<8x128xf32>
    %2832 = arith.mulf %2792, %2831 : vector<8x128xf32>
    %2833 = arith.addf %2830, %2832 : vector<8x128xf32>
    %2834 = vector.broadcast %174 : f32 to vector<8x128xf32>
    %2835 = arith.addf %2833, %2834 : vector<8x128xf32>
    %cst_248 = arith.constant 0.000000e+00 : f32
    %2836 = vector.broadcast %cst_248 : f32 to vector<8x128xf32>
    %2837 = arith.maximumf %2835, %2836 : vector<8x128xf32>
    %2838 = vector.broadcast %132 : f32 to vector<8x128xf32>
    %2839 = arith.mulf %2747, %2838 : vector<8x128xf32>
    %2840 = vector.broadcast %133 : f32 to vector<8x128xf32>
    %2841 = arith.mulf %2762, %2840 : vector<8x128xf32>
    %2842 = arith.addf %2839, %2841 : vector<8x128xf32>
    %2843 = vector.broadcast %134 : f32 to vector<8x128xf32>
    %2844 = arith.mulf %2777, %2843 : vector<8x128xf32>
    %2845 = arith.addf %2842, %2844 : vector<8x128xf32>
    %2846 = vector.broadcast %135 : f32 to vector<8x128xf32>
    %2847 = arith.mulf %2792, %2846 : vector<8x128xf32>
    %2848 = arith.addf %2845, %2847 : vector<8x128xf32>
    %2849 = vector.broadcast %175 : f32 to vector<8x128xf32>
    %2850 = arith.addf %2848, %2849 : vector<8x128xf32>
    %cst_249 = arith.constant 0.000000e+00 : f32
    %2851 = vector.broadcast %cst_249 : f32 to vector<8x128xf32>
    %2852 = arith.maximumf %2850, %2851 : vector<8x128xf32>
    %2853 = vector.broadcast %136 : f32 to vector<8x128xf32>
    %2854 = arith.mulf %2807, %2853 : vector<8x128xf32>
    %2855 = vector.broadcast %137 : f32 to vector<8x128xf32>
    %2856 = arith.mulf %2822, %2855 : vector<8x128xf32>
    %2857 = arith.addf %2854, %2856 : vector<8x128xf32>
    %2858 = vector.broadcast %138 : f32 to vector<8x128xf32>
    %2859 = arith.mulf %2837, %2858 : vector<8x128xf32>
    %2860 = arith.addf %2857, %2859 : vector<8x128xf32>
    %2861 = vector.broadcast %139 : f32 to vector<8x128xf32>
    %2862 = arith.mulf %2852, %2861 : vector<8x128xf32>
    %2863 = arith.addf %2860, %2862 : vector<8x128xf32>
    %2864 = vector.broadcast %176 : f32 to vector<8x128xf32>
    %2865 = arith.addf %2863, %2864 : vector<8x128xf32>
    %2866 = arith.negf %2865 : vector<8x128xf32>
    %2867 = math.exp %2866 : vector<8x128xf32>
    %cst_250 = arith.constant 1.000000e+00 : f32
    %2868 = vector.broadcast %cst_250 : f32 to vector<8x128xf32>
    %2869 = arith.addf %2868, %2867 : vector<8x128xf32>
    %2870 = arith.divf %2868, %2869 : vector<8x128xf32>
    %c32_251 = arith.constant 32 : index
    %c0_252 = arith.constant 0 : index
    %2871 = vector.load %arg4[%c32_251, %c0_252] : memref<64x128xf32, #tpu.memory_space<vmem>>, vector<8x128xf32>
    tpu.vector_store %arg4[%c32_251, %c0_252], %2870 {strides = array<i32>} : memref<64x128xf32, #tpu.memory_space<vmem>>, vector<8x128xf32>,
    %c0_253 = arith.constant 0 : index
    %c40_254 = arith.constant 40 : index
    %c0_255 = arith.constant 0 : index
    %2872 = vector.load %arg3[%c0_253, %c40_254, %c0_255] : memref<2x64x128xf32, #tpu.memory_space<vmem>>, vector<1x8x128xf32>
    %2873 = vector.shape_cast %2872 : vector<1x8x128xf32> to vector<8x128xf32>
    %c1_256 = arith.constant 1 : index
    %c40_257 = arith.constant 40 : index
    %c0_258 = arith.constant 0 : index
    %2874 = vector.load %arg3[%c1_256, %c40_257, %c0_258] : memref<2x64x128xf32, #tpu.memory_space<vmem>>, vector<1x8x128xf32>
    %2875 = vector.shape_cast %2874 : vector<1x8x128xf32> to vector<8x128xf32>
    %2876 = vector.broadcast %0 : f32 to vector<8x128xf32>
    %2877 = arith.mulf %2873, %2876 : vector<8x128xf32>
    %2878 = vector.broadcast %1 : f32 to vector<8x128xf32>
    %2879 = arith.mulf %2875, %2878 : vector<8x128xf32>
    %2880 = arith.addf %2877, %2879 : vector<8x128xf32>
    %2881 = vector.broadcast %140 : f32 to vector<8x128xf32>
    %2882 = arith.addf %2880, %2881 : vector<8x128xf32>
    %cst_259 = arith.constant 0.000000e+00 : f32
    %2883 = vector.broadcast %cst_259 : f32 to vector<8x128xf32>
    %2884 = arith.maximumf %2882, %2883 : vector<8x128xf32>
    %2885 = vector.broadcast %2 : f32 to vector<8x128xf32>
    %2886 = arith.mulf %2873, %2885 : vector<8x128xf32>
    %2887 = vector.broadcast %3 : f32 to vector<8x128xf32>
    %2888 = arith.mulf %2875, %2887 : vector<8x128xf32>
    %2889 = arith.addf %2886, %2888 : vector<8x128xf32>
    %2890 = vector.broadcast %141 : f32 to vector<8x128xf32>
    %2891 = arith.addf %2889, %2890 : vector<8x128xf32>
    %cst_260 = arith.constant 0.000000e+00 : f32
    %2892 = vector.broadcast %cst_260 : f32 to vector<8x128xf32>
    %2893 = arith.maximumf %2891, %2892 : vector<8x128xf32>
    %2894 = vector.broadcast %4 : f32 to vector<8x128xf32>
    %2895 = arith.mulf %2873, %2894 : vector<8x128xf32>
    %2896 = vector.broadcast %5 : f32 to vector<8x128xf32>
    %2897 = arith.mulf %2875, %2896 : vector<8x128xf32>
    %2898 = arith.addf %2895, %2897 : vector<8x128xf32>
    %2899 = vector.broadcast %142 : f32 to vector<8x128xf32>
    %2900 = arith.addf %2898, %2899 : vector<8x128xf32>
    %cst_261 = arith.constant 0.000000e+00 : f32
    %2901 = vector.broadcast %cst_261 : f32 to vector<8x128xf32>
    %2902 = arith.maximumf %2900, %2901 : vector<8x128xf32>
    %2903 = vector.broadcast %6 : f32 to vector<8x128xf32>
    %2904 = arith.mulf %2873, %2903 : vector<8x128xf32>
    %2905 = vector.broadcast %7 : f32 to vector<8x128xf32>
    %2906 = arith.mulf %2875, %2905 : vector<8x128xf32>
    %2907 = arith.addf %2904, %2906 : vector<8x128xf32>
    %2908 = vector.broadcast %143 : f32 to vector<8x128xf32>
    %2909 = arith.addf %2907, %2908 : vector<8x128xf32>
    %cst_262 = arith.constant 0.000000e+00 : f32
    %2910 = vector.broadcast %cst_262 : f32 to vector<8x128xf32>
    %2911 = arith.maximumf %2909, %2910 : vector<8x128xf32>
    %2912 = vector.broadcast %8 : f32 to vector<8x128xf32>
    %2913 = arith.mulf %2884, %2912 : vector<8x128xf32>
    %2914 = vector.broadcast %9 : f32 to vector<8x128xf32>
    %2915 = arith.mulf %2893, %2914 : vector<8x128xf32>
    %2916 = arith.addf %2913, %2915 : vector<8x128xf32>
    %2917 = vector.broadcast %10 : f32 to vector<8x128xf32>
    %2918 = arith.mulf %2902, %2917 : vector<8x128xf32>
    %2919 = arith.addf %2916, %2918 : vector<8x128xf32>
    %2920 = vector.broadcast %11 : f32 to vector<8x128xf32>
    %2921 = arith.mulf %2911, %2920 : vector<8x128xf32>
    %2922 = arith.addf %2919, %2921 : vector<8x128xf32>
    %2923 = vector.broadcast %144 : f32 to vector<8x128xf32>
    %2924 = arith.addf %2922, %2923 : vector<8x128xf32>
    %cst_263 = arith.constant 0.000000e+00 : f32
    %2925 = vector.broadcast %cst_263 : f32 to vector<8x128xf32>
    %2926 = arith.maximumf %2924, %2925 : vector<8x128xf32>
    %2927 = vector.broadcast %12 : f32 to vector<8x128xf32>
    %2928 = arith.mulf %2884, %2927 : vector<8x128xf32>
    %2929 = vector.broadcast %13 : f32 to vector<8x128xf32>
    %2930 = arith.mulf %2893, %2929 : vector<8x128xf32>
    %2931 = arith.addf %2928, %2930 : vector<8x128xf32>
    %2932 = vector.broadcast %14 : f32 to vector<8x128xf32>
    %2933 = arith.mulf %2902, %2932 : vector<8x128xf32>
    %2934 = arith.addf %2931, %2933 : vector<8x128xf32>
    %2935 = vector.broadcast %15 : f32 to vector<8x128xf32>
    %2936 = arith.mulf %2911, %2935 : vector<8x128xf32>
    %2937 = arith.addf %2934, %2936 : vector<8x128xf32>
    %2938 = vector.broadcast %145 : f32 to vector<8x128xf32>
    %2939 = arith.addf %2937, %2938 : vector<8x128xf32>
    %cst_264 = arith.constant 0.000000e+00 : f32
    %2940 = vector.broadcast %cst_264 : f32 to vector<8x128xf32>
    %2941 = arith.maximumf %2939, %2940 : vector<8x128xf32>
    %2942 = vector.broadcast %16 : f32 to vector<8x128xf32>
    %2943 = arith.mulf %2884, %2942 : vector<8x128xf32>
    %2944 = vector.broadcast %17 : f32 to vector<8x128xf32>
    %2945 = arith.mulf %2893, %2944 : vector<8x128xf32>
    %2946 = arith.addf %2943, %2945 : vector<8x128xf32>
    %2947 = vector.broadcast %18 : f32 to vector<8x128xf32>
    %2948 = arith.mulf %2902, %2947 : vector<8x128xf32>
    %2949 = arith.addf %2946, %2948 : vector<8x128xf32>
    %2950 = vector.broadcast %19 : f32 to vector<8x128xf32>
    %2951 = arith.mulf %2911, %2950 : vector<8x128xf32>
    %2952 = arith.addf %2949, %2951 : vector<8x128xf32>
    %2953 = vector.broadcast %146 : f32 to vector<8x128xf32>
    %2954 = arith.addf %2952, %2953 : vector<8x128xf32>
    %cst_265 = arith.constant 0.000000e+00 : f32
    %2955 = vector.broadcast %cst_265 : f32 to vector<8x128xf32>
    %2956 = arith.maximumf %2954, %2955 : vector<8x128xf32>
    %2957 = vector.broadcast %20 : f32 to vector<8x128xf32>
    %2958 = arith.mulf %2884, %2957 : vector<8x128xf32>
    %2959 = vector.broadcast %21 : f32 to vector<8x128xf32>
    %2960 = arith.mulf %2893, %2959 : vector<8x128xf32>
    %2961 = arith.addf %2958, %2960 : vector<8x128xf32>
    %2962 = vector.broadcast %22 : f32 to vector<8x128xf32>
    %2963 = arith.mulf %2902, %2962 : vector<8x128xf32>
    %2964 = arith.addf %2961, %2963 : vector<8x128xf32>
    %2965 = vector.broadcast %23 : f32 to vector<8x128xf32>
    %2966 = arith.mulf %2911, %2965 : vector<8x128xf32>
    %2967 = arith.addf %2964, %2966 : vector<8x128xf32>
    %2968 = vector.broadcast %147 : f32 to vector<8x128xf32>
    %2969 = arith.addf %2967, %2968 : vector<8x128xf32>
    %cst_266 = arith.constant 0.000000e+00 : f32
    %2970 = vector.broadcast %cst_266 : f32 to vector<8x128xf32>
    %2971 = arith.maximumf %2969, %2970 : vector<8x128xf32>
    %2972 = vector.broadcast %24 : f32 to vector<8x128xf32>
    %2973 = arith.mulf %2926, %2972 : vector<8x128xf32>
    %2974 = vector.broadcast %25 : f32 to vector<8x128xf32>
    %2975 = arith.mulf %2941, %2974 : vector<8x128xf32>
    %2976 = arith.addf %2973, %2975 : vector<8x128xf32>
    %2977 = vector.broadcast %26 : f32 to vector<8x128xf32>
    %2978 = arith.mulf %2956, %2977 : vector<8x128xf32>
    %2979 = arith.addf %2976, %2978 : vector<8x128xf32>
    %2980 = vector.broadcast %27 : f32 to vector<8x128xf32>
    %2981 = arith.mulf %2971, %2980 : vector<8x128xf32>
    %2982 = arith.addf %2979, %2981 : vector<8x128xf32>
    %2983 = vector.broadcast %148 : f32 to vector<8x128xf32>
    %2984 = arith.addf %2982, %2983 : vector<8x128xf32>
    %cst_267 = arith.constant 0.000000e+00 : f32
    %2985 = vector.broadcast %cst_267 : f32 to vector<8x128xf32>
    %2986 = arith.maximumf %2984, %2985 : vector<8x128xf32>
    %2987 = vector.broadcast %28 : f32 to vector<8x128xf32>
    %2988 = arith.mulf %2926, %2987 : vector<8x128xf32>
    %2989 = vector.broadcast %29 : f32 to vector<8x128xf32>
    %2990 = arith.mulf %2941, %2989 : vector<8x128xf32>
    %2991 = arith.addf %2988, %2990 : vector<8x128xf32>
    %2992 = vector.broadcast %30 : f32 to vector<8x128xf32>
    %2993 = arith.mulf %2956, %2992 : vector<8x128xf32>
    %2994 = arith.addf %2991, %2993 : vector<8x128xf32>
    %2995 = vector.broadcast %31 : f32 to vector<8x128xf32>
    %2996 = arith.mulf %2971, %2995 : vector<8x128xf32>
    %2997 = arith.addf %2994, %2996 : vector<8x128xf32>
    %2998 = vector.broadcast %149 : f32 to vector<8x128xf32>
    %2999 = arith.addf %2997, %2998 : vector<8x128xf32>
    %cst_268 = arith.constant 0.000000e+00 : f32
    %3000 = vector.broadcast %cst_268 : f32 to vector<8x128xf32>
    %3001 = arith.maximumf %2999, %3000 : vector<8x128xf32>
    %3002 = vector.broadcast %32 : f32 to vector<8x128xf32>
    %3003 = arith.mulf %2926, %3002 : vector<8x128xf32>
    %3004 = vector.broadcast %33 : f32 to vector<8x128xf32>
    %3005 = arith.mulf %2941, %3004 : vector<8x128xf32>
    %3006 = arith.addf %3003, %3005 : vector<8x128xf32>
    %3007 = vector.broadcast %34 : f32 to vector<8x128xf32>
    %3008 = arith.mulf %2956, %3007 : vector<8x128xf32>
    %3009 = arith.addf %3006, %3008 : vector<8x128xf32>
    %3010 = vector.broadcast %35 : f32 to vector<8x128xf32>
    %3011 = arith.mulf %2971, %3010 : vector<8x128xf32>
    %3012 = arith.addf %3009, %3011 : vector<8x128xf32>
    %3013 = vector.broadcast %150 : f32 to vector<8x128xf32>
    %3014 = arith.addf %3012, %3013 : vector<8x128xf32>
    %cst_269 = arith.constant 0.000000e+00 : f32
    %3015 = vector.broadcast %cst_269 : f32 to vector<8x128xf32>
    %3016 = arith.maximumf %3014, %3015 : vector<8x128xf32>
    %3017 = vector.broadcast %36 : f32 to vector<8x128xf32>
    %3018 = arith.mulf %2926, %3017 : vector<8x128xf32>
    %3019 = vector.broadcast %37 : f32 to vector<8x128xf32>
    %3020 = arith.mulf %2941, %3019 : vector<8x128xf32>
    %3021 = arith.addf %3018, %3020 : vector<8x128xf32>
    %3022 = vector.broadcast %38 : f32 to vector<8x128xf32>
    %3023 = arith.mulf %2956, %3022 : vector<8x128xf32>
    %3024 = arith.addf %3021, %3023 : vector<8x128xf32>
    %3025 = vector.broadcast %39 : f32 to vector<8x128xf32>
    %3026 = arith.mulf %2971, %3025 : vector<8x128xf32>
    %3027 = arith.addf %3024, %3026 : vector<8x128xf32>
    %3028 = vector.broadcast %151 : f32 to vector<8x128xf32>
    %3029 = arith.addf %3027, %3028 : vector<8x128xf32>
    %cst_270 = arith.constant 0.000000e+00 : f32
    %3030 = vector.broadcast %cst_270 : f32 to vector<8x128xf32>
    %3031 = arith.maximumf %3029, %3030 : vector<8x128xf32>
    %3032 = vector.broadcast %40 : f32 to vector<8x128xf32>
    %3033 = arith.mulf %2986, %3032 : vector<8x128xf32>
    %3034 = vector.broadcast %41 : f32 to vector<8x128xf32>
    %3035 = arith.mulf %3001, %3034 : vector<8x128xf32>
    %3036 = arith.addf %3033, %3035 : vector<8x128xf32>
    %3037 = vector.broadcast %42 : f32 to vector<8x128xf32>
    %3038 = arith.mulf %3016, %3037 : vector<8x128xf32>
    %3039 = arith.addf %3036, %3038 : vector<8x128xf32>
    %3040 = vector.broadcast %43 : f32 to vector<8x128xf32>
    %3041 = arith.mulf %3031, %3040 : vector<8x128xf32>
    %3042 = arith.addf %3039, %3041 : vector<8x128xf32>
    %3043 = vector.broadcast %152 : f32 to vector<8x128xf32>
    %3044 = arith.addf %3042, %3043 : vector<8x128xf32>
    %cst_271 = arith.constant 0.000000e+00 : f32
    %3045 = vector.broadcast %cst_271 : f32 to vector<8x128xf32>
    %3046 = arith.maximumf %3044, %3045 : vector<8x128xf32>
    %3047 = vector.broadcast %44 : f32 to vector<8x128xf32>
    %3048 = arith.mulf %2986, %3047 : vector<8x128xf32>
    %3049 = vector.broadcast %45 : f32 to vector<8x128xf32>
    %3050 = arith.mulf %3001, %3049 : vector<8x128xf32>
    %3051 = arith.addf %3048, %3050 : vector<8x128xf32>
    %3052 = vector.broadcast %46 : f32 to vector<8x128xf32>
    %3053 = arith.mulf %3016, %3052 : vector<8x128xf32>
    %3054 = arith.addf %3051, %3053 : vector<8x128xf32>
    %3055 = vector.broadcast %47 : f32 to vector<8x128xf32>
    %3056 = arith.mulf %3031, %3055 : vector<8x128xf32>
    %3057 = arith.addf %3054, %3056 : vector<8x128xf32>
    %3058 = vector.broadcast %153 : f32 to vector<8x128xf32>
    %3059 = arith.addf %3057, %3058 : vector<8x128xf32>
    %cst_272 = arith.constant 0.000000e+00 : f32
    %3060 = vector.broadcast %cst_272 : f32 to vector<8x128xf32>
    %3061 = arith.maximumf %3059, %3060 : vector<8x128xf32>
    %3062 = vector.broadcast %48 : f32 to vector<8x128xf32>
    %3063 = arith.mulf %2986, %3062 : vector<8x128xf32>
    %3064 = vector.broadcast %49 : f32 to vector<8x128xf32>
    %3065 = arith.mulf %3001, %3064 : vector<8x128xf32>
    %3066 = arith.addf %3063, %3065 : vector<8x128xf32>
    %3067 = vector.broadcast %50 : f32 to vector<8x128xf32>
    %3068 = arith.mulf %3016, %3067 : vector<8x128xf32>
    %3069 = arith.addf %3066, %3068 : vector<8x128xf32>
    %3070 = vector.broadcast %51 : f32 to vector<8x128xf32>
    %3071 = arith.mulf %3031, %3070 : vector<8x128xf32>
    %3072 = arith.addf %3069, %3071 : vector<8x128xf32>
    %3073 = vector.broadcast %154 : f32 to vector<8x128xf32>
    %3074 = arith.addf %3072, %3073 : vector<8x128xf32>
    %cst_273 = arith.constant 0.000000e+00 : f32
    %3075 = vector.broadcast %cst_273 : f32 to vector<8x128xf32>
    %3076 = arith.maximumf %3074, %3075 : vector<8x128xf32>
    %3077 = vector.broadcast %52 : f32 to vector<8x128xf32>
    %3078 = arith.mulf %2986, %3077 : vector<8x128xf32>
    %3079 = vector.broadcast %53 : f32 to vector<8x128xf32>
    %3080 = arith.mulf %3001, %3079 : vector<8x128xf32>
    %3081 = arith.addf %3078, %3080 : vector<8x128xf32>
    %3082 = vector.broadcast %54 : f32 to vector<8x128xf32>
    %3083 = arith.mulf %3016, %3082 : vector<8x128xf32>
    %3084 = arith.addf %3081, %3083 : vector<8x128xf32>
    %3085 = vector.broadcast %55 : f32 to vector<8x128xf32>
    %3086 = arith.mulf %3031, %3085 : vector<8x128xf32>
    %3087 = arith.addf %3084, %3086 : vector<8x128xf32>
    %3088 = vector.broadcast %155 : f32 to vector<8x128xf32>
    %3089 = arith.addf %3087, %3088 : vector<8x128xf32>
    %cst_274 = arith.constant 0.000000e+00 : f32
    %3090 = vector.broadcast %cst_274 : f32 to vector<8x128xf32>
    %3091 = arith.maximumf %3089, %3090 : vector<8x128xf32>
    %3092 = vector.broadcast %56 : f32 to vector<8x128xf32>
    %3093 = arith.mulf %3046, %3092 : vector<8x128xf32>
    %3094 = vector.broadcast %57 : f32 to vector<8x128xf32>
    %3095 = arith.mulf %3061, %3094 : vector<8x128xf32>
    %3096 = arith.addf %3093, %3095 : vector<8x128xf32>
    %3097 = vector.broadcast %58 : f32 to vector<8x128xf32>
    %3098 = arith.mulf %3076, %3097 : vector<8x128xf32>
    %3099 = arith.addf %3096, %3098 : vector<8x128xf32>
    %3100 = vector.broadcast %59 : f32 to vector<8x128xf32>
    %3101 = arith.mulf %3091, %3100 : vector<8x128xf32>
    %3102 = arith.addf %3099, %3101 : vector<8x128xf32>
    %3103 = vector.broadcast %156 : f32 to vector<8x128xf32>
    %3104 = arith.addf %3102, %3103 : vector<8x128xf32>
    %cst_275 = arith.constant 0.000000e+00 : f32
    %3105 = vector.broadcast %cst_275 : f32 to vector<8x128xf32>
    %3106 = arith.maximumf %3104, %3105 : vector<8x128xf32>
    %3107 = vector.broadcast %60 : f32 to vector<8x128xf32>
    %3108 = arith.mulf %3046, %3107 : vector<8x128xf32>
    %3109 = vector.broadcast %61 : f32 to vector<8x128xf32>
    %3110 = arith.mulf %3061, %3109 : vector<8x128xf32>
    %3111 = arith.addf %3108, %3110 : vector<8x128xf32>
    %3112 = vector.broadcast %62 : f32 to vector<8x128xf32>
    %3113 = arith.mulf %3076, %3112 : vector<8x128xf32>
    %3114 = arith.addf %3111, %3113 : vector<8x128xf32>
    %3115 = vector.broadcast %63 : f32 to vector<8x128xf32>
    %3116 = arith.mulf %3091, %3115 : vector<8x128xf32>
    %3117 = arith.addf %3114, %3116 : vector<8x128xf32>
    %3118 = vector.broadcast %157 : f32 to vector<8x128xf32>
    %3119 = arith.addf %3117, %3118 : vector<8x128xf32>
    %cst_276 = arith.constant 0.000000e+00 : f32
    %3120 = vector.broadcast %cst_276 : f32 to vector<8x128xf32>
    %3121 = arith.maximumf %3119, %3120 : vector<8x128xf32>
    %3122 = vector.broadcast %64 : f32 to vector<8x128xf32>
    %3123 = arith.mulf %3046, %3122 : vector<8x128xf32>
    %3124 = vector.broadcast %65 : f32 to vector<8x128xf32>
    %3125 = arith.mulf %3061, %3124 : vector<8x128xf32>
    %3126 = arith.addf %3123, %3125 : vector<8x128xf32>
    %3127 = vector.broadcast %66 : f32 to vector<8x128xf32>
    %3128 = arith.mulf %3076, %3127 : vector<8x128xf32>
    %3129 = arith.addf %3126, %3128 : vector<8x128xf32>
    %3130 = vector.broadcast %67 : f32 to vector<8x128xf32>
    %3131 = arith.mulf %3091, %3130 : vector<8x128xf32>
    %3132 = arith.addf %3129, %3131 : vector<8x128xf32>
    %3133 = vector.broadcast %158 : f32 to vector<8x128xf32>
    %3134 = arith.addf %3132, %3133 : vector<8x128xf32>
    %cst_277 = arith.constant 0.000000e+00 : f32
    %3135 = vector.broadcast %cst_277 : f32 to vector<8x128xf32>
    %3136 = arith.maximumf %3134, %3135 : vector<8x128xf32>
    %3137 = vector.broadcast %68 : f32 to vector<8x128xf32>
    %3138 = arith.mulf %3046, %3137 : vector<8x128xf32>
    %3139 = vector.broadcast %69 : f32 to vector<8x128xf32>
    %3140 = arith.mulf %3061, %3139 : vector<8x128xf32>
    %3141 = arith.addf %3138, %3140 : vector<8x128xf32>
    %3142 = vector.broadcast %70 : f32 to vector<8x128xf32>
    %3143 = arith.mulf %3076, %3142 : vector<8x128xf32>
    %3144 = arith.addf %3141, %3143 : vector<8x128xf32>
    %3145 = vector.broadcast %71 : f32 to vector<8x128xf32>
    %3146 = arith.mulf %3091, %3145 : vector<8x128xf32>
    %3147 = arith.addf %3144, %3146 : vector<8x128xf32>
    %3148 = vector.broadcast %159 : f32 to vector<8x128xf32>
    %3149 = arith.addf %3147, %3148 : vector<8x128xf32>
    %cst_278 = arith.constant 0.000000e+00 : f32
    %3150 = vector.broadcast %cst_278 : f32 to vector<8x128xf32>
    %3151 = arith.maximumf %3149, %3150 : vector<8x128xf32>
    %3152 = vector.broadcast %72 : f32 to vector<8x128xf32>
    %3153 = arith.mulf %3106, %3152 : vector<8x128xf32>
    %3154 = vector.broadcast %73 : f32 to vector<8x128xf32>
    %3155 = arith.mulf %3121, %3154 : vector<8x128xf32>
    %3156 = arith.addf %3153, %3155 : vector<8x128xf32>
    %3157 = vector.broadcast %74 : f32 to vector<8x128xf32>
    %3158 = arith.mulf %3136, %3157 : vector<8x128xf32>
    %3159 = arith.addf %3156, %3158 : vector<8x128xf32>
    %3160 = vector.broadcast %75 : f32 to vector<8x128xf32>
    %3161 = arith.mulf %3151, %3160 : vector<8x128xf32>
    %3162 = arith.addf %3159, %3161 : vector<8x128xf32>
    %3163 = vector.broadcast %160 : f32 to vector<8x128xf32>
    %3164 = arith.addf %3162, %3163 : vector<8x128xf32>
    %cst_279 = arith.constant 0.000000e+00 : f32
    %3165 = vector.broadcast %cst_279 : f32 to vector<8x128xf32>
    %3166 = arith.maximumf %3164, %3165 : vector<8x128xf32>
    %3167 = vector.broadcast %76 : f32 to vector<8x128xf32>
    %3168 = arith.mulf %3106, %3167 : vector<8x128xf32>
    %3169 = vector.broadcast %77 : f32 to vector<8x128xf32>
    %3170 = arith.mulf %3121, %3169 : vector<8x128xf32>
    %3171 = arith.addf %3168, %3170 : vector<8x128xf32>
    %3172 = vector.broadcast %78 : f32 to vector<8x128xf32>
    %3173 = arith.mulf %3136, %3172 : vector<8x128xf32>
    %3174 = arith.addf %3171, %3173 : vector<8x128xf32>
    %3175 = vector.broadcast %79 : f32 to vector<8x128xf32>
    %3176 = arith.mulf %3151, %3175 : vector<8x128xf32>
    %3177 = arith.addf %3174, %3176 : vector<8x128xf32>
    %3178 = vector.broadcast %161 : f32 to vector<8x128xf32>
    %3179 = arith.addf %3177, %3178 : vector<8x128xf32>
    %cst_280 = arith.constant 0.000000e+00 : f32
    %3180 = vector.broadcast %cst_280 : f32 to vector<8x128xf32>
    %3181 = arith.maximumf %3179, %3180 : vector<8x128xf32>
    %3182 = vector.broadcast %80 : f32 to vector<8x128xf32>
    %3183 = arith.mulf %3106, %3182 : vector<8x128xf32>
    %3184 = vector.broadcast %81 : f32 to vector<8x128xf32>
    %3185 = arith.mulf %3121, %3184 : vector<8x128xf32>
    %3186 = arith.addf %3183, %3185 : vector<8x128xf32>
    %3187 = vector.broadcast %82 : f32 to vector<8x128xf32>
    %3188 = arith.mulf %3136, %3187 : vector<8x128xf32>
    %3189 = arith.addf %3186, %3188 : vector<8x128xf32>
    %3190 = vector.broadcast %83 : f32 to vector<8x128xf32>
    %3191 = arith.mulf %3151, %3190 : vector<8x128xf32>
    %3192 = arith.addf %3189, %3191 : vector<8x128xf32>
    %3193 = vector.broadcast %162 : f32 to vector<8x128xf32>
    %3194 = arith.addf %3192, %3193 : vector<8x128xf32>
    %cst_281 = arith.constant 0.000000e+00 : f32
    %3195 = vector.broadcast %cst_281 : f32 to vector<8x128xf32>
    %3196 = arith.maximumf %3194, %3195 : vector<8x128xf32>
    %3197 = vector.broadcast %84 : f32 to vector<8x128xf32>
    %3198 = arith.mulf %3106, %3197 : vector<8x128xf32>
    %3199 = vector.broadcast %85 : f32 to vector<8x128xf32>
    %3200 = arith.mulf %3121, %3199 : vector<8x128xf32>
    %3201 = arith.addf %3198, %3200 : vector<8x128xf32>
    %3202 = vector.broadcast %86 : f32 to vector<8x128xf32>
    %3203 = arith.mulf %3136, %3202 : vector<8x128xf32>
    %3204 = arith.addf %3201, %3203 : vector<8x128xf32>
    %3205 = vector.broadcast %87 : f32 to vector<8x128xf32>
    %3206 = arith.mulf %3151, %3205 : vector<8x128xf32>
    %3207 = arith.addf %3204, %3206 : vector<8x128xf32>
    %3208 = vector.broadcast %163 : f32 to vector<8x128xf32>
    %3209 = arith.addf %3207, %3208 : vector<8x128xf32>
    %cst_282 = arith.constant 0.000000e+00 : f32
    %3210 = vector.broadcast %cst_282 : f32 to vector<8x128xf32>
    %3211 = arith.maximumf %3209, %3210 : vector<8x128xf32>
    %3212 = vector.broadcast %88 : f32 to vector<8x128xf32>
    %3213 = arith.mulf %3166, %3212 : vector<8x128xf32>
    %3214 = vector.broadcast %89 : f32 to vector<8x128xf32>
    %3215 = arith.mulf %3181, %3214 : vector<8x128xf32>
    %3216 = arith.addf %3213, %3215 : vector<8x128xf32>
    %3217 = vector.broadcast %90 : f32 to vector<8x128xf32>
    %3218 = arith.mulf %3196, %3217 : vector<8x128xf32>
    %3219 = arith.addf %3216, %3218 : vector<8x128xf32>
    %3220 = vector.broadcast %91 : f32 to vector<8x128xf32>
    %3221 = arith.mulf %3211, %3220 : vector<8x128xf32>
    %3222 = arith.addf %3219, %3221 : vector<8x128xf32>
    %3223 = vector.broadcast %164 : f32 to vector<8x128xf32>
    %3224 = arith.addf %3222, %3223 : vector<8x128xf32>
    %cst_283 = arith.constant 0.000000e+00 : f32
    %3225 = vector.broadcast %cst_283 : f32 to vector<8x128xf32>
    %3226 = arith.maximumf %3224, %3225 : vector<8x128xf32>
    %3227 = vector.broadcast %92 : f32 to vector<8x128xf32>
    %3228 = arith.mulf %3166, %3227 : vector<8x128xf32>
    %3229 = vector.broadcast %93 : f32 to vector<8x128xf32>
    %3230 = arith.mulf %3181, %3229 : vector<8x128xf32>
    %3231 = arith.addf %3228, %3230 : vector<8x128xf32>
    %3232 = vector.broadcast %94 : f32 to vector<8x128xf32>
    %3233 = arith.mulf %3196, %3232 : vector<8x128xf32>
    %3234 = arith.addf %3231, %3233 : vector<8x128xf32>
    %3235 = vector.broadcast %95 : f32 to vector<8x128xf32>
    %3236 = arith.mulf %3211, %3235 : vector<8x128xf32>
    %3237 = arith.addf %3234, %3236 : vector<8x128xf32>
    %3238 = vector.broadcast %165 : f32 to vector<8x128xf32>
    %3239 = arith.addf %3237, %3238 : vector<8x128xf32>
    %cst_284 = arith.constant 0.000000e+00 : f32
    %3240 = vector.broadcast %cst_284 : f32 to vector<8x128xf32>
    %3241 = arith.maximumf %3239, %3240 : vector<8x128xf32>
    %3242 = vector.broadcast %96 : f32 to vector<8x128xf32>
    %3243 = arith.mulf %3166, %3242 : vector<8x128xf32>
    %3244 = vector.broadcast %97 : f32 to vector<8x128xf32>
    %3245 = arith.mulf %3181, %3244 : vector<8x128xf32>
    %3246 = arith.addf %3243, %3245 : vector<8x128xf32>
    %3247 = vector.broadcast %98 : f32 to vector<8x128xf32>
    %3248 = arith.mulf %3196, %3247 : vector<8x128xf32>
    %3249 = arith.addf %3246, %3248 : vector<8x128xf32>
    %3250 = vector.broadcast %99 : f32 to vector<8x128xf32>
    %3251 = arith.mulf %3211, %3250 : vector<8x128xf32>
    %3252 = arith.addf %3249, %3251 : vector<8x128xf32>
    %3253 = vector.broadcast %166 : f32 to vector<8x128xf32>
    %3254 = arith.addf %3252, %3253 : vector<8x128xf32>
    %cst_285 = arith.constant 0.000000e+00 : f32
    %3255 = vector.broadcast %cst_285 : f32 to vector<8x128xf32>
    %3256 = arith.maximumf %3254, %3255 : vector<8x128xf32>
    %3257 = vector.broadcast %100 : f32 to vector<8x128xf32>
    %3258 = arith.mulf %3166, %3257 : vector<8x128xf32>
    %3259 = vector.broadcast %101 : f32 to vector<8x128xf32>
    %3260 = arith.mulf %3181, %3259 : vector<8x128xf32>
    %3261 = arith.addf %3258, %3260 : vector<8x128xf32>
    %3262 = vector.broadcast %102 : f32 to vector<8x128xf32>
    %3263 = arith.mulf %3196, %3262 : vector<8x128xf32>
    %3264 = arith.addf %3261, %3263 : vector<8x128xf32>
    %3265 = vector.broadcast %103 : f32 to vector<8x128xf32>
    %3266 = arith.mulf %3211, %3265 : vector<8x128xf32>
    %3267 = arith.addf %3264, %3266 : vector<8x128xf32>
    %3268 = vector.broadcast %167 : f32 to vector<8x128xf32>
    %3269 = arith.addf %3267, %3268 : vector<8x128xf32>
    %cst_286 = arith.constant 0.000000e+00 : f32
    %3270 = vector.broadcast %cst_286 : f32 to vector<8x128xf32>
    %3271 = arith.maximumf %3269, %3270 : vector<8x128xf32>
    %3272 = vector.broadcast %104 : f32 to vector<8x128xf32>
    %3273 = arith.mulf %3226, %3272 : vector<8x128xf32>
    %3274 = vector.broadcast %105 : f32 to vector<8x128xf32>
    %3275 = arith.mulf %3241, %3274 : vector<8x128xf32>
    %3276 = arith.addf %3273, %3275 : vector<8x128xf32>
    %3277 = vector.broadcast %106 : f32 to vector<8x128xf32>
    %3278 = arith.mulf %3256, %3277 : vector<8x128xf32>
    %3279 = arith.addf %3276, %3278 : vector<8x128xf32>
    %3280 = vector.broadcast %107 : f32 to vector<8x128xf32>
    %3281 = arith.mulf %3271, %3280 : vector<8x128xf32>
    %3282 = arith.addf %3279, %3281 : vector<8x128xf32>
    %3283 = vector.broadcast %168 : f32 to vector<8x128xf32>
    %3284 = arith.addf %3282, %3283 : vector<8x128xf32>
    %cst_287 = arith.constant 0.000000e+00 : f32
    %3285 = vector.broadcast %cst_287 : f32 to vector<8x128xf32>
    %3286 = arith.maximumf %3284, %3285 : vector<8x128xf32>
    %3287 = vector.broadcast %108 : f32 to vector<8x128xf32>
    %3288 = arith.mulf %3226, %3287 : vector<8x128xf32>
    %3289 = vector.broadcast %109 : f32 to vector<8x128xf32>
    %3290 = arith.mulf %3241, %3289 : vector<8x128xf32>
    %3291 = arith.addf %3288, %3290 : vector<8x128xf32>
    %3292 = vector.broadcast %110 : f32 to vector<8x128xf32>
    %3293 = arith.mulf %3256, %3292 : vector<8x128xf32>
    %3294 = arith.addf %3291, %3293 : vector<8x128xf32>
    %3295 = vector.broadcast %111 : f32 to vector<8x128xf32>
    %3296 = arith.mulf %3271, %3295 : vector<8x128xf32>
    %3297 = arith.addf %3294, %3296 : vector<8x128xf32>
    %3298 = vector.broadcast %169 : f32 to vector<8x128xf32>
    %3299 = arith.addf %3297, %3298 : vector<8x128xf32>
    %cst_288 = arith.constant 0.000000e+00 : f32
    %3300 = vector.broadcast %cst_288 : f32 to vector<8x128xf32>
    %3301 = arith.maximumf %3299, %3300 : vector<8x128xf32>
    %3302 = vector.broadcast %112 : f32 to vector<8x128xf32>
    %3303 = arith.mulf %3226, %3302 : vector<8x128xf32>
    %3304 = vector.broadcast %113 : f32 to vector<8x128xf32>
    %3305 = arith.mulf %3241, %3304 : vector<8x128xf32>
    %3306 = arith.addf %3303, %3305 : vector<8x128xf32>
    %3307 = vector.broadcast %114 : f32 to vector<8x128xf32>
    %3308 = arith.mulf %3256, %3307 : vector<8x128xf32>
    %3309 = arith.addf %3306, %3308 : vector<8x128xf32>
    %3310 = vector.broadcast %115 : f32 to vector<8x128xf32>
    %3311 = arith.mulf %3271, %3310 : vector<8x128xf32>
    %3312 = arith.addf %3309, %3311 : vector<8x128xf32>
    %3313 = vector.broadcast %170 : f32 to vector<8x128xf32>
    %3314 = arith.addf %3312, %3313 : vector<8x128xf32>
    %cst_289 = arith.constant 0.000000e+00 : f32
    %3315 = vector.broadcast %cst_289 : f32 to vector<8x128xf32>
    %3316 = arith.maximumf %3314, %3315 : vector<8x128xf32>
    %3317 = vector.broadcast %116 : f32 to vector<8x128xf32>
    %3318 = arith.mulf %3226, %3317 : vector<8x128xf32>
    %3319 = vector.broadcast %117 : f32 to vector<8x128xf32>
    %3320 = arith.mulf %3241, %3319 : vector<8x128xf32>
    %3321 = arith.addf %3318, %3320 : vector<8x128xf32>
    %3322 = vector.broadcast %118 : f32 to vector<8x128xf32>
    %3323 = arith.mulf %3256, %3322 : vector<8x128xf32>
    %3324 = arith.addf %3321, %3323 : vector<8x128xf32>
    %3325 = vector.broadcast %119 : f32 to vector<8x128xf32>
    %3326 = arith.mulf %3271, %3325 : vector<8x128xf32>
    %3327 = arith.addf %3324, %3326 : vector<8x128xf32>
    %3328 = vector.broadcast %171 : f32 to vector<8x128xf32>
    %3329 = arith.addf %3327, %3328 : vector<8x128xf32>
    %cst_290 = arith.constant 0.000000e+00 : f32
    %3330 = vector.broadcast %cst_290 : f32 to vector<8x128xf32>
    %3331 = arith.maximumf %3329, %3330 : vector<8x128xf32>
    %3332 = vector.broadcast %120 : f32 to vector<8x128xf32>
    %3333 = arith.mulf %3286, %3332 : vector<8x128xf32>
    %3334 = vector.broadcast %121 : f32 to vector<8x128xf32>
    %3335 = arith.mulf %3301, %3334 : vector<8x128xf32>
    %3336 = arith.addf %3333, %3335 : vector<8x128xf32>
    %3337 = vector.broadcast %122 : f32 to vector<8x128xf32>
    %3338 = arith.mulf %3316, %3337 : vector<8x128xf32>
    %3339 = arith.addf %3336, %3338 : vector<8x128xf32>
    %3340 = vector.broadcast %123 : f32 to vector<8x128xf32>
    %3341 = arith.mulf %3331, %3340 : vector<8x128xf32>
    %3342 = arith.addf %3339, %3341 : vector<8x128xf32>
    %3343 = vector.broadcast %172 : f32 to vector<8x128xf32>
    %3344 = arith.addf %3342, %3343 : vector<8x128xf32>
    %cst_291 = arith.constant 0.000000e+00 : f32
    %3345 = vector.broadcast %cst_291 : f32 to vector<8x128xf32>
    %3346 = arith.maximumf %3344, %3345 : vector<8x128xf32>
    %3347 = vector.broadcast %124 : f32 to vector<8x128xf32>
    %3348 = arith.mulf %3286, %3347 : vector<8x128xf32>
    %3349 = vector.broadcast %125 : f32 to vector<8x128xf32>
    %3350 = arith.mulf %3301, %3349 : vector<8x128xf32>
    %3351 = arith.addf %3348, %3350 : vector<8x128xf32>
    %3352 = vector.broadcast %126 : f32 to vector<8x128xf32>
    %3353 = arith.mulf %3316, %3352 : vector<8x128xf32>
    %3354 = arith.addf %3351, %3353 : vector<8x128xf32>
    %3355 = vector.broadcast %127 : f32 to vector<8x128xf32>
    %3356 = arith.mulf %3331, %3355 : vector<8x128xf32>
    %3357 = arith.addf %3354, %3356 : vector<8x128xf32>
    %3358 = vector.broadcast %173 : f32 to vector<8x128xf32>
    %3359 = arith.addf %3357, %3358 : vector<8x128xf32>
    %cst_292 = arith.constant 0.000000e+00 : f32
    %3360 = vector.broadcast %cst_292 : f32 to vector<8x128xf32>
    %3361 = arith.maximumf %3359, %3360 : vector<8x128xf32>
    %3362 = vector.broadcast %128 : f32 to vector<8x128xf32>
    %3363 = arith.mulf %3286, %3362 : vector<8x128xf32>
    %3364 = vector.broadcast %129 : f32 to vector<8x128xf32>
    %3365 = arith.mulf %3301, %3364 : vector<8x128xf32>
    %3366 = arith.addf %3363, %3365 : vector<8x128xf32>
    %3367 = vector.broadcast %130 : f32 to vector<8x128xf32>
    %3368 = arith.mulf %3316, %3367 : vector<8x128xf32>
    %3369 = arith.addf %3366, %3368 : vector<8x128xf32>
    %3370 = vector.broadcast %131 : f32 to vector<8x128xf32>
    %3371 = arith.mulf %3331, %3370 : vector<8x128xf32>
    %3372 = arith.addf %3369, %3371 : vector<8x128xf32>
    %3373 = vector.broadcast %174 : f32 to vector<8x128xf32>
    %3374 = arith.addf %3372, %3373 : vector<8x128xf32>
    %cst_293 = arith.constant 0.000000e+00 : f32
    %3375 = vector.broadcast %cst_293 : f32 to vector<8x128xf32>
    %3376 = arith.maximumf %3374, %3375 : vector<8x128xf32>
    %3377 = vector.broadcast %132 : f32 to vector<8x128xf32>
    %3378 = arith.mulf %3286, %3377 : vector<8x128xf32>
    %3379 = vector.broadcast %133 : f32 to vector<8x128xf32>
    %3380 = arith.mulf %3301, %3379 : vector<8x128xf32>
    %3381 = arith.addf %3378, %3380 : vector<8x128xf32>
    %3382 = vector.broadcast %134 : f32 to vector<8x128xf32>
    %3383 = arith.mulf %3316, %3382 : vector<8x128xf32>
    %3384 = arith.addf %3381, %3383 : vector<8x128xf32>
    %3385 = vector.broadcast %135 : f32 to vector<8x128xf32>
    %3386 = arith.mulf %3331, %3385 : vector<8x128xf32>
    %3387 = arith.addf %3384, %3386 : vector<8x128xf32>
    %3388 = vector.broadcast %175 : f32 to vector<8x128xf32>
    %3389 = arith.addf %3387, %3388 : vector<8x128xf32>
    %cst_294 = arith.constant 0.000000e+00 : f32
    %3390 = vector.broadcast %cst_294 : f32 to vector<8x128xf32>
    %3391 = arith.maximumf %3389, %3390 : vector<8x128xf32>
    %3392 = vector.broadcast %136 : f32 to vector<8x128xf32>
    %3393 = arith.mulf %3346, %3392 : vector<8x128xf32>
    %3394 = vector.broadcast %137 : f32 to vector<8x128xf32>
    %3395 = arith.mulf %3361, %3394 : vector<8x128xf32>
    %3396 = arith.addf %3393, %3395 : vector<8x128xf32>
    %3397 = vector.broadcast %138 : f32 to vector<8x128xf32>
    %3398 = arith.mulf %3376, %3397 : vector<8x128xf32>
    %3399 = arith.addf %3396, %3398 : vector<8x128xf32>
    %3400 = vector.broadcast %139 : f32 to vector<8x128xf32>
    %3401 = arith.mulf %3391, %3400 : vector<8x128xf32>
    %3402 = arith.addf %3399, %3401 : vector<8x128xf32>
    %3403 = vector.broadcast %176 : f32 to vector<8x128xf32>
    %3404 = arith.addf %3402, %3403 : vector<8x128xf32>
    %3405 = arith.negf %3404 : vector<8x128xf32>
    %3406 = math.exp %3405 : vector<8x128xf32>
    %cst_295 = arith.constant 1.000000e+00 : f32
    %3407 = vector.broadcast %cst_295 : f32 to vector<8x128xf32>
    %3408 = arith.addf %3407, %3406 : vector<8x128xf32>
    %3409 = arith.divf %3407, %3408 : vector<8x128xf32>
    %c40_296 = arith.constant 40 : index
    %c0_297 = arith.constant 0 : index
    %3410 = vector.load %arg4[%c40_296, %c0_297] : memref<64x128xf32, #tpu.memory_space<vmem>>, vector<8x128xf32>
    tpu.vector_store %arg4[%c40_296, %c0_297], %3409 {strides = array<i32>} : memref<64x128xf32, #tpu.memory_space<vmem>>, vector<8x128xf32>,
    %c0_298 = arith.constant 0 : index
    %c48_299 = arith.constant 48 : index
    %c0_300 = arith.constant 0 : index
    %3411 = vector.load %arg3[%c0_298, %c48_299, %c0_300] : memref<2x64x128xf32, #tpu.memory_space<vmem>>, vector<1x8x128xf32>
    %3412 = vector.shape_cast %3411 : vector<1x8x128xf32> to vector<8x128xf32>
    %c1_301 = arith.constant 1 : index
    %c48_302 = arith.constant 48 : index
    %c0_303 = arith.constant 0 : index
    %3413 = vector.load %arg3[%c1_301, %c48_302, %c0_303] : memref<2x64x128xf32, #tpu.memory_space<vmem>>, vector<1x8x128xf32>
    %3414 = vector.shape_cast %3413 : vector<1x8x128xf32> to vector<8x128xf32>
    %3415 = vector.broadcast %0 : f32 to vector<8x128xf32>
    %3416 = arith.mulf %3412, %3415 : vector<8x128xf32>
    %3417 = vector.broadcast %1 : f32 to vector<8x128xf32>
    %3418 = arith.mulf %3414, %3417 : vector<8x128xf32>
    %3419 = arith.addf %3416, %3418 : vector<8x128xf32>
    %3420 = vector.broadcast %140 : f32 to vector<8x128xf32>
    %3421 = arith.addf %3419, %3420 : vector<8x128xf32>
    %cst_304 = arith.constant 0.000000e+00 : f32
    %3422 = vector.broadcast %cst_304 : f32 to vector<8x128xf32>
    %3423 = arith.maximumf %3421, %3422 : vector<8x128xf32>
    %3424 = vector.broadcast %2 : f32 to vector<8x128xf32>
    %3425 = arith.mulf %3412, %3424 : vector<8x128xf32>
    %3426 = vector.broadcast %3 : f32 to vector<8x128xf32>
    %3427 = arith.mulf %3414, %3426 : vector<8x128xf32>
    %3428 = arith.addf %3425, %3427 : vector<8x128xf32>
    %3429 = vector.broadcast %141 : f32 to vector<8x128xf32>
    %3430 = arith.addf %3428, %3429 : vector<8x128xf32>
    %cst_305 = arith.constant 0.000000e+00 : f32
    %3431 = vector.broadcast %cst_305 : f32 to vector<8x128xf32>
    %3432 = arith.maximumf %3430, %3431 : vector<8x128xf32>
    %3433 = vector.broadcast %4 : f32 to vector<8x128xf32>
    %3434 = arith.mulf %3412, %3433 : vector<8x128xf32>
    %3435 = vector.broadcast %5 : f32 to vector<8x128xf32>
    %3436 = arith.mulf %3414, %3435 : vector<8x128xf32>
    %3437 = arith.addf %3434, %3436 : vector<8x128xf32>
    %3438 = vector.broadcast %142 : f32 to vector<8x128xf32>
    %3439 = arith.addf %3437, %3438 : vector<8x128xf32>
    %cst_306 = arith.constant 0.000000e+00 : f32
    %3440 = vector.broadcast %cst_306 : f32 to vector<8x128xf32>
    %3441 = arith.maximumf %3439, %3440 : vector<8x128xf32>
    %3442 = vector.broadcast %6 : f32 to vector<8x128xf32>
    %3443 = arith.mulf %3412, %3442 : vector<8x128xf32>
    %3444 = vector.broadcast %7 : f32 to vector<8x128xf32>
    %3445 = arith.mulf %3414, %3444 : vector<8x128xf32>
    %3446 = arith.addf %3443, %3445 : vector<8x128xf32>
    %3447 = vector.broadcast %143 : f32 to vector<8x128xf32>
    %3448 = arith.addf %3446, %3447 : vector<8x128xf32>
    %cst_307 = arith.constant 0.000000e+00 : f32
    %3449 = vector.broadcast %cst_307 : f32 to vector<8x128xf32>
    %3450 = arith.maximumf %3448, %3449 : vector<8x128xf32>
    %3451 = vector.broadcast %8 : f32 to vector<8x128xf32>
    %3452 = arith.mulf %3423, %3451 : vector<8x128xf32>
    %3453 = vector.broadcast %9 : f32 to vector<8x128xf32>
    %3454 = arith.mulf %3432, %3453 : vector<8x128xf32>
    %3455 = arith.addf %3452, %3454 : vector<8x128xf32>
    %3456 = vector.broadcast %10 : f32 to vector<8x128xf32>
    %3457 = arith.mulf %3441, %3456 : vector<8x128xf32>
    %3458 = arith.addf %3455, %3457 : vector<8x128xf32>
    %3459 = vector.broadcast %11 : f32 to vector<8x128xf32>
    %3460 = arith.mulf %3450, %3459 : vector<8x128xf32>
    %3461 = arith.addf %3458, %3460 : vector<8x128xf32>
    %3462 = vector.broadcast %144 : f32 to vector<8x128xf32>
    %3463 = arith.addf %3461, %3462 : vector<8x128xf32>
    %cst_308 = arith.constant 0.000000e+00 : f32
    %3464 = vector.broadcast %cst_308 : f32 to vector<8x128xf32>
    %3465 = arith.maximumf %3463, %3464 : vector<8x128xf32>
    %3466 = vector.broadcast %12 : f32 to vector<8x128xf32>
    %3467 = arith.mulf %3423, %3466 : vector<8x128xf32>
    %3468 = vector.broadcast %13 : f32 to vector<8x128xf32>
    %3469 = arith.mulf %3432, %3468 : vector<8x128xf32>
    %3470 = arith.addf %3467, %3469 : vector<8x128xf32>
    %3471 = vector.broadcast %14 : f32 to vector<8x128xf32>
    %3472 = arith.mulf %3441, %3471 : vector<8x128xf32>
    %3473 = arith.addf %3470, %3472 : vector<8x128xf32>
    %3474 = vector.broadcast %15 : f32 to vector<8x128xf32>
    %3475 = arith.mulf %3450, %3474 : vector<8x128xf32>
    %3476 = arith.addf %3473, %3475 : vector<8x128xf32>
    %3477 = vector.broadcast %145 : f32 to vector<8x128xf32>
    %3478 = arith.addf %3476, %3477 : vector<8x128xf32>
    %cst_309 = arith.constant 0.000000e+00 : f32
    %3479 = vector.broadcast %cst_309 : f32 to vector<8x128xf32>
    %3480 = arith.maximumf %3478, %3479 : vector<8x128xf32>
    %3481 = vector.broadcast %16 : f32 to vector<8x128xf32>
    %3482 = arith.mulf %3423, %3481 : vector<8x128xf32>
    %3483 = vector.broadcast %17 : f32 to vector<8x128xf32>
    %3484 = arith.mulf %3432, %3483 : vector<8x128xf32>
    %3485 = arith.addf %3482, %3484 : vector<8x128xf32>
    %3486 = vector.broadcast %18 : f32 to vector<8x128xf32>
    %3487 = arith.mulf %3441, %3486 : vector<8x128xf32>
    %3488 = arith.addf %3485, %3487 : vector<8x128xf32>
    %3489 = vector.broadcast %19 : f32 to vector<8x128xf32>
    %3490 = arith.mulf %3450, %3489 : vector<8x128xf32>
    %3491 = arith.addf %3488, %3490 : vector<8x128xf32>
    %3492 = vector.broadcast %146 : f32 to vector<8x128xf32>
    %3493 = arith.addf %3491, %3492 : vector<8x128xf32>
    %cst_310 = arith.constant 0.000000e+00 : f32
    %3494 = vector.broadcast %cst_310 : f32 to vector<8x128xf32>
    %3495 = arith.maximumf %3493, %3494 : vector<8x128xf32>
    %3496 = vector.broadcast %20 : f32 to vector<8x128xf32>
    %3497 = arith.mulf %3423, %3496 : vector<8x128xf32>
    %3498 = vector.broadcast %21 : f32 to vector<8x128xf32>
    %3499 = arith.mulf %3432, %3498 : vector<8x128xf32>
    %3500 = arith.addf %3497, %3499 : vector<8x128xf32>
    %3501 = vector.broadcast %22 : f32 to vector<8x128xf32>
    %3502 = arith.mulf %3441, %3501 : vector<8x128xf32>
    %3503 = arith.addf %3500, %3502 : vector<8x128xf32>
    %3504 = vector.broadcast %23 : f32 to vector<8x128xf32>
    %3505 = arith.mulf %3450, %3504 : vector<8x128xf32>
    %3506 = arith.addf %3503, %3505 : vector<8x128xf32>
    %3507 = vector.broadcast %147 : f32 to vector<8x128xf32>
    %3508 = arith.addf %3506, %3507 : vector<8x128xf32>
    %cst_311 = arith.constant 0.000000e+00 : f32
    %3509 = vector.broadcast %cst_311 : f32 to vector<8x128xf32>
    %3510 = arith.maximumf %3508, %3509 : vector<8x128xf32>
    %3511 = vector.broadcast %24 : f32 to vector<8x128xf32>
    %3512 = arith.mulf %3465, %3511 : vector<8x128xf32>
    %3513 = vector.broadcast %25 : f32 to vector<8x128xf32>
    %3514 = arith.mulf %3480, %3513 : vector<8x128xf32>
    %3515 = arith.addf %3512, %3514 : vector<8x128xf32>
    %3516 = vector.broadcast %26 : f32 to vector<8x128xf32>
    %3517 = arith.mulf %3495, %3516 : vector<8x128xf32>
    %3518 = arith.addf %3515, %3517 : vector<8x128xf32>
    %3519 = vector.broadcast %27 : f32 to vector<8x128xf32>
    %3520 = arith.mulf %3510, %3519 : vector<8x128xf32>
    %3521 = arith.addf %3518, %3520 : vector<8x128xf32>
    %3522 = vector.broadcast %148 : f32 to vector<8x128xf32>
    %3523 = arith.addf %3521, %3522 : vector<8x128xf32>
    %cst_312 = arith.constant 0.000000e+00 : f32
    %3524 = vector.broadcast %cst_312 : f32 to vector<8x128xf32>
    %3525 = arith.maximumf %3523, %3524 : vector<8x128xf32>
    %3526 = vector.broadcast %28 : f32 to vector<8x128xf32>
    %3527 = arith.mulf %3465, %3526 : vector<8x128xf32>
    %3528 = vector.broadcast %29 : f32 to vector<8x128xf32>
    %3529 = arith.mulf %3480, %3528 : vector<8x128xf32>
    %3530 = arith.addf %3527, %3529 : vector<8x128xf32>
    %3531 = vector.broadcast %30 : f32 to vector<8x128xf32>
    %3532 = arith.mulf %3495, %3531 : vector<8x128xf32>
    %3533 = arith.addf %3530, %3532 : vector<8x128xf32>
    %3534 = vector.broadcast %31 : f32 to vector<8x128xf32>
    %3535 = arith.mulf %3510, %3534 : vector<8x128xf32>
    %3536 = arith.addf %3533, %3535 : vector<8x128xf32>
    %3537 = vector.broadcast %149 : f32 to vector<8x128xf32>
    %3538 = arith.addf %3536, %3537 : vector<8x128xf32>
    %cst_313 = arith.constant 0.000000e+00 : f32
    %3539 = vector.broadcast %cst_313 : f32 to vector<8x128xf32>
    %3540 = arith.maximumf %3538, %3539 : vector<8x128xf32>
    %3541 = vector.broadcast %32 : f32 to vector<8x128xf32>
    %3542 = arith.mulf %3465, %3541 : vector<8x128xf32>
    %3543 = vector.broadcast %33 : f32 to vector<8x128xf32>
    %3544 = arith.mulf %3480, %3543 : vector<8x128xf32>
    %3545 = arith.addf %3542, %3544 : vector<8x128xf32>
    %3546 = vector.broadcast %34 : f32 to vector<8x128xf32>
    %3547 = arith.mulf %3495, %3546 : vector<8x128xf32>
    %3548 = arith.addf %3545, %3547 : vector<8x128xf32>
    %3549 = vector.broadcast %35 : f32 to vector<8x128xf32>
    %3550 = arith.mulf %3510, %3549 : vector<8x128xf32>
    %3551 = arith.addf %3548, %3550 : vector<8x128xf32>
    %3552 = vector.broadcast %150 : f32 to vector<8x128xf32>
    %3553 = arith.addf %3551, %3552 : vector<8x128xf32>
    %cst_314 = arith.constant 0.000000e+00 : f32
    %3554 = vector.broadcast %cst_314 : f32 to vector<8x128xf32>
    %3555 = arith.maximumf %3553, %3554 : vector<8x128xf32>
    %3556 = vector.broadcast %36 : f32 to vector<8x128xf32>
    %3557 = arith.mulf %3465, %3556 : vector<8x128xf32>
    %3558 = vector.broadcast %37 : f32 to vector<8x128xf32>
    %3559 = arith.mulf %3480, %3558 : vector<8x128xf32>
    %3560 = arith.addf %3557, %3559 : vector<8x128xf32>
    %3561 = vector.broadcast %38 : f32 to vector<8x128xf32>
    %3562 = arith.mulf %3495, %3561 : vector<8x128xf32>
    %3563 = arith.addf %3560, %3562 : vector<8x128xf32>
    %3564 = vector.broadcast %39 : f32 to vector<8x128xf32>
    %3565 = arith.mulf %3510, %3564 : vector<8x128xf32>
    %3566 = arith.addf %3563, %3565 : vector<8x128xf32>
    %3567 = vector.broadcast %151 : f32 to vector<8x128xf32>
    %3568 = arith.addf %3566, %3567 : vector<8x128xf32>
    %cst_315 = arith.constant 0.000000e+00 : f32
    %3569 = vector.broadcast %cst_315 : f32 to vector<8x128xf32>
    %3570 = arith.maximumf %3568, %3569 : vector<8x128xf32>
    %3571 = vector.broadcast %40 : f32 to vector<8x128xf32>
    %3572 = arith.mulf %3525, %3571 : vector<8x128xf32>
    %3573 = vector.broadcast %41 : f32 to vector<8x128xf32>
    %3574 = arith.mulf %3540, %3573 : vector<8x128xf32>
    %3575 = arith.addf %3572, %3574 : vector<8x128xf32>
    %3576 = vector.broadcast %42 : f32 to vector<8x128xf32>
    %3577 = arith.mulf %3555, %3576 : vector<8x128xf32>
    %3578 = arith.addf %3575, %3577 : vector<8x128xf32>
    %3579 = vector.broadcast %43 : f32 to vector<8x128xf32>
    %3580 = arith.mulf %3570, %3579 : vector<8x128xf32>
    %3581 = arith.addf %3578, %3580 : vector<8x128xf32>
    %3582 = vector.broadcast %152 : f32 to vector<8x128xf32>
    %3583 = arith.addf %3581, %3582 : vector<8x128xf32>
    %cst_316 = arith.constant 0.000000e+00 : f32
    %3584 = vector.broadcast %cst_316 : f32 to vector<8x128xf32>
    %3585 = arith.maximumf %3583, %3584 : vector<8x128xf32>
    %3586 = vector.broadcast %44 : f32 to vector<8x128xf32>
    %3587 = arith.mulf %3525, %3586 : vector<8x128xf32>
    %3588 = vector.broadcast %45 : f32 to vector<8x128xf32>
    %3589 = arith.mulf %3540, %3588 : vector<8x128xf32>
    %3590 = arith.addf %3587, %3589 : vector<8x128xf32>
    %3591 = vector.broadcast %46 : f32 to vector<8x128xf32>
    %3592 = arith.mulf %3555, %3591 : vector<8x128xf32>
    %3593 = arith.addf %3590, %3592 : vector<8x128xf32>
    %3594 = vector.broadcast %47 : f32 to vector<8x128xf32>
    %3595 = arith.mulf %3570, %3594 : vector<8x128xf32>
    %3596 = arith.addf %3593, %3595 : vector<8x128xf32>
    %3597 = vector.broadcast %153 : f32 to vector<8x128xf32>
    %3598 = arith.addf %3596, %3597 : vector<8x128xf32>
    %cst_317 = arith.constant 0.000000e+00 : f32
    %3599 = vector.broadcast %cst_317 : f32 to vector<8x128xf32>
    %3600 = arith.maximumf %3598, %3599 : vector<8x128xf32>
    %3601 = vector.broadcast %48 : f32 to vector<8x128xf32>
    %3602 = arith.mulf %3525, %3601 : vector<8x128xf32>
    %3603 = vector.broadcast %49 : f32 to vector<8x128xf32>
    %3604 = arith.mulf %3540, %3603 : vector<8x128xf32>
    %3605 = arith.addf %3602, %3604 : vector<8x128xf32>
    %3606 = vector.broadcast %50 : f32 to vector<8x128xf32>
    %3607 = arith.mulf %3555, %3606 : vector<8x128xf32>
    %3608 = arith.addf %3605, %3607 : vector<8x128xf32>
    %3609 = vector.broadcast %51 : f32 to vector<8x128xf32>
    %3610 = arith.mulf %3570, %3609 : vector<8x128xf32>
    %3611 = arith.addf %3608, %3610 : vector<8x128xf32>
    %3612 = vector.broadcast %154 : f32 to vector<8x128xf32>
    %3613 = arith.addf %3611, %3612 : vector<8x128xf32>
    %cst_318 = arith.constant 0.000000e+00 : f32
    %3614 = vector.broadcast %cst_318 : f32 to vector<8x128xf32>
    %3615 = arith.maximumf %3613, %3614 : vector<8x128xf32>
    %3616 = vector.broadcast %52 : f32 to vector<8x128xf32>
    %3617 = arith.mulf %3525, %3616 : vector<8x128xf32>
    %3618 = vector.broadcast %53 : f32 to vector<8x128xf32>
    %3619 = arith.mulf %3540, %3618 : vector<8x128xf32>
    %3620 = arith.addf %3617, %3619 : vector<8x128xf32>
    %3621 = vector.broadcast %54 : f32 to vector<8x128xf32>
    %3622 = arith.mulf %3555, %3621 : vector<8x128xf32>
    %3623 = arith.addf %3620, %3622 : vector<8x128xf32>
    %3624 = vector.broadcast %55 : f32 to vector<8x128xf32>
    %3625 = arith.mulf %3570, %3624 : vector<8x128xf32>
    %3626 = arith.addf %3623, %3625 : vector<8x128xf32>
    %3627 = vector.broadcast %155 : f32 to vector<8x128xf32>
    %3628 = arith.addf %3626, %3627 : vector<8x128xf32>
    %cst_319 = arith.constant 0.000000e+00 : f32
    %3629 = vector.broadcast %cst_319 : f32 to vector<8x128xf32>
    %3630 = arith.maximumf %3628, %3629 : vector<8x128xf32>
    %3631 = vector.broadcast %56 : f32 to vector<8x128xf32>
    %3632 = arith.mulf %3585, %3631 : vector<8x128xf32>
    %3633 = vector.broadcast %57 : f32 to vector<8x128xf32>
    %3634 = arith.mulf %3600, %3633 : vector<8x128xf32>
    %3635 = arith.addf %3632, %3634 : vector<8x128xf32>
    %3636 = vector.broadcast %58 : f32 to vector<8x128xf32>
    %3637 = arith.mulf %3615, %3636 : vector<8x128xf32>
    %3638 = arith.addf %3635, %3637 : vector<8x128xf32>
    %3639 = vector.broadcast %59 : f32 to vector<8x128xf32>
    %3640 = arith.mulf %3630, %3639 : vector<8x128xf32>
    %3641 = arith.addf %3638, %3640 : vector<8x128xf32>
    %3642 = vector.broadcast %156 : f32 to vector<8x128xf32>
    %3643 = arith.addf %3641, %3642 : vector<8x128xf32>
    %cst_320 = arith.constant 0.000000e+00 : f32
    %3644 = vector.broadcast %cst_320 : f32 to vector<8x128xf32>
    %3645 = arith.maximumf %3643, %3644 : vector<8x128xf32>
    %3646 = vector.broadcast %60 : f32 to vector<8x128xf32>
    %3647 = arith.mulf %3585, %3646 : vector<8x128xf32>
    %3648 = vector.broadcast %61 : f32 to vector<8x128xf32>
    %3649 = arith.mulf %3600, %3648 : vector<8x128xf32>
    %3650 = arith.addf %3647, %3649 : vector<8x128xf32>
    %3651 = vector.broadcast %62 : f32 to vector<8x128xf32>
    %3652 = arith.mulf %3615, %3651 : vector<8x128xf32>
    %3653 = arith.addf %3650, %3652 : vector<8x128xf32>
    %3654 = vector.broadcast %63 : f32 to vector<8x128xf32>
    %3655 = arith.mulf %3630, %3654 : vector<8x128xf32>
    %3656 = arith.addf %3653, %3655 : vector<8x128xf32>
    %3657 = vector.broadcast %157 : f32 to vector<8x128xf32>
    %3658 = arith.addf %3656, %3657 : vector<8x128xf32>
    %cst_321 = arith.constant 0.000000e+00 : f32
    %3659 = vector.broadcast %cst_321 : f32 to vector<8x128xf32>
    %3660 = arith.maximumf %3658, %3659 : vector<8x128xf32>
    %3661 = vector.broadcast %64 : f32 to vector<8x128xf32>
    %3662 = arith.mulf %3585, %3661 : vector<8x128xf32>
    %3663 = vector.broadcast %65 : f32 to vector<8x128xf32>
    %3664 = arith.mulf %3600, %3663 : vector<8x128xf32>
    %3665 = arith.addf %3662, %3664 : vector<8x128xf32>
    %3666 = vector.broadcast %66 : f32 to vector<8x128xf32>
    %3667 = arith.mulf %3615, %3666 : vector<8x128xf32>
    %3668 = arith.addf %3665, %3667 : vector<8x128xf32>
    %3669 = vector.broadcast %67 : f32 to vector<8x128xf32>
    %3670 = arith.mulf %3630, %3669 : vector<8x128xf32>
    %3671 = arith.addf %3668, %3670 : vector<8x128xf32>
    %3672 = vector.broadcast %158 : f32 to vector<8x128xf32>
    %3673 = arith.addf %3671, %3672 : vector<8x128xf32>
    %cst_322 = arith.constant 0.000000e+00 : f32
    %3674 = vector.broadcast %cst_322 : f32 to vector<8x128xf32>
    %3675 = arith.maximumf %3673, %3674 : vector<8x128xf32>
    %3676 = vector.broadcast %68 : f32 to vector<8x128xf32>
    %3677 = arith.mulf %3585, %3676 : vector<8x128xf32>
    %3678 = vector.broadcast %69 : f32 to vector<8x128xf32>
    %3679 = arith.mulf %3600, %3678 : vector<8x128xf32>
    %3680 = arith.addf %3677, %3679 : vector<8x128xf32>
    %3681 = vector.broadcast %70 : f32 to vector<8x128xf32>
    %3682 = arith.mulf %3615, %3681 : vector<8x128xf32>
    %3683 = arith.addf %3680, %3682 : vector<8x128xf32>
    %3684 = vector.broadcast %71 : f32 to vector<8x128xf32>
    %3685 = arith.mulf %3630, %3684 : vector<8x128xf32>
    %3686 = arith.addf %3683, %3685 : vector<8x128xf32>
    %3687 = vector.broadcast %159 : f32 to vector<8x128xf32>
    %3688 = arith.addf %3686, %3687 : vector<8x128xf32>
    %cst_323 = arith.constant 0.000000e+00 : f32
    %3689 = vector.broadcast %cst_323 : f32 to vector<8x128xf32>
    %3690 = arith.maximumf %3688, %3689 : vector<8x128xf32>
    %3691 = vector.broadcast %72 : f32 to vector<8x128xf32>
    %3692 = arith.mulf %3645, %3691 : vector<8x128xf32>
    %3693 = vector.broadcast %73 : f32 to vector<8x128xf32>
    %3694 = arith.mulf %3660, %3693 : vector<8x128xf32>
    %3695 = arith.addf %3692, %3694 : vector<8x128xf32>
    %3696 = vector.broadcast %74 : f32 to vector<8x128xf32>
    %3697 = arith.mulf %3675, %3696 : vector<8x128xf32>
    %3698 = arith.addf %3695, %3697 : vector<8x128xf32>
    %3699 = vector.broadcast %75 : f32 to vector<8x128xf32>
    %3700 = arith.mulf %3690, %3699 : vector<8x128xf32>
    %3701 = arith.addf %3698, %3700 : vector<8x128xf32>
    %3702 = vector.broadcast %160 : f32 to vector<8x128xf32>
    %3703 = arith.addf %3701, %3702 : vector<8x128xf32>
    %cst_324 = arith.constant 0.000000e+00 : f32
    %3704 = vector.broadcast %cst_324 : f32 to vector<8x128xf32>
    %3705 = arith.maximumf %3703, %3704 : vector<8x128xf32>
    %3706 = vector.broadcast %76 : f32 to vector<8x128xf32>
    %3707 = arith.mulf %3645, %3706 : vector<8x128xf32>
    %3708 = vector.broadcast %77 : f32 to vector<8x128xf32>
    %3709 = arith.mulf %3660, %3708 : vector<8x128xf32>
    %3710 = arith.addf %3707, %3709 : vector<8x128xf32>
    %3711 = vector.broadcast %78 : f32 to vector<8x128xf32>
    %3712 = arith.mulf %3675, %3711 : vector<8x128xf32>
    %3713 = arith.addf %3710, %3712 : vector<8x128xf32>
    %3714 = vector.broadcast %79 : f32 to vector<8x128xf32>
    %3715 = arith.mulf %3690, %3714 : vector<8x128xf32>
    %3716 = arith.addf %3713, %3715 : vector<8x128xf32>
    %3717 = vector.broadcast %161 : f32 to vector<8x128xf32>
    %3718 = arith.addf %3716, %3717 : vector<8x128xf32>
    %cst_325 = arith.constant 0.000000e+00 : f32
    %3719 = vector.broadcast %cst_325 : f32 to vector<8x128xf32>
    %3720 = arith.maximumf %3718, %3719 : vector<8x128xf32>
    %3721 = vector.broadcast %80 : f32 to vector<8x128xf32>
    %3722 = arith.mulf %3645, %3721 : vector<8x128xf32>
    %3723 = vector.broadcast %81 : f32 to vector<8x128xf32>
    %3724 = arith.mulf %3660, %3723 : vector<8x128xf32>
    %3725 = arith.addf %3722, %3724 : vector<8x128xf32>
    %3726 = vector.broadcast %82 : f32 to vector<8x128xf32>
    %3727 = arith.mulf %3675, %3726 : vector<8x128xf32>
    %3728 = arith.addf %3725, %3727 : vector<8x128xf32>
    %3729 = vector.broadcast %83 : f32 to vector<8x128xf32>
    %3730 = arith.mulf %3690, %3729 : vector<8x128xf32>
    %3731 = arith.addf %3728, %3730 : vector<8x128xf32>
    %3732 = vector.broadcast %162 : f32 to vector<8x128xf32>
    %3733 = arith.addf %3731, %3732 : vector<8x128xf32>
    %cst_326 = arith.constant 0.000000e+00 : f32
    %3734 = vector.broadcast %cst_326 : f32 to vector<8x128xf32>
    %3735 = arith.maximumf %3733, %3734 : vector<8x128xf32>
    %3736 = vector.broadcast %84 : f32 to vector<8x128xf32>
    %3737 = arith.mulf %3645, %3736 : vector<8x128xf32>
    %3738 = vector.broadcast %85 : f32 to vector<8x128xf32>
    %3739 = arith.mulf %3660, %3738 : vector<8x128xf32>
    %3740 = arith.addf %3737, %3739 : vector<8x128xf32>
    %3741 = vector.broadcast %86 : f32 to vector<8x128xf32>
    %3742 = arith.mulf %3675, %3741 : vector<8x128xf32>
    %3743 = arith.addf %3740, %3742 : vector<8x128xf32>
    %3744 = vector.broadcast %87 : f32 to vector<8x128xf32>
    %3745 = arith.mulf %3690, %3744 : vector<8x128xf32>
    %3746 = arith.addf %3743, %3745 : vector<8x128xf32>
    %3747 = vector.broadcast %163 : f32 to vector<8x128xf32>
    %3748 = arith.addf %3746, %3747 : vector<8x128xf32>
    %cst_327 = arith.constant 0.000000e+00 : f32
    %3749 = vector.broadcast %cst_327 : f32 to vector<8x128xf32>
    %3750 = arith.maximumf %3748, %3749 : vector<8x128xf32>
    %3751 = vector.broadcast %88 : f32 to vector<8x128xf32>
    %3752 = arith.mulf %3705, %3751 : vector<8x128xf32>
    %3753 = vector.broadcast %89 : f32 to vector<8x128xf32>
    %3754 = arith.mulf %3720, %3753 : vector<8x128xf32>
    %3755 = arith.addf %3752, %3754 : vector<8x128xf32>
    %3756 = vector.broadcast %90 : f32 to vector<8x128xf32>
    %3757 = arith.mulf %3735, %3756 : vector<8x128xf32>
    %3758 = arith.addf %3755, %3757 : vector<8x128xf32>
    %3759 = vector.broadcast %91 : f32 to vector<8x128xf32>
    %3760 = arith.mulf %3750, %3759 : vector<8x128xf32>
    %3761 = arith.addf %3758, %3760 : vector<8x128xf32>
    %3762 = vector.broadcast %164 : f32 to vector<8x128xf32>
    %3763 = arith.addf %3761, %3762 : vector<8x128xf32>
    %cst_328 = arith.constant 0.000000e+00 : f32
    %3764 = vector.broadcast %cst_328 : f32 to vector<8x128xf32>
    %3765 = arith.maximumf %3763, %3764 : vector<8x128xf32>
    %3766 = vector.broadcast %92 : f32 to vector<8x128xf32>
    %3767 = arith.mulf %3705, %3766 : vector<8x128xf32>
    %3768 = vector.broadcast %93 : f32 to vector<8x128xf32>
    %3769 = arith.mulf %3720, %3768 : vector<8x128xf32>
    %3770 = arith.addf %3767, %3769 : vector<8x128xf32>
    %3771 = vector.broadcast %94 : f32 to vector<8x128xf32>
    %3772 = arith.mulf %3735, %3771 : vector<8x128xf32>
    %3773 = arith.addf %3770, %3772 : vector<8x128xf32>
    %3774 = vector.broadcast %95 : f32 to vector<8x128xf32>
    %3775 = arith.mulf %3750, %3774 : vector<8x128xf32>
    %3776 = arith.addf %3773, %3775 : vector<8x128xf32>
    %3777 = vector.broadcast %165 : f32 to vector<8x128xf32>
    %3778 = arith.addf %3776, %3777 : vector<8x128xf32>
    %cst_329 = arith.constant 0.000000e+00 : f32
    %3779 = vector.broadcast %cst_329 : f32 to vector<8x128xf32>
    %3780 = arith.maximumf %3778, %3779 : vector<8x128xf32>
    %3781 = vector.broadcast %96 : f32 to vector<8x128xf32>
    %3782 = arith.mulf %3705, %3781 : vector<8x128xf32>
    %3783 = vector.broadcast %97 : f32 to vector<8x128xf32>
    %3784 = arith.mulf %3720, %3783 : vector<8x128xf32>
    %3785 = arith.addf %3782, %3784 : vector<8x128xf32>
    %3786 = vector.broadcast %98 : f32 to vector<8x128xf32>
    %3787 = arith.mulf %3735, %3786 : vector<8x128xf32>
    %3788 = arith.addf %3785, %3787 : vector<8x128xf32>
    %3789 = vector.broadcast %99 : f32 to vector<8x128xf32>
    %3790 = arith.mulf %3750, %3789 : vector<8x128xf32>
    %3791 = arith.addf %3788, %3790 : vector<8x128xf32>
    %3792 = vector.broadcast %166 : f32 to vector<8x128xf32>
    %3793 = arith.addf %3791, %3792 : vector<8x128xf32>
    %cst_330 = arith.constant 0.000000e+00 : f32
    %3794 = vector.broadcast %cst_330 : f32 to vector<8x128xf32>
    %3795 = arith.maximumf %3793, %3794 : vector<8x128xf32>
    %3796 = vector.broadcast %100 : f32 to vector<8x128xf32>
    %3797 = arith.mulf %3705, %3796 : vector<8x128xf32>
    %3798 = vector.broadcast %101 : f32 to vector<8x128xf32>
    %3799 = arith.mulf %3720, %3798 : vector<8x128xf32>
    %3800 = arith.addf %3797, %3799 : vector<8x128xf32>
    %3801 = vector.broadcast %102 : f32 to vector<8x128xf32>
    %3802 = arith.mulf %3735, %3801 : vector<8x128xf32>
    %3803 = arith.addf %3800, %3802 : vector<8x128xf32>
    %3804 = vector.broadcast %103 : f32 to vector<8x128xf32>
    %3805 = arith.mulf %3750, %3804 : vector<8x128xf32>
    %3806 = arith.addf %3803, %3805 : vector<8x128xf32>
    %3807 = vector.broadcast %167 : f32 to vector<8x128xf32>
    %3808 = arith.addf %3806, %3807 : vector<8x128xf32>
    %cst_331 = arith.constant 0.000000e+00 : f32
    %3809 = vector.broadcast %cst_331 : f32 to vector<8x128xf32>
    %3810 = arith.maximumf %3808, %3809 : vector<8x128xf32>
    %3811 = vector.broadcast %104 : f32 to vector<8x128xf32>
    %3812 = arith.mulf %3765, %3811 : vector<8x128xf32>
    %3813 = vector.broadcast %105 : f32 to vector<8x128xf32>
    %3814 = arith.mulf %3780, %3813 : vector<8x128xf32>
    %3815 = arith.addf %3812, %3814 : vector<8x128xf32>
    %3816 = vector.broadcast %106 : f32 to vector<8x128xf32>
    %3817 = arith.mulf %3795, %3816 : vector<8x128xf32>
    %3818 = arith.addf %3815, %3817 : vector<8x128xf32>
    %3819 = vector.broadcast %107 : f32 to vector<8x128xf32>
    %3820 = arith.mulf %3810, %3819 : vector<8x128xf32>
    %3821 = arith.addf %3818, %3820 : vector<8x128xf32>
    %3822 = vector.broadcast %168 : f32 to vector<8x128xf32>
    %3823 = arith.addf %3821, %3822 : vector<8x128xf32>
    %cst_332 = arith.constant 0.000000e+00 : f32
    %3824 = vector.broadcast %cst_332 : f32 to vector<8x128xf32>
    %3825 = arith.maximumf %3823, %3824 : vector<8x128xf32>
    %3826 = vector.broadcast %108 : f32 to vector<8x128xf32>
    %3827 = arith.mulf %3765, %3826 : vector<8x128xf32>
    %3828 = vector.broadcast %109 : f32 to vector<8x128xf32>
    %3829 = arith.mulf %3780, %3828 : vector<8x128xf32>
    %3830 = arith.addf %3827, %3829 : vector<8x128xf32>
    %3831 = vector.broadcast %110 : f32 to vector<8x128xf32>
    %3832 = arith.mulf %3795, %3831 : vector<8x128xf32>
    %3833 = arith.addf %3830, %3832 : vector<8x128xf32>
    %3834 = vector.broadcast %111 : f32 to vector<8x128xf32>
    %3835 = arith.mulf %3810, %3834 : vector<8x128xf32>
    %3836 = arith.addf %3833, %3835 : vector<8x128xf32>
    %3837 = vector.broadcast %169 : f32 to vector<8x128xf32>
    %3838 = arith.addf %3836, %3837 : vector<8x128xf32>
    %cst_333 = arith.constant 0.000000e+00 : f32
    %3839 = vector.broadcast %cst_333 : f32 to vector<8x128xf32>
    %3840 = arith.maximumf %3838, %3839 : vector<8x128xf32>
    %3841 = vector.broadcast %112 : f32 to vector<8x128xf32>
    %3842 = arith.mulf %3765, %3841 : vector<8x128xf32>
    %3843 = vector.broadcast %113 : f32 to vector<8x128xf32>
    %3844 = arith.mulf %3780, %3843 : vector<8x128xf32>
    %3845 = arith.addf %3842, %3844 : vector<8x128xf32>
    %3846 = vector.broadcast %114 : f32 to vector<8x128xf32>
    %3847 = arith.mulf %3795, %3846 : vector<8x128xf32>
    %3848 = arith.addf %3845, %3847 : vector<8x128xf32>
    %3849 = vector.broadcast %115 : f32 to vector<8x128xf32>
    %3850 = arith.mulf %3810, %3849 : vector<8x128xf32>
    %3851 = arith.addf %3848, %3850 : vector<8x128xf32>
    %3852 = vector.broadcast %170 : f32 to vector<8x128xf32>
    %3853 = arith.addf %3851, %3852 : vector<8x128xf32>
    %cst_334 = arith.constant 0.000000e+00 : f32
    %3854 = vector.broadcast %cst_334 : f32 to vector<8x128xf32>
    %3855 = arith.maximumf %3853, %3854 : vector<8x128xf32>
    %3856 = vector.broadcast %116 : f32 to vector<8x128xf32>
    %3857 = arith.mulf %3765, %3856 : vector<8x128xf32>
    %3858 = vector.broadcast %117 : f32 to vector<8x128xf32>
    %3859 = arith.mulf %3780, %3858 : vector<8x128xf32>
    %3860 = arith.addf %3857, %3859 : vector<8x128xf32>
    %3861 = vector.broadcast %118 : f32 to vector<8x128xf32>
    %3862 = arith.mulf %3795, %3861 : vector<8x128xf32>
    %3863 = arith.addf %3860, %3862 : vector<8x128xf32>
    %3864 = vector.broadcast %119 : f32 to vector<8x128xf32>
    %3865 = arith.mulf %3810, %3864 : vector<8x128xf32>
    %3866 = arith.addf %3863, %3865 : vector<8x128xf32>
    %3867 = vector.broadcast %171 : f32 to vector<8x128xf32>
    %3868 = arith.addf %3866, %3867 : vector<8x128xf32>
    %cst_335 = arith.constant 0.000000e+00 : f32
    %3869 = vector.broadcast %cst_335 : f32 to vector<8x128xf32>
    %3870 = arith.maximumf %3868, %3869 : vector<8x128xf32>
    %3871 = vector.broadcast %120 : f32 to vector<8x128xf32>
    %3872 = arith.mulf %3825, %3871 : vector<8x128xf32>
    %3873 = vector.broadcast %121 : f32 to vector<8x128xf32>
    %3874 = arith.mulf %3840, %3873 : vector<8x128xf32>
    %3875 = arith.addf %3872, %3874 : vector<8x128xf32>
    %3876 = vector.broadcast %122 : f32 to vector<8x128xf32>
    %3877 = arith.mulf %3855, %3876 : vector<8x128xf32>
    %3878 = arith.addf %3875, %3877 : vector<8x128xf32>
    %3879 = vector.broadcast %123 : f32 to vector<8x128xf32>
    %3880 = arith.mulf %3870, %3879 : vector<8x128xf32>
    %3881 = arith.addf %3878, %3880 : vector<8x128xf32>
    %3882 = vector.broadcast %172 : f32 to vector<8x128xf32>
    %3883 = arith.addf %3881, %3882 : vector<8x128xf32>
    %cst_336 = arith.constant 0.000000e+00 : f32
    %3884 = vector.broadcast %cst_336 : f32 to vector<8x128xf32>
    %3885 = arith.maximumf %3883, %3884 : vector<8x128xf32>
    %3886 = vector.broadcast %124 : f32 to vector<8x128xf32>
    %3887 = arith.mulf %3825, %3886 : vector<8x128xf32>
    %3888 = vector.broadcast %125 : f32 to vector<8x128xf32>
    %3889 = arith.mulf %3840, %3888 : vector<8x128xf32>
    %3890 = arith.addf %3887, %3889 : vector<8x128xf32>
    %3891 = vector.broadcast %126 : f32 to vector<8x128xf32>
    %3892 = arith.mulf %3855, %3891 : vector<8x128xf32>
    %3893 = arith.addf %3890, %3892 : vector<8x128xf32>
    %3894 = vector.broadcast %127 : f32 to vector<8x128xf32>
    %3895 = arith.mulf %3870, %3894 : vector<8x128xf32>
    %3896 = arith.addf %3893, %3895 : vector<8x128xf32>
    %3897 = vector.broadcast %173 : f32 to vector<8x128xf32>
    %3898 = arith.addf %3896, %3897 : vector<8x128xf32>
    %cst_337 = arith.constant 0.000000e+00 : f32
    %3899 = vector.broadcast %cst_337 : f32 to vector<8x128xf32>
    %3900 = arith.maximumf %3898, %3899 : vector<8x128xf32>
    %3901 = vector.broadcast %128 : f32 to vector<8x128xf32>
    %3902 = arith.mulf %3825, %3901 : vector<8x128xf32>
    %3903 = vector.broadcast %129 : f32 to vector<8x128xf32>
    %3904 = arith.mulf %3840, %3903 : vector<8x128xf32>
    %3905 = arith.addf %3902, %3904 : vector<8x128xf32>
    %3906 = vector.broadcast %130 : f32 to vector<8x128xf32>
    %3907 = arith.mulf %3855, %3906 : vector<8x128xf32>
    %3908 = arith.addf %3905, %3907 : vector<8x128xf32>
    %3909 = vector.broadcast %131 : f32 to vector<8x128xf32>
    %3910 = arith.mulf %3870, %3909 : vector<8x128xf32>
    %3911 = arith.addf %3908, %3910 : vector<8x128xf32>
    %3912 = vector.broadcast %174 : f32 to vector<8x128xf32>
    %3913 = arith.addf %3911, %3912 : vector<8x128xf32>
    %cst_338 = arith.constant 0.000000e+00 : f32
    %3914 = vector.broadcast %cst_338 : f32 to vector<8x128xf32>
    %3915 = arith.maximumf %3913, %3914 : vector<8x128xf32>
    %3916 = vector.broadcast %132 : f32 to vector<8x128xf32>
    %3917 = arith.mulf %3825, %3916 : vector<8x128xf32>
    %3918 = vector.broadcast %133 : f32 to vector<8x128xf32>
    %3919 = arith.mulf %3840, %3918 : vector<8x128xf32>
    %3920 = arith.addf %3917, %3919 : vector<8x128xf32>
    %3921 = vector.broadcast %134 : f32 to vector<8x128xf32>
    %3922 = arith.mulf %3855, %3921 : vector<8x128xf32>
    %3923 = arith.addf %3920, %3922 : vector<8x128xf32>
    %3924 = vector.broadcast %135 : f32 to vector<8x128xf32>
    %3925 = arith.mulf %3870, %3924 : vector<8x128xf32>
    %3926 = arith.addf %3923, %3925 : vector<8x128xf32>
    %3927 = vector.broadcast %175 : f32 to vector<8x128xf32>
    %3928 = arith.addf %3926, %3927 : vector<8x128xf32>
    %cst_339 = arith.constant 0.000000e+00 : f32
    %3929 = vector.broadcast %cst_339 : f32 to vector<8x128xf32>
    %3930 = arith.maximumf %3928, %3929 : vector<8x128xf32>
    %3931 = vector.broadcast %136 : f32 to vector<8x128xf32>
    %3932 = arith.mulf %3885, %3931 : vector<8x128xf32>
    %3933 = vector.broadcast %137 : f32 to vector<8x128xf32>
    %3934 = arith.mulf %3900, %3933 : vector<8x128xf32>
    %3935 = arith.addf %3932, %3934 : vector<8x128xf32>
    %3936 = vector.broadcast %138 : f32 to vector<8x128xf32>
    %3937 = arith.mulf %3915, %3936 : vector<8x128xf32>
    %3938 = arith.addf %3935, %3937 : vector<8x128xf32>
    %3939 = vector.broadcast %139 : f32 to vector<8x128xf32>
    %3940 = arith.mulf %3930, %3939 : vector<8x128xf32>
    %3941 = arith.addf %3938, %3940 : vector<8x128xf32>
    %3942 = vector.broadcast %176 : f32 to vector<8x128xf32>
    %3943 = arith.addf %3941, %3942 : vector<8x128xf32>
    %3944 = arith.negf %3943 : vector<8x128xf32>
    %3945 = math.exp %3944 : vector<8x128xf32>
    %cst_340 = arith.constant 1.000000e+00 : f32
    %3946 = vector.broadcast %cst_340 : f32 to vector<8x128xf32>
    %3947 = arith.addf %3946, %3945 : vector<8x128xf32>
    %3948 = arith.divf %3946, %3947 : vector<8x128xf32>
    %c48_341 = arith.constant 48 : index
    %c0_342 = arith.constant 0 : index
    %3949 = vector.load %arg4[%c48_341, %c0_342] : memref<64x128xf32, #tpu.memory_space<vmem>>, vector<8x128xf32>
    tpu.vector_store %arg4[%c48_341, %c0_342], %3948 {strides = array<i32>} : memref<64x128xf32, #tpu.memory_space<vmem>>, vector<8x128xf32>,
    %c0_343 = arith.constant 0 : index
    %c56_344 = arith.constant 56 : index
    %c0_345 = arith.constant 0 : index
    %3950 = vector.load %arg3[%c0_343, %c56_344, %c0_345] : memref<2x64x128xf32, #tpu.memory_space<vmem>>, vector<1x8x128xf32>
    %3951 = vector.shape_cast %3950 : vector<1x8x128xf32> to vector<8x128xf32>
    %c1_346 = arith.constant 1 : index
    %c56_347 = arith.constant 56 : index
    %c0_348 = arith.constant 0 : index
    %3952 = vector.load %arg3[%c1_346, %c56_347, %c0_348] : memref<2x64x128xf32, #tpu.memory_space<vmem>>, vector<1x8x128xf32>
    %3953 = vector.shape_cast %3952 : vector<1x8x128xf32> to vector<8x128xf32>
    %3954 = vector.broadcast %0 : f32 to vector<8x128xf32>
    %3955 = arith.mulf %3951, %3954 : vector<8x128xf32>
    %3956 = vector.broadcast %1 : f32 to vector<8x128xf32>
    %3957 = arith.mulf %3953, %3956 : vector<8x128xf32>
    %3958 = arith.addf %3955, %3957 : vector<8x128xf32>
    %3959 = vector.broadcast %140 : f32 to vector<8x128xf32>
    %3960 = arith.addf %3958, %3959 : vector<8x128xf32>
    %cst_349 = arith.constant 0.000000e+00 : f32
    %3961 = vector.broadcast %cst_349 : f32 to vector<8x128xf32>
    %3962 = arith.maximumf %3960, %3961 : vector<8x128xf32>
    %3963 = vector.broadcast %2 : f32 to vector<8x128xf32>
    %3964 = arith.mulf %3951, %3963 : vector<8x128xf32>
    %3965 = vector.broadcast %3 : f32 to vector<8x128xf32>
    %3966 = arith.mulf %3953, %3965 : vector<8x128xf32>
    %3967 = arith.addf %3964, %3966 : vector<8x128xf32>
    %3968 = vector.broadcast %141 : f32 to vector<8x128xf32>
    %3969 = arith.addf %3967, %3968 : vector<8x128xf32>
    %cst_350 = arith.constant 0.000000e+00 : f32
    %3970 = vector.broadcast %cst_350 : f32 to vector<8x128xf32>
    %3971 = arith.maximumf %3969, %3970 : vector<8x128xf32>
    %3972 = vector.broadcast %4 : f32 to vector<8x128xf32>
    %3973 = arith.mulf %3951, %3972 : vector<8x128xf32>
    %3974 = vector.broadcast %5 : f32 to vector<8x128xf32>
    %3975 = arith.mulf %3953, %3974 : vector<8x128xf32>
    %3976 = arith.addf %3973, %3975 : vector<8x128xf32>
    %3977 = vector.broadcast %142 : f32 to vector<8x128xf32>
    %3978 = arith.addf %3976, %3977 : vector<8x128xf32>
    %cst_351 = arith.constant 0.000000e+00 : f32
    %3979 = vector.broadcast %cst_351 : f32 to vector<8x128xf32>
    %3980 = arith.maximumf %3978, %3979 : vector<8x128xf32>
    %3981 = vector.broadcast %6 : f32 to vector<8x128xf32>
    %3982 = arith.mulf %3951, %3981 : vector<8x128xf32>
    %3983 = vector.broadcast %7 : f32 to vector<8x128xf32>
    %3984 = arith.mulf %3953, %3983 : vector<8x128xf32>
    %3985 = arith.addf %3982, %3984 : vector<8x128xf32>
    %3986 = vector.broadcast %143 : f32 to vector<8x128xf32>
    %3987 = arith.addf %3985, %3986 : vector<8x128xf32>
    %cst_352 = arith.constant 0.000000e+00 : f32
    %3988 = vector.broadcast %cst_352 : f32 to vector<8x128xf32>
    %3989 = arith.maximumf %3987, %3988 : vector<8x128xf32>
    %3990 = vector.broadcast %8 : f32 to vector<8x128xf32>
    %3991 = arith.mulf %3962, %3990 : vector<8x128xf32>
    %3992 = vector.broadcast %9 : f32 to vector<8x128xf32>
    %3993 = arith.mulf %3971, %3992 : vector<8x128xf32>
    %3994 = arith.addf %3991, %3993 : vector<8x128xf32>
    %3995 = vector.broadcast %10 : f32 to vector<8x128xf32>
    %3996 = arith.mulf %3980, %3995 : vector<8x128xf32>
    %3997 = arith.addf %3994, %3996 : vector<8x128xf32>
    %3998 = vector.broadcast %11 : f32 to vector<8x128xf32>
    %3999 = arith.mulf %3989, %3998 : vector<8x128xf32>
    %4000 = arith.addf %3997, %3999 : vector<8x128xf32>
    %4001 = vector.broadcast %144 : f32 to vector<8x128xf32>
    %4002 = arith.addf %4000, %4001 : vector<8x128xf32>
    %cst_353 = arith.constant 0.000000e+00 : f32
    %4003 = vector.broadcast %cst_353 : f32 to vector<8x128xf32>
    %4004 = arith.maximumf %4002, %4003 : vector<8x128xf32>
    %4005 = vector.broadcast %12 : f32 to vector<8x128xf32>
    %4006 = arith.mulf %3962, %4005 : vector<8x128xf32>
    %4007 = vector.broadcast %13 : f32 to vector<8x128xf32>
    %4008 = arith.mulf %3971, %4007 : vector<8x128xf32>
    %4009 = arith.addf %4006, %4008 : vector<8x128xf32>
    %4010 = vector.broadcast %14 : f32 to vector<8x128xf32>
    %4011 = arith.mulf %3980, %4010 : vector<8x128xf32>
    %4012 = arith.addf %4009, %4011 : vector<8x128xf32>
    %4013 = vector.broadcast %15 : f32 to vector<8x128xf32>
    %4014 = arith.mulf %3989, %4013 : vector<8x128xf32>
    %4015 = arith.addf %4012, %4014 : vector<8x128xf32>
    %4016 = vector.broadcast %145 : f32 to vector<8x128xf32>
    %4017 = arith.addf %4015, %4016 : vector<8x128xf32>
    %cst_354 = arith.constant 0.000000e+00 : f32
    %4018 = vector.broadcast %cst_354 : f32 to vector<8x128xf32>
    %4019 = arith.maximumf %4017, %4018 : vector<8x128xf32>
    %4020 = vector.broadcast %16 : f32 to vector<8x128xf32>
    %4021 = arith.mulf %3962, %4020 : vector<8x128xf32>
    %4022 = vector.broadcast %17 : f32 to vector<8x128xf32>
    %4023 = arith.mulf %3971, %4022 : vector<8x128xf32>
    %4024 = arith.addf %4021, %4023 : vector<8x128xf32>
    %4025 = vector.broadcast %18 : f32 to vector<8x128xf32>
    %4026 = arith.mulf %3980, %4025 : vector<8x128xf32>
    %4027 = arith.addf %4024, %4026 : vector<8x128xf32>
    %4028 = vector.broadcast %19 : f32 to vector<8x128xf32>
    %4029 = arith.mulf %3989, %4028 : vector<8x128xf32>
    %4030 = arith.addf %4027, %4029 : vector<8x128xf32>
    %4031 = vector.broadcast %146 : f32 to vector<8x128xf32>
    %4032 = arith.addf %4030, %4031 : vector<8x128xf32>
    %cst_355 = arith.constant 0.000000e+00 : f32
    %4033 = vector.broadcast %cst_355 : f32 to vector<8x128xf32>
    %4034 = arith.maximumf %4032, %4033 : vector<8x128xf32>
    %4035 = vector.broadcast %20 : f32 to vector<8x128xf32>
    %4036 = arith.mulf %3962, %4035 : vector<8x128xf32>
    %4037 = vector.broadcast %21 : f32 to vector<8x128xf32>
    %4038 = arith.mulf %3971, %4037 : vector<8x128xf32>
    %4039 = arith.addf %4036, %4038 : vector<8x128xf32>
    %4040 = vector.broadcast %22 : f32 to vector<8x128xf32>
    %4041 = arith.mulf %3980, %4040 : vector<8x128xf32>
    %4042 = arith.addf %4039, %4041 : vector<8x128xf32>
    %4043 = vector.broadcast %23 : f32 to vector<8x128xf32>
    %4044 = arith.mulf %3989, %4043 : vector<8x128xf32>
    %4045 = arith.addf %4042, %4044 : vector<8x128xf32>
    %4046 = vector.broadcast %147 : f32 to vector<8x128xf32>
    %4047 = arith.addf %4045, %4046 : vector<8x128xf32>
    %cst_356 = arith.constant 0.000000e+00 : f32
    %4048 = vector.broadcast %cst_356 : f32 to vector<8x128xf32>
    %4049 = arith.maximumf %4047, %4048 : vector<8x128xf32>
    %4050 = vector.broadcast %24 : f32 to vector<8x128xf32>
    %4051 = arith.mulf %4004, %4050 : vector<8x128xf32>
    %4052 = vector.broadcast %25 : f32 to vector<8x128xf32>
    %4053 = arith.mulf %4019, %4052 : vector<8x128xf32>
    %4054 = arith.addf %4051, %4053 : vector<8x128xf32>
    %4055 = vector.broadcast %26 : f32 to vector<8x128xf32>
    %4056 = arith.mulf %4034, %4055 : vector<8x128xf32>
    %4057 = arith.addf %4054, %4056 : vector<8x128xf32>
    %4058 = vector.broadcast %27 : f32 to vector<8x128xf32>
    %4059 = arith.mulf %4049, %4058 : vector<8x128xf32>
    %4060 = arith.addf %4057, %4059 : vector<8x128xf32>
    %4061 = vector.broadcast %148 : f32 to vector<8x128xf32>
    %4062 = arith.addf %4060, %4061 : vector<8x128xf32>
    %cst_357 = arith.constant 0.000000e+00 : f32
    %4063 = vector.broadcast %cst_357 : f32 to vector<8x128xf32>
    %4064 = arith.maximumf %4062, %4063 : vector<8x128xf32>
    %4065 = vector.broadcast %28 : f32 to vector<8x128xf32>
    %4066 = arith.mulf %4004, %4065 : vector<8x128xf32>
    %4067 = vector.broadcast %29 : f32 to vector<8x128xf32>
    %4068 = arith.mulf %4019, %4067 : vector<8x128xf32>
    %4069 = arith.addf %4066, %4068 : vector<8x128xf32>
    %4070 = vector.broadcast %30 : f32 to vector<8x128xf32>
    %4071 = arith.mulf %4034, %4070 : vector<8x128xf32>
    %4072 = arith.addf %4069, %4071 : vector<8x128xf32>
    %4073 = vector.broadcast %31 : f32 to vector<8x128xf32>
    %4074 = arith.mulf %4049, %4073 : vector<8x128xf32>
    %4075 = arith.addf %4072, %4074 : vector<8x128xf32>
    %4076 = vector.broadcast %149 : f32 to vector<8x128xf32>
    %4077 = arith.addf %4075, %4076 : vector<8x128xf32>
    %cst_358 = arith.constant 0.000000e+00 : f32
    %4078 = vector.broadcast %cst_358 : f32 to vector<8x128xf32>
    %4079 = arith.maximumf %4077, %4078 : vector<8x128xf32>
    %4080 = vector.broadcast %32 : f32 to vector<8x128xf32>
    %4081 = arith.mulf %4004, %4080 : vector<8x128xf32>
    %4082 = vector.broadcast %33 : f32 to vector<8x128xf32>
    %4083 = arith.mulf %4019, %4082 : vector<8x128xf32>
    %4084 = arith.addf %4081, %4083 : vector<8x128xf32>
    %4085 = vector.broadcast %34 : f32 to vector<8x128xf32>
    %4086 = arith.mulf %4034, %4085 : vector<8x128xf32>
    %4087 = arith.addf %4084, %4086 : vector<8x128xf32>
    %4088 = vector.broadcast %35 : f32 to vector<8x128xf32>
    %4089 = arith.mulf %4049, %4088 : vector<8x128xf32>
    %4090 = arith.addf %4087, %4089 : vector<8x128xf32>
    %4091 = vector.broadcast %150 : f32 to vector<8x128xf32>
    %4092 = arith.addf %4090, %4091 : vector<8x128xf32>
    %cst_359 = arith.constant 0.000000e+00 : f32
    %4093 = vector.broadcast %cst_359 : f32 to vector<8x128xf32>
    %4094 = arith.maximumf %4092, %4093 : vector<8x128xf32>
    %4095 = vector.broadcast %36 : f32 to vector<8x128xf32>
    %4096 = arith.mulf %4004, %4095 : vector<8x128xf32>
    %4097 = vector.broadcast %37 : f32 to vector<8x128xf32>
    %4098 = arith.mulf %4019, %4097 : vector<8x128xf32>
    %4099 = arith.addf %4096, %4098 : vector<8x128xf32>
    %4100 = vector.broadcast %38 : f32 to vector<8x128xf32>
    %4101 = arith.mulf %4034, %4100 : vector<8x128xf32>
    %4102 = arith.addf %4099, %4101 : vector<8x128xf32>
    %4103 = vector.broadcast %39 : f32 to vector<8x128xf32>
    %4104 = arith.mulf %4049, %4103 : vector<8x128xf32>
    %4105 = arith.addf %4102, %4104 : vector<8x128xf32>
    %4106 = vector.broadcast %151 : f32 to vector<8x128xf32>
    %4107 = arith.addf %4105, %4106 : vector<8x128xf32>
    %cst_360 = arith.constant 0.000000e+00 : f32
    %4108 = vector.broadcast %cst_360 : f32 to vector<8x128xf32>
    %4109 = arith.maximumf %4107, %4108 : vector<8x128xf32>
    %4110 = vector.broadcast %40 : f32 to vector<8x128xf32>
    %4111 = arith.mulf %4064, %4110 : vector<8x128xf32>
    %4112 = vector.broadcast %41 : f32 to vector<8x128xf32>
    %4113 = arith.mulf %4079, %4112 : vector<8x128xf32>
    %4114 = arith.addf %4111, %4113 : vector<8x128xf32>
    %4115 = vector.broadcast %42 : f32 to vector<8x128xf32>
    %4116 = arith.mulf %4094, %4115 : vector<8x128xf32>
    %4117 = arith.addf %4114, %4116 : vector<8x128xf32>
    %4118 = vector.broadcast %43 : f32 to vector<8x128xf32>
    %4119 = arith.mulf %4109, %4118 : vector<8x128xf32>
    %4120 = arith.addf %4117, %4119 : vector<8x128xf32>
    %4121 = vector.broadcast %152 : f32 to vector<8x128xf32>
    %4122 = arith.addf %4120, %4121 : vector<8x128xf32>
    %cst_361 = arith.constant 0.000000e+00 : f32
    %4123 = vector.broadcast %cst_361 : f32 to vector<8x128xf32>
    %4124 = arith.maximumf %4122, %4123 : vector<8x128xf32>
    %4125 = vector.broadcast %44 : f32 to vector<8x128xf32>
    %4126 = arith.mulf %4064, %4125 : vector<8x128xf32>
    %4127 = vector.broadcast %45 : f32 to vector<8x128xf32>
    %4128 = arith.mulf %4079, %4127 : vector<8x128xf32>
    %4129 = arith.addf %4126, %4128 : vector<8x128xf32>
    %4130 = vector.broadcast %46 : f32 to vector<8x128xf32>
    %4131 = arith.mulf %4094, %4130 : vector<8x128xf32>
    %4132 = arith.addf %4129, %4131 : vector<8x128xf32>
    %4133 = vector.broadcast %47 : f32 to vector<8x128xf32>
    %4134 = arith.mulf %4109, %4133 : vector<8x128xf32>
    %4135 = arith.addf %4132, %4134 : vector<8x128xf32>
    %4136 = vector.broadcast %153 : f32 to vector<8x128xf32>
    %4137 = arith.addf %4135, %4136 : vector<8x128xf32>
    %cst_362 = arith.constant 0.000000e+00 : f32
    %4138 = vector.broadcast %cst_362 : f32 to vector<8x128xf32>
    %4139 = arith.maximumf %4137, %4138 : vector<8x128xf32>
    %4140 = vector.broadcast %48 : f32 to vector<8x128xf32>
    %4141 = arith.mulf %4064, %4140 : vector<8x128xf32>
    %4142 = vector.broadcast %49 : f32 to vector<8x128xf32>
    %4143 = arith.mulf %4079, %4142 : vector<8x128xf32>
    %4144 = arith.addf %4141, %4143 : vector<8x128xf32>
    %4145 = vector.broadcast %50 : f32 to vector<8x128xf32>
    %4146 = arith.mulf %4094, %4145 : vector<8x128xf32>
    %4147 = arith.addf %4144, %4146 : vector<8x128xf32>
    %4148 = vector.broadcast %51 : f32 to vector<8x128xf32>
    %4149 = arith.mulf %4109, %4148 : vector<8x128xf32>
    %4150 = arith.addf %4147, %4149 : vector<8x128xf32>
    %4151 = vector.broadcast %154 : f32 to vector<8x128xf32>
    %4152 = arith.addf %4150, %4151 : vector<8x128xf32>
    %cst_363 = arith.constant 0.000000e+00 : f32
    %4153 = vector.broadcast %cst_363 : f32 to vector<8x128xf32>
    %4154 = arith.maximumf %4152, %4153 : vector<8x128xf32>
    %4155 = vector.broadcast %52 : f32 to vector<8x128xf32>
    %4156 = arith.mulf %4064, %4155 : vector<8x128xf32>
    %4157 = vector.broadcast %53 : f32 to vector<8x128xf32>
    %4158 = arith.mulf %4079, %4157 : vector<8x128xf32>
    %4159 = arith.addf %4156, %4158 : vector<8x128xf32>
    %4160 = vector.broadcast %54 : f32 to vector<8x128xf32>
    %4161 = arith.mulf %4094, %4160 : vector<8x128xf32>
    %4162 = arith.addf %4159, %4161 : vector<8x128xf32>
    %4163 = vector.broadcast %55 : f32 to vector<8x128xf32>
    %4164 = arith.mulf %4109, %4163 : vector<8x128xf32>
    %4165 = arith.addf %4162, %4164 : vector<8x128xf32>
    %4166 = vector.broadcast %155 : f32 to vector<8x128xf32>
    %4167 = arith.addf %4165, %4166 : vector<8x128xf32>
    %cst_364 = arith.constant 0.000000e+00 : f32
    %4168 = vector.broadcast %cst_364 : f32 to vector<8x128xf32>
    %4169 = arith.maximumf %4167, %4168 : vector<8x128xf32>
    %4170 = vector.broadcast %56 : f32 to vector<8x128xf32>
    %4171 = arith.mulf %4124, %4170 : vector<8x128xf32>
    %4172 = vector.broadcast %57 : f32 to vector<8x128xf32>
    %4173 = arith.mulf %4139, %4172 : vector<8x128xf32>
    %4174 = arith.addf %4171, %4173 : vector<8x128xf32>
    %4175 = vector.broadcast %58 : f32 to vector<8x128xf32>
    %4176 = arith.mulf %4154, %4175 : vector<8x128xf32>
    %4177 = arith.addf %4174, %4176 : vector<8x128xf32>
    %4178 = vector.broadcast %59 : f32 to vector<8x128xf32>
    %4179 = arith.mulf %4169, %4178 : vector<8x128xf32>
    %4180 = arith.addf %4177, %4179 : vector<8x128xf32>
    %4181 = vector.broadcast %156 : f32 to vector<8x128xf32>
    %4182 = arith.addf %4180, %4181 : vector<8x128xf32>
    %cst_365 = arith.constant 0.000000e+00 : f32
    %4183 = vector.broadcast %cst_365 : f32 to vector<8x128xf32>
    %4184 = arith.maximumf %4182, %4183 : vector<8x128xf32>
    %4185 = vector.broadcast %60 : f32 to vector<8x128xf32>
    %4186 = arith.mulf %4124, %4185 : vector<8x128xf32>
    %4187 = vector.broadcast %61 : f32 to vector<8x128xf32>
    %4188 = arith.mulf %4139, %4187 : vector<8x128xf32>
    %4189 = arith.addf %4186, %4188 : vector<8x128xf32>
    %4190 = vector.broadcast %62 : f32 to vector<8x128xf32>
    %4191 = arith.mulf %4154, %4190 : vector<8x128xf32>
    %4192 = arith.addf %4189, %4191 : vector<8x128xf32>
    %4193 = vector.broadcast %63 : f32 to vector<8x128xf32>
    %4194 = arith.mulf %4169, %4193 : vector<8x128xf32>
    %4195 = arith.addf %4192, %4194 : vector<8x128xf32>
    %4196 = vector.broadcast %157 : f32 to vector<8x128xf32>
    %4197 = arith.addf %4195, %4196 : vector<8x128xf32>
    %cst_366 = arith.constant 0.000000e+00 : f32
    %4198 = vector.broadcast %cst_366 : f32 to vector<8x128xf32>
    %4199 = arith.maximumf %4197, %4198 : vector<8x128xf32>
    %4200 = vector.broadcast %64 : f32 to vector<8x128xf32>
    %4201 = arith.mulf %4124, %4200 : vector<8x128xf32>
    %4202 = vector.broadcast %65 : f32 to vector<8x128xf32>
    %4203 = arith.mulf %4139, %4202 : vector<8x128xf32>
    %4204 = arith.addf %4201, %4203 : vector<8x128xf32>
    %4205 = vector.broadcast %66 : f32 to vector<8x128xf32>
    %4206 = arith.mulf %4154, %4205 : vector<8x128xf32>
    %4207 = arith.addf %4204, %4206 : vector<8x128xf32>
    %4208 = vector.broadcast %67 : f32 to vector<8x128xf32>
    %4209 = arith.mulf %4169, %4208 : vector<8x128xf32>
    %4210 = arith.addf %4207, %4209 : vector<8x128xf32>
    %4211 = vector.broadcast %158 : f32 to vector<8x128xf32>
    %4212 = arith.addf %4210, %4211 : vector<8x128xf32>
    %cst_367 = arith.constant 0.000000e+00 : f32
    %4213 = vector.broadcast %cst_367 : f32 to vector<8x128xf32>
    %4214 = arith.maximumf %4212, %4213 : vector<8x128xf32>
    %4215 = vector.broadcast %68 : f32 to vector<8x128xf32>
    %4216 = arith.mulf %4124, %4215 : vector<8x128xf32>
    %4217 = vector.broadcast %69 : f32 to vector<8x128xf32>
    %4218 = arith.mulf %4139, %4217 : vector<8x128xf32>
    %4219 = arith.addf %4216, %4218 : vector<8x128xf32>
    %4220 = vector.broadcast %70 : f32 to vector<8x128xf32>
    %4221 = arith.mulf %4154, %4220 : vector<8x128xf32>
    %4222 = arith.addf %4219, %4221 : vector<8x128xf32>
    %4223 = vector.broadcast %71 : f32 to vector<8x128xf32>
    %4224 = arith.mulf %4169, %4223 : vector<8x128xf32>
    %4225 = arith.addf %4222, %4224 : vector<8x128xf32>
    %4226 = vector.broadcast %159 : f32 to vector<8x128xf32>
    %4227 = arith.addf %4225, %4226 : vector<8x128xf32>
    %cst_368 = arith.constant 0.000000e+00 : f32
    %4228 = vector.broadcast %cst_368 : f32 to vector<8x128xf32>
    %4229 = arith.maximumf %4227, %4228 : vector<8x128xf32>
    %4230 = vector.broadcast %72 : f32 to vector<8x128xf32>
    %4231 = arith.mulf %4184, %4230 : vector<8x128xf32>
    %4232 = vector.broadcast %73 : f32 to vector<8x128xf32>
    %4233 = arith.mulf %4199, %4232 : vector<8x128xf32>
    %4234 = arith.addf %4231, %4233 : vector<8x128xf32>
    %4235 = vector.broadcast %74 : f32 to vector<8x128xf32>
    %4236 = arith.mulf %4214, %4235 : vector<8x128xf32>
    %4237 = arith.addf %4234, %4236 : vector<8x128xf32>
    %4238 = vector.broadcast %75 : f32 to vector<8x128xf32>
    %4239 = arith.mulf %4229, %4238 : vector<8x128xf32>
    %4240 = arith.addf %4237, %4239 : vector<8x128xf32>
    %4241 = vector.broadcast %160 : f32 to vector<8x128xf32>
    %4242 = arith.addf %4240, %4241 : vector<8x128xf32>
    %cst_369 = arith.constant 0.000000e+00 : f32
    %4243 = vector.broadcast %cst_369 : f32 to vector<8x128xf32>
    %4244 = arith.maximumf %4242, %4243 : vector<8x128xf32>
    %4245 = vector.broadcast %76 : f32 to vector<8x128xf32>
    %4246 = arith.mulf %4184, %4245 : vector<8x128xf32>
    %4247 = vector.broadcast %77 : f32 to vector<8x128xf32>
    %4248 = arith.mulf %4199, %4247 : vector<8x128xf32>
    %4249 = arith.addf %4246, %4248 : vector<8x128xf32>
    %4250 = vector.broadcast %78 : f32 to vector<8x128xf32>
    %4251 = arith.mulf %4214, %4250 : vector<8x128xf32>
    %4252 = arith.addf %4249, %4251 : vector<8x128xf32>
    %4253 = vector.broadcast %79 : f32 to vector<8x128xf32>
    %4254 = arith.mulf %4229, %4253 : vector<8x128xf32>
    %4255 = arith.addf %4252, %4254 : vector<8x128xf32>
    %4256 = vector.broadcast %161 : f32 to vector<8x128xf32>
    %4257 = arith.addf %4255, %4256 : vector<8x128xf32>
    %cst_370 = arith.constant 0.000000e+00 : f32
    %4258 = vector.broadcast %cst_370 : f32 to vector<8x128xf32>
    %4259 = arith.maximumf %4257, %4258 : vector<8x128xf32>
    %4260 = vector.broadcast %80 : f32 to vector<8x128xf32>
    %4261 = arith.mulf %4184, %4260 : vector<8x128xf32>
    %4262 = vector.broadcast %81 : f32 to vector<8x128xf32>
    %4263 = arith.mulf %4199, %4262 : vector<8x128xf32>
    %4264 = arith.addf %4261, %4263 : vector<8x128xf32>
    %4265 = vector.broadcast %82 : f32 to vector<8x128xf32>
    %4266 = arith.mulf %4214, %4265 : vector<8x128xf32>
    %4267 = arith.addf %4264, %4266 : vector<8x128xf32>
    %4268 = vector.broadcast %83 : f32 to vector<8x128xf32>
    %4269 = arith.mulf %4229, %4268 : vector<8x128xf32>
    %4270 = arith.addf %4267, %4269 : vector<8x128xf32>
    %4271 = vector.broadcast %162 : f32 to vector<8x128xf32>
    %4272 = arith.addf %4270, %4271 : vector<8x128xf32>
    %cst_371 = arith.constant 0.000000e+00 : f32
    %4273 = vector.broadcast %cst_371 : f32 to vector<8x128xf32>
    %4274 = arith.maximumf %4272, %4273 : vector<8x128xf32>
    %4275 = vector.broadcast %84 : f32 to vector<8x128xf32>
    %4276 = arith.mulf %4184, %4275 : vector<8x128xf32>
    %4277 = vector.broadcast %85 : f32 to vector<8x128xf32>
    %4278 = arith.mulf %4199, %4277 : vector<8x128xf32>
    %4279 = arith.addf %4276, %4278 : vector<8x128xf32>
    %4280 = vector.broadcast %86 : f32 to vector<8x128xf32>
    %4281 = arith.mulf %4214, %4280 : vector<8x128xf32>
    %4282 = arith.addf %4279, %4281 : vector<8x128xf32>
    %4283 = vector.broadcast %87 : f32 to vector<8x128xf32>
    %4284 = arith.mulf %4229, %4283 : vector<8x128xf32>
    %4285 = arith.addf %4282, %4284 : vector<8x128xf32>
    %4286 = vector.broadcast %163 : f32 to vector<8x128xf32>
    %4287 = arith.addf %4285, %4286 : vector<8x128xf32>
    %cst_372 = arith.constant 0.000000e+00 : f32
    %4288 = vector.broadcast %cst_372 : f32 to vector<8x128xf32>
    %4289 = arith.maximumf %4287, %4288 : vector<8x128xf32>
    %4290 = vector.broadcast %88 : f32 to vector<8x128xf32>
    %4291 = arith.mulf %4244, %4290 : vector<8x128xf32>
    %4292 = vector.broadcast %89 : f32 to vector<8x128xf32>
    %4293 = arith.mulf %4259, %4292 : vector<8x128xf32>
    %4294 = arith.addf %4291, %4293 : vector<8x128xf32>
    %4295 = vector.broadcast %90 : f32 to vector<8x128xf32>
    %4296 = arith.mulf %4274, %4295 : vector<8x128xf32>
    %4297 = arith.addf %4294, %4296 : vector<8x128xf32>
    %4298 = vector.broadcast %91 : f32 to vector<8x128xf32>
    %4299 = arith.mulf %4289, %4298 : vector<8x128xf32>
    %4300 = arith.addf %4297, %4299 : vector<8x128xf32>
    %4301 = vector.broadcast %164 : f32 to vector<8x128xf32>
    %4302 = arith.addf %4300, %4301 : vector<8x128xf32>
    %cst_373 = arith.constant 0.000000e+00 : f32
    %4303 = vector.broadcast %cst_373 : f32 to vector<8x128xf32>
    %4304 = arith.maximumf %4302, %4303 : vector<8x128xf32>
    %4305 = vector.broadcast %92 : f32 to vector<8x128xf32>
    %4306 = arith.mulf %4244, %4305 : vector<8x128xf32>
    %4307 = vector.broadcast %93 : f32 to vector<8x128xf32>
    %4308 = arith.mulf %4259, %4307 : vector<8x128xf32>
    %4309 = arith.addf %4306, %4308 : vector<8x128xf32>
    %4310 = vector.broadcast %94 : f32 to vector<8x128xf32>
    %4311 = arith.mulf %4274, %4310 : vector<8x128xf32>
    %4312 = arith.addf %4309, %4311 : vector<8x128xf32>
    %4313 = vector.broadcast %95 : f32 to vector<8x128xf32>
    %4314 = arith.mulf %4289, %4313 : vector<8x128xf32>
    %4315 = arith.addf %4312, %4314 : vector<8x128xf32>
    %4316 = vector.broadcast %165 : f32 to vector<8x128xf32>
    %4317 = arith.addf %4315, %4316 : vector<8x128xf32>
    %cst_374 = arith.constant 0.000000e+00 : f32
    %4318 = vector.broadcast %cst_374 : f32 to vector<8x128xf32>
    %4319 = arith.maximumf %4317, %4318 : vector<8x128xf32>
    %4320 = vector.broadcast %96 : f32 to vector<8x128xf32>
    %4321 = arith.mulf %4244, %4320 : vector<8x128xf32>
    %4322 = vector.broadcast %97 : f32 to vector<8x128xf32>
    %4323 = arith.mulf %4259, %4322 : vector<8x128xf32>
    %4324 = arith.addf %4321, %4323 : vector<8x128xf32>
    %4325 = vector.broadcast %98 : f32 to vector<8x128xf32>
    %4326 = arith.mulf %4274, %4325 : vector<8x128xf32>
    %4327 = arith.addf %4324, %4326 : vector<8x128xf32>
    %4328 = vector.broadcast %99 : f32 to vector<8x128xf32>
    %4329 = arith.mulf %4289, %4328 : vector<8x128xf32>
    %4330 = arith.addf %4327, %4329 : vector<8x128xf32>
    %4331 = vector.broadcast %166 : f32 to vector<8x128xf32>
    %4332 = arith.addf %4330, %4331 : vector<8x128xf32>
    %cst_375 = arith.constant 0.000000e+00 : f32
    %4333 = vector.broadcast %cst_375 : f32 to vector<8x128xf32>
    %4334 = arith.maximumf %4332, %4333 : vector<8x128xf32>
    %4335 = vector.broadcast %100 : f32 to vector<8x128xf32>
    %4336 = arith.mulf %4244, %4335 : vector<8x128xf32>
    %4337 = vector.broadcast %101 : f32 to vector<8x128xf32>
    %4338 = arith.mulf %4259, %4337 : vector<8x128xf32>
    %4339 = arith.addf %4336, %4338 : vector<8x128xf32>
    %4340 = vector.broadcast %102 : f32 to vector<8x128xf32>
    %4341 = arith.mulf %4274, %4340 : vector<8x128xf32>
    %4342 = arith.addf %4339, %4341 : vector<8x128xf32>
    %4343 = vector.broadcast %103 : f32 to vector<8x128xf32>
    %4344 = arith.mulf %4289, %4343 : vector<8x128xf32>
    %4345 = arith.addf %4342, %4344 : vector<8x128xf32>
    %4346 = vector.broadcast %167 : f32 to vector<8x128xf32>
    %4347 = arith.addf %4345, %4346 : vector<8x128xf32>
    %cst_376 = arith.constant 0.000000e+00 : f32
    %4348 = vector.broadcast %cst_376 : f32 to vector<8x128xf32>
    %4349 = arith.maximumf %4347, %4348 : vector<8x128xf32>
    %4350 = vector.broadcast %104 : f32 to vector<8x128xf32>
    %4351 = arith.mulf %4304, %4350 : vector<8x128xf32>
    %4352 = vector.broadcast %105 : f32 to vector<8x128xf32>
    %4353 = arith.mulf %4319, %4352 : vector<8x128xf32>
    %4354 = arith.addf %4351, %4353 : vector<8x128xf32>
    %4355 = vector.broadcast %106 : f32 to vector<8x128xf32>
    %4356 = arith.mulf %4334, %4355 : vector<8x128xf32>
    %4357 = arith.addf %4354, %4356 : vector<8x128xf32>
    %4358 = vector.broadcast %107 : f32 to vector<8x128xf32>
    %4359 = arith.mulf %4349, %4358 : vector<8x128xf32>
    %4360 = arith.addf %4357, %4359 : vector<8x128xf32>
    %4361 = vector.broadcast %168 : f32 to vector<8x128xf32>
    %4362 = arith.addf %4360, %4361 : vector<8x128xf32>
    %cst_377 = arith.constant 0.000000e+00 : f32
    %4363 = vector.broadcast %cst_377 : f32 to vector<8x128xf32>
    %4364 = arith.maximumf %4362, %4363 : vector<8x128xf32>
    %4365 = vector.broadcast %108 : f32 to vector<8x128xf32>
    %4366 = arith.mulf %4304, %4365 : vector<8x128xf32>
    %4367 = vector.broadcast %109 : f32 to vector<8x128xf32>
    %4368 = arith.mulf %4319, %4367 : vector<8x128xf32>
    %4369 = arith.addf %4366, %4368 : vector<8x128xf32>
    %4370 = vector.broadcast %110 : f32 to vector<8x128xf32>
    %4371 = arith.mulf %4334, %4370 : vector<8x128xf32>
    %4372 = arith.addf %4369, %4371 : vector<8x128xf32>
    %4373 = vector.broadcast %111 : f32 to vector<8x128xf32>
    %4374 = arith.mulf %4349, %4373 : vector<8x128xf32>
    %4375 = arith.addf %4372, %4374 : vector<8x128xf32>
    %4376 = vector.broadcast %169 : f32 to vector<8x128xf32>
    %4377 = arith.addf %4375, %4376 : vector<8x128xf32>
    %cst_378 = arith.constant 0.000000e+00 : f32
    %4378 = vector.broadcast %cst_378 : f32 to vector<8x128xf32>
    %4379 = arith.maximumf %4377, %4378 : vector<8x128xf32>
    %4380 = vector.broadcast %112 : f32 to vector<8x128xf32>
    %4381 = arith.mulf %4304, %4380 : vector<8x128xf32>
    %4382 = vector.broadcast %113 : f32 to vector<8x128xf32>
    %4383 = arith.mulf %4319, %4382 : vector<8x128xf32>
    %4384 = arith.addf %4381, %4383 : vector<8x128xf32>
    %4385 = vector.broadcast %114 : f32 to vector<8x128xf32>
    %4386 = arith.mulf %4334, %4385 : vector<8x128xf32>
    %4387 = arith.addf %4384, %4386 : vector<8x128xf32>
    %4388 = vector.broadcast %115 : f32 to vector<8x128xf32>
    %4389 = arith.mulf %4349, %4388 : vector<8x128xf32>
    %4390 = arith.addf %4387, %4389 : vector<8x128xf32>
    %4391 = vector.broadcast %170 : f32 to vector<8x128xf32>
    %4392 = arith.addf %4390, %4391 : vector<8x128xf32>
    %cst_379 = arith.constant 0.000000e+00 : f32
    %4393 = vector.broadcast %cst_379 : f32 to vector<8x128xf32>
    %4394 = arith.maximumf %4392, %4393 : vector<8x128xf32>
    %4395 = vector.broadcast %116 : f32 to vector<8x128xf32>
    %4396 = arith.mulf %4304, %4395 : vector<8x128xf32>
    %4397 = vector.broadcast %117 : f32 to vector<8x128xf32>
    %4398 = arith.mulf %4319, %4397 : vector<8x128xf32>
    %4399 = arith.addf %4396, %4398 : vector<8x128xf32>
    %4400 = vector.broadcast %118 : f32 to vector<8x128xf32>
    %4401 = arith.mulf %4334, %4400 : vector<8x128xf32>
    %4402 = arith.addf %4399, %4401 : vector<8x128xf32>
    %4403 = vector.broadcast %119 : f32 to vector<8x128xf32>
    %4404 = arith.mulf %4349, %4403 : vector<8x128xf32>
    %4405 = arith.addf %4402, %4404 : vector<8x128xf32>
    %4406 = vector.broadcast %171 : f32 to vector<8x128xf32>
    %4407 = arith.addf %4405, %4406 : vector<8x128xf32>
    %cst_380 = arith.constant 0.000000e+00 : f32
    %4408 = vector.broadcast %cst_380 : f32 to vector<8x128xf32>
    %4409 = arith.maximumf %4407, %4408 : vector<8x128xf32>
    %4410 = vector.broadcast %120 : f32 to vector<8x128xf32>
    %4411 = arith.mulf %4364, %4410 : vector<8x128xf32>
    %4412 = vector.broadcast %121 : f32 to vector<8x128xf32>
    %4413 = arith.mulf %4379, %4412 : vector<8x128xf32>
    %4414 = arith.addf %4411, %4413 : vector<8x128xf32>
    %4415 = vector.broadcast %122 : f32 to vector<8x128xf32>
    %4416 = arith.mulf %4394, %4415 : vector<8x128xf32>
    %4417 = arith.addf %4414, %4416 : vector<8x128xf32>
    %4418 = vector.broadcast %123 : f32 to vector<8x128xf32>
    %4419 = arith.mulf %4409, %4418 : vector<8x128xf32>
    %4420 = arith.addf %4417, %4419 : vector<8x128xf32>
    %4421 = vector.broadcast %172 : f32 to vector<8x128xf32>
    %4422 = arith.addf %4420, %4421 : vector<8x128xf32>
    %cst_381 = arith.constant 0.000000e+00 : f32
    %4423 = vector.broadcast %cst_381 : f32 to vector<8x128xf32>
    %4424 = arith.maximumf %4422, %4423 : vector<8x128xf32>
    %4425 = vector.broadcast %124 : f32 to vector<8x128xf32>
    %4426 = arith.mulf %4364, %4425 : vector<8x128xf32>
    %4427 = vector.broadcast %125 : f32 to vector<8x128xf32>
    %4428 = arith.mulf %4379, %4427 : vector<8x128xf32>
    %4429 = arith.addf %4426, %4428 : vector<8x128xf32>
    %4430 = vector.broadcast %126 : f32 to vector<8x128xf32>
    %4431 = arith.mulf %4394, %4430 : vector<8x128xf32>
    %4432 = arith.addf %4429, %4431 : vector<8x128xf32>
    %4433 = vector.broadcast %127 : f32 to vector<8x128xf32>
    %4434 = arith.mulf %4409, %4433 : vector<8x128xf32>
    %4435 = arith.addf %4432, %4434 : vector<8x128xf32>
    %4436 = vector.broadcast %173 : f32 to vector<8x128xf32>
    %4437 = arith.addf %4435, %4436 : vector<8x128xf32>
    %cst_382 = arith.constant 0.000000e+00 : f32
    %4438 = vector.broadcast %cst_382 : f32 to vector<8x128xf32>
    %4439 = arith.maximumf %4437, %4438 : vector<8x128xf32>
    %4440 = vector.broadcast %128 : f32 to vector<8x128xf32>
    %4441 = arith.mulf %4364, %4440 : vector<8x128xf32>
    %4442 = vector.broadcast %129 : f32 to vector<8x128xf32>
    %4443 = arith.mulf %4379, %4442 : vector<8x128xf32>
    %4444 = arith.addf %4441, %4443 : vector<8x128xf32>
    %4445 = vector.broadcast %130 : f32 to vector<8x128xf32>
    %4446 = arith.mulf %4394, %4445 : vector<8x128xf32>
    %4447 = arith.addf %4444, %4446 : vector<8x128xf32>
    %4448 = vector.broadcast %131 : f32 to vector<8x128xf32>
    %4449 = arith.mulf %4409, %4448 : vector<8x128xf32>
    %4450 = arith.addf %4447, %4449 : vector<8x128xf32>
    %4451 = vector.broadcast %174 : f32 to vector<8x128xf32>
    %4452 = arith.addf %4450, %4451 : vector<8x128xf32>
    %cst_383 = arith.constant 0.000000e+00 : f32
    %4453 = vector.broadcast %cst_383 : f32 to vector<8x128xf32>
    %4454 = arith.maximumf %4452, %4453 : vector<8x128xf32>
    %4455 = vector.broadcast %132 : f32 to vector<8x128xf32>
    %4456 = arith.mulf %4364, %4455 : vector<8x128xf32>
    %4457 = vector.broadcast %133 : f32 to vector<8x128xf32>
    %4458 = arith.mulf %4379, %4457 : vector<8x128xf32>
    %4459 = arith.addf %4456, %4458 : vector<8x128xf32>
    %4460 = vector.broadcast %134 : f32 to vector<8x128xf32>
    %4461 = arith.mulf %4394, %4460 : vector<8x128xf32>
    %4462 = arith.addf %4459, %4461 : vector<8x128xf32>
    %4463 = vector.broadcast %135 : f32 to vector<8x128xf32>
    %4464 = arith.mulf %4409, %4463 : vector<8x128xf32>
    %4465 = arith.addf %4462, %4464 : vector<8x128xf32>
    %4466 = vector.broadcast %175 : f32 to vector<8x128xf32>
    %4467 = arith.addf %4465, %4466 : vector<8x128xf32>
    %cst_384 = arith.constant 0.000000e+00 : f32
    %4468 = vector.broadcast %cst_384 : f32 to vector<8x128xf32>
    %4469 = arith.maximumf %4467, %4468 : vector<8x128xf32>
    %4470 = vector.broadcast %136 : f32 to vector<8x128xf32>
    %4471 = arith.mulf %4424, %4470 : vector<8x128xf32>
    %4472 = vector.broadcast %137 : f32 to vector<8x128xf32>
    %4473 = arith.mulf %4439, %4472 : vector<8x128xf32>
    %4474 = arith.addf %4471, %4473 : vector<8x128xf32>
    %4475 = vector.broadcast %138 : f32 to vector<8x128xf32>
    %4476 = arith.mulf %4454, %4475 : vector<8x128xf32>
    %4477 = arith.addf %4474, %4476 : vector<8x128xf32>
    %4478 = vector.broadcast %139 : f32 to vector<8x128xf32>
    %4479 = arith.mulf %4469, %4478 : vector<8x128xf32>
    %4480 = arith.addf %4477, %4479 : vector<8x128xf32>
    %4481 = vector.broadcast %176 : f32 to vector<8x128xf32>
    %4482 = arith.addf %4480, %4481 : vector<8x128xf32>
    %4483 = arith.negf %4482 : vector<8x128xf32>
    %4484 = math.exp %4483 : vector<8x128xf32>
    %cst_385 = arith.constant 1.000000e+00 : f32
    %4485 = vector.broadcast %cst_385 : f32 to vector<8x128xf32>
    %4486 = arith.addf %4485, %4484 : vector<8x128xf32>
    %4487 = arith.divf %4485, %4486 : vector<8x128xf32>
    %c56_386 = arith.constant 56 : index
    %c0_387 = arith.constant 0 : index
    %4488 = vector.load %arg4[%c56_386, %c0_387] : memref<64x128xf32, #tpu.memory_space<vmem>>, vector<8x128xf32>
    tpu.vector_store %arg4[%c56_386, %c0_387], %4487 {strides = array<i32>} : memref<64x128xf32, #tpu.memory_space<vmem>>, vector<8x128xf32>,
    return
  }
  func.func @transform_0(%arg0: i32) -> i32 {
    %c0_i32 = arith.constant 0 : i32
    %c0_i32_0 = arith.constant 0 : i32
    return %c0_i32 : i32
  }
  func.func @transform_1(%arg0: i32) -> i32 {
    %c0_i32 = arith.constant 0 : i32
    %c0_i32_0 = arith.constant 0 : i32
    return %c0_i32 : i32
  }
  func.func @transform_2(%arg0: i32) -> (i32, i32, i32) {
    %c0_i32 = arith.constant 0 : i32
    %c0_i32_0 = arith.constant 0 : i32
    %c0_i32_1 = arith.constant 0 : i32
    return %c0_i32, %arg0, %c0_i32_0 : i32, i32, i32
  }
  func.func @transform_3(%arg0: i32) -> (i32, i32) {
    %c0_i32 = arith.constant 0 : i32
    %c0_i32_0 = arith.constant 0 : i32
    return %arg0, %c0_i32 : i32, i32
  }
}

</mosaic_0001>

<llo_original>
// kernel: nn10_forward.1
$region0: #{nn10_forward.1}
  #allocation0 [shape = 'u32[]', space=smem, size = 0x4, offset = 0x4, fixed_abs, tag = 'smem constant byte address 0x4 - core index']
  #allocation1 [shape = 'u32[72,128]{1,0:T(1,128)}', space=vmem, size = 0x9000, scoped, tag = 'internal scratch']
  %s0 = inlined_call_operand.vmem [shape: f32[160], index: 0, kind: input, shape index: {}]
  %s1 = inlined_call_operand.vmem [shape: f32[40], index: 1, kind: input, shape index: {}]
  %s2 = inlined_call_operand.vmem [shape: f32[2,64,128], index: 2, kind: input, shape index: {}]
  %s3 = inlined_call_operand.vmem [shape: f32[64,128], index: 3, kind: output, shape index: {}]
  %s4 = sld [smem:[#allocation0]]
  $region30: #{nn10_forward.1} parent=0
    _
  %s6 = ssub.s32 1, %s4
  %s7 = scalar_select 0, %s6, %s4
  $region1: #{nn10_forward.1} parent=0
    #allocation2 [shape = 'u8[1024]{0}', space=smem, size = 0x400, scoped, tag = 'input window, operand 0, single buffered']
    #allocation3 [shape = 's32[1]{0}', space=sflag, size = 0x4, scoped, tag = 'scoped memory for nn10_forward.1']
    #allocation4 [shape = 'u8[512]{0}', space=smem, size = 0x200, scoped, tag = 'input window, operand 1, single buffered']
    #allocation5 [shape = 's32[1]{0}', space=sflag, size = 0x4, scoped, tag = 'scoped memory for nn10_forward.1']
    %8 = vsyncpa [#allocation3], 0
    %9 = vsyncpa [#allocation5], 0
    // Predicated region
    $region2: #{nn10_forward.1} parent=1 // pred_check
      _
    $region3: #{nn10_forward.1} parent=1 // pred_check_branch
      %11 = sbr.rel (0) target = $region5
    $region4: #{nn10_forward.1} parent=1 // pred_region
      %13 = vsyncadd [#allocation3], 0
      %s15 = sshll.u32 %s0, 4
      %s16 = int_to_ptr.vmem [resolvable:$true] %s15
      %18 = dma.vmem_to_smem %s16, 32, [#allocation2], [#allocation3]
    $region5: #{nn10_forward.1} parent=1 // pred_fallthru
      _
    // Predicated region
    $region6: #{nn10_forward.1} parent=1 // pred_check
      _
    $region7: #{nn10_forward.1} parent=1 // pred_check_branch
      %20 = sbr.rel (0) target = $region9
    $region8: #{nn10_forward.1} parent=1 // pred_region
      %22 = vsyncadd [#allocation5], 0
      %s24 = sshll.u32 %s1, 4
      %s25 = int_to_ptr.vmem [resolvable:$true] %s24
      %27 = dma.vmem_to_smem %s25, 16, [#allocation4], [#allocation5]
    $region9: #{nn10_forward.1} parent=1 // pred_fallthru
      _
    // Predicated region
    $region10: #{nn10_forward.1} parent=1 // pred_check
      _
    $region11: #{nn10_forward.1} parent=1 // pred_check_branch
      %29 = sbr.rel (0) target = $region13
    $region12: #{nn10_forward.1} parent=1 // pred_region
      _
    $region13: #{nn10_forward.1} parent=1 // pred_fallthru
      _
    // Predicated region
    $region14: #{nn10_forward.1} parent=1 // pred_check
      _
    $region15: #{nn10_forward.1} parent=1 // pred_check_branch
      %31 = sbr.rel (0) target = $region17
    $region16: #{nn10_forward.1} parent=1 // pred_region
      %33 = dma.done [#allocation3], 32
    $region17: #{nn10_forward.1} parent=1 // pred_fallthru
      _
    // Predicated region
    $region18: #{nn10_forward.1} parent=1 // pred_check
      _
    $region19: #{nn10_forward.1} parent=1 // pred_check_branch
      %35 = sbr.rel (0) target = $region21
    $region20: #{nn10_forward.1} parent=1 // pred_region
      %37 = dma.done [#allocation5], 16
    $region21: #{nn10_forward.1} parent=1 // pred_fallthru
      _
    %38 = sfence
    %s39 = sld [smem:[#allocation2]]
    %s40 = sld [smem:[#allocation2 + $0x1]]
    %s41 = sld [smem:[#allocation2 + $0x4]]
    %s42 = sld [smem:[#allocation2 + $0x5]]
    %s43 = sld [smem:[#allocation2 + $0x8]]
    %s44 = sld [smem:[#allocation2 + $0x9]]
    %s45 = sld [smem:[#allocation2 + $0xc]]
    %s46 = sld [smem:[#allocation2 + $0xd]]
    %s47 = sld [smem:[#allocation2 + $0x10]]
    %s48 = sld [smem:[#allocation2 + $0x11]]
    %s49 = sld [smem:[#allocation2 + $0x12]]
    %s50 = sld [smem:[#allocation2 + $0x13]]
    %s51 = sld [smem:[#allocation2 + $0x14]]
    %s52 = sld [smem:[#allocation2 + $0x15]]
    %s53 = sld [smem:[#allocation2 + $0x16]]
    %s54 = sld [smem:[#allocation2 + $0x17]]
    %s55 = sld [smem:[#allocation2 + $0x18]]
    %s56 = sld [smem:[#allocation2 + $0x19]]
    %s57 = sld [smem:[#allocation2 + $0x1a]]
    %s58 = sld [smem:[#allocation2 + $0x1b]]
    %s59 = sld [smem:[#allocation2 + $0x1c]]
    %s60 = sld [smem:[#allocation2 + $0x1d]]
    %s61 = sld [smem:[#allocation2 + $0x1e]]
    %s62 = sld [smem:[#allocation2 + $0x1f]]
    %s63 = sld [smem:[#allocation2 + $0x20]]
    %s64 = sld [smem:[#allocation2 + $0x21]]
    %s65 = sld [smem:[#allocation2 + $0x22]]
    %s66 = sld [smem:[#allocation2 + $0x23]]
    %s67 = sld [smem:[#allocation2 + $0x24]]
    %s68 = sld [smem:[#allocation2 + $0x25]]
    %s69 = sld [smem:[#allocation2 + $0x26]]
    %s70 = sld [smem:[#allocation2 + $0x27]]
    %s71 = sld [smem:[#allocation2 + $0x28]]
    %s72 = sld [smem:[#allocation2 + $0x29]]
    %s73 = sld [smem:[#allocation2 + $0x2a]]
    %s74 = sld [smem:[#allocation2 + $0x2b]]
    %s75 = sld [smem:[#allocation2 + $0x2c]]
    %s76 = sld [smem:[#allocation2 + $0x2d]]
    %s77 = sld [smem:[#allocation2 + $0x2e]]
    %s78 = sld [smem:[#allocation2 + $0x2f]]
    %s79 = sld [smem:[#allocation2 + $0x30]]
    %s80 = sld [smem:[#allocation2 + $0x31]]
    %s81 = sld [smem:[#allocation2 + $0x32]]
    %s82 = sld [smem:[#allocation2 + $0x33]]
    %s83 = sld [smem:[#allocation2 + $0x34]]
    %s84 = sld [smem:[#allocation2 + $0x35]]
    %s85 = sld [smem:[#allocation2 + $0x36]]
    %s86 = sld [smem:[#allocation2 + $0x37]]
    %s87 = sld [smem:[#allocation2 + $0x38]]
    %s88 = sld [smem:[#allocation2 + $0x39]]
    %s89 = sld [smem:[#allocation2 + $0x3a]]
    %s90 = sld [smem:[#allocation2 + $0x3b]]
    %s91 = sld [smem:[#allocation2 + $0x3c]]
    %s92 = sld [smem:[#allocation2 + $0x3d]]
    %s93 = sld [smem:[#allocation2 + $0x3e]]
    %s94 = sld [smem:[#allocation2 + $0x3f]]
    %s95 = sld [smem:[#allocation2 + $0x40]]
    %s96 = sld [smem:[#allocation2 + $0x41]]
    %s97 = sld [smem:[#allocation2 + $0x42]]
    %s98 = sld [smem:[#allocation2 + $0x43]]
    %s99 = sld [smem:[#allocation2 + $0x44]]
    %s100 = sld [smem:[#allocation2 + $0x45]]
    %s101 = sld [smem:[#allocation2 + $0x46]]
    %s102 = sld [smem:[#allocation2 + $0x47]]
    %s103 = sld [smem:[#allocation2 + $0x48]]
    %s104 = sld [smem:[#allocation2 + $0x49]]
    %s105 = sld [smem:[#allocation2 + $0x4a]]
    %s106 = sld [smem:[#allocation2 + $0x4b]]
    %s107 = sld [smem:[#allocation2 + $0x4c]]
    %s108 = sld [smem:[#allocation2 + $0x4d]]
    %s109 = sld [smem:[#allocation2 + $0x4e]]
    %s110 = sld [smem:[#allocation2 + $0x4f]]
    %s111 = sld [smem:[#allocation2 + $0x50]]
    %s112 = sld [smem:[#allocation2 + $0x51]]
    %s113 = sld [smem:[#allocation2 + $0x52]]
    %s114 = sld [smem:[#allocation2 + $0x53]]
    %s115 = sld [smem:[#allocation2 + $0x54]]
    %s116 = sld [smem:[#allocation2 + $0x55]]
    %s117 = sld [smem:[#allocation2 + $0x56]]
    %s118 = sld [smem:[#allocation2 + $0x57]]
    %s119 = sld [smem:[#allocation2 + $0x58]]
    %s120 = sld [smem:[#allocation2 + $0x59]]
    %s121 = sld [smem:[#allocation2 + $0x5a]]
    %s122 = sld [smem:[#allocation2 + $0x5b]]
    %s123 = sld [smem:[#allocation2 + $0x5c]]
    %s124 = sld [smem:[#allocation2 + $0x5d]]
    %s125 = sld [smem:[#allocation2 + $0x5e]]
    %s126 = sld [smem:[#allocation2 + $0x5f]]
    %s127 = sld [smem:[#allocation2 + $0x60]]
    %s128 = sld [smem:[#allocation2 + $0x61]]
    %s129 = sld [smem:[#allocation2 + $0x62]]
    %s130 = sld [smem:[#allocation2 + $0x63]]
    %s131 = sld [smem:[#allocation2 + $0x64]]
    %s132 = sld [smem:[#allocation2 + $0x65]]
    %s133 = sld [smem:[#allocation2 + $0x66]]
    %s134 = sld [smem:[#allocation2 + $0x67]]
    %s135 = sld [smem:[#allocation2 + $0x68]]
    %s136 = sld [smem:[#allocation2 + $0x69]]
    %s137 = sld [smem:[#allocation2 + $0x6a]]
    %s138 = sld [smem:[#allocation2 + $0x6b]]
    %s139 = sld [smem:[#allocation2 + $0x6c]]
    %s140 = sld [smem:[#allocation2 + $0x6d]]
    %s141 = sld [smem:[#allocation2 + $0x6e]]
    %s142 = sld [smem:[#allocation2 + $0x6f]]
    %s143 = sld [smem:[#allocation2 + $0x70]]
    %s144 = sld [smem:[#allocation2 + $0x71]]
    %s145 = sld [smem:[#allocation2 + $0x72]]
    %s146 = sld [smem:[#allocation2 + $0x73]]
    %s147 = sld [smem:[#allocation2 + $0x74]]
    %s148 = sld [smem:[#allocation2 + $0x75]]
    %s149 = sld [smem:[#allocation2 + $0x76]]
    %s150 = sld [smem:[#allocation2 + $0x77]]
    %s151 = sld [smem:[#allocation2 + $0x78]]
    %s152 = sld [smem:[#allocation2 + $0x79]]
    %s153 = sld [smem:[#allocation2 + $0x7a]]
    %s154 = sld [smem:[#allocation2 + $0x7b]]
    %s155 = sld [smem:[#allocation2 + $0x7c]]
    %s156 = sld [smem:[#allocation2 + $0x7d]]
    %s157 = sld [smem:[#allocation2 + $0x7e]]
    %s158 = sld [smem:[#allocation2 + $0x7f]]
    %s159 = sld [smem:[#allocation2 + $0x80]]
    %s160 = sld [smem:[#allocation2 + $0x81]]
    %s161 = sld [smem:[#allocation2 + $0x82]]
    %s162 = sld [smem:[#allocation2 + $0x83]]
    %s163 = sld [smem:[#allocation2 + $0x84]]
    %s164 = sld [smem:[#allocation2 + $0x85]]
    %s165 = sld [smem:[#allocation2 + $0x86]]
    %s166 = sld [smem:[#allocation2 + $0x87]]
    %s167 = sld [smem:[#allocation2 + $0x88]]
    %s168 = sld [smem:[#allocation2 + $0x89]]
    %s169 = sld [smem:[#allocation2 + $0x8a]]
    %s170 = sld [smem:[#allocation2 + $0x8b]]
    %s171 = sld [smem:[#allocation2 + $0x8c]]
    %s172 = sld [smem:[#allocation2 + $0x8d]]
    %s173 = sld [smem:[#allocation2 + $0x8e]]
    %s174 = sld [smem:[#allocation2 + $0x8f]]
    %s175 = sld [smem:[#allocation2 + $0x90]]
    %s176 = sld [smem:[#allocation2 + $0x91]]
    %s177 = sld [smem:[#allocation2 + $0x92]]
    %s178 = sld [smem:[#allocation2 + $0x93]]
    %s179 = sld [smem:[#allocation4]]
    %s180 = sld [smem:[#allocation4 + $0x1]]
    %s181 = sld [smem:[#allocation4 + $0x2]]
    %s182 = sld [smem:[#allocation4 + $0x3]]
    %s183 = sld [smem:[#allocation4 + $0x4]]
    %s184 = sld [smem:[#allocation4 + $0x5]]
    %s185 = sld [smem:[#allocation4 + $0x6]]
    %s186 = sld [smem:[#allocation4 + $0x7]]
    %s187 = sld [smem:[#allocation4 + $0x8]]
    %s188 = sld [smem:[#allocation4 + $0x9]]
    %s189 = sld [smem:[#allocation4 + $0xa]]
    %s190 = sld [smem:[#allocation4 + $0xb]]
    %s191 = sld [smem:[#allocation4 + $0xc]]
    %s192 = sld [smem:[#allocation4 + $0xd]]
    %s193 = sld [smem:[#allocation4 + $0xe]]
    %s194 = sld [smem:[#allocation4 + $0xf]]
    %s195 = sld [smem:[#allocation4 + $0x10]]
    %s196 = sld [smem:[#allocation4 + $0x11]]
    %s197 = sld [smem:[#allocation4 + $0x12]]
    %s198 = sld [smem:[#allocation4 + $0x13]]
    %s199 = sld [smem:[#allocation4 + $0x14]]
    %s200 = sld [smem:[#allocation4 + $0x15]]
    %s201 = sld [smem:[#allocation4 + $0x16]]
    %s202 = sld [smem:[#allocation4 + $0x17]]
    %s203 = sld [smem:[#allocation4 + $0x18]]
    %s204 = sld [smem:[#allocation4 + $0x19]]
    %s205 = sld [smem:[#allocation4 + $0x1a]]
    %s206 = sld [smem:[#allocation4 + $0x1b]]
    %s207 = sld [smem:[#allocation4 + $0x1c]]
    %s208 = sld [smem:[#allocation4 + $0x1d]]
    %s209 = sld [smem:[#allocation4 + $0x1e]]
    %s210 = sld [smem:[#allocation4 + $0x1f]]
    %s211 = sld [smem:[#allocation4 + $0x20]]
    %s212 = sld [smem:[#allocation4 + $0x21]]
    %s213 = sld [smem:[#allocation4 + $0x22]]
    %s214 = sld [smem:[#allocation4 + $0x23]]
    %s215 = sld [smem:[#allocation4 + $0x24]]
    %v216 = vld [vmem:[%s2] sm:$0xff]
    %s217 = scalar_lea.vmem %s2, 64
    %v218 = vld [vmem:[%s217] sm:$0xff]
    %v219 = vstv %s39
    %v220 = vmul.f32 %v216, %v219
    %v221 = vstv %s40
    %v222 = vmul.f32 %v218, %v221
    %v223 = vadd.f32 %v220, %v222
    %v224 = vstv %s179
    %v225 = vadd.f32 %v223, %v224
    %v226 = vmax.f32 %v225, 0.0
    %v227 = vstv %s41
    %v228 = vmul.f32 %v216, %v227
    %v229 = vstv %s42
    %v230 = vmul.f32 %v218, %v229
    %v231 = vadd.f32 %v228, %v230
    %v232 = vstv %s180
    %v233 = vadd.f32 %v231, %v232
    %v234 = vmax.f32 %v233, 0.0
    %v235 = vstv %s43
    %v236 = vmul.f32 %v216, %v235
    %v237 = vstv %s44
    %v238 = vmul.f32 %v218, %v237
    %v239 = vadd.f32 %v236, %v238
    %v240 = vstv %s181
    %v241 = vadd.f32 %v239, %v240
    %v242 = vmax.f32 %v241, 0.0
    %v243 = vstv %s45
    %v244 = vmul.f32 %v216, %v243
    %v245 = vstv %s46
    %v246 = vmul.f32 %v218, %v245
    %v247 = vadd.f32 %v244, %v246
    %v248 = vstv %s182
    %v249 = vadd.f32 %v247, %v248
    %v250 = vmax.f32 %v249, 0.0
    %v251 = vstv %s47
    %v252 = vmul.f32 %v226, %v251
    %v253 = vstv %s48
    %v254 = vmul.f32 %v234, %v253
    %v255 = vadd.f32 %v252, %v254
    %v256 = vstv %s49
    %v257 = vmul.f32 %v242, %v256
    %v258 = vadd.f32 %v255, %v257
    %v259 = vstv %s50
    %v260 = vmul.f32 %v250, %v259
    %v261 = vadd.f32 %v258, %v260
    %v262 = vstv %s183
    %v263 = vadd.f32 %v261, %v262
    %v264 = vmax.f32 %v263, 0.0
    %v265 = vstv %s51
    %v266 = vmul.f32 %v226, %v265
    %v267 = vstv %s52
    %v268 = vmul.f32 %v234, %v267
    %v269 = vadd.f32 %v266, %v268
    %v270 = vstv %s53
    %v271 = vmul.f32 %v242, %v270
    %v272 = vadd.f32 %v269, %v271
    %v273 = vstv %s54
    %v274 = vmul.f32 %v250, %v273
    %v275 = vadd.f32 %v272, %v274
    %v276 = vstv %s184
    %v277 = vadd.f32 %v275, %v276
    %v278 = vmax.f32 %v277, 0.0
    %v279 = vstv %s55
    %v280 = vmul.f32 %v226, %v279
    %v281 = vstv %s56
    %v282 = vmul.f32 %v234, %v281
    %v283 = vadd.f32 %v280, %v282
    %v284 = vstv %s57
    %v285 = vmul.f32 %v242, %v284
    %v286 = vadd.f32 %v283, %v285
    %v287 = vstv %s58
    %v288 = vmul.f32 %v250, %v287
    %v289 = vadd.f32 %v286, %v288
    %v290 = vstv %s185
    %v291 = vadd.f32 %v289, %v290
    %v292 = vmax.f32 %v291, 0.0
    %v293 = vstv %s59
    %v294 = vmul.f32 %v226, %v293
    %v295 = vstv %s60
    %v296 = vmul.f32 %v234, %v295
    %v297 = vadd.f32 %v294, %v296
    %v298 = vstv %s61
    %v299 = vmul.f32 %v242, %v298
    %v300 = vadd.f32 %v297, %v299
    %v301 = vstv %s62
    %v302 = vmul.f32 %v250, %v301
    %v303 = vadd.f32 %v300, %v302
    %v304 = vstv %s186
    %v305 = vadd.f32 %v303, %v304
    %v306 = vmax.f32 %v305, 0.0
    %v307 = vstv %s63
    %v308 = vmul.f32 %v264, %v307
    %v309 = vstv %s64
    %v310 = vmul.f32 %v278, %v309
    %v311 = vadd.f32 %v308, %v310
    %v312 = vstv %s65
    %v313 = vmul.f32 %v292, %v312
    %v314 = vadd.f32 %v311, %v313
    %v315 = vstv %s66
    %v316 = vmul.f32 %v306, %v315
    %v317 = vadd.f32 %v314, %v316
    %v318 = vstv %s187
    %v319 = vadd.f32 %v317, %v318
    %v320 = vmax.f32 %v319, 0.0
    %v321 = vstv %s67
    %v322 = vmul.f32 %v264, %v321
    %v323 = vstv %s68
    %v324 = vmul.f32 %v278, %v323
    %v325 = vadd.f32 %v322, %v324
    %v326 = vstv %s69
    %v327 = vmul.f32 %v292, %v326
    %v328 = vadd.f32 %v325, %v327
    %v329 = vstv %s70
    %v330 = vmul.f32 %v306, %v329
    %v331 = vadd.f32 %v328, %v330
    %v332 = vstv %s188
    %v333 = vadd.f32 %v331, %v332
    %v334 = vmax.f32 %v333, 0.0
    %v335 = vstv %s71
    %v336 = vmul.f32 %v264, %v335
    %v337 = vstv %s72
    %v338 = vmul.f32 %v278, %v337
    %v339 = vadd.f32 %v336, %v338
    %v340 = vstv %s73
    %v341 = vmul.f32 %v292, %v340
    %v342 = vadd.f32 %v339, %v341
    %v343 = vstv %s74
    %v344 = vmul.f32 %v306, %v343
    %v345 = vadd.f32 %v342, %v344
    %v346 = vstv %s189
    %v347 = vadd.f32 %v345, %v346
    %v348 = vmax.f32 %v347, 0.0
    %v349 = vstv %s75
    %v350 = vmul.f32 %v264, %v349
    %v351 = vstv %s76
    %v352 = vmul.f32 %v278, %v351
    %v353 = vadd.f32 %v350, %v352
    %v354 = vstv %s77
    %v355 = vmul.f32 %v292, %v354
    %v356 = vadd.f32 %v353, %v355
    %v357 = vstv %s78
    %v358 = vmul.f32 %v306, %v357
    %v359 = vadd.f32 %v356, %v358
    %v360 = vstv %s190
    %v361 = vadd.f32 %v359, %v360
    %v362 = vmax.f32 %v361, 0.0
    %v363 = vstv %s79
    %v364 = vmul.f32 %v320, %v363
    %v365 = vstv %s80
    %v366 = vmul.f32 %v334, %v365
    %v367 = vadd.f32 %v364, %v366
    %v368 = vstv %s81
    %v369 = vmul.f32 %v348, %v368
    %v370 = vadd.f32 %v367, %v369
    %v371 = vstv %s82
    %v372 = vmul.f32 %v362, %v371
    %v373 = vadd.f32 %v370, %v372
    %v374 = vstv %s191
    %v375 = vadd.f32 %v373, %v374
    %v376 = vmax.f32 %v375, 0.0
    %v377 = vstv %s83
    %v378 = vmul.f32 %v320, %v377
    %v379 = vstv %s84
    %v380 = vmul.f32 %v334, %v379
    %v381 = vadd.f32 %v378, %v380
    %v382 = vstv %s85
    %v383 = vmul.f32 %v348, %v382
    %v384 = vadd.f32 %v381, %v383
    %v385 = vstv %s86
    %v386 = vmul.f32 %v362, %v385
    %v387 = vadd.f32 %v384, %v386
    %v388 = vstv %s192
    %v389 = vadd.f32 %v387, %v388
    %v390 = vmax.f32 %v389, 0.0
    %v391 = vstv %s87
    %v392 = vmul.f32 %v320, %v391
    %v393 = vstv %s88
    %v394 = vmul.f32 %v334, %v393
    %v395 = vadd.f32 %v392, %v394
    %v396 = vstv %s89
    %v397 = vmul.f32 %v348, %v396
    %v398 = vadd.f32 %v395, %v397
    %v399 = vstv %s90
    %v400 = vmul.f32 %v362, %v399
    %v401 = vadd.f32 %v398, %v400
    %v402 = vstv %s193
    %v403 = vadd.f32 %v401, %v402
    %v404 = vmax.f32 %v403, 0.0
    %v405 = vstv %s91
    %v406 = vmul.f32 %v320, %v405
    %v407 = vstv %s92
    %v408 = vmul.f32 %v334, %v407
    %v409 = vadd.f32 %v406, %v408
    %v410 = vstv %s93
    %v411 = vmul.f32 %v348, %v410
    %v412 = vadd.f32 %v409, %v411
    %v413 = vstv %s94
    %v414 = vmul.f32 %v362, %v413
    %v415 = vadd.f32 %v412, %v414
    %v416 = vstv %s194
    %v417 = vadd.f32 %v415, %v416
    %v418 = vmax.f32 %v417, 0.0
    %v419 = vstv %s95
    %v420 = vmul.f32 %v376, %v419
    %v421 = vstv %s96
    %v422 = vmul.f32 %v390, %v421
    %v423 = vadd.f32 %v420, %v422
    %v424 = vstv %s97
    %v425 = vmul.f32 %v404, %v424
    %v426 = vadd.f32 %v423, %v425
    %v427 = vstv %s98
    %v428 = vmul.f32 %v418, %v427
    %v429 = vadd.f32 %v426, %v428
    %v430 = vstv %s195
    %v431 = vadd.f32 %v429, %v430
    %v432 = vmax.f32 %v431, 0.0
    %v433 = vstv %s99
    %v434 = vmul.f32 %v376, %v433
    %v435 = vstv %s100
    %v436 = vmul.f32 %v390, %v435
    %v437 = vadd.f32 %v434, %v436
    %v438 = vstv %s101
    %v439 = vmul.f32 %v404, %v438
    %v440 = vadd.f32 %v437, %v439
    %v441 = vstv %s102
    %v442 = vmul.f32 %v418, %v441
    %v443 = vadd.f32 %v440, %v442
    %v444 = vstv %s196
    %v445 = vadd.f32 %v443, %v444
    %v446 = vmax.f32 %v445, 0.0
    %v447 = vstv %s103
    %v448 = vmul.f32 %v376, %v447
    %v449 = vstv %s104
    %v450 = vmul.f32 %v390, %v449
    %v451 = vadd.f32 %v448, %v450
    %v452 = vstv %s105
    %v453 = vmul.f32 %v404, %v452
    %v454 = vadd.f32 %v451, %v453
    %v455 = vstv %s106
    %v456 = vmul.f32 %v418, %v455
    %v457 = vadd.f32 %v454, %v456
    %v458 = vstv %s197
    %v459 = vadd.f32 %v457, %v458
    %v460 = vmax.f32 %v459, 0.0
    %v461 = vstv %s107
    %v462 = vmul.f32 %v376, %v461
    %v463 = vstv %s108
    %v464 = vmul.f32 %v390, %v463
    %v465 = vadd.f32 %v462, %v464
    %v466 = vstv %s109
    %v467 = vmul.f32 %v404, %v466
    %v468 = vadd.f32 %v465, %v467
    %v469 = vstv %s110
    %v470 = vmul.f32 %v418, %v469
    %v471 = vadd.f32 %v468, %v470
    %v472 = vstv %s198
    %v473 = vadd.f32 %v471, %v472
    %v474 = vmax.f32 %v473, 0.0
    %v475 = vstv %s111
    %v476 = vmul.f32 %v432, %v475
    %v477 = vstv %s112
    %v478 = vmul.f32 %v446, %v477
    %v479 = vadd.f32 %v476, %v478
    %v480 = vstv %s113
    %v481 = vmul.f32 %v460, %v480
    %v482 = vadd.f32 %v479, %v481
    %v483 = vstv %s114
    %v484 = vmul.f32 %v474, %v483
    %v485 = vadd.f32 %v482, %v484
    %v486 = vstv %s199
    %v487 = vadd.f32 %v485, %v486
    %v488 = vmax.f32 %v487, 0.0
    %v489 = vstv %s115
    %v490 = vmul.f32 %v432, %v489
    %v491 = vstv %s116
    %v492 = vmul.f32 %v446, %v491
    %v493 = vadd.f32 %v490, %v492
    %v494 = vstv %s117
    %v495 = vmul.f32 %v460, %v494
    %v496 = vadd.f32 %v493, %v495
    %v497 = vstv %s118
    %v498 = vmul.f32 %v474, %v497
    %v499 = vadd.f32 %v496, %v498
    %v500 = vstv %s200
    %v501 = vadd.f32 %v499, %v500
    %v502 = vmax.f32 %v501, 0.0
    %v503 = vstv %s119
    %v504 = vmul.f32 %v432, %v503
    %v505 = vstv %s120
    %v506 = vmul.f32 %v446, %v505
    %v507 = vadd.f32 %v504, %v506
    %v508 = vstv %s121
    %v509 = vmul.f32 %v460, %v508
    %v510 = vadd.f32 %v507, %v509
    %v511 = vstv %s122
    %v512 = vmul.f32 %v474, %v511
    %v513 = vadd.f32 %v510, %v512
    %v514 = vstv %s201
    %v515 = vadd.f32 %v513, %v514
    %v516 = vmax.f32 %v515, 0.0
    %v517 = vstv %s123
    %v518 = vmul.f32 %v432, %v517
    %v519 = vstv %s124
    %v520 = vmul.f32 %v446, %v519
    %v521 = vadd.f32 %v518, %v520
    %v522 = vstv %s125
    %v523 = vmul.f32 %v460, %v522
    %v524 = vadd.f32 %v521, %v523
    %v525 = vstv %s126
    %v526 = vmul.f32 %v474, %v525
    %v527 = vadd.f32 %v524, %v526
    %v528 = vstv %s202
    %v529 = vadd.f32 %v527, %v528
    %v530 = vmax.f32 %v529, 0.0
    %v531 = vstv %s127
    %v532 = vmul.f32 %v488, %v531
    %v533 = vstv %s128
    %v534 = vmul.f32 %v502, %v533
    %v535 = vadd.f32 %v532, %v534
    %v536 = vstv %s129
    %v537 = vmul.f32 %v516, %v536
    %v538 = vadd.f32 %v535, %v537
    %v539 = vstv %s130
    %v540 = vmul.f32 %v530, %v539
    %v541 = vadd.f32 %v538, %v540
    %v542 = vstv %s203
    %v543 = vadd.f32 %v541, %v542
    %v544 = vmax.f32 %v543, 0.0
    %v545 = vstv %s131
    %v546 = vmul.f32 %v488, %v545
    %v547 = vstv %s132
    %v548 = vmul.f32 %v502, %v547
    %v549 = vadd.f32 %v546, %v548
    %v550 = vstv %s133
    %v551 = vmul.f32 %v516, %v550
    %v552 = vadd.f32 %v549, %v551
    %v553 = vstv %s134
    %v554 = vmul.f32 %v530, %v553
    %v555 = vadd.f32 %v552, %v554
    %v556 = vstv %s204
    %v557 = vadd.f32 %v555, %v556
    %v558 = vmax.f32 %v557, 0.0
    %v559 = vstv %s135
    %v560 = vmul.f32 %v488, %v559
    %v561 = vstv %s136
    %v562 = vmul.f32 %v502, %v561
    %v563 = vadd.f32 %v560, %v562
    %v564 = vstv %s137
    %v565 = vmul.f32 %v516, %v564
    %v566 = vadd.f32 %v563, %v565
    %v567 = vstv %s138
    %v568 = vmul.f32 %v530, %v567
    %v569 = vadd.f32 %v566, %v568
    %v570 = vstv %s205
    %v571 = vadd.f32 %v569, %v570
    %v572 = vmax.f32 %v571, 0.0
    %v573 = vstv %s139
    %v574 = vmul.f32 %v488, %v573
    %v575 = vstv %s140
    %v576 = vmul.f32 %v502, %v575
    %v577 = vadd.f32 %v574, %v576
    %v578 = vstv %s141
    %v579 = vmul.f32 %v516, %v578
    %v580 = vadd.f32 %v577, %v579
    %v581 = vstv %s142
    %v582 = vmul.f32 %v530, %v581
    %v583 = vadd.f32 %v580, %v582
    %v584 = vstv %s206
    %v585 = vadd.f32 %v583, %v584
    %v586 = vmax.f32 %v585, 0.0
    %v587 = vstv %s143
    %v588 = vmul.f32 %v544, %v587
    %v589 = vstv %s144
    %v590 = vmul.f32 %v558, %v589
    %v591 = vadd.f32 %v588, %v590
    %v592 = vstv %s145
    %v593 = vmul.f32 %v572, %v592
    %v594 = vadd.f32 %v591, %v593
    %v595 = vstv %s146
    %v596 = vmul.f32 %v586, %v595
    %v597 = vadd.f32 %v594, %v596
    %v598 = vstv %s207
    %v599 = vadd.f32 %v597, %v598
    %v600 = vmax.f32 %v599, 0.0
    %v601 = vstv %s147
    %v602 = vmul.f32 %v544, %v601
    %v603 = vstv %s148
    %v604 = vmul.f32 %v558, %v603
    %v605 = vadd.f32 %v602, %v604
    %v606 = vstv %s149
    %v607 = vmul.f32 %v572, %v606
    %v608 = vadd.f32 %v605, %v607
    %v609 = vstv %s150
    %v610 = vmul.f32 %v586, %v609
    %v611 = vadd.f32 %v608, %v610
    %v612 = vstv %s208
    %v613 = vadd.f32 %v611, %v612
    %v614 = vmax.f32 %v613, 0.0
    %v615 = vstv %s151
    %v616 = vmul.f32 %v544, %v615
    %v617 = vstv %s152
    %v618 = vmul.f32 %v558, %v617
    %v619 = vadd.f32 %v616, %v618
    %v620 = vstv %s153
    %v621 = vmul.f32 %v572, %v620
    %v622 = vadd.f32 %v619, %v621
    %v623 = vstv %s154
    %v624 = vmul.f32 %v586, %v623
    %v625 = vadd.f32 %v622, %v624
    %v626 = vstv %s209
    %v627 = vadd.f32 %v625, %v626
    %v628 = vmax.f32 %v627, 0.0
    %v629 = vstv %s155
    %v630 = vmul.f32 %v544, %v629
    %v631 = vstv %s156
    %v632 = vmul.f32 %v558, %v631
    %v633 = vadd.f32 %v630, %v632
    %v634 = vstv %s157
    %v635 = vmul.f32 %v572, %v634
    %v636 = vadd.f32 %v633, %v635
    %v637 = vstv %s158
    %v638 = vmul.f32 %v586, %v637
    %v639 = vadd.f32 %v636, %v638
    %v640 = vstv %s210
    %v641 = vadd.f32 %v639, %v640
    %v642 = vmax.f32 %v641, 0.0
    %v643 = vstv %s159
    %v644 = vmul.f32 %v600, %v643
    %v645 = vstv %s160
    %v646 = vmul.f32 %v614, %v645
    %v647 = vadd.f32 %v644, %v646
    %v648 = vstv %s161
    %v649 = vmul.f32 %v628, %v648
    %v650 = vadd.f32 %v647, %v649
    %v651 = vstv %s162
    %v652 = vmul.f32 %v642, %v651
    %v653 = vadd.f32 %v650, %v652
    %v654 = vstv %s211
    %v655 = vadd.f32 %v653, %v654
    %v656 = vmax.f32 %v655, 0.0
    %v657 = vstv %s163
    %v658 = vmul.f32 %v600, %v657
    %v659 = vstv %s164
    %v660 = vmul.f32 %v614, %v659
    %v661 = vadd.f32 %v658, %v660
    %v662 = vstv %s165
    %v663 = vmul.f32 %v628, %v662
    %v664 = vadd.f32 %v661, %v663
    %v665 = vstv %s166
    %v666 = vmul.f32 %v642, %v665
    %v667 = vadd.f32 %v664, %v666
    %v668 = vstv %s212
    %v669 = vadd.f32 %v667, %v668
    %v670 = vmax.f32 %v669, 0.0
    %v671 = vstv %s167
    %v672 = vmul.f32 %v600, %v671
    %v673 = vstv %s168
    %v674 = vmul.f32 %v614, %v673
    %v675 = vadd.f32 %v672, %v674
    %v676 = vstv %s169
    %v677 = vmul.f32 %v628, %v676
    %v678 = vadd.f32 %v675, %v677
    %v679 = vstv %s170
    %v680 = vmul.f32 %v642, %v679
    %v681 = vadd.f32 %v678, %v680
    %v682 = vstv %s213
    %v683 = vadd.f32 %v681, %v682
    %v684 = vmax.f32 %v683, 0.0
    %v685 = vstv %s171
    %v686 = vmul.f32 %v600, %v685
    %v687 = vstv %s172
    %v688 = vmul.f32 %v614, %v687
    %v689 = vadd.f32 %v686, %v688
    %v690 = vstv %s173
    %v691 = vmul.f32 %v628, %v690
    %v692 = vadd.f32 %v689, %v691
    %v693 = vstv %s174
    %v694 = vmul.f32 %v642, %v693
    %v695 = vadd.f32 %v692, %v694
    %v696 = vstv %s214
    %v697 = vadd.f32 %v695, %v696
    %v698 = vmax.f32 %v697, 0.0
    %v699 = vstv %s175
    %v700 = vmul.f32 %v656, %v699
    %v701 = vstv %s176
    %v702 = vmul.f32 %v670, %v701
    %v703 = vadd.f32 %v700, %v702
    %v704 = vstv %s177
    %v705 = vmul.f32 %v684, %v704
    %v706 = vadd.f32 %v703, %v705
    %v707 = vstv %s178
    %v708 = vmul.f32 %v698, %v707
    %v709 = vadd.f32 %v706, %v708
    %v710 = vstv %s215
    %v711 = vadd.f32 %v709, %v710
    %v712 = vxor.u32 %v711, 2147483648
    %v713 = vmul.f32 %v712, 1.442695
    %v714 = vpow.pop %v713
    %v715 = vadd.f32 %v714, 1.0
    %v716 = vrcp.pop %v715
    %v717 = vmul.f32 %v715, %v716
    %v718 = vsub.f32 1.0, %v717
    %v719 = vmul.f32 %v716, %v718
    %v720 = vadd.f32 %v716, %v719
    %vm721 = vweird.f32 %v715
    %vm722 = vweird.f32 %v716
    %vm723 = vmor %vm721, %vm722
    %v724 = vsel %vm723, %v716, %v720
    %v725 = vand.u32 2147483647, %v715
    %vm726 = vcmp.eq.f32.partialorder %v725, 8.507059e+37
    %v727 = vand.u32 %v715, 2147483648
    %v728 = vor.u32 1.1754944e-38, %v727
    %v729 = vsel %vm726, %v728, %v724
    %v730 = vmul.f32 1.0, %v729
    %731 = vst [vmem:[%s3] sm:$0xff] %v730
    %v732 = vld [vmem:[%s2 + $0x8] sm:$0xff]
    %v733 = vld [vmem:[%s217 + $0x8] sm:$0xff]
    %v734 = vmul.f32 %v732, %v219
    %v735 = vmul.f32 %v733, %v221
    %v736 = vadd.f32 %v734, %v735
    %v737 = vadd.f32 %v736, %v224
    %v738 = vmax.f32 %v737, 0.0
    %v739 = vmul.f32 %v732, %v227
    %v740 = vmul.f32 %v733, %v229
    %v741 = vadd.f32 %v739, %v740
    %v742 = vadd.f32 %v741, %v232
    %v743 = vmax.f32 %v742, 0.0
    %v744 = vmul.f32 %v732, %v235
    %v745 = vmul.f32 %v733, %v237
    %v746 = vadd.f32 %v744, %v745
    %v747 = vadd.f32 %v746, %v240
    %v748 = vmax.f32 %v747, 0.0
    %v749 = vmul.f32 %v732, %v243
    %v750 = vmul.f32 %v733, %v245
    %v751 = vadd.f32 %v749, %v750
    %v752 = vadd.f32 %v751, %v248
    %v753 = vmax.f32 %v752, 0.0
    %v754 = vmul.f32 %v738, %v251
    %v755 = vmul.f32 %v743, %v253
    %v756 = vadd.f32 %v754, %v755
    %v757 = vmul.f32 %v748, %v256
    %v758 = vadd.f32 %v756, %v757
    %v759 = vmul.f32 %v753, %v259
    %v760 = vadd.f32 %v758, %v759
    %v761 = vadd.f32 %v760, %v262
    %v762 = vmax.f32 %v761, 0.0
    %v763 = vmul.f32 %v738, %v265
    %v764 = vmul.f32 %v743, %v267
    %v765 = vadd.f32 %v763, %v764
    %v766 = vmul.f32 %v748, %v270
    %v767 = vadd.f32 %v765, %v766
    %v768 = vmul.f32 %v753, %v273
    %v769 = vadd.f32 %v767, %v768
    %v770 = vadd.f32 %v769, %v276
    %v771 = vmax.f32 %v770, 0.0
    %v772 = vmul.f32 %v738, %v279
    %v773 = vmul.f32 %v743, %v281
    %v774 = vadd.f32 %v772, %v773
    %v775 = vmul.f32 %v748, %v284
    %v776 = vadd.f32 %v774, %v775
    %v777 = vmul.f32 %v753, %v287
    %v778 = vadd.f32 %v776, %v777
    %v779 = vadd.f32 %v778, %v290
    %v780 = vmax.f32 %v779, 0.0
    %v781 = vmul.f32 %v738, %v293
    %v782 = vmul.f32 %v743, %v295
    %v783 = vadd.f32 %v781, %v782
    %v784 = vmul.f32 %v748, %v298
    %v785 = vadd.f32 %v783, %v784
    %v786 = vmul.f32 %v753, %v301
    %v787 = vadd.f32 %v785, %v786
    %v788 = vadd.f32 %v787, %v304
    %v789 = vmax.f32 %v788, 0.0
    %v790 = vmul.f32 %v762, %v307
    %v791 = vmul.f32 %v771, %v309
    %v792 = vadd.f32 %v790, %v791
    %v793 = vmul.f32 %v780, %v312
    %v794 = vadd.f32 %v792, %v793
    %v795 = vmul.f32 %v789, %v315
    %v796 = vadd.f32 %v794, %v795
    %v797 = vadd.f32 %v796, %v318
    %v798 = vmax.f32 %v797, 0.0
    %v799 = vmul.f32 %v762, %v321
    %v800 = vmul.f32 %v771, %v323
    %v801 = vadd.f32 %v799, %v800
    %v802 = vmul.f32 %v780, %v326
    %v803 = vadd.f32 %v801, %v802
    %v804 = vmul.f32 %v789, %v329
    %v805 = vadd.f32 %v803, %v804
    %v806 = vadd.f32 %v805, %v332
    %v807 = vmax.f32 %v806, 0.0
    %v808 = vmul.f32 %v762, %v335
    %v809 = vmul.f32 %v771, %v337
    %v810 = vadd.f32 %v808, %v809
    %v811 = vmul.f32 %v780, %v340
    %v812 = vadd.f32 %v810, %v811
    %v813 = vmul.f32 %v789, %v343
    %v814 = vadd.f32 %v812, %v813
    %v815 = vadd.f32 %v814, %v346
    %v816 = vmax.f32 %v815, 0.0
    %v817 = vmul.f32 %v762, %v349
    %v818 = vmul.f32 %v771, %v351
    %v819 = vadd.f32 %v817, %v818
    %v820 = vmul.f32 %v780, %v354
    %v821 = vadd.f32 %v819, %v820
    %v822 = vmul.f32 %v789, %v357
    %v823 = vadd.f32 %v821, %v822
    %v824 = vadd.f32 %v823, %v360
    %v825 = vmax.f32 %v824, 0.0
    %v826 = vmul.f32 %v798, %v363
    %v827 = vmul.f32 %v807, %v365
    %v828 = vadd.f32 %v826, %v827
    %v829 = vmul.f32 %v816, %v368
    %v830 = vadd.f32 %v828, %v829
    %v831 = vmul.f32 %v825, %v371
    %v832 = vadd.f32 %v830, %v831
    %v833 = vadd.f32 %v832, %v374
    %v834 = vmax.f32 %v833, 0.0
    %v835 = vmul.f32 %v798, %v377
    %v836 = vmul.f32 %v807, %v379
    %v837 = vadd.f32 %v835, %v836
    %v838 = vmul.f32 %v816, %v382
    %v839 = vadd.f32 %v837, %v838
    %v840 = vmul.f32 %v825, %v385
    %v841 = vadd.f32 %v839, %v840
    %v842 = vadd.f32 %v841, %v388
    %v843 = vmax.f32 %v842, 0.0
    %v844 = vmul.f32 %v798, %v391
    %v845 = vmul.f32 %v807, %v393
    %v846 = vadd.f32 %v844, %v845
    %v847 = vmul.f32 %v816, %v396
    %v848 = vadd.f32 %v846, %v847
    %v849 = vmul.f32 %v825, %v399
    %v850 = vadd.f32 %v848, %v849
    %v851 = vadd.f32 %v850, %v402
    %v852 = vmax.f32 %v851, 0.0
    %v853 = vmul.f32 %v798, %v405
    %v854 = vmul.f32 %v807, %v407
    %v855 = vadd.f32 %v853, %v854
    %v856 = vmul.f32 %v816, %v410
    %v857 = vadd.f32 %v855, %v856
    %v858 = vmul.f32 %v825, %v413
    %v859 = vadd.f32 %v857, %v858
    %v860 = vadd.f32 %v859, %v416
    %v861 = vmax.f32 %v860, 0.0
    %v862 = vmul.f32 %v834, %v419
    %v863 = vmul.f32 %v843, %v421
    %v864 = vadd.f32 %v862, %v863
    %v865 = vmul.f32 %v852, %v424
    %v866 = vadd.f32 %v864, %v865
    %v867 = vmul.f32 %v861, %v427
    %v868 = vadd.f32 %v866, %v867
    %v869 = vadd.f32 %v868, %v430
    %v870 = vmax.f32 %v869, 0.0
    %v871 = vmul.f32 %v834, %v433
    %v872 = vmul.f32 %v843, %v435
    %v873 = vadd.f32 %v871, %v872
    %v874 = vmul.f32 %v852, %v438
    %v875 = vadd.f32 %v873, %v874
    %v876 = vmul.f32 %v861, %v441
    %v877 = vadd.f32 %v875, %v876
    %v878 = vadd.f32 %v877, %v444
    %v879 = vmax.f32 %v878, 0.0
    %v880 = vmul.f32 %v834, %v447
    %v881 = vmul.f32 %v843, %v449
    %v882 = vadd.f32 %v880, %v881
    %v883 = vmul.f32 %v852, %v452
    %v884 = vadd.f32 %v882, %v883
    %v885 = vmul.f32 %v861, %v455
    %v886 = vadd.f32 %v884, %v885
    %v887 = vadd.f32 %v886, %v458
    %v888 = vmax.f32 %v887, 0.0
    %v889 = vmul.f32 %v834, %v461
    %v890 = vmul.f32 %v843, %v463
    %v891 = vadd.f32 %v889, %v890
    %v892 = vmul.f32 %v852, %v466
    %v893 = vadd.f32 %v891, %v892
    %v894 = vmul.f32 %v861, %v469
    %v895 = vadd.f32 %v893, %v894
    %v896 = vadd.f32 %v895, %v472
    %v897 = vmax.f32 %v896, 0.0
    %v898 = vmul.f32 %v870, %v475
    %v899 = vmul.f32 %v879, %v477
    %v900 = vadd.f32 %v898, %v899
    %v901 = vmul.f32 %v888, %v480
    %v902 = vadd.f32 %v900, %v901
    %v903 = vmul.f32 %v897, %v483
    %v904 = vadd.f32 %v902, %v903
    %v905 = vadd.f32 %v904, %v486
    %v906 = vmax.f32 %v905, 0.0
    %v907 = vmul.f32 %v870, %v489
    %v908 = vmul.f32 %v879, %v491
    %v909 = vadd.f32 %v907, %v908
    %v910 = vmul.f32 %v888, %v494
    %v911 = vadd.f32 %v909, %v910
    %v912 = vmul.f32 %v897, %v497
    %v913 = vadd.f32 %v911, %v912
    %v914 = vadd.f32 %v913, %v500
    %v915 = vmax.f32 %v914, 0.0
    %v916 = vmul.f32 %v870, %v503
    %v917 = vmul.f32 %v879, %v505
    %v918 = vadd.f32 %v916, %v917
    %v919 = vmul.f32 %v888, %v508
    %v920 = vadd.f32 %v918, %v919
    %v921 = vmul.f32 %v897, %v511
    %v922 = vadd.f32 %v920, %v921
    %v923 = vadd.f32 %v922, %v514
    %v924 = vmax.f32 %v923, 0.0
    %v925 = vmul.f32 %v870, %v517
    %v926 = vmul.f32 %v879, %v519
    %v927 = vadd.f32 %v925, %v926
    %v928 = vmul.f32 %v888, %v522
    %v929 = vadd.f32 %v927, %v928
    %v930 = vmul.f32 %v897, %v525
    %v931 = vadd.f32 %v929, %v930
    %v932 = vadd.f32 %v931, %v528
    %v933 = vmax.f32 %v932, 0.0
    %v934 = vmul.f32 %v906, %v531
    %v935 = vmul.f32 %v915, %v533
    %v936 = vadd.f32 %v934, %v935
    %v937 = vmul.f32 %v924, %v536
    %v938 = vadd.f32 %v936, %v937
    %v939 = vmul.f32 %v933, %v539
    %v940 = vadd.f32 %v938, %v939
    %v941 = vadd.f32 %v940, %v542
    %v942 = vmax.f32 %v941, 0.0
    %v943 = vmul.f32 %v906, %v545
    %v944 = vmul.f32 %v915, %v547
    %v945 = vadd.f32 %v943, %v944
    %v946 = vmul.f32 %v924, %v550
    %v947 = vadd.f32 %v945, %v946
    %v948 = vmul.f32 %v933, %v553
    %v949 = vadd.f32 %v947, %v948
    %v950 = vadd.f32 %v949, %v556
    %v951 = vmax.f32 %v950, 0.0
    %v952 = vmul.f32 %v906, %v559
    %v953 = vmul.f32 %v915, %v561
    %v954 = vadd.f32 %v952, %v953
    %v955 = vmul.f32 %v924, %v564
    %v956 = vadd.f32 %v954, %v955
    %v957 = vmul.f32 %v933, %v567
    %v958 = vadd.f32 %v956, %v957
    %v959 = vadd.f32 %v958, %v570
    %v960 = vmax.f32 %v959, 0.0
    %v961 = vmul.f32 %v906, %v573
    %v962 = vmul.f32 %v915, %v575
    %v963 = vadd.f32 %v961, %v962
    %v964 = vmul.f32 %v924, %v578
    %v965 = vadd.f32 %v963, %v964
    %v966 = vmul.f32 %v933, %v581
    %v967 = vadd.f32 %v965, %v966
    %v968 = vadd.f32 %v967, %v584
    %v969 = vmax.f32 %v968, 0.0
    %v970 = vmul.f32 %v942, %v587
    %v971 = vmul.f32 %v951, %v589
    %v972 = vadd.f32 %v970, %v971
    %v973 = vmul.f32 %v960, %v592
    %v974 = vadd.f32 %v972, %v973
    %v975 = vmul.f32 %v969, %v595
    %v976 = vadd.f32 %v974, %v975
    %v977 = vadd.f32 %v976, %v598
    %v978 = vmax.f32 %v977, 0.0
    %v979 = vmul.f32 %v942, %v601
    %v980 = vmul.f32 %v951, %v603
    %v981 = vadd.f32 %v979, %v980
    %v982 = vmul.f32 %v960, %v606
    %v983 = vadd.f32 %v981, %v982
    %v984 = vmul.f32 %v969, %v609
    %v985 = vadd.f32 %v983, %v984
    %v986 = vadd.f32 %v985, %v612
    %v987 = vmax.f32 %v986, 0.0
    %v988 = vmul.f32 %v942, %v615
    %v989 = vmul.f32 %v951, %v617
    %v990 = vadd.f32 %v988, %v989
    %v991 = vmul.f32 %v960, %v620
    %v992 = vadd.f32 %v990, %v991
    %v993 = vmul.f32 %v969, %v623
    %v994 = vadd.f32 %v992, %v993
    %v995 = vadd.f32 %v994, %v626
    %v996 = vmax.f32 %v995, 0.0
    %v997 = vmul.f32 %v942, %v629
    %v998 = vmul.f32 %v951, %v631
    %v999 = vadd.f32 %v997, %v998
    %v1000 = vmul.f32 %v960, %v634
    %v1001 = vadd.f32 %v999, %v1000
    %v1002 = vmul.f32 %v969, %v637
    %v1003 = vadd.f32 %v1001, %v1002
    %v1004 = vadd.f32 %v1003, %v640
    %v1005 = vmax.f32 %v1004, 0.0
    %v1006 = vmul.f32 %v978, %v643
    %v1007 = vmul.f32 %v987, %v645
    %v1008 = vadd.f32 %v1006, %v1007
    %v1009 = vmul.f32 %v996, %v648
    %v1010 = vadd.f32 %v1008, %v1009
    %v1011 = vmul.f32 %v1005, %v651
    %v1012 = vadd.f32 %v1010, %v1011
    %v1013 = vadd.f32 %v1012, %v654
    %v1014 = vmax.f32 %v1013, 0.0
    %v1015 = vmul.f32 %v978, %v657
    %v1016 = vmul.f32 %v987, %v659
    %v1017 = vadd.f32 %v1015, %v1016
    %v1018 = vmul.f32 %v996, %v662
    %v1019 = vadd.f32 %v1017, %v1018
    %v1020 = vmul.f32 %v1005, %v665
    %v1021 = vadd.f32 %v1019, %v1020
    %v1022 = vadd.f32 %v1021, %v668
    %v1023 = vmax.f32 %v1022, 0.0
    %v1024 = vmul.f32 %v978, %v671
    %v1025 = vmul.f32 %v987, %v673
    %v1026 = vadd.f32 %v1024, %v1025
    %v1027 = vmul.f32 %v996, %v676
    %v1028 = vadd.f32 %v1026, %v1027
    %v1029 = vmul.f32 %v1005, %v679
    %v1030 = vadd.f32 %v1028, %v1029
    %v1031 = vadd.f32 %v1030, %v682
    %v1032 = vmax.f32 %v1031, 0.0
    %v1033 = vmul.f32 %v978, %v685
    %v1034 = vmul.f32 %v987, %v687
    %v1035 = vadd.f32 %v1033, %v1034
    %v1036 = vmul.f32 %v996, %v690
    %v1037 = vadd.f32 %v1035, %v1036
    %v1038 = vmul.f32 %v1005, %v693
    %v1039 = vadd.f32 %v1037, %v1038
    %v1040 = vadd.f32 %v1039, %v696
    %v1041 = vmax.f32 %v1040, 0.0
    %v1042 = vmul.f32 %v1014, %v699
    %v1043 = vmul.f32 %v1023, %v701
    %v1044 = vadd.f32 %v1042, %v1043
    %v1045 = vmul.f32 %v1032, %v704
    %v1046 = vadd.f32 %v1044, %v1045
    %v1047 = vmul.f32 %v1041, %v707
    %v1048 = vadd.f32 %v1046, %v1047
    %v1049 = vadd.f32 %v1048, %v710
    %v1050 = vxor.u32 %v1049, 2147483648
    %v1051 = vmul.f32 %v1050, 1.442695
    %v1052 = vpow.pop %v1051
    %v1053 = vadd.f32 %v1052, 1.0
    %v1054 = vrcp.pop %v1053
    %v1055 = vmul.f32 %v1053, %v1054
    %v1056 = vsub.f32 1.0, %v1055
    %v1057 = vmul.f32 %v1054, %v1056
    %v1058 = vadd.f32 %v1054, %v1057
    %vm1059 = vweird.f32 %v1053
    %vm1060 = vweird.f32 %v1054
    %vm1061 = vmor %vm1059, %vm1060
    %v1062 = vsel %vm1061, %v1054, %v1058
    %v1063 = vand.u32 2147483647, %v1053
    %vm1064 = vcmp.eq.f32.partialorder %v1063, 8.507059e+37
    %v1065 = vand.u32 %v1053, 2147483648
    %v1066 = vor.u32 1.1754944e-38, %v1065
    %v1067 = vsel %vm1064, %v1066, %v1062
    %v1068 = vmul.f32 1.0, %v1067
    %1069 = vst [vmem:[%s3 + $0x8] sm:$0xff] %v1068
    %v1070 = vld [vmem:[%s2 + $0x10] sm:$0xff]
    %v1071 = vld [vmem:[%s217 + $0x10] sm:$0xff]
    %v1072 = vmul.f32 %v1070, %v219
    %v1073 = vmul.f32 %v1071, %v221
    %v1074 = vadd.f32 %v1072, %v1073
    %v1075 = vadd.f32 %v1074, %v224
    %v1076 = vmax.f32 %v1075, 0.0
    %v1077 = vmul.f32 %v1070, %v227
    %v1078 = vmul.f32 %v1071, %v229
    %v1079 = vadd.f32 %v1077, %v1078
    %v1080 = vadd.f32 %v1079, %v232
    %v1081 = vmax.f32 %v1080, 0.0
    %v1082 = vmul.f32 %v1070, %v235
    %v1083 = vmul.f32 %v1071, %v237
    %v1084 = vadd.f32 %v1082, %v1083
    %v1085 = vadd.f32 %v1084, %v240
    %v1086 = vmax.f32 %v1085, 0.0
    %v1087 = vmul.f32 %v1070, %v243
    %v1088 = vmul.f32 %v1071, %v245
    %v1089 = vadd.f32 %v1087, %v1088
    %v1090 = vadd.f32 %v1089, %v248
    %v1091 = vmax.f32 %v1090, 0.0
    %v1092 = vmul.f32 %v1076, %v251
    %v1093 = vmul.f32 %v1081, %v253
    %v1094 = vadd.f32 %v1092, %v1093
    %v1095 = vmul.f32 %v1086, %v256
    %v1096 = vadd.f32 %v1094, %v1095
    %v1097 = vmul.f32 %v1091, %v259
    %v1098 = vadd.f32 %v1096, %v1097
    %v1099 = vadd.f32 %v1098, %v262
    %v1100 = vmax.f32 %v1099, 0.0
    %v1101 = vmul.f32 %v1076, %v265
    %v1102 = vmul.f32 %v1081, %v267
    %v1103 = vadd.f32 %v1101, %v1102
    %v1104 = vmul.f32 %v1086, %v270
    %v1105 = vadd.f32 %v1103, %v1104
    %v1106 = vmul.f32 %v1091, %v273
    %v1107 = vadd.f32 %v1105, %v1106
    %v1108 = vadd.f32 %v1107, %v276
    %v1109 = vmax.f32 %v1108, 0.0
    %v1110 = vmul.f32 %v1076, %v279
    %v1111 = vmul.f32 %v1081, %v281
    %v1112 = vadd.f32 %v1110, %v1111
    %v1113 = vmul.f32 %v1086, %v284
    %v1114 = vadd.f32 %v1112, %v1113
    %v1115 = vmul.f32 %v1091, %v287
    %v1116 = vadd.f32 %v1114, %v1115
    %v1117 = vadd.f32 %v1116, %v290
    %v1118 = vmax.f32 %v1117, 0.0
    %v1119 = vmul.f32 %v1076, %v293
    %v1120 = vmul.f32 %v1081, %v295
    %v1121 = vadd.f32 %v1119, %v1120
    %v1122 = vmul.f32 %v1086, %v298
    %v1123 = vadd.f32 %v1121, %v1122
    %v1124 = vmul.f32 %v1091, %v301
    %v1125 = vadd.f32 %v1123, %v1124
    %v1126 = vadd.f32 %v1125, %v304
    %v1127 = vmax.f32 %v1126, 0.0
    %v1128 = vmul.f32 %v1100, %v307
    %v1129 = vmul.f32 %v1109, %v309
    %v1130 = vadd.f32 %v1128, %v1129
    %v1131 = vmul.f32 %v1118, %v312
    %v1132 = vadd.f32 %v1130, %v1131
    %v1133 = vmul.f32 %v1127, %v315
    %v1134 = vadd.f32 %v1132, %v1133
    %v1135 = vadd.f32 %v1134, %v318
    %v1136 = vmax.f32 %v1135, 0.0
    %v1137 = vmul.f32 %v1100, %v321
    %v1138 = vmul.f32 %v1109, %v323
    %v1139 = vadd.f32 %v1137, %v1138
    %v1140 = vmul.f32 %v1118, %v326
    %v1141 = vadd.f32 %v1139, %v1140
    %v1142 = vmul.f32 %v1127, %v329
    %v1143 = vadd.f32 %v1141, %v1142
    %v1144 = vadd.f32 %v1143, %v332
    %v1145 = vmax.f32 %v1144, 0.0
    %v1146 = vmul.f32 %v1100, %v335
    %v1147 = vmul.f32 %v1109, %v337
    %v1148 = vadd.f32 %v1146, %v1147
    %v1149 = vmul.f32 %v1118, %v340
    %v1150 = vadd.f32 %v1148, %v1149
    %v1151 = vmul.f32 %v1127, %v343
    %v1152 = vadd.f32 %v1150, %v1151
    %v1153 = vadd.f32 %v1152, %v346
    %v1154 = vmax.f32 %v1153, 0.0
    %v1155 = vmul.f32 %v1100, %v349
    %v1156 = vmul.f32 %v1109, %v351
    %v1157 = vadd.f32 %v1155, %v1156
    %v1158 = vmul.f32 %v1118, %v354
    %v1159 = vadd.f32 %v1157, %v1158
    %v1160 = vmul.f32 %v1127, %v357
    %v1161 = vadd.f32 %v1159, %v1160
    %v1162 = vadd.f32 %v1161, %v360
    %v1163 = vmax.f32 %v1162, 0.0
    %v1164 = vmul.f32 %v1136, %v363
    %v1165 = vmul.f32 %v1145, %v365
    %v1166 = vadd.f32 %v1164, %v1165
    %v1167 = vmul.f32 %v1154, %v368
    %v1168 = vadd.f32 %v1166, %v1167
    %v1169 = vmul.f32 %v1163, %v371
    %v1170 = vadd.f32 %v1168, %v1169
    %v1171 = vadd.f32 %v1170, %v374
    %v1172 = vmax.f32 %v1171, 0.0
    %v1173 = vmul.f32 %v1136, %v377
    %v1174 = vmul.f32 %v1145, %v379
    %v1175 = vadd.f32 %v1173, %v1174
    %v1176 = vmul.f32 %v1154, %v382
    %v1177 = vadd.f32 %v1175, %v1176
    %v1178 = vmul.f32 %v1163, %v385
    %v1179 = vadd.f32 %v1177, %v1178
    %v1180 = vadd.f32 %v1179, %v388
    %v1181 = vmax.f32 %v1180, 0.0
    %v1182 = vmul.f32 %v1136, %v391
    %v1183 = vmul.f32 %v1145, %v393
    %v1184 = vadd.f32 %v1182, %v1183
    %v1185 = vmul.f32 %v1154, %v396
    %v1186 = vadd.f32 %v1184, %v1185
    %v1187 = vmul.f32 %v1163, %v399
    %v1188 = vadd.f32 %v1186, %v1187
    %v1189 = vadd.f32 %v1188, %v402
    %v1190 = vmax.f32 %v1189, 0.0
    %v1191 = vmul.f32 %v1136, %v405
    %v1192 = vmul.f32 %v1145, %v407
    %v1193 = vadd.f32 %v1191, %v1192
    %v1194 = vmul.f32 %v1154, %v410
    %v1195 = vadd.f32 %v1193, %v1194
    %v1196 = vmul.f32 %v1163, %v413
    %v1197 = vadd.f32 %v1195, %v1196
    %v1198 = vadd.f32 %v1197, %v416
    %v1199 = vmax.f32 %v1198, 0.0
    %v1200 = vmul.f32 %v1172, %v419
    %v1201 = vmul.f32 %v1181, %v421
    %v1202 = vadd.f32 %v1200, %v1201
    %v1203 = vmul.f32 %v1190, %v424
    %v1204 = vadd.f32 %v1202, %v1203
    %v1205 = vmul.f32 %v1199, %v427
    %v1206 = vadd.f32 %v1204, %v1205
    %v1207 = vadd.f32 %v1206, %v430
    %v1208 = vmax.f32 %v1207, 0.0
    %v1209 = vmul.f32 %v1172, %v433
    %v1210 = vmul.f32 %v1181, %v435
    %v1211 = vadd.f32 %v1209, %v1210
    %v1212 = vmul.f32 %v1190, %v438
    %v1213 = vadd.f32 %v1211, %v1212
    %v1214 = vmul.f32 %v1199, %v441
    %v1215 = vadd.f32 %v1213, %v1214
    %v1216 = vadd.f32 %v1215, %v444
    %v1217 = vmax.f32 %v1216, 0.0
    %v1218 = vmul.f32 %v1172, %v447
    %v1219 = vmul.f32 %v1181, %v449
    %v1220 = vadd.f32 %v1218, %v1219
    %v1221 = vmul.f32 %v1190, %v452
    %v1222 = vadd.f32 %v1220, %v1221
    %v1223 = vmul.f32 %v1199, %v455
    %v1224 = vadd.f32 %v1222, %v1223
    %v1225 = vadd.f32 %v1224, %v458
    %v1226 = vmax.f32 %v1225, 0.0
    %v1227 = vmul.f32 %v1172, %v461
    %v1228 = vmul.f32 %v1181, %v463
    %v1229 = vadd.f32 %v1227, %v1228
    %v1230 = vmul.f32 %v1190, %v466
    %v1231 = vadd.f32 %v1229, %v1230
    %v1232 = vmul.f32 %v1199, %v469
    %v1233 = vadd.f32 %v1231, %v1232
    %v1234 = vadd.f32 %v1233, %v472
    %v1235 = vmax.f32 %v1234, 0.0
    %v1236 = vmul.f32 %v1208, %v475
    %v1237 = vmul.f32 %v1217, %v477
    %v1238 = vadd.f32 %v1236, %v1237
    %v1239 = vmul.f32 %v1226, %v480
    %v1240 = vadd.f32 %v1238, %v1239
    %v1241 = vmul.f32 %v1235, %v483
    %v1242 = vadd.f32 %v1240, %v1241
    %v1243 = vadd.f32 %v1242, %v486
    %v1244 = vmax.f32 %v1243, 0.0
    %v1245 = vmul.f32 %v1208, %v489
    %v1246 = vmul.f32 %v1217, %v491
    %v1247 = vadd.f32 %v1245, %v1246
    %v1248 = vmul.f32 %v1226, %v494
    %v1249 = vadd.f32 %v1247, %v1248
    %v1250 = vmul.f32 %v1235, %v497
    %v1251 = vadd.f32 %v1249, %v1250
    %v1252 = vadd.f32 %v1251, %v500
    %v1253 = vmax.f32 %v1252, 0.0
    %v1254 = vmul.f32 %v1208, %v503
    %v1255 = vmul.f32 %v1217, %v505
    %v1256 = vadd.f32 %v1254, %v1255
    %v1257 = vmul.f32 %v1226, %v508
    %v1258 = vadd.f32 %v1256, %v1257
    %v1259 = vmul.f32 %v1235, %v511
    %v1260 = vadd.f32 %v1258, %v1259
    %v1261 = vadd.f32 %v1260, %v514
    %v1262 = vmax.f32 %v1261, 0.0
    %v1263 = vmul.f32 %v1208, %v517
    %v1264 = vmul.f32 %v1217, %v519
    %v1265 = vadd.f32 %v1263, %v1264
    %v1266 = vmul.f32 %v1226, %v522
    %v1267 = vadd.f32 %v1265, %v1266
    %v1268 = vmul.f32 %v1235, %v525
    %v1269 = vadd.f32 %v1267, %v1268
    %v1270 = vadd.f32 %v1269, %v528
    %v1271 = vmax.f32 %v1270, 0.0
    %v1272 = vmul.f32 %v1244, %v531
    %v1273 = vmul.f32 %v1253, %v533
    %v1274 = vadd.f32 %v1272, %v1273
    %v1275 = vmul.f32 %v1262, %v536
    %v1276 = vadd.f32 %v1274, %v1275
    %v1277 = vmul.f32 %v1271, %v539
    %v1278 = vadd.f32 %v1276, %v1277
    %v1279 = vadd.f32 %v1278, %v542
    %v1280 = vmax.f32 %v1279, 0.0
    %v1281 = vmul.f32 %v1244, %v545
    %v1282 = vmul.f32 %v1253, %v547
    %v1283 = vadd.f32 %v1281, %v1282
    %v1284 = vmul.f32 %v1262, %v550
    %v1285 = vadd.f32 %v1283, %v1284
    %v1286 = vmul.f32 %v1271, %v553
    %v1287 = vadd.f32 %v1285, %v1286
    %v1288 = vadd.f32 %v1287, %v556
    %v1289 = vmax.f32 %v1288, 0.0
    %v1290 = vmul.f32 %v1244, %v559
    %v1291 = vmul.f32 %v1253, %v561
    %v1292 = vadd.f32 %v1290, %v1291
    %v1293 = vmul.f32 %v1262, %v564
    %v1294 = vadd.f32 %v1292, %v1293
    %v1295 = vmul.f32 %v1271, %v567
    %v1296 = vadd.f32 %v1294, %v1295
    %v1297 = vadd.f32 %v1296, %v570
    %v1298 = vmax.f32 %v1297, 0.0
    %v1299 = vmul.f32 %v1244, %v573
    %v1300 = vmul.f32 %v1253, %v575
    %v1301 = vadd.f32 %v1299, %v1300
    %v1302 = vmul.f32 %v1262, %v578
    %v1303 = vadd.f32 %v1301, %v1302
    %v1304 = vmul.f32 %v1271, %v581
    %v1305 = vadd.f32 %v1303, %v1304
    %v1306 = vadd.f32 %v1305, %v584
    %v1307 = vmax.f32 %v1306, 0.0
    %v1308 = vmul.f32 %v1280, %v587
    %v1309 = vmul.f32 %v1289, %v589
    %v1310 = vadd.f32 %v1308, %v1309
    %v1311 = vmul.f32 %v1298, %v592
    %v1312 = vadd.f32 %v1310, %v1311
    %v1313 = vmul.f32 %v1307, %v595
    %v1314 = vadd.f32 %v1312, %v1313
    %v1315 = vadd.f32 %v1314, %v598
    %v1316 = vmax.f32 %v1315, 0.0
    %v1317 = vmul.f32 %v1280, %v601
    %v1318 = vmul.f32 %v1289, %v603
    %v1319 = vadd.f32 %v1317, %v1318
    %v1320 = vmul.f32 %v1298, %v606
    %v1321 = vadd.f32 %v1319, %v1320
    %v1322 = vmul.f32 %v1307, %v609
    %v1323 = vadd.f32 %v1321, %v1322
    %v1324 = vadd.f32 %v1323, %v612
    %v1325 = vmax.f32 %v1324, 0.0
    %v1326 = vmul.f32 %v1280, %v615
    %v1327 = vmul.f32 %v1289, %v617
    %v1328 = vadd.f32 %v1326, %v1327
    %v1329 = vmul.f32 %v1298, %v620
    %v1330 = vadd.f32 %v1328, %v1329
    %v1331 = vmul.f32 %v1307, %v623
    %v1332 = vadd.f32 %v1330, %v1331
    %v1333 = vadd.f32 %v1332, %v626
    %v1334 = vmax.f32 %v1333, 0.0
    %v1335 = vmul.f32 %v1280, %v629
    %v1336 = vmul.f32 %v1289, %v631
    %v1337 = vadd.f32 %v1335, %v1336
    %v1338 = vmul.f32 %v1298, %v634
    %v1339 = vadd.f32 %v1337, %v1338
    %v1340 = vmul.f32 %v1307, %v637
    %v1341 = vadd.f32 %v1339, %v1340
    %v1342 = vadd.f32 %v1341, %v640
    %v1343 = vmax.f32 %v1342, 0.0
    %v1344 = vmul.f32 %v1316, %v643
    %v1345 = vmul.f32 %v1325, %v645
    %v1346 = vadd.f32 %v1344, %v1345
    %v1347 = vmul.f32 %v1334, %v648
    %v1348 = vadd.f32 %v1346, %v1347
    %v1349 = vmul.f32 %v1343, %v651
    %v1350 = vadd.f32 %v1348, %v1349
    %v1351 = vadd.f32 %v1350, %v654
    %v1352 = vmax.f32 %v1351, 0.0
    %v1353 = vmul.f32 %v1316, %v657
    %v1354 = vmul.f32 %v1325, %v659
    %v1355 = vadd.f32 %v1353, %v1354
    %v1356 = vmul.f32 %v1334, %v662
    %v1357 = vadd.f32 %v1355, %v1356
    %v1358 = vmul.f32 %v1343, %v665
    %v1359 = vadd.f32 %v1357, %v1358
    %v1360 = vadd.f32 %v1359, %v668
    %v1361 = vmax.f32 %v1360, 0.0
    %v1362 = vmul.f32 %v1316, %v671
    %v1363 = vmul.f32 %v1325, %v673
    %v1364 = vadd.f32 %v1362, %v1363
    %v1365 = vmul.f32 %v1334, %v676
    %v1366 = vadd.f32 %v1364, %v1365
    %v1367 = vmul.f32 %v1343, %v679
    %v1368 = vadd.f32 %v1366, %v1367
    %v1369 = vadd.f32 %v1368, %v682
    %v1370 = vmax.f32 %v1369, 0.0
    %v1371 = vmul.f32 %v1316, %v685
    %v1372 = vmul.f32 %v1325, %v687
    %v1373 = vadd.f32 %v1371, %v1372
    %v1374 = vmul.f32 %v1334, %v690
    %v1375 = vadd.f32 %v1373, %v1374
    %v1376 = vmul.f32 %v1343, %v693
    %v1377 = vadd.f32 %v1375, %v1376
    %v1378 = vadd.f32 %v1377, %v696
    %v1379 = vmax.f32 %v1378, 0.0
    %v1380 = vmul.f32 %v1352, %v699
    %v1381 = vmul.f32 %v1361, %v701
    %v1382 = vadd.f32 %v1380, %v1381
    %v1383 = vmul.f32 %v1370, %v704
    %v1384 = vadd.f32 %v1382, %v1383
    %v1385 = vmul.f32 %v1379, %v707
    %v1386 = vadd.f32 %v1384, %v1385
    %v1387 = vadd.f32 %v1386, %v710
    %v1388 = vxor.u32 %v1387, 2147483648
    %v1389 = vmul.f32 %v1388, 1.442695
    %v1390 = vpow.pop %v1389
    %v1391 = vadd.f32 %v1390, 1.0
    %v1392 = vrcp.pop %v1391
    %v1393 = vmul.f32 %v1391, %v1392
    %v1394 = vsub.f32 1.0, %v1393
    %v1395 = vmul.f32 %v1392, %v1394
    %v1396 = vadd.f32 %v1392, %v1395
    %vm1397 = vweird.f32 %v1391
    %vm1398 = vweird.f32 %v1392
    %vm1399 = vmor %vm1397, %vm1398
    %v1400 = vsel %vm1399, %v1392, %v1396
    %v1401 = vand.u32 2147483647, %v1391
    %vm1402 = vcmp.eq.f32.partialorder %v1401, 8.507059e+37
    %v1403 = vand.u32 %v1391, 2147483648
    %v1404 = vor.u32 1.1754944e-38, %v1403
    %v1405 = vsel %vm1402, %v1404, %v1400
    %v1406 = vmul.f32 1.0, %v1405
    %1407 = vst [vmem:[%s3 + $0x10] sm:$0xff] %v1406
    %v1408 = vld [vmem:[%s2 + $0x18] sm:$0xff]
    %v1409 = vld [vmem:[%s217 + $0x18] sm:$0xff]
    %v1410 = vmul.f32 %v1408, %v219
    %v1411 = vmul.f32 %v1409, %v221
    %v1412 = vadd.f32 %v1410, %v1411
    %v1413 = vadd.f32 %v1412, %v224
    %v1414 = vmax.f32 %v1413, 0.0
    %v1415 = vmul.f32 %v1408, %v227
    %v1416 = vmul.f32 %v1409, %v229
    %v1417 = vadd.f32 %v1415, %v1416
    %v1418 = vadd.f32 %v1417, %v232
    %v1419 = vmax.f32 %v1418, 0.0
    %v1420 = vmul.f32 %v1408, %v235
    %v1421 = vmul.f32 %v1409, %v237
    %v1422 = vadd.f32 %v1420, %v1421
    %v1423 = vadd.f32 %v1422, %v240
    %v1424 = vmax.f32 %v1423, 0.0
    %v1425 = vmul.f32 %v1408, %v243
    %v1426 = vmul.f32 %v1409, %v245
    %v1427 = vadd.f32 %v1425, %v1426
    %v1428 = vadd.f32 %v1427, %v248
    %v1429 = vmax.f32 %v1428, 0.0
    %v1430 = vmul.f32 %v1414, %v251
    %v1431 = vmul.f32 %v1419, %v253
    %v1432 = vadd.f32 %v1430, %v1431
    %v1433 = vmul.f32 %v1424, %v256
    %v1434 = vadd.f32 %v1432, %v1433
    %v1435 = vmul.f32 %v1429, %v259
    %v1436 = vadd.f32 %v1434, %v1435
    %v1437 = vadd.f32 %v1436, %v262
    %v1438 = vmax.f32 %v1437, 0.0
    %v1439 = vmul.f32 %v1414, %v265
    %v1440 = vmul.f32 %v1419, %v267
    %v1441 = vadd.f32 %v1439, %v1440
    %v1442 = vmul.f32 %v1424, %v270
    %v1443 = vadd.f32 %v1441, %v1442
    %v1444 = vmul.f32 %v1429, %v273
    %v1445 = vadd.f32 %v1443, %v1444
    %v1446 = vadd.f32 %v1445, %v276
    %v1447 = vmax.f32 %v1446, 0.0
    %v1448 = vmul.f32 %v1414, %v279
    %v1449 = vmul.f32 %v1419, %v281
    %v1450 = vadd.f32 %v1448, %v1449
    %v1451 = vmul.f32 %v1424, %v284
    %v1452 = vadd.f32 %v1450, %v1451
    %v1453 = vmul.f32 %v1429, %v287
    %v1454 = vadd.f32 %v1452, %v1453
    %v1455 = vadd.f32 %v1454, %v290
    %v1456 = vmax.f32 %v1455, 0.0
    %v1457 = vmul.f32 %v1414, %v293
    %v1458 = vmul.f32 %v1419, %v295
    %v1459 = vadd.f32 %v1457, %v1458
    %v1460 = vmul.f32 %v1424, %v298
    %v1461 = vadd.f32 %v1459, %v1460
    %v1462 = vmul.f32 %v1429, %v301
    %v1463 = vadd.f32 %v1461, %v1462
    %v1464 = vadd.f32 %v1463, %v304
    %v1465 = vmax.f32 %v1464, 0.0
    %v1466 = vmul.f32 %v1438, %v307
    %v1467 = vmul.f32 %v1447, %v309
    %v1468 = vadd.f32 %v1466, %v1467
    %v1469 = vmul.f32 %v1456, %v312
    %v1470 = vadd.f32 %v1468, %v1469
    %v1471 = vmul.f32 %v1465, %v315
    %v1472 = vadd.f32 %v1470, %v1471
    %v1473 = vadd.f32 %v1472, %v318
    %v1474 = vmax.f32 %v1473, 0.0
    %v1475 = vmul.f32 %v1438, %v321
    %v1476 = vmul.f32 %v1447, %v323
    %v1477 = vadd.f32 %v1475, %v1476
    %v1478 = vmul.f32 %v1456, %v326
    %v1479 = vadd.f32 %v1477, %v1478
    %v1480 = vmul.f32 %v1465, %v329
    %v1481 = vadd.f32 %v1479, %v1480
    %v1482 = vadd.f32 %v1481, %v332
    %v1483 = vmax.f32 %v1482, 0.0
    %v1484 = vmul.f32 %v1438, %v335
    %v1485 = vmul.f32 %v1447, %v337
    %v1486 = vadd.f32 %v1484, %v1485
    %v1487 = vmul.f32 %v1456, %v340
    %v1488 = vadd.f32 %v1486, %v1487
    %v1489 = vmul.f32 %v1465, %v343
    %v1490 = vadd.f32 %v1488, %v1489
    %v1491 = vadd.f32 %v1490, %v346
    %v1492 = vmax.f32 %v1491, 0.0
    %v1493 = vmul.f32 %v1438, %v349
    %v1494 = vmul.f32 %v1447, %v351
    %v1495 = vadd.f32 %v1493, %v1494
    %v1496 = vmul.f32 %v1456, %v354
    %v1497 = vadd.f32 %v1495, %v1496
    %v1498 = vmul.f32 %v1465, %v357
    %v1499 = vadd.f32 %v1497, %v1498
    %v1500 = vadd.f32 %v1499, %v360
    %v1501 = vmax.f32 %v1500, 0.0
    %v1502 = vmul.f32 %v1474, %v363
    %v1503 = vmul.f32 %v1483, %v365
    %v1504 = vadd.f32 %v1502, %v1503
    %v1505 = vmul.f32 %v1492, %v368
    %v1506 = vadd.f32 %v1504, %v1505
    %v1507 = vmul.f32 %v1501, %v371
    %v1508 = vadd.f32 %v1506, %v1507
    %v1509 = vadd.f32 %v1508, %v374
    %v1510 = vmax.f32 %v1509, 0.0
    %v1511 = vmul.f32 %v1474, %v377
    %v1512 = vmul.f32 %v1483, %v379
    %v1513 = vadd.f32 %v1511, %v1512
    %v1514 = vmul.f32 %v1492, %v382
    %v1515 = vadd.f32 %v1513, %v1514
    %v1516 = vmul.f32 %v1501, %v385
    %v1517 = vadd.f32 %v1515, %v1516
    %v1518 = vadd.f32 %v1517, %v388
    %v1519 = vmax.f32 %v1518, 0.0
    %v1520 = vmul.f32 %v1474, %v391
    %v1521 = vmul.f32 %v1483, %v393
    %v1522 = vadd.f32 %v1520, %v1521
    %v1523 = vmul.f32 %v1492, %v396
    %v1524 = vadd.f32 %v1522, %v1523
    %v1525 = vmul.f32 %v1501, %v399
    %v1526 = vadd.f32 %v1524, %v1525
    %v1527 = vadd.f32 %v1526, %v402
    %v1528 = vmax.f32 %v1527, 0.0
    %v1529 = vmul.f32 %v1474, %v405
    %v1530 = vmul.f32 %v1483, %v407
    %v1531 = vadd.f32 %v1529, %v1530
    %v1532 = vmul.f32 %v1492, %v410
    %v1533 = vadd.f32 %v1531, %v1532
    %v1534 = vmul.f32 %v1501, %v413
    %v1535 = vadd.f32 %v1533, %v1534
    %v1536 = vadd.f32 %v1535, %v416
    %v1537 = vmax.f32 %v1536, 0.0
    %v1538 = vmul.f32 %v1510, %v419
    %v1539 = vmul.f32 %v1519, %v421
    %v1540 = vadd.f32 %v1538, %v1539
    %v1541 = vmul.f32 %v1528, %v424
    %v1542 = vadd.f32 %v1540, %v1541
    %v1543 = vmul.f32 %v1537, %v427
    %v1544 = vadd.f32 %v1542, %v1543
    %v1545 = vadd.f32 %v1544, %v430
    %v1546 = vmax.f32 %v1545, 0.0
    %v1547 = vmul.f32 %v1510, %v433
    %v1548 = vmul.f32 %v1519, %v435
    %v1549 = vadd.f32 %v1547, %v1548
    %v1550 = vmul.f32 %v1528, %v438
    %v1551 = vadd.f32 %v1549, %v1550
    %v1552 = vmul.f32 %v1537, %v441
    %v1553 = vadd.f32 %v1551, %v1552
    %v1554 = vadd.f32 %v1553, %v444
    %v1555 = vmax.f32 %v1554, 0.0
    %v1556 = vmul.f32 %v1510, %v447
    %v1557 = vmul.f32 %v1519, %v449
    %v1558 = vadd.f32 %v1556, %v1557
    %v1559 = vmul.f32 %v1528, %v452
    %v1560 = vadd.f32 %v1558, %v1559
    %v1561 = vmul.f32 %v1537, %v455
    %v1562 = vadd.f32 %v1560, %v1561
    %v1563 = vadd.f32 %v1562, %v458
    %v1564 = vmax.f32 %v1563, 0.0
    %v1565 = vmul.f32 %v1510, %v461
    %v1566 = vmul.f32 %v1519, %v463
    %v1567 = vadd.f32 %v1565, %v1566
    %v1568 = vmul.f32 %v1528, %v466
    %v1569 = vadd.f32 %v1567, %v1568
    %v1570 = vmul.f32 %v1537, %v469
    %v1571 = vadd.f32 %v1569, %v1570
    %v1572 = vadd.f32 %v1571, %v472
    %v1573 = vmax.f32 %v1572, 0.0
    %v1574 = vmul.f32 %v1546, %v475
    %v1575 = vmul.f32 %v1555, %v477
    %v1576 = vadd.f32 %v1574, %v1575
    %v1577 = vmul.f32 %v1564, %v480
    %v1578 = vadd.f32 %v1576, %v1577
    %v1579 = vmul.f32 %v1573, %v483
    %v1580 = vadd.f32 %v1578, %v1579
    %v1581 = vadd.f32 %v1580, %v486
    %v1582 = vmax.f32 %v1581, 0.0
    %v1583 = vmul.f32 %v1546, %v489
    %v1584 = vmul.f32 %v1555, %v491
    %v1585 = vadd.f32 %v1583, %v1584
    %v1586 = vmul.f32 %v1564, %v494
    %v1587 = vadd.f32 %v1585, %v1586
    %v1588 = vmul.f32 %v1573, %v497
    %v1589 = vadd.f32 %v1587, %v1588
    %v1590 = vadd.f32 %v1589, %v500
    %v1591 = vmax.f32 %v1590, 0.0
    %v1592 = vmul.f32 %v1546, %v503
    %v1593 = vmul.f32 %v1555, %v505
    %v1594 = vadd.f32 %v1592, %v1593
    %v1595 = vmul.f32 %v1564, %v508
    %v1596 = vadd.f32 %v1594, %v1595
    %v1597 = vmul.f32 %v1573, %v511
    %v1598 = vadd.f32 %v1596, %v1597
    %v1599 = vadd.f32 %v1598, %v514
    %v1600 = vmax.f32 %v1599, 0.0
    %v1601 = vmul.f32 %v1546, %v517
    %v1602 = vmul.f32 %v1555, %v519
    %v1603 = vadd.f32 %v1601, %v1602
    %v1604 = vmul.f32 %v1564, %v522
    %v1605 = vadd.f32 %v1603, %v1604
    %v1606 = vmul.f32 %v1573, %v525
    %v1607 = vadd.f32 %v1605, %v1606
    %v1608 = vadd.f32 %v1607, %v528
    %v1609 = vmax.f32 %v1608, 0.0
    %v1610 = vmul.f32 %v1582, %v531
    %v1611 = vmul.f32 %v1591, %v533
    %v1612 = vadd.f32 %v1610, %v1611
    %v1613 = vmul.f32 %v1600, %v536
    %v1614 = vadd.f32 %v1612, %v1613
    %v1615 = vmul.f32 %v1609, %v539
    %v1616 = vadd.f32 %v1614, %v1615
    %v1617 = vadd.f32 %v1616, %v542
    %v1618 = vmax.f32 %v1617, 0.0
    %v1619 = vmul.f32 %v1582, %v545
    %v1620 = vmul.f32 %v1591, %v547
    %v1621 = vadd.f32 %v1619, %v1620
    %v1622 = vmul.f32 %v1600, %v550
    %v1623 = vadd.f32 %v1621, %v1622
    %v1624 = vmul.f32 %v1609, %v553
    %v1625 = vadd.f32 %v1623, %v1624
    %v1626 = vadd.f32 %v1625, %v556
    %v1627 = vmax.f32 %v1626, 0.0
    %v1628 = vmul.f32 %v1582, %v559
    %v1629 = vmul.f32 %v1591, %v561
    %v1630 = vadd.f32 %v1628, %v1629
    %v1631 = vmul.f32 %v1600, %v564
    %v1632 = vadd.f32 %v1630, %v1631
    %v1633 = vmul.f32 %v1609, %v567
    %v1634 = vadd.f32 %v1632, %v1633
    %v1635 = vadd.f32 %v1634, %v570
    %v1636 = vmax.f32 %v1635, 0.0
    %v1637 = vmul.f32 %v1582, %v573
    %v1638 = vmul.f32 %v1591, %v575
    %v1639 = vadd.f32 %v1637, %v1638
    %v1640 = vmul.f32 %v1600, %v578
    %v1641 = vadd.f32 %v1639, %v1640
    %v1642 = vmul.f32 %v1609, %v581
    %v1643 = vadd.f32 %v1641, %v1642
    %v1644 = vadd.f32 %v1643, %v584
    %v1645 = vmax.f32 %v1644, 0.0
    %v1646 = vmul.f32 %v1618, %v587
    %v1647 = vmul.f32 %v1627, %v589
    %v1648 = vadd.f32 %v1646, %v1647
    %v1649 = vmul.f32 %v1636, %v592
    %v1650 = vadd.f32 %v1648, %v1649
    %v1651 = vmul.f32 %v1645, %v595
    %v1652 = vadd.f32 %v1650, %v1651
    %v1653 = vadd.f32 %v1652, %v598
    %v1654 = vmax.f32 %v1653, 0.0
    %v1655 = vmul.f32 %v1618, %v601
    %v1656 = vmul.f32 %v1627, %v603
    %v1657 = vadd.f32 %v1655, %v1656
    %v1658 = vmul.f32 %v1636, %v606
    %v1659 = vadd.f32 %v1657, %v1658
    %v1660 = vmul.f32 %v1645, %v609
    %v1661 = vadd.f32 %v1659, %v1660
    %v1662 = vadd.f32 %v1661, %v612
    %v1663 = vmax.f32 %v1662, 0.0
    %v1664 = vmul.f32 %v1618, %v615
    %v1665 = vmul.f32 %v1627, %v617
    %v1666 = vadd.f32 %v1664, %v1665
    %v1667 = vmul.f32 %v1636, %v620
    %v1668 = vadd.f32 %v1666, %v1667
    %v1669 = vmul.f32 %v1645, %v623
    %v1670 = vadd.f32 %v1668, %v1669
    %v1671 = vadd.f32 %v1670, %v626
    %v1672 = vmax.f32 %v1671, 0.0
    %v1673 = vmul.f32 %v1618, %v629
    %v1674 = vmul.f32 %v1627, %v631
    %v1675 = vadd.f32 %v1673, %v1674
    %v1676 = vmul.f32 %v1636, %v634
    %v1677 = vadd.f32 %v1675, %v1676
    %v1678 = vmul.f32 %v1645, %v637
    %v1679 = vadd.f32 %v1677, %v1678
    %v1680 = vadd.f32 %v1679, %v640
    %v1681 = vmax.f32 %v1680, 0.0
    %v1682 = vmul.f32 %v1654, %v643
    %v1683 = vmul.f32 %v1663, %v645
    %v1684 = vadd.f32 %v1682, %v1683
    %v1685 = vmul.f32 %v1672, %v648
    %v1686 = vadd.f32 %v1684, %v1685
    %v1687 = vmul.f32 %v1681, %v651
    %v1688 = vadd.f32 %v1686, %v1687
    %v1689 = vadd.f32 %v1688, %v654
    %v1690 = vmax.f32 %v1689, 0.0
    %v1691 = vmul.f32 %v1654, %v657
    %v1692 = vmul.f32 %v1663, %v659
    %v1693 = vadd.f32 %v1691, %v1692
    %v1694 = vmul.f32 %v1672, %v662
    %v1695 = vadd.f32 %v1693, %v1694
    %v1696 = vmul.f32 %v1681, %v665
    %v1697 = vadd.f32 %v1695, %v1696
    %v1698 = vadd.f32 %v1697, %v668
    %v1699 = vmax.f32 %v1698, 0.0
    %v1700 = vmul.f32 %v1654, %v671
    %v1701 = vmul.f32 %v1663, %v673
    %v1702 = vadd.f32 %v1700, %v1701
    %v1703 = vmul.f32 %v1672, %v676
    %v1704 = vadd.f32 %v1702, %v1703
    %v1705 = vmul.f32 %v1681, %v679
    %v1706 = vadd.f32 %v1704, %v1705
    %v1707 = vadd.f32 %v1706, %v682
    %v1708 = vmax.f32 %v1707, 0.0
    %v1709 = vmul.f32 %v1654, %v685
    %v1710 = vmul.f32 %v1663, %v687
    %v1711 = vadd.f32 %v1709, %v1710
    %v1712 = vmul.f32 %v1672, %v690
    %v1713 = vadd.f32 %v1711, %v1712
    %v1714 = vmul.f32 %v1681, %v693
    %v1715 = vadd.f32 %v1713, %v1714
    %v1716 = vadd.f32 %v1715, %v696
    %v1717 = vmax.f32 %v1716, 0.0
    %v1718 = vmul.f32 %v1690, %v699
    %v1719 = vmul.f32 %v1699, %v701
    %v1720 = vadd.f32 %v1718, %v1719
    %v1721 = vmul.f32 %v1708, %v704
    %v1722 = vadd.f32 %v1720, %v1721
    %v1723 = vmul.f32 %v1717, %v707
    %v1724 = vadd.f32 %v1722, %v1723
    %v1725 = vadd.f32 %v1724, %v710
    %v1726 = vxor.u32 %v1725, 2147483648
    %v1727 = vmul.f32 %v1726, 1.442695
    %v1728 = vpow.pop %v1727
    %v1729 = vadd.f32 %v1728, 1.0
    %v1730 = vrcp.pop %v1729
    %v1731 = vmul.f32 %v1729, %v1730
    %v1732 = vsub.f32 1.0, %v1731
    %v1733 = vmul.f32 %v1730, %v1732
    %v1734 = vadd.f32 %v1730, %v1733
    %vm1735 = vweird.f32 %v1729
    %vm1736 = vweird.f32 %v1730
    %vm1737 = vmor %vm1735, %vm1736
    %v1738 = vsel %vm1737, %v1730, %v1734
    %v1739 = vand.u32 2147483647, %v1729
    %vm1740 = vcmp.eq.f32.partialorder %v1739, 8.507059e+37
    %v1741 = vand.u32 %v1729, 2147483648
    %v1742 = vor.u32 1.1754944e-38, %v1741
    %v1743 = vsel %vm1740, %v1742, %v1738
    %v1744 = vmul.f32 1.0, %v1743
    %1745 = vst [vmem:[%s3 + $0x18] sm:$0xff] %v1744
    %v1746 = vld [vmem:[%s2 + $0x20] sm:$0xff]
    %v1747 = vld [vmem:[%s217 + $0x20] sm:$0xff]
    %v1748 = vmul.f32 %v1746, %v219
    %v1749 = vmul.f32 %v1747, %v221
    %v1750 = vadd.f32 %v1748, %v1749
    %v1751 = vadd.f32 %v1750, %v224
    %v1752 = vmax.f32 %v1751, 0.0
    %v1753 = vmul.f32 %v1746, %v227
    %v1754 = vmul.f32 %v1747, %v229
    %v1755 = vadd.f32 %v1753, %v1754
    %v1756 = vadd.f32 %v1755, %v232
    %v1757 = vmax.f32 %v1756, 0.0
    %v1758 = vmul.f32 %v1746, %v235
    %v1759 = vmul.f32 %v1747, %v237
    %v1760 = vadd.f32 %v1758, %v1759
    %v1761 = vadd.f32 %v1760, %v240
    %v1762 = vmax.f32 %v1761, 0.0
    %v1763 = vmul.f32 %v1746, %v243
    %v1764 = vmul.f32 %v1747, %v245
    %v1765 = vadd.f32 %v1763, %v1764
    %v1766 = vadd.f32 %v1765, %v248
    %v1767 = vmax.f32 %v1766, 0.0
    %v1768 = vmul.f32 %v1752, %v251
    %v1769 = vmul.f32 %v1757, %v253
    %v1770 = vadd.f32 %v1768, %v1769
    %v1771 = vmul.f32 %v1762, %v256
    %v1772 = vadd.f32 %v1770, %v1771
    %v1773 = vmul.f32 %v1767, %v259
    %v1774 = vadd.f32 %v1772, %v1773
    %v1775 = vadd.f32 %v1774, %v262
    %v1776 = vmax.f32 %v1775, 0.0
    %v1777 = vmul.f32 %v1752, %v265
    %v1778 = vmul.f32 %v1757, %v267
    %v1779 = vadd.f32 %v1777, %v1778
    %v1780 = vmul.f32 %v1762, %v270
    %v1781 = vadd.f32 %v1779, %v1780
    %v1782 = vmul.f32 %v1767, %v273
    %v1783 = vadd.f32 %v1781, %v1782
    %v1784 = vadd.f32 %v1783, %v276
    %v1785 = vmax.f32 %v1784, 0.0
    %v1786 = vmul.f32 %v1752, %v279
    %v1787 = vmul.f32 %v1757, %v281
    %v1788 = vadd.f32 %v1786, %v1787
    %v1789 = vmul.f32 %v1762, %v284
    %v1790 = vadd.f32 %v1788, %v1789
    %v1791 = vmul.f32 %v1767, %v287
    %v1792 = vadd.f32 %v1790, %v1791
    %v1793 = vadd.f32 %v1792, %v290
    %v1794 = vmax.f32 %v1793, 0.0
    %v1795 = vmul.f32 %v1752, %v293
    %v1796 = vmul.f32 %v1757, %v295
    %v1797 = vadd.f32 %v1795, %v1796
    %v1798 = vmul.f32 %v1762, %v298
    %v1799 = vadd.f32 %v1797, %v1798
    %v1800 = vmul.f32 %v1767, %v301
    %v1801 = vadd.f32 %v1799, %v1800
    %v1802 = vadd.f32 %v1801, %v304
    %v1803 = vmax.f32 %v1802, 0.0
    %v1804 = vmul.f32 %v1776, %v307
    %v1805 = vmul.f32 %v1785, %v309
    %v1806 = vadd.f32 %v1804, %v1805
    %v1807 = vmul.f32 %v1794, %v312
    %v1808 = vadd.f32 %v1806, %v1807
    %v1809 = vmul.f32 %v1803, %v315
    %v1810 = vadd.f32 %v1808, %v1809
    %v1811 = vadd.f32 %v1810, %v318
    %v1812 = vmax.f32 %v1811, 0.0
    %v1813 = vmul.f32 %v1776, %v321
    %v1814 = vmul.f32 %v1785, %v323
    %v1815 = vadd.f32 %v1813, %v1814
    %v1816 = vmul.f32 %v1794, %v326
    %v1817 = vadd.f32 %v1815, %v1816
    %v1818 = vmul.f32 %v1803, %v329
    %v1819 = vadd.f32 %v1817, %v1818
    %v1820 = vadd.f32 %v1819, %v332
    %v1821 = vmax.f32 %v1820, 0.0
    %v1822 = vmul.f32 %v1776, %v335
    %v1823 = vmul.f32 %v1785, %v337
    %v1824 = vadd.f32 %v1822, %v1823
    %v1825 = vmul.f32 %v1794, %v340
    %v1826 = vadd.f32 %v1824, %v1825
    %v1827 = vmul.f32 %v1803, %v343
    %v1828 = vadd.f32 %v1826, %v1827
    %v1829 = vadd.f32 %v1828, %v346
    %v1830 = vmax.f32 %v1829, 0.0
    %v1831 = vmul.f32 %v1776, %v349
    %v1832 = vmul.f32 %v1785, %v351
    %v1833 = vadd.f32 %v1831, %v1832
    %v1834 = vmul.f32 %v1794, %v354
    %v1835 = vadd.f32 %v1833, %v1834
    %v1836 = vmul.f32 %v1803, %v357
    %v1837 = vadd.f32 %v1835, %v1836
    %v1838 = vadd.f32 %v1837, %v360
    %v1839 = vmax.f32 %v1838, 0.0
    %v1840 = vmul.f32 %v1812, %v363
    %v1841 = vmul.f32 %v1821, %v365
    %v1842 = vadd.f32 %v1840, %v1841
    %v1843 = vmul.f32 %v1830, %v368
    %v1844 = vadd.f32 %v1842, %v1843
    %v1845 = vmul.f32 %v1839, %v371
    %v1846 = vadd.f32 %v1844, %v1845
    %v1847 = vadd.f32 %v1846, %v374
    %v1848 = vmax.f32 %v1847, 0.0
    %v1849 = vmul.f32 %v1812, %v377
    %v1850 = vmul.f32 %v1821, %v379
    %v1851 = vadd.f32 %v1849, %v1850
    %v1852 = vmul.f32 %v1830, %v382
    %v1853 = vadd.f32 %v1851, %v1852
    %v1854 = vmul.f32 %v1839, %v385
    %v1855 = vadd.f32 %v1853, %v1854
    %v1856 = vadd.f32 %v1855, %v388
    %v1857 = vmax.f32 %v1856, 0.0
    %v1858 = vmul.f32 %v1812, %v391
    %v1859 = vmul.f32 %v1821, %v393
    %v1860 = vadd.f32 %v1858, %v1859
    %v1861 = vmul.f32 %v1830, %v396
    %v1862 = vadd.f32 %v1860, %v1861
    %v1863 = vmul.f32 %v1839, %v399
    %v1864 = vadd.f32 %v1862, %v1863
    %v1865 = vadd.f32 %v1864, %v402
    %v1866 = vmax.f32 %v1865, 0.0
    %v1867 = vmul.f32 %v1812, %v405
    %v1868 = vmul.f32 %v1821, %v407
    %v1869 = vadd.f32 %v1867, %v1868
    %v1870 = vmul.f32 %v1830, %v410
    %v1871 = vadd.f32 %v1869, %v1870
    %v1872 = vmul.f32 %v1839, %v413
    %v1873 = vadd.f32 %v1871, %v1872
    %v1874 = vadd.f32 %v1873, %v416
    %v1875 = vmax.f32 %v1874, 0.0
    %v1876 = vmul.f32 %v1848, %v419
    %v1877 = vmul.f32 %v1857, %v421
    %v1878 = vadd.f32 %v1876, %v1877
    %v1879 = vmul.f32 %v1866, %v424
    %v1880 = vadd.f32 %v1878, %v1879
    %v1881 = vmul.f32 %v1875, %v427
    %v1882 = vadd.f32 %v1880, %v1881
    %v1883 = vadd.f32 %v1882, %v430
    %v1884 = vmax.f32 %v1883, 0.0
    %v1885 = vmul.f32 %v1848, %v433
    %v1886 = vmul.f32 %v1857, %v435
    %v1887 = vadd.f32 %v1885, %v1886
    %v1888 = vmul.f32 %v1866, %v438
    %v1889 = vadd.f32 %v1887, %v1888
    %v1890 = vmul.f32 %v1875, %v441
    %v1891 = vadd.f32 %v1889, %v1890
    %v1892 = vadd.f32 %v1891, %v444
    %v1893 = vmax.f32 %v1892, 0.0
    %v1894 = vmul.f32 %v1848, %v447
    %v1895 = vmul.f32 %v1857, %v449
    %v1896 = vadd.f32 %v1894, %v1895
    %v1897 = vmul.f32 %v1866, %v452
    %v1898 = vadd.f32 %v1896, %v1897
    %v1899 = vmul.f32 %v1875, %v455
    %v1900 = vadd.f32 %v1898, %v1899
    %v1901 = vadd.f32 %v1900, %v458
    %v1902 = vmax.f32 %v1901, 0.0
    %v1903 = vmul.f32 %v1848, %v461
    %v1904 = vmul.f32 %v1857, %v463
    %v1905 = vadd.f32 %v1903, %v1904
    %v1906 = vmul.f32 %v1866, %v466
    %v1907 = vadd.f32 %v1905, %v1906
    %v1908 = vmul.f32 %v1875, %v469
    %v1909 = vadd.f32 %v1907, %v1908
    %v1910 = vadd.f32 %v1909, %v472
    %v1911 = vmax.f32 %v1910, 0.0
    %v1912 = vmul.f32 %v1884, %v475
    %v1913 = vmul.f32 %v1893, %v477
    %v1914 = vadd.f32 %v1912, %v1913
    %v1915 = vmul.f32 %v1902, %v480
    %v1916 = vadd.f32 %v1914, %v1915
    %v1917 = vmul.f32 %v1911, %v483
    %v1918 = vadd.f32 %v1916, %v1917
    %v1919 = vadd.f32 %v1918, %v486
    %v1920 = vmax.f32 %v1919, 0.0
    %v1921 = vmul.f32 %v1884, %v489
    %v1922 = vmul.f32 %v1893, %v491
    %v1923 = vadd.f32 %v1921, %v1922
    %v1924 = vmul.f32 %v1902, %v494
    %v1925 = vadd.f32 %v1923, %v1924
    %v1926 = vmul.f32 %v1911, %v497
    %v1927 = vadd.f32 %v1925, %v1926
    %v1928 = vadd.f32 %v1927, %v500
    %v1929 = vmax.f32 %v1928, 0.0
    %v1930 = vmul.f32 %v1884, %v503
    %v1931 = vmul.f32 %v1893, %v505
    %v1932 = vadd.f32 %v1930, %v1931
    %v1933 = vmul.f32 %v1902, %v508
    %v1934 = vadd.f32 %v1932, %v1933
    %v1935 = vmul.f32 %v1911, %v511
    %v1936 = vadd.f32 %v1934, %v1935
    %v1937 = vadd.f32 %v1936, %v514
    %v1938 = vmax.f32 %v1937, 0.0
    %v1939 = vmul.f32 %v1884, %v517
    %v1940 = vmul.f32 %v1893, %v519
    %v1941 = vadd.f32 %v1939, %v1940
    %v1942 = vmul.f32 %v1902, %v522
    %v1943 = vadd.f32 %v1941, %v1942
    %v1944 = vmul.f32 %v1911, %v525
    %v1945 = vadd.f32 %v1943, %v1944
    %v1946 = vadd.f32 %v1945, %v528
    %v1947 = vmax.f32 %v1946, 0.0
    %v1948 = vmul.f32 %v1920, %v531
    %v1949 = vmul.f32 %v1929, %v533
    %v1950 = vadd.f32 %v1948, %v1949
    %v1951 = vmul.f32 %v1938, %v536
    %v1952 = vadd.f32 %v1950, %v1951
    %v1953 = vmul.f32 %v1947, %v539
    %v1954 = vadd.f32 %v1952, %v1953
    %v1955 = vadd.f32 %v1954, %v542
    %v1956 = vmax.f32 %v1955, 0.0
    %v1957 = vmul.f32 %v1920, %v545
    %v1958 = vmul.f32 %v1929, %v547
    %v1959 = vadd.f32 %v1957, %v1958
    %v1960 = vmul.f32 %v1938, %v550
    %v1961 = vadd.f32 %v1959, %v1960
    %v1962 = vmul.f32 %v1947, %v553
    %v1963 = vadd.f32 %v1961, %v1962
    %v1964 = vadd.f32 %v1963, %v556
    %v1965 = vmax.f32 %v1964, 0.0
    %v1966 = vmul.f32 %v1920, %v559
    %v1967 = vmul.f32 %v1929, %v561
    %v1968 = vadd.f32 %v1966, %v1967
    %v1969 = vmul.f32 %v1938, %v564
    %v1970 = vadd.f32 %v1968, %v1969
    %v1971 = vmul.f32 %v1947, %v567
    %v1972 = vadd.f32 %v1970, %v1971
    %v1973 = vadd.f32 %v1972, %v570
    %v1974 = vmax.f32 %v1973, 0.0
    %v1975 = vmul.f32 %v1920, %v573
    %v1976 = vmul.f32 %v1929, %v575
    %v1977 = vadd.f32 %v1975, %v1976
    %v1978 = vmul.f32 %v1938, %v578
    %v1979 = vadd.f32 %v1977, %v1978
    %v1980 = vmul.f32 %v1947, %v581
    %v1981 = vadd.f32 %v1979, %v1980
    %v1982 = vadd.f32 %v1981, %v584
    %v1983 = vmax.f32 %v1982, 0.0
    %v1984 = vmul.f32 %v1956, %v587
    %v1985 = vmul.f32 %v1965, %v589
    %v1986 = vadd.f32 %v1984, %v1985
    %v1987 = vmul.f32 %v1974, %v592
    %v1988 = vadd.f32 %v1986, %v1987
    %v1989 = vmul.f32 %v1983, %v595
    %v1990 = vadd.f32 %v1988, %v1989
    %v1991 = vadd.f32 %v1990, %v598
    %v1992 = vmax.f32 %v1991, 0.0
    %v1993 = vmul.f32 %v1956, %v601
    %v1994 = vmul.f32 %v1965, %v603
    %v1995 = vadd.f32 %v1993, %v1994
    %v1996 = vmul.f32 %v1974, %v606
    %v1997 = vadd.f32 %v1995, %v1996
    %v1998 = vmul.f32 %v1983, %v609
    %v1999 = vadd.f32 %v1997, %v1998
    %v2000 = vadd.f32 %v1999, %v612
    %v2001 = vmax.f32 %v2000, 0.0
    %v2002 = vmul.f32 %v1956, %v615
    %v2003 = vmul.f32 %v1965, %v617
    %v2004 = vadd.f32 %v2002, %v2003
    %v2005 = vmul.f32 %v1974, %v620
    %v2006 = vadd.f32 %v2004, %v2005
    %v2007 = vmul.f32 %v1983, %v623
    %v2008 = vadd.f32 %v2006, %v2007
    %v2009 = vadd.f32 %v2008, %v626
    %v2010 = vmax.f32 %v2009, 0.0
    %v2011 = vmul.f32 %v1956, %v629
    %v2012 = vmul.f32 %v1965, %v631
    %v2013 = vadd.f32 %v2011, %v2012
    %v2014 = vmul.f32 %v1974, %v634
    %v2015 = vadd.f32 %v2013, %v2014
    %v2016 = vmul.f32 %v1983, %v637
    %v2017 = vadd.f32 %v2015, %v2016
    %v2018 = vadd.f32 %v2017, %v640
    %v2019 = vmax.f32 %v2018, 0.0
    %v2020 = vmul.f32 %v1992, %v643
    %v2021 = vmul.f32 %v2001, %v645
    %v2022 = vadd.f32 %v2020, %v2021
    %v2023 = vmul.f32 %v2010, %v648
    %v2024 = vadd.f32 %v2022, %v2023
    %v2025 = vmul.f32 %v2019, %v651
    %v2026 = vadd.f32 %v2024, %v2025
    %v2027 = vadd.f32 %v2026, %v654
    %v2028 = vmax.f32 %v2027, 0.0
    %v2029 = vmul.f32 %v1992, %v657
    %v2030 = vmul.f32 %v2001, %v659
    %v2031 = vadd.f32 %v2029, %v2030
    %v2032 = vmul.f32 %v2010, %v662
    %v2033 = vadd.f32 %v2031, %v2032
    %v2034 = vmul.f32 %v2019, %v665
    %v2035 = vadd.f32 %v2033, %v2034
    %v2036 = vadd.f32 %v2035, %v668
    %v2037 = vmax.f32 %v2036, 0.0
    %v2038 = vmul.f32 %v1992, %v671
    %v2039 = vmul.f32 %v2001, %v673
    %v2040 = vadd.f32 %v2038, %v2039
    %v2041 = vmul.f32 %v2010, %v676
    %v2042 = vadd.f32 %v2040, %v2041
    %v2043 = vmul.f32 %v2019, %v679
    %v2044 = vadd.f32 %v2042, %v2043
    %v2045 = vadd.f32 %v2044, %v682
    %v2046 = vmax.f32 %v2045, 0.0
    %v2047 = vmul.f32 %v1992, %v685
    %v2048 = vmul.f32 %v2001, %v687
    %v2049 = vadd.f32 %v2047, %v2048
    %v2050 = vmul.f32 %v2010, %v690
    %v2051 = vadd.f32 %v2049, %v2050
    %v2052 = vmul.f32 %v2019, %v693
    %v2053 = vadd.f32 %v2051, %v2052
    %v2054 = vadd.f32 %v2053, %v696
    %v2055 = vmax.f32 %v2054, 0.0
    %v2056 = vmul.f32 %v2028, %v699
    %v2057 = vmul.f32 %v2037, %v701
    %v2058 = vadd.f32 %v2056, %v2057
    %v2059 = vmul.f32 %v2046, %v704
    %v2060 = vadd.f32 %v2058, %v2059
    %v2061 = vmul.f32 %v2055, %v707
    %v2062 = vadd.f32 %v2060, %v2061
    %v2063 = vadd.f32 %v2062, %v710
    %v2064 = vxor.u32 %v2063, 2147483648
    %v2065 = vmul.f32 %v2064, 1.442695
    %v2066 = vpow.pop %v2065
    %v2067 = vadd.f32 %v2066, 1.0
    %v2068 = vrcp.pop %v2067
    %v2069 = vmul.f32 %v2067, %v2068
    %v2070 = vsub.f32 1.0, %v2069
    %v2071 = vmul.f32 %v2068, %v2070
    %v2072 = vadd.f32 %v2068, %v2071
    %vm2073 = vweird.f32 %v2067
    %vm2074 = vweird.f32 %v2068
    %vm2075 = vmor %vm2073, %vm2074
    %v2076 = vsel %vm2075, %v2068, %v2072
    %v2077 = vand.u32 2147483647, %v2067
    %vm2078 = vcmp.eq.f32.partialorder %v2077, 8.507059e+37
    %v2079 = vand.u32 %v2067, 2147483648
    %v2080 = vor.u32 1.1754944e-38, %v2079
    %v2081 = vsel %vm2078, %v2080, %v2076
    %v2082 = vmul.f32 1.0, %v2081
    %2083 = vst [vmem:[%s3 + $0x20] sm:$0xff] %v2082
    %v2084 = vld [vmem:[%s2 + $0x28] sm:$0xff]
    %v2085 = vld [vmem:[%s217 + $0x28] sm:$0xff]
    %v2086 = vmul.f32 %v2084, %v219
    %v2087 = vmul.f32 %v2085, %v221
    %v2088 = vadd.f32 %v2086, %v2087
    %v2089 = vadd.f32 %v2088, %v224
    %v2090 = vmax.f32 %v2089, 0.0
    %v2091 = vmul.f32 %v2084, %v227
    %v2092 = vmul.f32 %v2085, %v229
    %v2093 = vadd.f32 %v2091, %v2092
    %v2094 = vadd.f32 %v2093, %v232
    %v2095 = vmax.f32 %v2094, 0.0
    %v2096 = vmul.f32 %v2084, %v235
    %v2097 = vmul.f32 %v2085, %v237
    %v2098 = vadd.f32 %v2096, %v2097
    %v2099 = vadd.f32 %v2098, %v240
    %v2100 = vmax.f32 %v2099, 0.0
    %v2101 = vmul.f32 %v2084, %v243
    %v2102 = vmul.f32 %v2085, %v245
    %v2103 = vadd.f32 %v2101, %v2102
    %v2104 = vadd.f32 %v2103, %v248
    %v2105 = vmax.f32 %v2104, 0.0
    %v2106 = vmul.f32 %v2090, %v251
    %v2107 = vmul.f32 %v2095, %v253
    %v2108 = vadd.f32 %v2106, %v2107
    %v2109 = vmul.f32 %v2100, %v256
    %v2110 = vadd.f32 %v2108, %v2109
    %v2111 = vmul.f32 %v2105, %v259
    %v2112 = vadd.f32 %v2110, %v2111
    %v2113 = vadd.f32 %v2112, %v262
    %v2114 = vmax.f32 %v2113, 0.0
    %v2115 = vmul.f32 %v2090, %v265
    %v2116 = vmul.f32 %v2095, %v267
    %v2117 = vadd.f32 %v2115, %v2116
    %v2118 = vmul.f32 %v2100, %v270
    %v2119 = vadd.f32 %v2117, %v2118
    %v2120 = vmul.f32 %v2105, %v273
    %v2121 = vadd.f32 %v2119, %v2120
    %v2122 = vadd.f32 %v2121, %v276
    %v2123 = vmax.f32 %v2122, 0.0
    %v2124 = vmul.f32 %v2090, %v279
    %v2125 = vmul.f32 %v2095, %v281
    %v2126 = vadd.f32 %v2124, %v2125
    %v2127 = vmul.f32 %v2100, %v284
    %v2128 = vadd.f32 %v2126, %v2127
    %v2129 = vmul.f32 %v2105, %v287
    %v2130 = vadd.f32 %v2128, %v2129
    %v2131 = vadd.f32 %v2130, %v290
    %v2132 = vmax.f32 %v2131, 0.0
    %v2133 = vmul.f32 %v2090, %v293
    %v2134 = vmul.f32 %v2095, %v295
    %v2135 = vadd.f32 %v2133, %v2134
    %v2136 = vmul.f32 %v2100, %v298
    %v2137 = vadd.f32 %v2135, %v2136
    %v2138 = vmul.f32 %v2105, %v301
    %v2139 = vadd.f32 %v2137, %v2138
    %v2140 = vadd.f32 %v2139, %v304
    %v2141 = vmax.f32 %v2140, 0.0
    %v2142 = vmul.f32 %v2114, %v307
    %v2143 = vmul.f32 %v2123, %v309
    %v2144 = vadd.f32 %v2142, %v2143
    %v2145 = vmul.f32 %v2132, %v312
    %v2146 = vadd.f32 %v2144, %v2145
    %v2147 = vmul.f32 %v2141, %v315
    %v2148 = vadd.f32 %v2146, %v2147
    %v2149 = vadd.f32 %v2148, %v318
    %v2150 = vmax.f32 %v2149, 0.0
    %v2151 = vmul.f32 %v2114, %v321
    %v2152 = vmul.f32 %v2123, %v323
    %v2153 = vadd.f32 %v2151, %v2152
    %v2154 = vmul.f32 %v2132, %v326
    %v2155 = vadd.f32 %v2153, %v2154
    %v2156 = vmul.f32 %v2141, %v329
    %v2157 = vadd.f32 %v2155, %v2156
    %v2158 = vadd.f32 %v2157, %v332
    %v2159 = vmax.f32 %v2158, 0.0
    %v2160 = vmul.f32 %v2114, %v335
    %v2161 = vmul.f32 %v2123, %v337
    %v2162 = vadd.f32 %v2160, %v2161
    %v2163 = vmul.f32 %v2132, %v340
    %v2164 = vadd.f32 %v2162, %v2163
    %v2165 = vmul.f32 %v2141, %v343
    %v2166 = vadd.f32 %v2164, %v2165
    %v2167 = vadd.f32 %v2166, %v346
    %v2168 = vmax.f32 %v2167, 0.0
    %v2169 = vmul.f32 %v2114, %v349
    %v2170 = vmul.f32 %v2123, %v351
    %v2171 = vadd.f32 %v2169, %v2170
    %v2172 = vmul.f32 %v2132, %v354
    %v2173 = vadd.f32 %v2171, %v2172
    %v2174 = vmul.f32 %v2141, %v357
    %v2175 = vadd.f32 %v2173, %v2174
    %v2176 = vadd.f32 %v2175, %v360
    %v2177 = vmax.f32 %v2176, 0.0
    %v2178 = vmul.f32 %v2150, %v363
    %v2179 = vmul.f32 %v2159, %v365
    %v2180 = vadd.f32 %v2178, %v2179
    %v2181 = vmul.f32 %v2168, %v368
    %v2182 = vadd.f32 %v2180, %v2181
    %v2183 = vmul.f32 %v2177, %v371
    %v2184 = vadd.f32 %v2182, %v2183
    %v2185 = vadd.f32 %v2184, %v374
    %v2186 = vmax.f32 %v2185, 0.0
    %v2187 = vmul.f32 %v2150, %v377
    %v2188 = vmul.f32 %v2159, %v379
    %v2189 = vadd.f32 %v2187, %v2188
    %v2190 = vmul.f32 %v2168, %v382
    %v2191 = vadd.f32 %v2189, %v2190
    %v2192 = vmul.f32 %v2177, %v385
    %v2193 = vadd.f32 %v2191, %v2192
    %v2194 = vadd.f32 %v2193, %v388
    %v2195 = vmax.f32 %v2194, 0.0
    %v2196 = vmul.f32 %v2150, %v391
    %v2197 = vmul.f32 %v2159, %v393
    %v2198 = vadd.f32 %v2196, %v2197
    %v2199 = vmul.f32 %v2168, %v396
    %v2200 = vadd.f32 %v2198, %v2199
    %v2201 = vmul.f32 %v2177, %v399
    %v2202 = vadd.f32 %v2200, %v2201
    %v2203 = vadd.f32 %v2202, %v402
    %v2204 = vmax.f32 %v2203, 0.0
    %v2205 = vmul.f32 %v2150, %v405
    %v2206 = vmul.f32 %v2159, %v407
    %v2207 = vadd.f32 %v2205, %v2206
    %v2208 = vmul.f32 %v2168, %v410
    %v2209 = vadd.f32 %v2207, %v2208
    %v2210 = vmul.f32 %v2177, %v413
    %v2211 = vadd.f32 %v2209, %v2210
    %v2212 = vadd.f32 %v2211, %v416
    %v2213 = vmax.f32 %v2212, 0.0
    %v2214 = vmul.f32 %v2186, %v419
    %v2215 = vmul.f32 %v2195, %v421
    %v2216 = vadd.f32 %v2214, %v2215
    %v2217 = vmul.f32 %v2204, %v424
    %v2218 = vadd.f32 %v2216, %v2217
    %v2219 = vmul.f32 %v2213, %v427
    %v2220 = vadd.f32 %v2218, %v2219
    %v2221 = vadd.f32 %v2220, %v430
    %v2222 = vmax.f32 %v2221, 0.0
    %v2223 = vmul.f32 %v2186, %v433
    %v2224 = vmul.f32 %v2195, %v435
    %v2225 = vadd.f32 %v2223, %v2224
    %v2226 = vmul.f32 %v2204, %v438
    %v2227 = vadd.f32 %v2225, %v2226
    %v2228 = vmul.f32 %v2213, %v441
    %v2229 = vadd.f32 %v2227, %v2228
    %v2230 = vadd.f32 %v2229, %v444
    %v2231 = vmax.f32 %v2230, 0.0
    %v2232 = vmul.f32 %v2186, %v447
    %v2233 = vmul.f32 %v2195, %v449
    %v2234 = vadd.f32 %v2232, %v2233
    %v2235 = vmul.f32 %v2204, %v452
    %v2236 = vadd.f32 %v2234, %v2235
    %v2237 = vmul.f32 %v2213, %v455
    %v2238 = vadd.f32 %v2236, %v2237
    %v2239 = vadd.f32 %v2238, %v458
    %v2240 = vmax.f32 %v2239, 0.0
    %v2241 = vmul.f32 %v2186, %v461
    %v2242 = vmul.f32 %v2195, %v463
    %v2243 = vadd.f32 %v2241, %v2242
    %v2244 = vmul.f32 %v2204, %v466
    %v2245 = vadd.f32 %v2243, %v2244
    %v2246 = vmul.f32 %v2213, %v469
    %v2247 = vadd.f32 %v2245, %v2246
    %v2248 = vadd.f32 %v2247, %v472
    %v2249 = vmax.f32 %v2248, 0.0
    %v2250 = vmul.f32 %v2222, %v475
    %v2251 = vmul.f32 %v2231, %v477
    %v2252 = vadd.f32 %v2250, %v2251
    %v2253 = vmul.f32 %v2240, %v480
    %v2254 = vadd.f32 %v2252, %v2253
    %v2255 = vmul.f32 %v2249, %v483
    %v2256 = vadd.f32 %v2254, %v2255
    %v2257 = vadd.f32 %v2256, %v486
    %v2258 = vmax.f32 %v2257, 0.0
    %v2259 = vmul.f32 %v2222, %v489
    %v2260 = vmul.f32 %v2231, %v491
    %v2261 = vadd.f32 %v2259, %v2260
    %v2262 = vmul.f32 %v2240, %v494
    %v2263 = vadd.f32 %v2261, %v2262
    %v2264 = vmul.f32 %v2249, %v497
    %v2265 = vadd.f32 %v2263, %v2264
    %v2266 = vadd.f32 %v2265, %v500
    %v2267 = vmax.f32 %v2266, 0.0
    %v2268 = vmul.f32 %v2222, %v503
    %v2269 = vmul.f32 %v2231, %v505
    %v2270 = vadd.f32 %v2268, %v2269
    %v2271 = vmul.f32 %v2240, %v508
    %v2272 = vadd.f32 %v2270, %v2271
    %v2273 = vmul.f32 %v2249, %v511
    %v2274 = vadd.f32 %v2272, %v2273
    %v2275 = vadd.f32 %v2274, %v514
    %v2276 = vmax.f32 %v2275, 0.0
    %v2277 = vmul.f32 %v2222, %v517
    %v2278 = vmul.f32 %v2231, %v519
    %v2279 = vadd.f32 %v2277, %v2278
    %v2280 = vmul.f32 %v2240, %v522
    %v2281 = vadd.f32 %v2279, %v2280
    %v2282 = vmul.f32 %v2249, %v525
    %v2283 = vadd.f32 %v2281, %v2282
    %v2284 = vadd.f32 %v2283, %v528
    %v2285 = vmax.f32 %v2284, 0.0
    %v2286 = vmul.f32 %v2258, %v531
    %v2287 = vmul.f32 %v2267, %v533
    %v2288 = vadd.f32 %v2286, %v2287
    %v2289 = vmul.f32 %v2276, %v536
    %v2290 = vadd.f32 %v2288, %v2289
    %v2291 = vmul.f32 %v2285, %v539
    %v2292 = vadd.f32 %v2290, %v2291
    %v2293 = vadd.f32 %v2292, %v542
    %v2294 = vmax.f32 %v2293, 0.0
    %v2295 = vmul.f32 %v2258, %v545
    %v2296 = vmul.f32 %v2267, %v547
    %v2297 = vadd.f32 %v2295, %v2296
    %v2298 = vmul.f32 %v2276, %v550
    %v2299 = vadd.f32 %v2297, %v2298
    %v2300 = vmul.f32 %v2285, %v553
    %v2301 = vadd.f32 %v2299, %v2300
    %v2302 = vadd.f32 %v2301, %v556
    %v2303 = vmax.f32 %v2302, 0.0
    %v2304 = vmul.f32 %v2258, %v559
    %v2305 = vmul.f32 %v2267, %v561
    %v2306 = vadd.f32 %v2304, %v2305
    %v2307 = vmul.f32 %v2276, %v564
    %v2308 = vadd.f32 %v2306, %v2307
    %v2309 = vmul.f32 %v2285, %v567
    %v2310 = vadd.f32 %v2308, %v2309
    %v2311 = vadd.f32 %v2310, %v570
    %v2312 = vmax.f32 %v2311, 0.0
    %v2313 = vmul.f32 %v2258, %v573
    %v2314 = vmul.f32 %v2267, %v575
    %v2315 = vadd.f32 %v2313, %v2314
    %v2316 = vmul.f32 %v2276, %v578
    %v2317 = vadd.f32 %v2315, %v2316
    %v2318 = vmul.f32 %v2285, %v581
    %v2319 = vadd.f32 %v2317, %v2318
    %v2320 = vadd.f32 %v2319, %v584
    %v2321 = vmax.f32 %v2320, 0.0
    %v2322 = vmul.f32 %v2294, %v587
    %v2323 = vmul.f32 %v2303, %v589
    %v2324 = vadd.f32 %v2322, %v2323
    %v2325 = vmul.f32 %v2312, %v592
    %v2326 = vadd.f32 %v2324, %v2325
    %v2327 = vmul.f32 %v2321, %v595
    %v2328 = vadd.f32 %v2326, %v2327
    %v2329 = vadd.f32 %v2328, %v598
    %v2330 = vmax.f32 %v2329, 0.0
    %v2331 = vmul.f32 %v2294, %v601
    %v2332 = vmul.f32 %v2303, %v603
    %v2333 = vadd.f32 %v2331, %v2332
    %v2334 = vmul.f32 %v2312, %v606
    %v2335 = vadd.f32 %v2333, %v2334
    %v2336 = vmul.f32 %v2321, %v609
    %v2337 = vadd.f32 %v2335, %v2336
    %v2338 = vadd.f32 %v2337, %v612
    %v2339 = vmax.f32 %v2338, 0.0
    %v2340 = vmul.f32 %v2294, %v615
    %v2341 = vmul.f32 %v2303, %v617
    %v2342 = vadd.f32 %v2340, %v2341
    %v2343 = vmul.f32 %v2312, %v620
    %v2344 = vadd.f32 %v2342, %v2343
    %v2345 = vmul.f32 %v2321, %v623
    %v2346 = vadd.f32 %v2344, %v2345
    %v2347 = vadd.f32 %v2346, %v626
    %v2348 = vmax.f32 %v2347, 0.0
    %v2349 = vmul.f32 %v2294, %v629
    %v2350 = vmul.f32 %v2303, %v631
    %v2351 = vadd.f32 %v2349, %v2350
    %v2352 = vmul.f32 %v2312, %v634
    %v2353 = vadd.f32 %v2351, %v2352
    %v2354 = vmul.f32 %v2321, %v637
    %v2355 = vadd.f32 %v2353, %v2354
    %v2356 = vadd.f32 %v2355, %v640
    %v2357 = vmax.f32 %v2356, 0.0
    %v2358 = vmul.f32 %v2330, %v643
    %v2359 = vmul.f32 %v2339, %v645
    %v2360 = vadd.f32 %v2358, %v2359
    %v2361 = vmul.f32 %v2348, %v648
    %v2362 = vadd.f32 %v2360, %v2361
    %v2363 = vmul.f32 %v2357, %v651
    %v2364 = vadd.f32 %v2362, %v2363
    %v2365 = vadd.f32 %v2364, %v654
    %v2366 = vmax.f32 %v2365, 0.0
    %v2367 = vmul.f32 %v2330, %v657
    %v2368 = vmul.f32 %v2339, %v659
    %v2369 = vadd.f32 %v2367, %v2368
    %v2370 = vmul.f32 %v2348, %v662
    %v2371 = vadd.f32 %v2369, %v2370
    %v2372 = vmul.f32 %v2357, %v665
    %v2373 = vadd.f32 %v2371, %v2372
    %v2374 = vadd.f32 %v2373, %v668
    %v2375 = vmax.f32 %v2374, 0.0
    %v2376 = vmul.f32 %v2330, %v671
    %v2377 = vmul.f32 %v2339, %v673
    %v2378 = vadd.f32 %v2376, %v2377
    %v2379 = vmul.f32 %v2348, %v676
    %v2380 = vadd.f32 %v2378, %v2379
    %v2381 = vmul.f32 %v2357, %v679
    %v2382 = vadd.f32 %v2380, %v2381
    %v2383 = vadd.f32 %v2382, %v682
    %v2384 = vmax.f32 %v2383, 0.0
    %v2385 = vmul.f32 %v2330, %v685
    %v2386 = vmul.f32 %v2339, %v687
    %v2387 = vadd.f32 %v2385, %v2386
    %v2388 = vmul.f32 %v2348, %v690
    %v2389 = vadd.f32 %v2387, %v2388
    %v2390 = vmul.f32 %v2357, %v693
    %v2391 = vadd.f32 %v2389, %v2390
    %v2392 = vadd.f32 %v2391, %v696
    %v2393 = vmax.f32 %v2392, 0.0
    %v2394 = vmul.f32 %v2366, %v699
    %v2395 = vmul.f32 %v2375, %v701
    %v2396 = vadd.f32 %v2394, %v2395
    %v2397 = vmul.f32 %v2384, %v704
    %v2398 = vadd.f32 %v2396, %v2397
    %v2399 = vmul.f32 %v2393, %v707
    %v2400 = vadd.f32 %v2398, %v2399
    %v2401 = vadd.f32 %v2400, %v710
    %v2402 = vxor.u32 %v2401, 2147483648
    %v2403 = vmul.f32 %v2402, 1.442695
    %v2404 = vpow.pop %v2403
    %v2405 = vadd.f32 %v2404, 1.0
    %v2406 = vrcp.pop %v2405
    %v2407 = vmul.f32 %v2405, %v2406
    %v2408 = vsub.f32 1.0, %v2407
    %v2409 = vmul.f32 %v2406, %v2408
    %v2410 = vadd.f32 %v2406, %v2409
    %vm2411 = vweird.f32 %v2405
    %vm2412 = vweird.f32 %v2406
    %vm2413 = vmor %vm2411, %vm2412
    %v2414 = vsel %vm2413, %v2406, %v2410
    %v2415 = vand.u32 2147483647, %v2405
    %vm2416 = vcmp.eq.f32.partialorder %v2415, 8.507059e+37
    %v2417 = vand.u32 %v2405, 2147483648
    %v2418 = vor.u32 1.1754944e-38, %v2417
    %v2419 = vsel %vm2416, %v2418, %v2414
    %v2420 = vmul.f32 1.0, %v2419
    %2421 = vst [vmem:[%s3 + $0x28] sm:$0xff] %v2420
    %v2422 = vld [vmem:[%s2 + $0x30] sm:$0xff]
    %v2423 = vld [vmem:[%s217 + $0x30] sm:$0xff]
    %v2424 = vmul.f32 %v2422, %v219
    %v2425 = vmul.f32 %v2423, %v221
    %v2426 = vadd.f32 %v2424, %v2425
    %v2427 = vadd.f32 %v2426, %v224
    %v2428 = vmax.f32 %v2427, 0.0
    %v2429 = vmul.f32 %v2422, %v227
    %v2430 = vmul.f32 %v2423, %v229
    %v2431 = vadd.f32 %v2429, %v2430
    %v2432 = vadd.f32 %v2431, %v232
    %v2433 = vmax.f32 %v2432, 0.0
    %v2434 = vmul.f32 %v2422, %v235
    %v2435 = vmul.f32 %v2423, %v237
    %v2436 = vadd.f32 %v2434, %v2435
    %v2437 = vadd.f32 %v2436, %v240
    %v2438 = vmax.f32 %v2437, 0.0
    %v2439 = vmul.f32 %v2422, %v243
    %v2440 = vmul.f32 %v2423, %v245
    %v2441 = vadd.f32 %v2439, %v2440
    %v2442 = vadd.f32 %v2441, %v248
    %v2443 = vmax.f32 %v2442, 0.0
    %v2444 = vmul.f32 %v2428, %v251
    %v2445 = vmul.f32 %v2433, %v253
    %v2446 = vadd.f32 %v2444, %v2445
    %v2447 = vmul.f32 %v2438, %v256
    %v2448 = vadd.f32 %v2446, %v2447
    %v2449 = vmul.f32 %v2443, %v259
    %v2450 = vadd.f32 %v2448, %v2449
    %v2451 = vadd.f32 %v2450, %v262
    %v2452 = vmax.f32 %v2451, 0.0
    %v2453 = vmul.f32 %v2428, %v265
    %v2454 = vmul.f32 %v2433, %v267
    %v2455 = vadd.f32 %v2453, %v2454
    %v2456 = vmul.f32 %v2438, %v270
    %v2457 = vadd.f32 %v2455, %v2456
    %v2458 = vmul.f32 %v2443, %v273
    %v2459 = vadd.f32 %v2457, %v2458
    %v2460 = vadd.f32 %v2459, %v276
    %v2461 = vmax.f32 %v2460, 0.0
    %v2462 = vmul.f32 %v2428, %v279
    %v2463 = vmul.f32 %v2433, %v281
    %v2464 = vadd.f32 %v2462, %v2463
    %v2465 = vmul.f32 %v2438, %v284
    %v2466 = vadd.f32 %v2464, %v2465
    %v2467 = vmul.f32 %v2443, %v287
    %v2468 = vadd.f32 %v2466, %v2467
    %v2469 = vadd.f32 %v2468, %v290
    %v2470 = vmax.f32 %v2469, 0.0
    %v2471 = vmul.f32 %v2428, %v293
    %v2472 = vmul.f32 %v2433, %v295
    %v2473 = vadd.f32 %v2471, %v2472
    %v2474 = vmul.f32 %v2438, %v298
    %v2475 = vadd.f32 %v2473, %v2474
    %v2476 = vmul.f32 %v2443, %v301
    %v2477 = vadd.f32 %v2475, %v2476
    %v2478 = vadd.f32 %v2477, %v304
    %v2479 = vmax.f32 %v2478, 0.0
    %v2480 = vmul.f32 %v2452, %v307
    %v2481 = vmul.f32 %v2461, %v309
    %v2482 = vadd.f32 %v2480, %v2481
    %v2483 = vmul.f32 %v2470, %v312
    %v2484 = vadd.f32 %v2482, %v2483
    %v2485 = vmul.f32 %v2479, %v315
    %v2486 = vadd.f32 %v2484, %v2485
    %v2487 = vadd.f32 %v2486, %v318
    %v2488 = vmax.f32 %v2487, 0.0
    %v2489 = vmul.f32 %v2452, %v321
    %v2490 = vmul.f32 %v2461, %v323
    %v2491 = vadd.f32 %v2489, %v2490
    %v2492 = vmul.f32 %v2470, %v326
    %v2493 = vadd.f32 %v2491, %v2492
    %v2494 = vmul.f32 %v2479, %v329
    %v2495 = vadd.f32 %v2493, %v2494
    %v2496 = vadd.f32 %v2495, %v332
    %v2497 = vmax.f32 %v2496, 0.0
    %v2498 = vmul.f32 %v2452, %v335
    %v2499 = vmul.f32 %v2461, %v337
    %v2500 = vadd.f32 %v2498, %v2499
    %v2501 = vmul.f32 %v2470, %v340
    %v2502 = vadd.f32 %v2500, %v2501
    %v2503 = vmul.f32 %v2479, %v343
    %v2504 = vadd.f32 %v2502, %v2503
    %v2505 = vadd.f32 %v2504, %v346
    %v2506 = vmax.f32 %v2505, 0.0
    %v2507 = vmul.f32 %v2452, %v349
    %v2508 = vmul.f32 %v2461, %v351
    %v2509 = vadd.f32 %v2507, %v2508
    %v2510 = vmul.f32 %v2470, %v354
    %v2511 = vadd.f32 %v2509, %v2510
    %v2512 = vmul.f32 %v2479, %v357
    %v2513 = vadd.f32 %v2511, %v2512
    %v2514 = vadd.f32 %v2513, %v360
    %v2515 = vmax.f32 %v2514, 0.0
    %v2516 = vmul.f32 %v2488, %v363
    %v2517 = vmul.f32 %v2497, %v365
    %v2518 = vadd.f32 %v2516, %v2517
    %v2519 = vmul.f32 %v2506, %v368
    %v2520 = vadd.f32 %v2518, %v2519
    %v2521 = vmul.f32 %v2515, %v371
    %v2522 = vadd.f32 %v2520, %v2521
    %v2523 = vadd.f32 %v2522, %v374
    %v2524 = vmax.f32 %v2523, 0.0
    %v2525 = vmul.f32 %v2488, %v377
    %v2526 = vmul.f32 %v2497, %v379
    %v2527 = vadd.f32 %v2525, %v2526
    %v2528 = vmul.f32 %v2506, %v382
    %v2529 = vadd.f32 %v2527, %v2528
    %v2530 = vmul.f32 %v2515, %v385
    %v2531 = vadd.f32 %v2529, %v2530
    %v2532 = vadd.f32 %v2531, %v388
    %v2533 = vmax.f32 %v2532, 0.0
    %v2534 = vmul.f32 %v2488, %v391
    %v2535 = vmul.f32 %v2497, %v393
    %v2536 = vadd.f32 %v2534, %v2535
    %v2537 = vmul.f32 %v2506, %v396
    %v2538 = vadd.f32 %v2536, %v2537
    %v2539 = vmul.f32 %v2515, %v399
    %v2540 = vadd.f32 %v2538, %v2539
    %v2541 = vadd.f32 %v2540, %v402
    %v2542 = vmax.f32 %v2541, 0.0
    %v2543 = vmul.f32 %v2488, %v405
    %v2544 = vmul.f32 %v2497, %v407
    %v2545 = vadd.f32 %v2543, %v2544
    %v2546 = vmul.f32 %v2506, %v410
    %v2547 = vadd.f32 %v2545, %v2546
    %v2548 = vmul.f32 %v2515, %v413
    %v2549 = vadd.f32 %v2547, %v2548
    %v2550 = vadd.f32 %v2549, %v416
    %v2551 = vmax.f32 %v2550, 0.0
    %v2552 = vmul.f32 %v2524, %v419
    %v2553 = vmul.f32 %v2533, %v421
    %v2554 = vadd.f32 %v2552, %v2553
    %v2555 = vmul.f32 %v2542, %v424
    %v2556 = vadd.f32 %v2554, %v2555
    %v2557 = vmul.f32 %v2551, %v427
    %v2558 = vadd.f32 %v2556, %v2557
    %v2559 = vadd.f32 %v2558, %v430
    %v2560 = vmax.f32 %v2559, 0.0
    %v2561 = vmul.f32 %v2524, %v433
    %v2562 = vmul.f32 %v2533, %v435
    %v2563 = vadd.f32 %v2561, %v2562
    %v2564 = vmul.f32 %v2542, %v438
    %v2565 = vadd.f32 %v2563, %v2564
    %v2566 = vmul.f32 %v2551, %v441
    %v2567 = vadd.f32 %v2565, %v2566
    %v2568 = vadd.f32 %v2567, %v444
    %v2569 = vmax.f32 %v2568, 0.0
    %v2570 = vmul.f32 %v2524, %v447
    %v2571 = vmul.f32 %v2533, %v449
    %v2572 = vadd.f32 %v2570, %v2571
    %v2573 = vmul.f32 %v2542, %v452
    %v2574 = vadd.f32 %v2572, %v2573
    %v2575 = vmul.f32 %v2551, %v455
    %v2576 = vadd.f32 %v2574, %v2575
    %v2577 = vadd.f32 %v2576, %v458
    %v2578 = vmax.f32 %v2577, 0.0
    %v2579 = vmul.f32 %v2524, %v461
    %v2580 = vmul.f32 %v2533, %v463
    %v2581 = vadd.f32 %v2579, %v2580
    %v2582 = vmul.f32 %v2542, %v466
    %v2583 = vadd.f32 %v2581, %v2582
    %v2584 = vmul.f32 %v2551, %v469
    %v2585 = vadd.f32 %v2583, %v2584
    %v2586 = vadd.f32 %v2585, %v472
    %v2587 = vmax.f32 %v2586, 0.0
    %v2588 = vmul.f32 %v2560, %v475
    %v2589 = vmul.f32 %v2569, %v477
    %v2590 = vadd.f32 %v2588, %v2589
    %v2591 = vmul.f32 %v2578, %v480
    %v2592 = vadd.f32 %v2590, %v2591
    %v2593 = vmul.f32 %v2587, %v483
    %v2594 = vadd.f32 %v2592, %v2593
    %v2595 = vadd.f32 %v2594, %v486
    %v2596 = vmax.f32 %v2595, 0.0
    %v2597 = vmul.f32 %v2560, %v489
    %v2598 = vmul.f32 %v2569, %v491
    %v2599 = vadd.f32 %v2597, %v2598
    %v2600 = vmul.f32 %v2578, %v494
    %v2601 = vadd.f32 %v2599, %v2600
    %v2602 = vmul.f32 %v2587, %v497
    %v2603 = vadd.f32 %v2601, %v2602
    %v2604 = vadd.f32 %v2603, %v500
    %v2605 = vmax.f32 %v2604, 0.0
    %v2606 = vmul.f32 %v2560, %v503
    %v2607 = vmul.f32 %v2569, %v505
    %v2608 = vadd.f32 %v2606, %v2607
    %v2609 = vmul.f32 %v2578, %v508
    %v2610 = vadd.f32 %v2608, %v2609
    %v2611 = vmul.f32 %v2587, %v511
    %v2612 = vadd.f32 %v2610, %v2611
    %v2613 = vadd.f32 %v2612, %v514
    %v2614 = vmax.f32 %v2613, 0.0
    %v2615 = vmul.f32 %v2560, %v517
    %v2616 = vmul.f32 %v2569, %v519
    %v2617 = vadd.f32 %v2615, %v2616
    %v2618 = vmul.f32 %v2578, %v522
    %v2619 = vadd.f32 %v2617, %v2618
    %v2620 = vmul.f32 %v2587, %v525
    %v2621 = vadd.f32 %v2619, %v2620
    %v2622 = vadd.f32 %v2621, %v528
    %v2623 = vmax.f32 %v2622, 0.0
    %v2624 = vmul.f32 %v2596, %v531
    %v2625 = vmul.f32 %v2605, %v533
    %v2626 = vadd.f32 %v2624, %v2625
    %v2627 = vmul.f32 %v2614, %v536
    %v2628 = vadd.f32 %v2626, %v2627
    %v2629 = vmul.f32 %v2623, %v539
    %v2630 = vadd.f32 %v2628, %v2629
    %v2631 = vadd.f32 %v2630, %v542
    %v2632 = vmax.f32 %v2631, 0.0
    %v2633 = vmul.f32 %v2596, %v545
    %v2634 = vmul.f32 %v2605, %v547
    %v2635 = vadd.f32 %v2633, %v2634
    %v2636 = vmul.f32 %v2614, %v550
    %v2637 = vadd.f32 %v2635, %v2636
    %v2638 = vmul.f32 %v2623, %v553
    %v2639 = vadd.f32 %v2637, %v2638
    %v2640 = vadd.f32 %v2639, %v556
    %v2641 = vmax.f32 %v2640, 0.0
    %v2642 = vmul.f32 %v2596, %v559
    %v2643 = vmul.f32 %v2605, %v561
    %v2644 = vadd.f32 %v2642, %v2643
    %v2645 = vmul.f32 %v2614, %v564
    %v2646 = vadd.f32 %v2644, %v2645
    %v2647 = vmul.f32 %v2623, %v567
    %v2648 = vadd.f32 %v2646, %v2647
    %v2649 = vadd.f32 %v2648, %v570
    %v2650 = vmax.f32 %v2649, 0.0
    %v2651 = vmul.f32 %v2596, %v573
    %v2652 = vmul.f32 %v2605, %v575
    %v2653 = vadd.f32 %v2651, %v2652
    %v2654 = vmul.f32 %v2614, %v578
    %v2655 = vadd.f32 %v2653, %v2654
    %v2656 = vmul.f32 %v2623, %v581
    %v2657 = vadd.f32 %v2655, %v2656
    %v2658 = vadd.f32 %v2657, %v584
    %v2659 = vmax.f32 %v2658, 0.0
    %v2660 = vmul.f32 %v2632, %v587
    %v2661 = vmul.f32 %v2641, %v589
    %v2662 = vadd.f32 %v2660, %v2661
    %v2663 = vmul.f32 %v2650, %v592
    %v2664 = vadd.f32 %v2662, %v2663
    %v2665 = vmul.f32 %v2659, %v595
    %v2666 = vadd.f32 %v2664, %v2665
    %v2667 = vadd.f32 %v2666, %v598
    %v2668 = vmax.f32 %v2667, 0.0
    %v2669 = vmul.f32 %v2632, %v601
    %v2670 = vmul.f32 %v2641, %v603
    %v2671 = vadd.f32 %v2669, %v2670
    %v2672 = vmul.f32 %v2650, %v606
    %v2673 = vadd.f32 %v2671, %v2672
    %v2674 = vmul.f32 %v2659, %v609
    %v2675 = vadd.f32 %v2673, %v2674
    %v2676 = vadd.f32 %v2675, %v612
    %v2677 = vmax.f32 %v2676, 0.0
    %v2678 = vmul.f32 %v2632, %v615
    %v2679 = vmul.f32 %v2641, %v617
    %v2680 = vadd.f32 %v2678, %v2679
    %v2681 = vmul.f32 %v2650, %v620
    %v2682 = vadd.f32 %v2680, %v2681
    %v2683 = vmul.f32 %v2659, %v623
    %v2684 = vadd.f32 %v2682, %v2683
    %v2685 = vadd.f32 %v2684, %v626
    %v2686 = vmax.f32 %v2685, 0.0
    %v2687 = vmul.f32 %v2632, %v629
    %v2688 = vmul.f32 %v2641, %v631
    %v2689 = vadd.f32 %v2687, %v2688
    %v2690 = vmul.f32 %v2650, %v634
    %v2691 = vadd.f32 %v2689, %v2690
    %v2692 = vmul.f32 %v2659, %v637
    %v2693 = vadd.f32 %v2691, %v2692
    %v2694 = vadd.f32 %v2693, %v640
    %v2695 = vmax.f32 %v2694, 0.0
    %v2696 = vmul.f32 %v2668, %v643
    %v2697 = vmul.f32 %v2677, %v645
    %v2698 = vadd.f32 %v2696, %v2697
    %v2699 = vmul.f32 %v2686, %v648
    %v2700 = vadd.f32 %v2698, %v2699
    %v2701 = vmul.f32 %v2695, %v651
    %v2702 = vadd.f32 %v2700, %v2701
    %v2703 = vadd.f32 %v2702, %v654
    %v2704 = vmax.f32 %v2703, 0.0
    %v2705 = vmul.f32 %v2668, %v657
    %v2706 = vmul.f32 %v2677, %v659
    %v2707 = vadd.f32 %v2705, %v2706
    %v2708 = vmul.f32 %v2686, %v662
    %v2709 = vadd.f32 %v2707, %v2708
    %v2710 = vmul.f32 %v2695, %v665
    %v2711 = vadd.f32 %v2709, %v2710
    %v2712 = vadd.f32 %v2711, %v668
    %v2713 = vmax.f32 %v2712, 0.0
    %v2714 = vmul.f32 %v2668, %v671
    %v2715 = vmul.f32 %v2677, %v673
    %v2716 = vadd.f32 %v2714, %v2715
    %v2717 = vmul.f32 %v2686, %v676
    %v2718 = vadd.f32 %v2716, %v2717
    %v2719 = vmul.f32 %v2695, %v679
    %v2720 = vadd.f32 %v2718, %v2719
    %v2721 = vadd.f32 %v2720, %v682
    %v2722 = vmax.f32 %v2721, 0.0
    %v2723 = vmul.f32 %v2668, %v685
    %v2724 = vmul.f32 %v2677, %v687
    %v2725 = vadd.f32 %v2723, %v2724
    %v2726 = vmul.f32 %v2686, %v690
    %v2727 = vadd.f32 %v2725, %v2726
    %v2728 = vmul.f32 %v2695, %v693
    %v2729 = vadd.f32 %v2727, %v2728
    %v2730 = vadd.f32 %v2729, %v696
    %v2731 = vmax.f32 %v2730, 0.0
    %v2732 = vmul.f32 %v2704, %v699
    %v2733 = vmul.f32 %v2713, %v701
    %v2734 = vadd.f32 %v2732, %v2733
    %v2735 = vmul.f32 %v2722, %v704
    %v2736 = vadd.f32 %v2734, %v2735
    %v2737 = vmul.f32 %v2731, %v707
    %v2738 = vadd.f32 %v2736, %v2737
    %v2739 = vadd.f32 %v2738, %v710
    %v2740 = vxor.u32 %v2739, 2147483648
    %v2741 = vmul.f32 %v2740, 1.442695
    %v2742 = vpow.pop %v2741
    %v2743 = vadd.f32 %v2742, 1.0
    %v2744 = vrcp.pop %v2743
    %v2745 = vmul.f32 %v2743, %v2744
    %v2746 = vsub.f32 1.0, %v2745
    %v2747 = vmul.f32 %v2744, %v2746
    %v2748 = vadd.f32 %v2744, %v2747
    %vm2749 = vweird.f32 %v2743
    %vm2750 = vweird.f32 %v2744
    %vm2751 = vmor %vm2749, %vm2750
    %v2752 = vsel %vm2751, %v2744, %v2748
    %v2753 = vand.u32 2147483647, %v2743
    %vm2754 = vcmp.eq.f32.partialorder %v2753, 8.507059e+37
    %v2755 = vand.u32 %v2743, 2147483648
    %v2756 = vor.u32 1.1754944e-38, %v2755
    %v2757 = vsel %vm2754, %v2756, %v2752
    %v2758 = vmul.f32 1.0, %v2757
    %2759 = vst [vmem:[%s3 + $0x30] sm:$0xff] %v2758
    %v2760 = vld [vmem:[%s2 + $0x38] sm:$0xff]
    %v2761 = vld [vmem:[%s217 + $0x38] sm:$0xff]
    %v2762 = vmul.f32 %v2760, %v219
    %v2763 = vmul.f32 %v2761, %v221
    %v2764 = vadd.f32 %v2762, %v2763
    %v2765 = vadd.f32 %v2764, %v224
    %v2766 = vmax.f32 %v2765, 0.0
    %v2767 = vmul.f32 %v2760, %v227
    %v2768 = vmul.f32 %v2761, %v229
    %v2769 = vadd.f32 %v2767, %v2768
    %v2770 = vadd.f32 %v2769, %v232
    %v2771 = vmax.f32 %v2770, 0.0
    %v2772 = vmul.f32 %v2760, %v235
    %v2773 = vmul.f32 %v2761, %v237
    %v2774 = vadd.f32 %v2772, %v2773
    %v2775 = vadd.f32 %v2774, %v240
    %v2776 = vmax.f32 %v2775, 0.0
    %v2777 = vmul.f32 %v2760, %v243
    %v2778 = vmul.f32 %v2761, %v245
    %v2779 = vadd.f32 %v2777, %v2778
    %v2780 = vadd.f32 %v2779, %v248
    %v2781 = vmax.f32 %v2780, 0.0
    %v2782 = vmul.f32 %v2766, %v251
    %v2783 = vmul.f32 %v2771, %v253
    %v2784 = vadd.f32 %v2782, %v2783
    %v2785 = vmul.f32 %v2776, %v256
    %v2786 = vadd.f32 %v2784, %v2785
    %v2787 = vmul.f32 %v2781, %v259
    %v2788 = vadd.f32 %v2786, %v2787
    %v2789 = vadd.f32 %v2788, %v262
    %v2790 = vmax.f32 %v2789, 0.0
    %v2791 = vmul.f32 %v2766, %v265
    %v2792 = vmul.f32 %v2771, %v267
    %v2793 = vadd.f32 %v2791, %v2792
    %v2794 = vmul.f32 %v2776, %v270
    %v2795 = vadd.f32 %v2793, %v2794
    %v2796 = vmul.f32 %v2781, %v273
    %v2797 = vadd.f32 %v2795, %v2796
    %v2798 = vadd.f32 %v2797, %v276
    %v2799 = vmax.f32 %v2798, 0.0
    %v2800 = vmul.f32 %v2766, %v279
    %v2801 = vmul.f32 %v2771, %v281
    %v2802 = vadd.f32 %v2800, %v2801
    %v2803 = vmul.f32 %v2776, %v284
    %v2804 = vadd.f32 %v2802, %v2803
    %v2805 = vmul.f32 %v2781, %v287
    %v2806 = vadd.f32 %v2804, %v2805
    %v2807 = vadd.f32 %v2806, %v290
    %v2808 = vmax.f32 %v2807, 0.0
    %v2809 = vmul.f32 %v2766, %v293
    %v2810 = vmul.f32 %v2771, %v295
    %v2811 = vadd.f32 %v2809, %v2810
    %v2812 = vmul.f32 %v2776, %v298
    %v2813 = vadd.f32 %v2811, %v2812
    %v2814 = vmul.f32 %v2781, %v301
    %v2815 = vadd.f32 %v2813, %v2814
    %v2816 = vadd.f32 %v2815, %v304
    %v2817 = vmax.f32 %v2816, 0.0
    %v2818 = vmul.f32 %v2790, %v307
    %v2819 = vmul.f32 %v2799, %v309
    %v2820 = vadd.f32 %v2818, %v2819
    %v2821 = vmul.f32 %v2808, %v312
    %v2822 = vadd.f32 %v2820, %v2821
    %v2823 = vmul.f32 %v2817, %v315
    %v2824 = vadd.f32 %v2822, %v2823
    %v2825 = vadd.f32 %v2824, %v318
    %v2826 = vmax.f32 %v2825, 0.0
    %v2827 = vmul.f32 %v2790, %v321
    %v2828 = vmul.f32 %v2799, %v323
    %v2829 = vadd.f32 %v2827, %v2828
    %v2830 = vmul.f32 %v2808, %v326
    %v2831 = vadd.f32 %v2829, %v2830
    %v2832 = vmul.f32 %v2817, %v329
    %v2833 = vadd.f32 %v2831, %v2832
    %v2834 = vadd.f32 %v2833, %v332
    %v2835 = vmax.f32 %v2834, 0.0
    %v2836 = vmul.f32 %v2790, %v335
    %v2837 = vmul.f32 %v2799, %v337
    %v2838 = vadd.f32 %v2836, %v2837
    %v2839 = vmul.f32 %v2808, %v340
    %v2840 = vadd.f32 %v2838, %v2839
    %v2841 = vmul.f32 %v2817, %v343
    %v2842 = vadd.f32 %v2840, %v2841
    %v2843 = vadd.f32 %v2842, %v346
    %v2844 = vmax.f32 %v2843, 0.0
    %v2845 = vmul.f32 %v2790, %v349
    %v2846 = vmul.f32 %v2799, %v351
    %v2847 = vadd.f32 %v2845, %v2846
    %v2848 = vmul.f32 %v2808, %v354
    %v2849 = vadd.f32 %v2847, %v2848
    %v2850 = vmul.f32 %v2817, %v357
    %v2851 = vadd.f32 %v2849, %v2850
    %v2852 = vadd.f32 %v2851, %v360
    %v2853 = vmax.f32 %v2852, 0.0
    %v2854 = vmul.f32 %v2826, %v363
    %v2855 = vmul.f32 %v2835, %v365
    %v2856 = vadd.f32 %v2854, %v2855
    %v2857 = vmul.f32 %v2844, %v368
    %v2858 = vadd.f32 %v2856, %v2857
    %v2859 = vmul.f32 %v2853, %v371
    %v2860 = vadd.f32 %v2858, %v2859
    %v2861 = vadd.f32 %v2860, %v374
    %v2862 = vmax.f32 %v2861, 0.0
    %v2863 = vmul.f32 %v2826, %v377
    %v2864 = vmul.f32 %v2835, %v379
    %v2865 = vadd.f32 %v2863, %v2864
    %v2866 = vmul.f32 %v2844, %v382
    %v2867 = vadd.f32 %v2865, %v2866
    %v2868 = vmul.f32 %v2853, %v385
    %v2869 = vadd.f32 %v2867, %v2868
    %v2870 = vadd.f32 %v2869, %v388
    %v2871 = vmax.f32 %v2870, 0.0
    %v2872 = vmul.f32 %v2826, %v391
    %v2873 = vmul.f32 %v2835, %v393
    %v2874 = vadd.f32 %v2872, %v2873
    %v2875 = vmul.f32 %v2844, %v396
    %v2876 = vadd.f32 %v2874, %v2875
    %v2877 = vmul.f32 %v2853, %v399
    %v2878 = vadd.f32 %v2876, %v2877
    %v2879 = vadd.f32 %v2878, %v402
    %v2880 = vmax.f32 %v2879, 0.0
    %v2881 = vmul.f32 %v2826, %v405
    %v2882 = vmul.f32 %v2835, %v407
    %v2883 = vadd.f32 %v2881, %v2882
    %v2884 = vmul.f32 %v2844, %v410
    %v2885 = vadd.f32 %v2883, %v2884
    %v2886 = vmul.f32 %v2853, %v413
    %v2887 = vadd.f32 %v2885, %v2886
    %v2888 = vadd.f32 %v2887, %v416
    %v2889 = vmax.f32 %v2888, 0.0
    %v2890 = vmul.f32 %v2862, %v419
    %v2891 = vmul.f32 %v2871, %v421
    %v2892 = vadd.f32 %v2890, %v2891
    %v2893 = vmul.f32 %v2880, %v424
    %v2894 = vadd.f32 %v2892, %v2893
    %v2895 = vmul.f32 %v2889, %v427
    %v2896 = vadd.f32 %v2894, %v2895
    %v2897 = vadd.f32 %v2896, %v430
    %v2898 = vmax.f32 %v2897, 0.0
    %v2899 = vmul.f32 %v2862, %v433
    %v2900 = vmul.f32 %v2871, %v435
    %v2901 = vadd.f32 %v2899, %v2900
    %v2902 = vmul.f32 %v2880, %v438
    %v2903 = vadd.f32 %v2901, %v2902
    %v2904 = vmul.f32 %v2889, %v441
    %v2905 = vadd.f32 %v2903, %v2904
    %v2906 = vadd.f32 %v2905, %v444
    %v2907 = vmax.f32 %v2906, 0.0
    %v2908 = vmul.f32 %v2862, %v447
    %v2909 = vmul.f32 %v2871, %v449
    %v2910 = vadd.f32 %v2908, %v2909
    %v2911 = vmul.f32 %v2880, %v452
    %v2912 = vadd.f32 %v2910, %v2911
    %v2913 = vmul.f32 %v2889, %v455
    %v2914 = vadd.f32 %v2912, %v2913
    %v2915 = vadd.f32 %v2914, %v458
    %v2916 = vmax.f32 %v2915, 0.0
    %v2917 = vmul.f32 %v2862, %v461
    %v2918 = vmul.f32 %v2871, %v463
    %v2919 = vadd.f32 %v2917, %v2918
    %v2920 = vmul.f32 %v2880, %v466
    %v2921 = vadd.f32 %v2919, %v2920
    %v2922 = vmul.f32 %v2889, %v469
    %v2923 = vadd.f32 %v2921, %v2922
    %v2924 = vadd.f32 %v2923, %v472
    %v2925 = vmax.f32 %v2924, 0.0
    %v2926 = vmul.f32 %v2898, %v475
    %v2927 = vmul.f32 %v2907, %v477
    %v2928 = vadd.f32 %v2926, %v2927
    %v2929 = vmul.f32 %v2916, %v480
    %v2930 = vadd.f32 %v2928, %v2929
    %v2931 = vmul.f32 %v2925, %v483
    %v2932 = vadd.f32 %v2930, %v2931
    %v2933 = vadd.f32 %v2932, %v486
    %v2934 = vmax.f32 %v2933, 0.0
    %v2935 = vmul.f32 %v2898, %v489
    %v2936 = vmul.f32 %v2907, %v491
    %v2937 = vadd.f32 %v2935, %v2936
    %v2938 = vmul.f32 %v2916, %v494
    %v2939 = vadd.f32 %v2937, %v2938
    %v2940 = vmul.f32 %v2925, %v497
    %v2941 = vadd.f32 %v2939, %v2940
    %v2942 = vadd.f32 %v2941, %v500
    %v2943 = vmax.f32 %v2942, 0.0
    %v2944 = vmul.f32 %v2898, %v503
    %v2945 = vmul.f32 %v2907, %v505
    %v2946 = vadd.f32 %v2944, %v2945
    %v2947 = vmul.f32 %v2916, %v508
    %v2948 = vadd.f32 %v2946, %v2947
    %v2949 = vmul.f32 %v2925, %v511
    %v2950 = vadd.f32 %v2948, %v2949
    %v2951 = vadd.f32 %v2950, %v514
    %v2952 = vmax.f32 %v2951, 0.0
    %v2953 = vmul.f32 %v2898, %v517
    %v2954 = vmul.f32 %v2907, %v519
    %v2955 = vadd.f32 %v2953, %v2954
    %v2956 = vmul.f32 %v2916, %v522
    %v2957 = vadd.f32 %v2955, %v2956
    %v2958 = vmul.f32 %v2925, %v525
    %v2959 = vadd.f32 %v2957, %v2958
    %v2960 = vadd.f32 %v2959, %v528
    %v2961 = vmax.f32 %v2960, 0.0
    %v2962 = vmul.f32 %v2934, %v531
    %v2963 = vmul.f32 %v2943, %v533
    %v2964 = vadd.f32 %v2962, %v2963
    %v2965 = vmul.f32 %v2952, %v536
    %v2966 = vadd.f32 %v2964, %v2965
    %v2967 = vmul.f32 %v2961, %v539
    %v2968 = vadd.f32 %v2966, %v2967
    %v2969 = vadd.f32 %v2968, %v542
    %v2970 = vmax.f32 %v2969, 0.0
    %v2971 = vmul.f32 %v2934, %v545
    %v2972 = vmul.f32 %v2943, %v547
    %v2973 = vadd.f32 %v2971, %v2972
    %v2974 = vmul.f32 %v2952, %v550
    %v2975 = vadd.f32 %v2973, %v2974
    %v2976 = vmul.f32 %v2961, %v553
    %v2977 = vadd.f32 %v2975, %v2976
    %v2978 = vadd.f32 %v2977, %v556
    %v2979 = vmax.f32 %v2978, 0.0
    %v2980 = vmul.f32 %v2934, %v559
    %v2981 = vmul.f32 %v2943, %v561
    %v2982 = vadd.f32 %v2980, %v2981
    %v2983 = vmul.f32 %v2952, %v564
    %v2984 = vadd.f32 %v2982, %v2983
    %v2985 = vmul.f32 %v2961, %v567
    %v2986 = vadd.f32 %v2984, %v2985
    %v2987 = vadd.f32 %v2986, %v570
    %v2988 = vmax.f32 %v2987, 0.0
    %v2989 = vmul.f32 %v2934, %v573
    %v2990 = vmul.f32 %v2943, %v575
    %v2991 = vadd.f32 %v2989, %v2990
    %v2992 = vmul.f32 %v2952, %v578
    %v2993 = vadd.f32 %v2991, %v2992
    %v2994 = vmul.f32 %v2961, %v581
    %v2995 = vadd.f32 %v2993, %v2994
    %v2996 = vadd.f32 %v2995, %v584
    %v2997 = vmax.f32 %v2996, 0.0
    %v2998 = vmul.f32 %v2970, %v587
    %v2999 = vmul.f32 %v2979, %v589
    %v3000 = vadd.f32 %v2998, %v2999
    %v3001 = vmul.f32 %v2988, %v592
    %v3002 = vadd.f32 %v3000, %v3001
    %v3003 = vmul.f32 %v2997, %v595
    %v3004 = vadd.f32 %v3002, %v3003
    %v3005 = vadd.f32 %v3004, %v598
    %v3006 = vmax.f32 %v3005, 0.0
    %v3007 = vmul.f32 %v2970, %v601
    %v3008 = vmul.f32 %v2979, %v603
    %v3009 = vadd.f32 %v3007, %v3008
    %v3010 = vmul.f32 %v2988, %v606
    %v3011 = vadd.f32 %v3009, %v3010
    %v3012 = vmul.f32 %v2997, %v609
    %v3013 = vadd.f32 %v3011, %v3012
    %v3014 = vadd.f32 %v3013, %v612
    %v3015 = vmax.f32 %v3014, 0.0
    %v3016 = vmul.f32 %v2970, %v615
    %v3017 = vmul.f32 %v2979, %v617
    %v3018 = vadd.f32 %v3016, %v3017
    %v3019 = vmul.f32 %v2988, %v620
    %v3020 = vadd.f32 %v3018, %v3019
    %v3021 = vmul.f32 %v2997, %v623
    %v3022 = vadd.f32 %v3020, %v3021
    %v3023 = vadd.f32 %v3022, %v626
    %v3024 = vmax.f32 %v3023, 0.0
    %v3025 = vmul.f32 %v2970, %v629
    %v3026 = vmul.f32 %v2979, %v631
    %v3027 = vadd.f32 %v3025, %v3026
    %v3028 = vmul.f32 %v2988, %v634
    %v3029 = vadd.f32 %v3027, %v3028
    %v3030 = vmul.f32 %v2997, %v637
    %v3031 = vadd.f32 %v3029, %v3030
    %v3032 = vadd.f32 %v3031, %v640
    %v3033 = vmax.f32 %v3032, 0.0
    %v3034 = vmul.f32 %v3006, %v643
    %v3035 = vmul.f32 %v3015, %v645
    %v3036 = vadd.f32 %v3034, %v3035
    %v3037 = vmul.f32 %v3024, %v648
    %v3038 = vadd.f32 %v3036, %v3037
    %v3039 = vmul.f32 %v3033, %v651
    %v3040 = vadd.f32 %v3038, %v3039
    %v3041 = vadd.f32 %v3040, %v654
    %v3042 = vmax.f32 %v3041, 0.0
    %v3043 = vmul.f32 %v3006, %v657
    %v3044 = vmul.f32 %v3015, %v659
    %v3045 = vadd.f32 %v3043, %v3044
    %v3046 = vmul.f32 %v3024, %v662
    %v3047 = vadd.f32 %v3045, %v3046
    %v3048 = vmul.f32 %v3033, %v665
    %v3049 = vadd.f32 %v3047, %v3048
    %v3050 = vadd.f32 %v3049, %v668
    %v3051 = vmax.f32 %v3050, 0.0
    %v3052 = vmul.f32 %v3006, %v671
    %v3053 = vmul.f32 %v3015, %v673
    %v3054 = vadd.f32 %v3052, %v3053
    %v3055 = vmul.f32 %v3024, %v676
    %v3056 = vadd.f32 %v3054, %v3055
    %v3057 = vmul.f32 %v3033, %v679
    %v3058 = vadd.f32 %v3056, %v3057
    %v3059 = vadd.f32 %v3058, %v682
    %v3060 = vmax.f32 %v3059, 0.0
    %v3061 = vmul.f32 %v3006, %v685
    %v3062 = vmul.f32 %v3015, %v687
    %v3063 = vadd.f32 %v3061, %v3062
    %v3064 = vmul.f32 %v3024, %v690
    %v3065 = vadd.f32 %v3063, %v3064
    %v3066 = vmul.f32 %v3033, %v693
    %v3067 = vadd.f32 %v3065, %v3066
    %v3068 = vadd.f32 %v3067, %v696
    %v3069 = vmax.f32 %v3068, 0.0
    %v3070 = vmul.f32 %v3042, %v699
    %v3071 = vmul.f32 %v3051, %v701
    %v3072 = vadd.f32 %v3070, %v3071
    %v3073 = vmul.f32 %v3060, %v704
    %v3074 = vadd.f32 %v3072, %v3073
    %v3075 = vmul.f32 %v3069, %v707
    %v3076 = vadd.f32 %v3074, %v3075
    %v3077 = vadd.f32 %v3076, %v710
    %v3078 = vxor.u32 %v3077, 2147483648
    %v3079 = vmul.f32 %v3078, 1.442695
    %v3080 = vpow.pop %v3079
    %v3081 = vadd.f32 %v3080, 1.0
    %v3082 = vrcp.pop %v3081
    %v3083 = vmul.f32 %v3081, %v3082
    %v3084 = vsub.f32 1.0, %v3083
    %v3085 = vmul.f32 %v3082, %v3084
    %v3086 = vadd.f32 %v3082, %v3085
    %vm3087 = vweird.f32 %v3081
    %vm3088 = vweird.f32 %v3082
    %vm3089 = vmor %vm3087, %vm3088
    %v3090 = vsel %vm3089, %v3082, %v3086
    %v3091 = vand.u32 2147483647, %v3081
    %vm3092 = vcmp.eq.f32.partialorder %v3091, 8.507059e+37
    %v3093 = vand.u32 %v3081, 2147483648
    %v3094 = vor.u32 1.1754944e-38, %v3093
    %v3095 = vsel %vm3092, %v3094, %v3090
    %v3096 = vmul.f32 1.0, %v3095
    %3097 = vst [vmem:[%s3 + $0x38] sm:$0xff] %v3096
    // Predicated region
    $region22: #{nn10_forward.1} parent=1 // pred_check
      _
    $region23: #{nn10_forward.1} parent=1 // pred_check_branch
      %3099 = sbr.rel (0) target = $region25
    $region24: #{nn10_forward.1} parent=1 // pred_region
      _
    $region25: #{nn10_forward.1} parent=1 // pred_fallthru
      _
    // Predicated region
    $region26: #{nn10_forward.1} parent=1 // pred_check
      _
    $region27: #{nn10_forward.1} parent=1 // pred_check_branch
      %3101 = sbr.rel (0) target = $region29
    $region28: #{nn10_forward.1} parent=1 // pred_region
      _
    $region29: #{nn10_forward.1} parent=1 // pred_fallthru
      _
    %3102 = vsyncpa [#allocation3], 1
    %3103 = vsyncpa [#allocation5], 1

</llo_original>
